<compile_context>
chip_gen: v7x
topology: tpu7x:2x2x1
jax: 0.10.0
libtpu: 0.0.40
codegen_flags: <defaults>
</compile_context>

<pallas_src>
import functools

import jax
import jax.numpy as jnp
from jax.experimental import pallas as pl
from jax.experimental.pallas import tpu as pltpu


def _round_up(x, m):
    return (x + m - 1) // m * m


def _vmem_budget_bytes():
    cap = 64 * 1024 * 1024  # conservative default = v7x physical VMEM per TensorCore
    try:
        info = pltpu.get_tpu_info()
        cap = int(getattr(info, "vmem_capacity_bytes", cap))
    except Exception:
        pass
    return int(cap * 3 // 4)  # headroom for compiler scratch / spills


# ------------------------------ fused SPPF kernel ------------------------------- #
def _sppf_fused_kernel(x_ref, w1_ref, b1_ref, w2_ref, b2_ref, o_ref,
                       yp_ref, p1_ref, p2_ref, *, H, W, k):
    # x_ref : (H*W, C1)   bf16 rows of one image (NHWC flattened)
    # w1_ref: (C1, c_)    bf16 (BN scale folded);  b1_ref: (1, c_)  f32
    # w2_ref: (4c_, c2)   bf16 (BN scale folded);  b2_ref: (1, c2)  f32
    # o_ref : (H*W, c2)   output rows
    # yp_ref: (H+6r, W+6r, c_) bf16 halo scratch; p1/p2: shrinking pool scratch (bf16)
    r = k // 2
    c_ = w1_ref.shape[1]
    dt = yp_ref.dtype

    # ---- cv1: 1x1 conv + folded-BN bias + SiLU (MXU, f32 accumulation) ----
    acc = jnp.dot(x_ref[...], w1_ref[...], preferred_element_type=jnp.float32)
    acc = acc + b1_ref[...]
    y = (acc * jax.nn.sigmoid(acc)).astype(dt)                    # (H*W, c_) bf16

    # ---- build the -BIG halo entirely in VMEM (no HBM pad round trip) ----
    neg = float(jnp.finfo(jnp.bfloat16).min)                      # SiLU >= -0.279 > neg
    yp_ref[...] = jnp.full(yp_ref.shape, neg, dt)
    for h in range(H):                                            # row-slab stores, no reshape
        yp_ref[3 * r + h, 3 * r:3 * r + W, :] = y[h * W:(h + 1) * W, :]

    # ---- 3 chained "same" (-inf padded) max pools == shrinking "valid" pools ----
    def pool(src_ref):  # valid k x k / stride-1 max pool: (h, w, C) -> (h-2r, w-2r, C)
        h, w, _ = src_ref.shape
        m = src_ref[:, 0:w - (k - 1), :]
        for s in range(1, k):                                     # max along W
            m = jnp.maximum(m, src_ref[:, s:s + w - (k - 1), :])
        out = m[0:h - (k - 1)]
        for s in range(1, k):                                     # max along H
            out = jnp.maximum(out, m[s:s + h - (k - 1)])
        return out

    p1_ref[...] = pool(yp_ref)                                    # (H+4r, W+4r, c_)
    p2_ref[...] = pool(p1_ref)                                    # (H+2r, W+2r, c_)
    p3 = pool(p2_ref)                                             # (H,    W,    c_)

    # ---- channel concat (stays in VMEM) + cv2 matmul + bias + SiLU ----
    cat = jnp.concatenate(
        [yp_ref[3 * r:3 * r + H, 3 * r:3 * r + W, :],
         p1_ref[2 * r:2 * r + H, 2 * r:2 * r + W, :],
         p2_ref[1 * r:1 * r + H, 1 * r:1 * r + W, :],
         p3], axis=-1).reshape(H * W, 4 * c_)                     # leading-dim collapse only
    z = jnp.dot(cat, w2_ref[...], preferred_element_type=jnp.float32) + b2_ref[...]
    o_ref[...] = (z * jax.nn.sigmoid(z)).astype(o_ref.dtype)


def _fused_vmem_estimate(H, W, C1, c_, c2, k, out_bytes):
    """Rough per-grid-step VMEM working set (explicit buffers + compiler temporaries)."""
    r, M = k // 2, H * W
    sub = lambda n: _round_up(max(n, 1), 16)     # packed-bf16 second-minor tile
    lane = lambda n: _round_up(max(n, 1), 128)
    est = 2 * sub(M) * lane(C1) * 2                               # x blocks (double-buffered)
    est += 2 * sub(M) * lane(c2) * out_bytes                      # out blocks
    est += 2 * (sub(C1) * lane(c_) + sub(4 * c_) * lane(c2)) * 2  # weights (worst case 2 bufs)
    est += 4 * 8 * (lane(c_) + lane(c2)) * 4                      # biases (sublane padded)
    for h, w in ((H + 6 * r, W + 6 * r), (H + 4 * r, W + 4 * r), (H + 2 * r, W + 2 * r)):
        est += h * sub(w) * lane(c_) * 2                          # bf16 pool scratch
    est += M * (lane(c_) + lane(c2)) * 4 + M * 4 * lane(c_) * 2   # f32 accumulators + concat
    est += 2 * (H + 6 * r) * sub(W + 6 * r) * lane(c_) * 2        # slack for slice relayouts
    return est


def _sppf_fused(x_rows, w1, b1, w2, b2, *, H, W, k, out_dtype, budget):
    N, M, C1 = x_rows.shape
    c_ = w1.shape[1]
    c2 = w2.shape[1]
    r = k // 2
    out_bytes = jnp.dtype(out_dtype).itemsize
    est = _fused_vmem_estimate(H, W, C1, c_, c2, k, out_bytes)
    if est > budget:
        # TODO(synk): spatial H-row tiling with a 3r halo would bound the working set.
        raise ValueError(f"SPPF fused working set ~{est >> 20} MiB exceeds VMEM budget "
                         f"{budget >> 20} MiB; spatial tiling not implemented.")
    kern = functools.partial(_sppf_fused_kernel, H=H, W=W, k=k)
    flops = 2 * N * M * (C1 * c_ + 4 * c_ * c2)
    return pl.pallas_call(
        kern,
        out_shape=jax.ShapeDtypeStruct((N, M, c2), out_dtype),
        grid=(N,),
        in_specs=[
            pl.BlockSpec((None, M, C1), lambda n: (n, 0, 0)),     # x rows, one image/step
            pl.BlockSpec((C1, c_), lambda n: (0, 0)),             # w1 (resident)
            pl.BlockSpec((1, c_), lambda n: (0, 0)),              # b1
            pl.BlockSpec((4 * c_, c2), lambda n: (0, 0)),         # w2 (resident)
            pl.BlockSpec((1, c2), lambda n: (0, 0)),              # b2
        ],
        out_specs=pl.BlockSpec((None, M, c2), lambda n: (n, 0, 0)),
        scratch_shapes=[
            pltpu.VMEM((H + 6 * r, W + 6 * r, c_), jnp.bfloat16),
            pltpu.VMEM((H + 4 * r, W + 4 * r, c_), jnp.bfloat16),
            pltpu.VMEM((H + 2 * r, W + 2 * r, c_), jnp.bfloat16),
        ],
        compiler_params=pltpu.CompilerParams(
            dimension_semantics=("parallel",),
            vmem_limit_bytes=budget),
        cost_estimate=pl.CostEstimate(
            flops=flops,
            transcendentals=N * M * (c_ + c2),
            bytes_accessed=(N * M * C1 * 2 + (C1 * c_ + 4 * c_ * c2) * 2
                            + N * M * c2 * out_bytes)),
    )(x_rows, w1, b1, w2, b2)


# ------------------------------- parameter holders ------------------------------ #
class _ConvBN:
    """Parameters of Conv2d(cin, cout, 1, 1, bias=False) + BatchNorm2d(cout) (eval)."""

    def __init__(self, cin, cout, key):
        kw, kg, kb, km, kv = jax.random.split(key, 5)
        bound = 1.0 / (cin ** 0.5)
        self.cin, self.cout = cin, cout
        self.weight = jax.random.uniform(kw, (cout, cin, 1, 1), jnp.float32,
                                         minval=-bound, maxval=bound)
        self.gamma = 1.0 + 0.1 * jax.random.normal(kg, (cout,), jnp.float32)
        self.beta = 0.1 * jax.random.normal(kb, (cout,), jnp.float32)
        self.running_mean = 0.1 * jax.random.normal(km, (cout,), jnp.float32)
        self.running_var = jnp.abs(1.0 + 0.1 * jax.random.normal(kv, (cout,), jnp.float32))
        self.eps = 1e-5

    def folded(self):
        # Eval-mode BN folded into the 1x1 conv: scale -> weight (bf16), shift -> bias (f32).
        scale = self.gamma / jnp.sqrt(self.running_var + self.eps)
        w = self.weight[:, :, 0, 0] * scale[:, None]              # (cout, cin)
        bias = (self.beta - self.running_mean * scale).reshape(1, self.cout)
        return jnp.transpose(w).astype(jnp.bfloat16), bias.astype(jnp.float32)


class SPPFPallas:
    """SPPF: cv1 (1x1 Conv+BN+SiLU) -> 3 chained MaxPool(k, s=1, p=k//2) -> concat -> cv2."""

    def __init__(self, c1, c2, k=5, key=None):
        assert k % 2 == 1, "SPPF pooling kernel size must be odd"
        # TODO(synk): training-mode BatchNorm (batch statistics) not implemented; eval only.
        self.c1, self.c2, self.k = c1, c2, k
        self.c_ = c1 // 2
        assert self.c_ % 128 == 0, (
            "fused kernel assumes lane-aligned hidden channels (c1//2 % 128 == 0)")
        key = jax.random.PRNGKey(0) if key is None else key
        k1, k2 = jax.random.split(key)
        self.cv1 = _ConvBN(c1, self.c_, k1)
        self.cv2 = _ConvBN(self.c_ * 4, c2, k2)
        self._vmem_budget = _vmem_budget_bytes()

    @functools.partial(jax.jit, static_argnums=0)
    def __call__(self, x):
        # x: NCHW f32 (PyTorch convention at the public boundary).
        N, C1, H, W = x.shape
        w1, b1 = self.cv1.folded()
        w2, b2 = self.cv2.folded()
        # NCHW -> per-image bf16 rows [H*W, C1] for the MXU.
        x_rows = jnp.transpose(x, (0, 2, 3, 1)).reshape(N, H * W, C1).astype(jnp.bfloat16)
        # Entire SPPF in one pallas_call. Keep f32 at the public boundary; pass
        # out_dtype=jnp.bfloat16 here if the downstream consumer accepts bf16.
        z = _sppf_fused(x_rows, w1, b1, w2, b2, H=H, W=W, k=self.k,
                        out_dtype=jnp.float32, budget=self._vmem_budget)
        return jnp.transpose(z.reshape(N, H, W, self.c2), (0, 3, 1, 2))


# ------------------------------- XLA reference ---------------------------------- #
def _sppf_reference(sppf, x):
    """Pure-JAX reference with the same bf16 operand quantization as the kernel."""
    N, C1, H, W = x.shape
    c_, c2, k = sppf.c_, sppf.cv2.cout, sppf.k
    w1, b1 = sppf.cv1.folded()
    w2, b2 = sppf.cv2.folded()

    x2d = jnp.transpose(x, (0, 2, 3, 1)).reshape(-1, C1).astype(jnp.bfloat16)
    y = jnp.dot(x2d, w1, preferred_element_type=jnp.float32) + b1
    y = (y * jax.nn.sigmoid(y)).astype(jnp.bfloat16)
    y = y.reshape(N, H, W, c_).astype(jnp.float32)

    pad = ((0, 0), (k // 2, k // 2), (k // 2, k // 2), (0, 0))
    mp = lambda t: jax.lax.reduce_window(t, -jnp.inf, jax.lax.max,
                                         (1, k, k, 1), (1, 1, 1, 1), pad)
    p1 = mp(y); p2 = mp(p1); p3 = mp(p2)
    cat = jnp.concatenate([y, p1, p2, p3], axis=-1).astype(jnp.bfloat16)

    z = jnp.dot(cat.reshape(-1, 4 * c_), w2, preferred_element_type=jnp.float32) + b2
    z = z * jax.nn.sigmoid(z)
    return jnp.transpose(z.reshape(N, H, W, c2), (0, 3, 1, 2))


# ------------------------------------ main --------------------------------------- #
if __name__ == "__main__":
    key = jax.random.PRNGKey(0)
    kx, kp = jax.random.split(key)

    N, C1, H, W = 2, 256, 16, 16        # SPPF-style shape: c_ = 128 -> lane-dense
    C2 = 256
    x = jax.random.normal(kx, (N, C1, H, W), jnp.float32)

    sppf = SPPFPallas(C1, C2, k=5, key=kp)
    y = jax.block_until_ready(sppf(x))

    ref = jax.block_until_ready(_sppf_reference(sppf, x))
    assert y.shape == (N, C2, H, W), y.shape
    err = float(jnp.max(jnp.abs(y - ref)))
    assert err < 2e-2, err

    print("KERNEL_OK")
</pallas_src>

<mosaic_0001>
module attributes {stable_mosaic.version = 11 : i64} {
  func.func @_sppf_fused_kernel(%arg0: i32, %arg1: memref<1x256x256xbf16, #tpu.memory_space<vmem>>, %arg2: memref<256x128xbf16, #tpu.memory_space<vmem>>, %arg3: memref<1x128xf32, #tpu.memory_space<vmem>>, %arg4: memref<512x256xbf16, #tpu.memory_space<vmem>>, %arg5: memref<1x256xf32, #tpu.memory_space<vmem>>, %arg6: memref<1x256x256xf32, #tpu.memory_space<vmem>>, %arg7: memref<28x28x128xbf16, #tpu.memory_space<vmem>>, %arg8: memref<24x24x128xbf16, #tpu.memory_space<vmem>>, %arg9: memref<20x20x128xbf16, #tpu.memory_space<vmem>>) attributes {dimension_semantics = [#tpu.dimension_semantics<parallel>], iteration_bounds = array<i64: 2>, scalar_prefetch = 0 : i64, scratch_operands = 3 : i64, tpu.core_type = #tpu.core_type<tc>, window_params = [{transform_indices = @transform_0, window_bounds = array<i64: 1, 256, 256>}, {pipeline_mode = #tpu.pipeline_mode<synchronous>, transform_indices = @transform_1, window_bounds = array<i64: 256, 128>}, {pipeline_mode = #tpu.pipeline_mode<synchronous>, transform_indices = @transform_2, window_bounds = array<i64: 1, 128>}, {pipeline_mode = #tpu.pipeline_mode<synchronous>, transform_indices = @transform_3, window_bounds = array<i64: 512, 256>}, {pipeline_mode = #tpu.pipeline_mode<synchronous>, transform_indices = @transform_4, window_bounds = array<i64: 1, 256>}, {transform_indices = @transform_5, window_bounds = array<i64: 1, 256, 256>}]} {
    %c0 = arith.constant 0 : index
    %c0_0 = arith.constant 0 : index
    %c0_1 = arith.constant 0 : index
    %0 = vector.load %arg1[%c0, %c0_0, %c0_1] : memref<1x256x256xbf16, #tpu.memory_space<vmem>>, vector<1x256x256xbf16>
    %1 = vector.shape_cast %0 : vector<1x256x256xbf16> to vector<256x256xbf16>
    %c0_2 = arith.constant 0 : index
    %c0_3 = arith.constant 0 : index
    %2 = vector.load %arg2[%c0_2, %c0_3] : memref<256x128xbf16, #tpu.memory_space<vmem>>, vector<256x128xbf16>
    %cst = arith.constant dense<0.000000e+00> : vector<256x128xf32>
    %3 = tpu.matmul %1, %2, %cst {dimension_numbers = #tpu.dot_dimension_numbers<[1], [0], [0], [1], [0, 0, 1, 1], [], []>} : vector<256x256xbf16>, vector<256x128xbf16>, vector<256x128xf32> -> vector<256x128xf32>
    %c0_4 = arith.constant 0 : index
    %c0_5 = arith.constant 0 : index
    %4 = vector.load %arg3[%c0_4, %c0_5] : memref<1x128xf32, #tpu.memory_space<vmem>>, vector<1x128xf32>
    %5 = vector.broadcast %4 : vector<1x128xf32> to vector<256x128xf32>
    %6 = arith.addf %3, %5 : vector<256x128xf32>
    %7 = arith.negf %6 : vector<256x128xf32>
    %8 = math.exp %7 : vector<256x128xf32>
    %cst_6 = arith.constant 1.000000e+00 : f32
    %9 = vector.broadcast %cst_6 : f32 to vector<256x128xf32>
    %10 = arith.addf %9, %8 : vector<256x128xf32>
    %11 = arith.divf %9, %10 : vector<256x128xf32>
    %12 = arith.mulf %6, %11 : vector<256x128xf32>
    %13 = arith.truncf %12 : vector<256x128xf32> to vector<256x128xbf16>
    %cst_7 = arith.constant -3.389530e+38 : bf16
    %14 = vector.broadcast %cst_7 : bf16 to vector<28x28x128xbf16>
    %c0_8 = arith.constant 0 : index
    %c0_9 = arith.constant 0 : index
    %c0_10 = arith.constant 0 : index
    %15 = vector.load %arg7[%c0_8, %c0_9, %c0_10] : memref<28x28x128xbf16, #tpu.memory_space<vmem>>, vector<28x28x128xbf16>
    tpu.vector_store %arg7[%c0_8, %c0_9, %c0_10], %14 {strides = array<i32>} : memref<28x28x128xbf16, #tpu.memory_space<vmem>>, vector<28x28x128xbf16>,
    %16 = vector.extract_strided_slice %13 {offsets = [0, 0], sizes = [16, 128], strides = [1, 1]} : vector<256x128xbf16> to vector<16x128xbf16>
    %c6 = arith.constant 6 : index
    %c6_11 = arith.constant 6 : index
    %c0_12 = arith.constant 0 : index
    %17 = vector.load %arg7[%c6, %c6_11, %c0_12] : memref<28x28x128xbf16, #tpu.memory_space<vmem>>, vector<1x16x128xbf16>
    %18 = vector.shape_cast %17 : vector<1x16x128xbf16> to vector<16x128xbf16>
    %19 = vector.shape_cast %16 : vector<16x128xbf16> to vector<1x16x128xbf16>
    tpu.vector_store %arg7[%c6, %c6_11, %c0_12], %19 {strides = array<i32>} : memref<28x28x128xbf16, #tpu.memory_space<vmem>>, vector<1x16x128xbf16>,
    %20 = vector.extract_strided_slice %13 {offsets = [16, 0], sizes = [16, 128], strides = [1, 1]} : vector<256x128xbf16> to vector<16x128xbf16>
    %c7 = arith.constant 7 : index
    %c6_13 = arith.constant 6 : index
    %c0_14 = arith.constant 0 : index
    %21 = vector.load %arg7[%c7, %c6_13, %c0_14] : memref<28x28x128xbf16, #tpu.memory_space<vmem>>, vector<1x16x128xbf16>
    %22 = vector.shape_cast %21 : vector<1x16x128xbf16> to vector<16x128xbf16>
    %23 = vector.shape_cast %20 : vector<16x128xbf16> to vector<1x16x128xbf16>
    tpu.vector_store %arg7[%c7, %c6_13, %c0_14], %23 {strides = array<i32>} : memref<28x28x128xbf16, #tpu.memory_space<vmem>>, vector<1x16x128xbf16>,
    %24 = vector.extract_strided_slice %13 {offsets = [32, 0], sizes = [16, 128], strides = [1, 1]} : vector<256x128xbf16> to vector<16x128xbf16>
    %c8 = arith.constant 8 : index
    %c6_15 = arith.constant 6 : index
    %c0_16 = arith.constant 0 : index
    %25 = vector.load %arg7[%c8, %c6_15, %c0_16] : memref<28x28x128xbf16, #tpu.memory_space<vmem>>, vector<1x16x128xbf16>
    %26 = vector.shape_cast %25 : vector<1x16x128xbf16> to vector<16x128xbf16>
    %27 = vector.shape_cast %24 : vector<16x128xbf16> to vector<1x16x128xbf16>
    tpu.vector_store %arg7[%c8, %c6_15, %c0_16], %27 {strides = array<i32>} : memref<28x28x128xbf16, #tpu.memory_space<vmem>>, vector<1x16x128xbf16>,
    %28 = vector.extract_strided_slice %13 {offsets = [48, 0], sizes = [16, 128], strides = [1, 1]} : vector<256x128xbf16> to vector<16x128xbf16>
    %c9 = arith.constant 9 : index
    %c6_17 = arith.constant 6 : index
    %c0_18 = arith.constant 0 : index
    %29 = vector.load %arg7[%c9, %c6_17, %c0_18] : memref<28x28x128xbf16, #tpu.memory_space<vmem>>, vector<1x16x128xbf16>
    %30 = vector.shape_cast %29 : vector<1x16x128xbf16> to vector<16x128xbf16>
    %31 = vector.shape_cast %28 : vector<16x128xbf16> to vector<1x16x128xbf16>
    tpu.vector_store %arg7[%c9, %c6_17, %c0_18], %31 {strides = array<i32>} : memref<28x28x128xbf16, #tpu.memory_space<vmem>>, vector<1x16x128xbf16>,
    %32 = vector.extract_strided_slice %13 {offsets = [64, 0], sizes = [16, 128], strides = [1, 1]} : vector<256x128xbf16> to vector<16x128xbf16>
    %c10 = arith.constant 10 : index
    %c6_19 = arith.constant 6 : index
    %c0_20 = arith.constant 0 : index
    %33 = vector.load %arg7[%c10, %c6_19, %c0_20] : memref<28x28x128xbf16, #tpu.memory_space<vmem>>, vector<1x16x128xbf16>
    %34 = vector.shape_cast %33 : vector<1x16x128xbf16> to vector<16x128xbf16>
    %35 = vector.shape_cast %32 : vector<16x128xbf16> to vector<1x16x128xbf16>
    tpu.vector_store %arg7[%c10, %c6_19, %c0_20], %35 {strides = array<i32>} : memref<28x28x128xbf16, #tpu.memory_space<vmem>>, vector<1x16x128xbf16>,
    %36 = vector.extract_strided_slice %13 {offsets = [80, 0], sizes = [16, 128], strides = [1, 1]} : vector<256x128xbf16> to vector<16x128xbf16>
    %c11 = arith.constant 11 : index
    %c6_21 = arith.constant 6 : index
    %c0_22 = arith.constant 0 : index
    %37 = vector.load %arg7[%c11, %c6_21, %c0_22] : memref<28x28x128xbf16, #tpu.memory_space<vmem>>, vector<1x16x128xbf16>
    %38 = vector.shape_cast %37 : vector<1x16x128xbf16> to vector<16x128xbf16>
    %39 = vector.shape_cast %36 : vector<16x128xbf16> to vector<1x16x128xbf16>
    tpu.vector_store %arg7[%c11, %c6_21, %c0_22], %39 {strides = array<i32>} : memref<28x28x128xbf16, #tpu.memory_space<vmem>>, vector<1x16x128xbf16>,
    %40 = vector.extract_strided_slice %13 {offsets = [96, 0], sizes = [16, 128], strides = [1, 1]} : vector<256x128xbf16> to vector<16x128xbf16>
    %c12 = arith.constant 12 : index
    %c6_23 = arith.constant 6 : index
    %c0_24 = arith.constant 0 : index
    %41 = vector.load %arg7[%c12, %c6_23, %c0_24] : memref<28x28x128xbf16, #tpu.memory_space<vmem>>, vector<1x16x128xbf16>
    %42 = vector.shape_cast %41 : vector<1x16x128xbf16> to vector<16x128xbf16>
    %43 = vector.shape_cast %40 : vector<16x128xbf16> to vector<1x16x128xbf16>
    tpu.vector_store %arg7[%c12, %c6_23, %c0_24], %43 {strides = array<i32>} : memref<28x28x128xbf16, #tpu.memory_space<vmem>>, vector<1x16x128xbf16>,
    %44 = vector.extract_strided_slice %13 {offsets = [112, 0], sizes = [16, 128], strides = [1, 1]} : vector<256x128xbf16> to vector<16x128xbf16>
    %c13 = arith.constant 13 : index
    %c6_25 = arith.constant 6 : index
    %c0_26 = arith.constant 0 : index
    %45 = vector.load %arg7[%c13, %c6_25, %c0_26] : memref<28x28x128xbf16, #tpu.memory_space<vmem>>, vector<1x16x128xbf16>
    %46 = vector.shape_cast %45 : vector<1x16x128xbf16> to vector<16x128xbf16>
    %47 = vector.shape_cast %44 : vector<16x128xbf16> to vector<1x16x128xbf16>
    tpu.vector_store %arg7[%c13, %c6_25, %c0_26], %47 {strides = array<i32>} : memref<28x28x128xbf16, #tpu.memory_space<vmem>>, vector<1x16x128xbf16>,
    %48 = vector.extract_strided_slice %13 {offsets = [128, 0], sizes = [16, 128], strides = [1, 1]} : vector<256x128xbf16> to vector<16x128xbf16>
    %c14 = arith.constant 14 : index
    %c6_27 = arith.constant 6 : index
    %c0_28 = arith.constant 0 : index
    %49 = vector.load %arg7[%c14, %c6_27, %c0_28] : memref<28x28x128xbf16, #tpu.memory_space<vmem>>, vector<1x16x128xbf16>
    %50 = vector.shape_cast %49 : vector<1x16x128xbf16> to vector<16x128xbf16>
    %51 = vector.shape_cast %48 : vector<16x128xbf16> to vector<1x16x128xbf16>
    tpu.vector_store %arg7[%c14, %c6_27, %c0_28], %51 {strides = array<i32>} : memref<28x28x128xbf16, #tpu.memory_space<vmem>>, vector<1x16x128xbf16>,
    %52 = vector.extract_strided_slice %13 {offsets = [144, 0], sizes = [16, 128], strides = [1, 1]} : vector<256x128xbf16> to vector<16x128xbf16>
    %c15 = arith.constant 15 : index
    %c6_29 = arith.constant 6 : index
    %c0_30 = arith.constant 0 : index
    %53 = vector.load %arg7[%c15, %c6_29, %c0_30] : memref<28x28x128xbf16, #tpu.memory_space<vmem>>, vector<1x16x128xbf16>
    %54 = vector.shape_cast %53 : vector<1x16x128xbf16> to vector<16x128xbf16>
    %55 = vector.shape_cast %52 : vector<16x128xbf16> to vector<1x16x128xbf16>
    tpu.vector_store %arg7[%c15, %c6_29, %c0_30], %55 {strides = array<i32>} : memref<28x28x128xbf16, #tpu.memory_space<vmem>>, vector<1x16x128xbf16>,
    %56 = vector.extract_strided_slice %13 {offsets = [160, 0], sizes = [16, 128], strides = [1, 1]} : vector<256x128xbf16> to vector<16x128xbf16>
    %c16 = arith.constant 16 : index
    %c6_31 = arith.constant 6 : index
    %c0_32 = arith.constant 0 : index
    %57 = vector.load %arg7[%c16, %c6_31, %c0_32] : memref<28x28x128xbf16, #tpu.memory_space<vmem>>, vector<1x16x128xbf16>
    %58 = vector.shape_cast %57 : vector<1x16x128xbf16> to vector<16x128xbf16>
    %59 = vector.shape_cast %56 : vector<16x128xbf16> to vector<1x16x128xbf16>
    tpu.vector_store %arg7[%c16, %c6_31, %c0_32], %59 {strides = array<i32>} : memref<28x28x128xbf16, #tpu.memory_space<vmem>>, vector<1x16x128xbf16>,
    %60 = vector.extract_strided_slice %13 {offsets = [176, 0], sizes = [16, 128], strides = [1, 1]} : vector<256x128xbf16> to vector<16x128xbf16>
    %c17 = arith.constant 17 : index
    %c6_33 = arith.constant 6 : index
    %c0_34 = arith.constant 0 : index
    %61 = vector.load %arg7[%c17, %c6_33, %c0_34] : memref<28x28x128xbf16, #tpu.memory_space<vmem>>, vector<1x16x128xbf16>
    %62 = vector.shape_cast %61 : vector<1x16x128xbf16> to vector<16x128xbf16>
    %63 = vector.shape_cast %60 : vector<16x128xbf16> to vector<1x16x128xbf16>
    tpu.vector_store %arg7[%c17, %c6_33, %c0_34], %63 {strides = array<i32>} : memref<28x28x128xbf16, #tpu.memory_space<vmem>>, vector<1x16x128xbf16>,
    %64 = vector.extract_strided_slice %13 {offsets = [192, 0], sizes = [16, 128], strides = [1, 1]} : vector<256x128xbf16> to vector<16x128xbf16>
    %c18 = arith.constant 18 : index
    %c6_35 = arith.constant 6 : index
    %c0_36 = arith.constant 0 : index
    %65 = vector.load %arg7[%c18, %c6_35, %c0_36] : memref<28x28x128xbf16, #tpu.memory_space<vmem>>, vector<1x16x128xbf16>
    %66 = vector.shape_cast %65 : vector<1x16x128xbf16> to vector<16x128xbf16>
    %67 = vector.shape_cast %64 : vector<16x128xbf16> to vector<1x16x128xbf16>
    tpu.vector_store %arg7[%c18, %c6_35, %c0_36], %67 {strides = array<i32>} : memref<28x28x128xbf16, #tpu.memory_space<vmem>>, vector<1x16x128xbf16>,
    %68 = vector.extract_strided_slice %13 {offsets = [208, 0], sizes = [16, 128], strides = [1, 1]} : vector<256x128xbf16> to vector<16x128xbf16>
    %c19 = arith.constant 19 : index
    %c6_37 = arith.constant 6 : index
    %c0_38 = arith.constant 0 : index
    %69 = vector.load %arg7[%c19, %c6_37, %c0_38] : memref<28x28x128xbf16, #tpu.memory_space<vmem>>, vector<1x16x128xbf16>
    %70 = vector.shape_cast %69 : vector<1x16x128xbf16> to vector<16x128xbf16>
    %71 = vector.shape_cast %68 : vector<16x128xbf16> to vector<1x16x128xbf16>
    tpu.vector_store %arg7[%c19, %c6_37, %c0_38], %71 {strides = array<i32>} : memref<28x28x128xbf16, #tpu.memory_space<vmem>>, vector<1x16x128xbf16>,
    %72 = vector.extract_strided_slice %13 {offsets = [224, 0], sizes = [16, 128], strides = [1, 1]} : vector<256x128xbf16> to vector<16x128xbf16>
    %c20 = arith.constant 20 : index
    %c6_39 = arith.constant 6 : index
    %c0_40 = arith.constant 0 : index
    %73 = vector.load %arg7[%c20, %c6_39, %c0_40] : memref<28x28x128xbf16, #tpu.memory_space<vmem>>, vector<1x16x128xbf16>
    %74 = vector.shape_cast %73 : vector<1x16x128xbf16> to vector<16x128xbf16>
    %75 = vector.shape_cast %72 : vector<16x128xbf16> to vector<1x16x128xbf16>
    tpu.vector_store %arg7[%c20, %c6_39, %c0_40], %75 {strides = array<i32>} : memref<28x28x128xbf16, #tpu.memory_space<vmem>>, vector<1x16x128xbf16>,
    %76 = vector.extract_strided_slice %13 {offsets = [240, 0], sizes = [16, 128], strides = [1, 1]} : vector<256x128xbf16> to vector<16x128xbf16>
    %c21 = arith.constant 21 : index
    %c6_41 = arith.constant 6 : index
    %c0_42 = arith.constant 0 : index
    %77 = vector.load %arg7[%c21, %c6_41, %c0_42] : memref<28x28x128xbf16, #tpu.memory_space<vmem>>, vector<1x16x128xbf16>
    %78 = vector.shape_cast %77 : vector<1x16x128xbf16> to vector<16x128xbf16>
    %79 = vector.shape_cast %76 : vector<16x128xbf16> to vector<1x16x128xbf16>
    tpu.vector_store %arg7[%c21, %c6_41, %c0_42], %79 {strides = array<i32>} : memref<28x28x128xbf16, #tpu.memory_space<vmem>>, vector<1x16x128xbf16>,
    %c0_43 = arith.constant 0 : index
    %c0_44 = arith.constant 0 : index
    %c0_45 = arith.constant 0 : index
    %80 = vector.load %arg7[%c0_43, %c0_44, %c0_45] : memref<28x28x128xbf16, #tpu.memory_space<vmem>>, vector<28x24x128xbf16>
    %c0_46 = arith.constant 0 : index
    %c1 = arith.constant 1 : index
    %c0_47 = arith.constant 0 : index
    %81 = vector.load %arg7[%c0_46, %c1, %c0_47] : memref<28x28x128xbf16, #tpu.memory_space<vmem>>, vector<28x24x128xbf16>
    %82 = arith.maximumf %80, %81 : vector<28x24x128xbf16>
    %c0_48 = arith.constant 0 : index
    %c2 = arith.constant 2 : index
    %c0_49 = arith.constant 0 : index
    %83 = vector.load %arg7[%c0_48, %c2, %c0_49] : memref<28x28x128xbf16, #tpu.memory_space<vmem>>, vector<28x24x128xbf16>
    %84 = arith.maximumf %82, %83 : vector<28x24x128xbf16>
    %c0_50 = arith.constant 0 : index
    %c3 = arith.constant 3 : index
    %c0_51 = arith.constant 0 : index
    %85 = vector.load %arg7[%c0_50, %c3, %c0_51] : memref<28x28x128xbf16, #tpu.memory_space<vmem>>, vector<28x24x128xbf16>
    %86 = arith.maximumf %84, %85 : vector<28x24x128xbf16>
    %c0_52 = arith.constant 0 : index
    %c4 = arith.constant 4 : index
    %c0_53 = arith.constant 0 : index
    %87 = vector.load %arg7[%c0_52, %c4, %c0_53] : memref<28x28x128xbf16, #tpu.memory_space<vmem>>, vector<28x24x128xbf16>
    %88 = arith.maximumf %86, %87 : vector<28x24x128xbf16>
    %89 = vector.extract_strided_slice %88 {offsets = [0, 0, 0], sizes = [24, 24, 128], strides = [1, 1, 1]} : vector<28x24x128xbf16> to vector<24x24x128xbf16>
    %90 = vector.extract_strided_slice %88 {offsets = [1, 0, 0], sizes = [24, 24, 128], strides = [1, 1, 1]} : vector<28x24x128xbf16> to vector<24x24x128xbf16>
    %91 = arith.maximumf %89, %90 : vector<24x24x128xbf16>
    %92 = vector.extract_strided_slice %88 {offsets = [2, 0, 0], sizes = [24, 24, 128], strides = [1, 1, 1]} : vector<28x24x128xbf16> to vector<24x24x128xbf16>
    %93 = arith.maximumf %91, %92 : vector<24x24x128xbf16>
    %94 = vector.extract_strided_slice %88 {offsets = [3, 0, 0], sizes = [24, 24, 128], strides = [1, 1, 1]} : vector<28x24x128xbf16> to vector<24x24x128xbf16>
    %95 = arith.maximumf %93, %94 : vector<24x24x128xbf16>
    %96 = vector.extract_strided_slice %88 {offsets = [4, 0, 0], sizes = [24, 24, 128], strides = [1, 1, 1]} : vector<28x24x128xbf16> to vector<24x24x128xbf16>
    %97 = arith.maximumf %95, %96 : vector<24x24x128xbf16>
    %c0_54 = arith.constant 0 : index
    %c0_55 = arith.constant 0 : index
    %c0_56 = arith.constant 0 : index
    %98 = vector.load %arg8[%c0_54, %c0_55, %c0_56] : memref<24x24x128xbf16, #tpu.memory_space<vmem>>, vector<24x24x128xbf16>
    tpu.vector_store %arg8[%c0_54, %c0_55, %c0_56], %97 {strides = array<i32>} : memref<24x24x128xbf16, #tpu.memory_space<vmem>>, vector<24x24x128xbf16>,
    %c0_57 = arith.constant 0 : index
    %c0_58 = arith.constant 0 : index
    %c0_59 = arith.constant 0 : index
    %99 = vector.load %arg8[%c0_57, %c0_58, %c0_59] : memref<24x24x128xbf16, #tpu.memory_space<vmem>>, vector<24x20x128xbf16>
    %c0_60 = arith.constant 0 : index
    %c1_61 = arith.constant 1 : index
    %c0_62 = arith.constant 0 : index
    %100 = vector.load %arg8[%c0_60, %c1_61, %c0_62] : memref<24x24x128xbf16, #tpu.memory_space<vmem>>, vector<24x20x128xbf16>
    %101 = arith.maximumf %99, %100 : vector<24x20x128xbf16>
    %c0_63 = arith.constant 0 : index
    %c2_64 = arith.constant 2 : index
    %c0_65 = arith.constant 0 : index
    %102 = vector.load %arg8[%c0_63, %c2_64, %c0_65] : memref<24x24x128xbf16, #tpu.memory_space<vmem>>, vector<24x20x128xbf16>
    %103 = arith.maximumf %101, %102 : vector<24x20x128xbf16>
    %c0_66 = arith.constant 0 : index
    %c3_67 = arith.constant 3 : index
    %c0_68 = arith.constant 0 : index
    %104 = vector.load %arg8[%c0_66, %c3_67, %c0_68] : memref<24x24x128xbf16, #tpu.memory_space<vmem>>, vector<24x20x128xbf16>
    %105 = arith.maximumf %103, %104 : vector<24x20x128xbf16>
    %c0_69 = arith.constant 0 : index
    %c4_70 = arith.constant 4 : index
    %c0_71 = arith.constant 0 : index
    %106 = vector.load %arg8[%c0_69, %c4_70, %c0_71] : memref<24x24x128xbf16, #tpu.memory_space<vmem>>, vector<24x20x128xbf16>
    %107 = arith.maximumf %105, %106 : vector<24x20x128xbf16>
    %108 = vector.extract_strided_slice %107 {offsets = [0, 0, 0], sizes = [20, 20, 128], strides = [1, 1, 1]} : vector<24x20x128xbf16> to vector<20x20x128xbf16>
    %109 = vector.extract_strided_slice %107 {offsets = [1, 0, 0], sizes = [20, 20, 128], strides = [1, 1, 1]} : vector<24x20x128xbf16> to vector<20x20x128xbf16>
    %110 = arith.maximumf %108, %109 : vector<20x20x128xbf16>
    %111 = vector.extract_strided_slice %107 {offsets = [2, 0, 0], sizes = [20, 20, 128], strides = [1, 1, 1]} : vector<24x20x128xbf16> to vector<20x20x128xbf16>
    %112 = arith.maximumf %110, %111 : vector<20x20x128xbf16>
    %113 = vector.extract_strided_slice %107 {offsets = [3, 0, 0], sizes = [20, 20, 128], strides = [1, 1, 1]} : vector<24x20x128xbf16> to vector<20x20x128xbf16>
    %114 = arith.maximumf %112, %113 : vector<20x20x128xbf16>
    %115 = vector.extract_strided_slice %107 {offsets = [4, 0, 0], sizes = [20, 20, 128], strides = [1, 1, 1]} : vector<24x20x128xbf16> to vector<20x20x128xbf16>
    %116 = arith.maximumf %114, %115 : vector<20x20x128xbf16>
    %c0_72 = arith.constant 0 : index
    %c0_73 = arith.constant 0 : index
    %c0_74 = arith.constant 0 : index
    %117 = vector.load %arg9[%c0_72, %c0_73, %c0_74] : memref<20x20x128xbf16, #tpu.memory_space<vmem>>, vector<20x20x128xbf16>
    tpu.vector_store %arg9[%c0_72, %c0_73, %c0_74], %116 {strides = array<i32>} : memref<20x20x128xbf16, #tpu.memory_space<vmem>>, vector<20x20x128xbf16>,
    %c0_75 = arith.constant 0 : index
    %c0_76 = arith.constant 0 : index
    %c0_77 = arith.constant 0 : index
    %118 = vector.load %arg9[%c0_75, %c0_76, %c0_77] : memref<20x20x128xbf16, #tpu.memory_space<vmem>>, vector<20x16x128xbf16>
    %c0_78 = arith.constant 0 : index
    %c1_79 = arith.constant 1 : index
    %c0_80 = arith.constant 0 : index
    %119 = vector.load %arg9[%c0_78, %c1_79, %c0_80] : memref<20x20x128xbf16, #tpu.memory_space<vmem>>, vector<20x16x128xbf16>
    %120 = arith.maximumf %118, %119 : vector<20x16x128xbf16>
    %c0_81 = arith.constant 0 : index
    %c2_82 = arith.constant 2 : index
    %c0_83 = arith.constant 0 : index
    %121 = vector.load %arg9[%c0_81, %c2_82, %c0_83] : memref<20x20x128xbf16, #tpu.memory_space<vmem>>, vector<20x16x128xbf16>
    %122 = arith.maximumf %120, %121 : vector<20x16x128xbf16>
    %c0_84 = arith.constant 0 : index
    %c3_85 = arith.constant 3 : index
    %c0_86 = arith.constant 0 : index
    %123 = vector.load %arg9[%c0_84, %c3_85, %c0_86] : memref<20x20x128xbf16, #tpu.memory_space<vmem>>, vector<20x16x128xbf16>
    %124 = arith.maximumf %122, %123 : vector<20x16x128xbf16>
    %c0_87 = arith.constant 0 : index
    %c4_88 = arith.constant 4 : index
    %c0_89 = arith.constant 0 : index
    %125 = vector.load %arg9[%c0_87, %c4_88, %c0_89] : memref<20x20x128xbf16, #tpu.memory_space<vmem>>, vector<20x16x128xbf16>
    %126 = arith.maximumf %124, %125 : vector<20x16x128xbf16>
    %127 = vector.extract_strided_slice %126 {offsets = [0, 0, 0], sizes = [16, 16, 128], strides = [1, 1, 1]} : vector<20x16x128xbf16> to vector<16x16x128xbf16>
    %128 = vector.extract_strided_slice %126 {offsets = [1, 0, 0], sizes = [16, 16, 128], strides = [1, 1, 1]} : vector<20x16x128xbf16> to vector<16x16x128xbf16>
    %129 = arith.maximumf %127, %128 : vector<16x16x128xbf16>
    %130 = vector.extract_strided_slice %126 {offsets = [2, 0, 0], sizes = [16, 16, 128], strides = [1, 1, 1]} : vector<20x16x128xbf16> to vector<16x16x128xbf16>
    %131 = arith.maximumf %129, %130 : vector<16x16x128xbf16>
    %132 = vector.extract_strided_slice %126 {offsets = [3, 0, 0], sizes = [16, 16, 128], strides = [1, 1, 1]} : vector<20x16x128xbf16> to vector<16x16x128xbf16>
    %133 = arith.maximumf %131, %132 : vector<16x16x128xbf16>
    %134 = vector.extract_strided_slice %126 {offsets = [4, 0, 0], sizes = [16, 16, 128], strides = [1, 1, 1]} : vector<20x16x128xbf16> to vector<16x16x128xbf16>
    %135 = arith.maximumf %133, %134 : vector<16x16x128xbf16>
    %c6_90 = arith.constant 6 : index
    %c6_91 = arith.constant 6 : index
    %c0_92 = arith.constant 0 : index
    %136 = vector.load %arg7[%c6_90, %c6_91, %c0_92] : memref<28x28x128xbf16, #tpu.memory_space<vmem>>, vector<16x16x128xbf16>
    %c4_93 = arith.constant 4 : index
    %c4_94 = arith.constant 4 : index
    %c0_95 = arith.constant 0 : index
    %137 = vector.load %arg8[%c4_93, %c4_94, %c0_95] : memref<24x24x128xbf16, #tpu.memory_space<vmem>>, vector<16x16x128xbf16>
    %c2_96 = arith.constant 2 : index
    %c2_97 = arith.constant 2 : index
    %c0_98 = arith.constant 0 : index
    %138 = vector.load %arg9[%c2_96, %c2_97, %c0_98] : memref<20x20x128xbf16, #tpu.memory_space<vmem>>, vector<16x16x128xbf16>
    %139 = tpu.concatenate %136, %137, %138, %135 in 2 : vector<16x16x128xbf16>, vector<16x16x128xbf16>, vector<16x16x128xbf16>, vector<16x16x128xbf16> -> vector<16x16x512xbf16>
    %140 = vector.shape_cast %139 : vector<16x16x512xbf16> to vector<256x512xbf16>
    %c0_99 = arith.constant 0 : index
    %c0_100 = arith.constant 0 : index
    %141 = vector.load %arg4[%c0_99, %c0_100] : memref<512x256xbf16, #tpu.memory_space<vmem>>, vector<512x256xbf16>
    %cst_101 = arith.constant dense<0.000000e+00> : vector<256x256xf32>
    %142 = tpu.matmul %140, %141, %cst_101 {dimension_numbers = #tpu.dot_dimension_numbers<[1], [0], [0], [1], [0, 0, 1, 1], [], []>} : vector<256x512xbf16>, vector<512x256xbf16>, vector<256x256xf32> -> vector<256x256xf32>
    %c0_102 = arith.constant 0 : index
    %c0_103 = arith.constant 0 : index
    %143 = vector.load %arg5[%c0_102, %c0_103] : memref<1x256xf32, #tpu.memory_space<vmem>>, vector<1x256xf32>
    %144 = vector.broadcast %143 : vector<1x256xf32> to vector<256x256xf32>
    %145 = arith.addf %142, %144 : vector<256x256xf32>
    %146 = arith.negf %145 : vector<256x256xf32>
    %147 = math.exp %146 : vector<256x256xf32>
    %cst_104 = arith.constant 1.000000e+00 : f32
    %148 = vector.broadcast %cst_104 : f32 to vector<256x256xf32>
    %149 = arith.addf %148, %147 : vector<256x256xf32>
    %150 = arith.divf %148, %149 : vector<256x256xf32>
    %151 = arith.mulf %145, %150 : vector<256x256xf32>
    %c0_105 = arith.constant 0 : index
    %c0_106 = arith.constant 0 : index
    %c0_107 = arith.constant 0 : index
    %152 = vector.load %arg6[%c0_105, %c0_106, %c0_107] : memref<1x256x256xf32, #tpu.memory_space<vmem>>, vector<1x256x256xf32>
    %153 = vector.shape_cast %152 : vector<1x256x256xf32> to vector<256x256xf32>
    %154 = vector.shape_cast %151 : vector<256x256xf32> to vector<1x256x256xf32>
    tpu.vector_store %arg6[%c0_105, %c0_106, %c0_107], %154 {strides = array<i32>} : memref<1x256x256xf32, #tpu.memory_space<vmem>>, vector<1x256x256xf32>,
    return
  }
  func.func @transform_0(%arg0: i32) -> (i32, i32, i32) {
    %c0_i32 = arith.constant 0 : i32
    %c0_i32_0 = arith.constant 0 : i32
    %c0_i32_1 = arith.constant 0 : i32
    return %arg0, %c0_i32, %c0_i32_0 : i32, i32, i32
  }
  func.func @transform_1(%arg0: i32) -> (i32, i32) {
    %c0_i32 = arith.constant 0 : i32
    %c0_i32_0 = arith.constant 0 : i32
    %c0_i32_1 = arith.constant 0 : i32
    return %c0_i32, %c0_i32_0 : i32, i32
  }
  func.func @transform_2(%arg0: i32) -> (i32, i32) {
    %c0_i32 = arith.constant 0 : i32
    %c0_i32_0 = arith.constant 0 : i32
    %c0_i32_1 = arith.constant 0 : i32
    return %c0_i32, %c0_i32_0 : i32, i32
  }
  func.func @transform_3(%arg0: i32) -> (i32, i32) {
    %c0_i32 = arith.constant 0 : i32
    %c0_i32_0 = arith.constant 0 : i32
    %c0_i32_1 = arith.constant 0 : i32
    return %c0_i32, %c0_i32_0 : i32, i32
  }
  func.func @transform_4(%arg0: i32) -> (i32, i32) {
    %c0_i32 = arith.constant 0 : i32
    %c0_i32_0 = arith.constant 0 : i32
    %c0_i32_1 = arith.constant 0 : i32
    return %c0_i32, %c0_i32_0 : i32, i32
  }
  func.func @transform_5(%arg0: i32) -> (i32, i32, i32) {
    %c0_i32 = arith.constant 0 : i32
    %c0_i32_0 = arith.constant 0 : i32
    %c0_i32_1 = arith.constant 0 : i32
    return %arg0, %c0_i32, %c0_i32_0 : i32, i32, i32
  }
}

</mosaic_0001>

<llo_original>
// kernel: a_call__.1
$region0: #{a_call__.1}
  #allocation0 [shape = 'u32[]', space=smem, size = 0x4, offset = 0x4, fixed_abs, tag = 'smem constant byte address 0x4 - core index']
  #allocation1 [shape = 'u32[144,128]{1,0:T(1,128)}', space=vmem, size = 0x12000, scoped, tag = 'internal scratch']
  #allocation2 [shape = 'bf16[28,28,128]{2,1,0:T(8,128)(2,1)}', space=vmem, size = 0x38000, scoped, tag = 'scratch operand']
  #allocation3 [shape = 'bf16[24,24,128]{2,1,0:T(8,128)(2,1)}', space=vmem, size = 0x24000, scoped, tag = 'scratch operand']
  #allocation4 [shape = 'bf16[20,20,128]{2,1,0:T(8,128)(2,1)}', space=vmem, size = 0x1e000, scoped, tag = 'scratch operand']
  %s0 = inlined_call_operand.vmem [shape: bf16[2,256,256], index: 0, kind: input, shape index: {}]
  %s1 = inlined_call_operand.vmem [shape: bf16[256,128], index: 1, kind: input, shape index: {}]
  %s2 = inlined_call_operand.vmem [shape: f32[1,128], index: 2, kind: input, shape index: {}]
  %s3 = inlined_call_operand.vmem [shape: bf16[512,256], index: 3, kind: input, shape index: {}]
  %s4 = inlined_call_operand.vmem [shape: f32[1,256], index: 4, kind: input, shape index: {}]
  %s5 = inlined_call_operand.hbm [shape: f32[2,256,256], index: 5, kind: output, shape index: {}]
  %s6 = sld [smem:[#allocation0]]
  $region53: #{a_call__.1} parent=0
    _
  %s8 = ssub.s32 1, %s6
  %s9 = scalar_select 0, %s8, %s6
  $region1: #{a_call__.1} parent=0
    #allocation5 [shape = 'u8[524288]{0}', space=vmem, size = 0x80000, scoped, tag = 'output window, operand 0']
    #allocation6 [shape = 's32[2]{0}', space=sflag, size = 0x8, scoped, tag = 'scoped memory for a_call__.1']
    %10 = vsyncpa [#allocation6], 0
    %s11 = scalar_lea.sflag [#allocation6], 1
    %12 = vsyncpa %s11, 0
    loop: start=0, step=1, limit=4
    $region2: #{a_call__.1} parent=1 // loop_pre_header
      _
    $region3: #{a_call__.1} parent=1 // loop_header
      %s14 = sphi 0, %s18
      %p15 = scmp.ge.s32.totalorder %s14, 4
      %s24 = sphi 0, %s26
      %s27 = sphi 0, %s24
      %s28 = sphi 0, %s27
      %s44 = sphi 0, %s28
      %s48 = sphi 0, %s48
      %s50 = sphi 0, %s48
      %s51 = sphi 0, %s50
      %s65 = sphi 0, %s51
      %s69 = sphi 0, %s69
      %s71 = sphi 0, %s69
      %s72 = sphi 0, %s71
      %s86 = sphi 0, %s72
      %s90 = sphi 0, %s90
      %s92 = sphi 0, %s90
      %s93 = sphi 0, %s92
      %s107 = sphi 0, %s93
      %s111 = sphi 0, %s111
      %s113 = sphi 0, %s111
      %s114 = sphi 0, %s113
      %s128 = sphi 0, %s114
      %s134 = sphi 0, %s136
      %s137 = sphi 0, %s134
      %s138 = sphi 0, %s137
      %s154 = sphi 0, %s138
    $region4: #{a_call__.1} parent=1 // loop_header_branch
      %17 = sbr.rel (%p15) target = $region8
    $region5: #{a_call__.1} parent=1 // loop_body
      %s19 = ssub.s32 %s14, 1
      %s20 = ssub.s32 %s14, 2
      %s21 = sadd.s32 %s14, 1
      %s22 = ssub.s32 %s14, %s21
      %p23 = scmp.eq.s32.totalorder %s22, 0
      %s25 = sadd.s32 %s24, 1
      %s26 = scalar_select %p23, %s24, %s25
      %p29 = pneg %p23
      %p30 = scmp.eq.s32.totalorder %s14, 1
      %p31 = por %p29, %p30
      %p32 = scmp.ne.s32.totalorder %s24, %s27
      %p33 = scmp.eq.s32.totalorder %s14, 0
      %p34 = por %p32, %p33
      %p35 = scmp.ne.s32.totalorder %s24, %s27
      %p36 = scmp.eq.s32.totalorder %s19, 1
      %p37 = por %p35, %p36
      %p38 = scmp.ne.s32.totalorder %s27, %s28
      %p39 = scmp.eq.s32.totalorder %s19, 0
      %p40 = por %p38, %p39
      %p41 = scmp.ne.s32.totalorder %s27, %s28
      %p42 = scmp.eq.s32.totalorder %s20, 1
      %p43 = por %p41, %p42
      %p45 = scmp.ne.s32.totalorder %s28, %s44
      %p46 = scmp.eq.s32.totalorder %s20, 0
      %p47 = por %p45, %p46
      %s49 = sadd.s32 %s48, 1
      %p52 = scmp.eq.s32.totalorder %s14, 1
      %p53 = scmp.ne.s32.totalorder %s48, %s50
      %p54 = scmp.eq.s32.totalorder %s14, 0
      %p55 = por %p53, %p54
      %p56 = scmp.ne.s32.totalorder %s48, %s50
      %p57 = scmp.eq.s32.totalorder %s19, 1
      %p58 = por %p56, %p57
      %p59 = scmp.ne.s32.totalorder %s50, %s51
      %p60 = scmp.eq.s32.totalorder %s19, 0
      %p61 = por %p59, %p60
      %p62 = scmp.ne.s32.totalorder %s50, %s51
      %p63 = scmp.eq.s32.totalorder %s20, 1
      %p64 = por %p62, %p63
      %p66 = scmp.ne.s32.totalorder %s51, %s65
      %p67 = scmp.eq.s32.totalorder %s20, 0
      %p68 = por %p66, %p67
      %s70 = sadd.s32 %s69, 1
      %p73 = scmp.eq.s32.totalorder %s14, 1
      %p74 = scmp.ne.s32.totalorder %s69, %s71
      %p75 = scmp.eq.s32.totalorder %s14, 0
      %p76 = por %p74, %p75
      %p77 = scmp.ne.s32.totalorder %s69, %s71
      %p78 = scmp.eq.s32.totalorder %s19, 1
      %p79 = por %p77, %p78
      %p80 = scmp.ne.s32.totalorder %s71, %s72
      %p81 = scmp.eq.s32.totalorder %s19, 0
      %p82 = por %p80, %p81
      %p83 = scmp.ne.s32.totalorder %s71, %s72
      %p84 = scmp.eq.s32.totalorder %s20, 1
      %p85 = por %p83, %p84
      %p87 = scmp.ne.s32.totalorder %s72, %s86
      %p88 = scmp.eq.s32.totalorder %s20, 0
      %p89 = por %p87, %p88
      %s91 = sadd.s32 %s90, 1
      %p94 = scmp.eq.s32.totalorder %s14, 1
      %p95 = scmp.ne.s32.totalorder %s90, %s92
      %p96 = scmp.eq.s32.totalorder %s14, 0
      %p97 = por %p95, %p96
      %p98 = scmp.ne.s32.totalorder %s90, %s92
      %p99 = scmp.eq.s32.totalorder %s19, 1
      %p100 = por %p98, %p99
      %p101 = scmp.ne.s32.totalorder %s92, %s93
      %p102 = scmp.eq.s32.totalorder %s19, 0
      %p103 = por %p101, %p102
      %p104 = scmp.ne.s32.totalorder %s92, %s93
      %p105 = scmp.eq.s32.totalorder %s20, 1
      %p106 = por %p104, %p105
      %p108 = scmp.ne.s32.totalorder %s93, %s107
      %p109 = scmp.eq.s32.totalorder %s20, 0
      %p110 = por %p108, %p109
      %s112 = sadd.s32 %s111, 1
      %p115 = scmp.eq.s32.totalorder %s14, 1
      %p116 = scmp.ne.s32.totalorder %s111, %s113
      %p117 = scmp.eq.s32.totalorder %s14, 0
      %p118 = por %p116, %p117
      %p119 = scmp.ne.s32.totalorder %s111, %s113
      %p120 = scmp.eq.s32.totalorder %s19, 1
      %p121 = por %p119, %p120
      %p122 = scmp.ne.s32.totalorder %s113, %s114
      %p123 = scmp.eq.s32.totalorder %s19, 0
      %p124 = por %p122, %p123
      %p125 = scmp.ne.s32.totalorder %s113, %s114
      %p126 = scmp.eq.s32.totalorder %s20, 1
      %p127 = por %p125, %p126
      %p129 = scmp.ne.s32.totalorder %s114, %s128
      %p130 = scmp.eq.s32.totalorder %s20, 0
      %p131 = por %p129, %p130
      %s132 = ssub.s32 %s14, %s21
      %p133 = scmp.eq.s32.totalorder %s132, 0
      %s135 = sadd.s32 %s134, 1
      %s136 = scalar_select %p133, %s134, %s135
      %p139 = pneg %p133
      %p140 = scmp.eq.s32.totalorder %s14, 1
      %p141 = por %p139, %p140
      %p142 = scmp.ne.s32.totalorder %s134, %s137
      %p143 = scmp.eq.s32.totalorder %s14, 0
      %p144 = por %p142, %p143
      %p145 = scmp.ne.s32.totalorder %s134, %s137
      %p146 = scmp.eq.s32.totalorder %s19, 1
      %p147 = por %p145, %p146
      %p148 = scmp.ne.s32.totalorder %s137, %s138
      %p149 = scmp.eq.s32.totalorder %s19, 0
      %p150 = por %p148, %p149
      %p151 = scmp.ne.s32.totalorder %s137, %s138
      %p152 = scmp.eq.s32.totalorder %s20, 1
      %p153 = por %p151, %p152
      %p155 = scmp.ne.s32.totalorder %s138, %s154
      %p156 = scmp.eq.s32.totalorder %s20, 0
      %p157 = por %p155, %p156
      %p158 = scmp.le.s32.totalorder 1, %s14
      %p159 = scmp.lt.s32.totalorder %s14, 3
      %p160 = pnand %p158, %p159
      %p161 = pneg %p160
      // Predicated region
      $region9: #{a_call__.1} parent=5 // pred_check
        _
      $region10: #{a_call__.1} parent=5 // pred_check_branch
        %163 = sbr.rel (%p160) target = $region12
      $region11: #{a_call__.1} parent=5 // pred_region
        %s164 = ssub.s32 %s14, 1
        // Predicated region
        $region13: #{a_call__.1} parent=11 // pred_check
          %p165 = pneg %p61
        $region14: #{a_call__.1} parent=11 // pred_check_branch
          %167 = sbr.rel (%p165) target = $region16
        $region15: #{a_call__.1} parent=11 // pred_region
          _
        $region16: #{a_call__.1} parent=11 // pred_fallthru
          _
        // Predicated region
        $region17: #{a_call__.1} parent=11 // pred_check
          %p168 = pneg %p82
        $region18: #{a_call__.1} parent=11 // pred_check_branch
          %170 = sbr.rel (%p168) target = $region20
        $region19: #{a_call__.1} parent=11 // pred_region
          _
        $region20: #{a_call__.1} parent=11 // pred_fallthru
          _
        // Predicated region
        $region21: #{a_call__.1} parent=11 // pred_check
          %p171 = pneg %p103
        $region22: #{a_call__.1} parent=11 // pred_check_branch
          %173 = sbr.rel (%p171) target = $region24
        $region23: #{a_call__.1} parent=11 // pred_region
          _
        $region24: #{a_call__.1} parent=11 // pred_fallthru
          _
        // Predicated region
        $region25: #{a_call__.1} parent=11 // pred_check
          %p174 = pneg %p124
        $region26: #{a_call__.1} parent=11 // pred_check_branch
          %176 = sbr.rel (%p174) target = $region28
        $region27: #{a_call__.1} parent=11 // pred_region
          _
        $region28: #{a_call__.1} parent=11 // pred_fallthru
          _
      $region12: #{a_call__.1} parent=5 // pred_fallthru
        _
      %p177 = scmp.lt.s32.totalorder %s14, 2
      // Predicated region
      $region29: #{a_call__.1} parent=5 // pred_check
        %p178 = pneg %p177
      $region30: #{a_call__.1} parent=5 // pred_check_branch
        %180 = sbr.rel (%p178) target = $region32
      $region31: #{a_call__.1} parent=5 // pred_region
        // Predicated region
        $region33: #{a_call__.1} parent=31 // pred_check
          %p181 = pneg %p34
        $region34: #{a_call__.1} parent=31 // pred_check_branch
          %183 = sbr.rel (%p181) target = $region36
        $region35: #{a_call__.1} parent=31 // pred_region
          %p184 = scmp.lt.s32.totalorder %s14, 1
          %s185 = scalar_select %p184, %s14, 1
          %s186 = smul.addr %s185, 64
          %s187 = smul.addr %s186, 4
          %s188 = scalar_lea.vmem %s0, %s187
        $region36: #{a_call__.1} parent=31 // pred_fallthru
          _
      $region32: #{a_call__.1} parent=5 // pred_fallthru
        _
      %p189 = scmp.le.s32.totalorder 1, %s14
      %p190 = scmp.lt.s32.totalorder %s14, 3
      %p191 = pnand %p189, %p190
      %p192 = pneg %p191
      // Predicated region
      $region37: #{a_call__.1} parent=5 // pred_check
        _
      $region38: #{a_call__.1} parent=5 // pred_check_branch
        %194 = sbr.rel (%p191) target = $region40
      $region39: #{a_call__.1} parent=5 // pred_region
        %s195 = ssub.s32 %s14, 1
        %p196 = scmp.lt.s32.totalorder %s19, 1
        %s197 = scalar_select %p196, %s19, 1
        %s198 = smul.addr %s197, 64
        %s199 = smul.addr %s198, 4
        %s200 = scalar_lea.vmem %s0, %s199
        %p201 = pneg %p40
        %p202 = pneg %p37
        %p203 = pneg %p61
        %p204 = pneg %p58
        %p205 = pneg %p82
        %p206 = pneg %p79
        %p207 = pneg %p103
        %p208 = pneg %p100
        %p209 = pneg %p124
        %p210 = pneg %p121
        %p211 = pneg %p150
        %p212 = pneg %p147
        %s213 = sand.u32 %s137, 1
        %s214 = scalar_lea.sflag [#allocation6], %s213
        %s215 = sand.u32 %s137, 1
        %s216 = smul.addr %s215, 512
        %s217 = scalar_lea.vmem [#allocation5], %s216
        %p218 = scmp.lt.s32.totalorder %s19, 1
        %s219 = scalar_select %p218, %s19, 1
        %s220 = smul.addr %s219, 64
        %s221 = smul.addr %s220, 4
        %s222 = scalar_lea.vmem %s0, %s221
        %v225 = vld [vmem:[%s222] sm:$0xff]
        %v226 = vld [vmem:[%s222 + $0x8] sm:$0xff]
        %v227 = vld [vmem:[%s222 + $0x10] sm:$0xff]
        %v228 = vld [vmem:[%s222 + $0x18] sm:$0xff]
        %v229 = vld [vmem:[%s222 + $0x20] sm:$0xff]
        %v230 = vld [vmem:[%s222 + $0x28] sm:$0xff]
        %v231 = vld [vmem:[%s222 + $0x30] sm:$0xff]
        %v232 = vld [vmem:[%s222 + $0x38] sm:$0xff]
        %v233 = vld [vmem:[%s222 + $0x40] sm:$0xff]
        %v234 = vld [vmem:[%s222 + $0x48] sm:$0xff]
        %v235 = vld [vmem:[%s222 + $0x50] sm:$0xff]
        %v236 = vld [vmem:[%s222 + $0x58] sm:$0xff]
        %v237 = vld [vmem:[%s222 + $0x60] sm:$0xff]
        %v238 = vld [vmem:[%s222 + $0x68] sm:$0xff]
        %v239 = vld [vmem:[%s222 + $0x70] sm:$0xff]
        %v240 = vld [vmem:[%s222 + $0x78] sm:$0xff]
        %v241 = vld [vmem:[%s222 + $0x80] sm:$0xff]
        %v242 = vld [vmem:[%s222 + $0x88] sm:$0xff]
        %v243 = vld [vmem:[%s222 + $0x90] sm:$0xff]
        %v244 = vld [vmem:[%s222 + $0x98] sm:$0xff]
        %v245 = vld [vmem:[%s222 + $0xa0] sm:$0xff]
        %v246 = vld [vmem:[%s222 + $0xa8] sm:$0xff]
        %v247 = vld [vmem:[%s222 + $0xb0] sm:$0xff]
        %v248 = vld [vmem:[%s222 + $0xb8] sm:$0xff]
        %v249 = vld [vmem:[%s222 + $0xc0] sm:$0xff]
        %v250 = vld [vmem:[%s222 + $0xc8] sm:$0xff]
        %v251 = vld [vmem:[%s222 + $0xd0] sm:$0xff]
        %v252 = vld [vmem:[%s222 + $0xd8] sm:$0xff]
        %v253 = vld [vmem:[%s222 + $0xe0] sm:$0xff]
        %v254 = vld [vmem:[%s222 + $0xe8] sm:$0xff]
        %v255 = vld [vmem:[%s222 + $0xf0] sm:$0xff]
        %v256 = vld [vmem:[%s222 + $0xf8] sm:$0xff]
        %v257 = vld [vmem:[%s1] sm:$0xf]
        %v258 = vld [vmem:[%s1 + $0x4] sm:$0xf]
        %v259 = vld [vmem:[%s1 + $0x8] sm:$0xf]
        %v260 = vld [vmem:[%s1 + $0xc] sm:$0xf]
        %v261 = vld [vmem:[%s1 + $0x10] sm:$0xf]
        %v262 = vld [vmem:[%s1 + $0x14] sm:$0xf]
        %v263 = vld [vmem:[%s1 + $0x18] sm:$0xf]
        %v264 = vld [vmem:[%s1 + $0x1c] sm:$0xf]
        %v265 = vld [vmem:[%s1 + $0x20] sm:$0xf]
        %v266 = vld [vmem:[%s1 + $0x24] sm:$0xf]
        %v267 = vld [vmem:[%s1 + $0x28] sm:$0xf]
        %v268 = vld [vmem:[%s1 + $0x2c] sm:$0xf]
        %v269 = vld [vmem:[%s1 + $0x30] sm:$0xf]
        %v270 = vld [vmem:[%s1 + $0x34] sm:$0xf]
        %v271 = vld [vmem:[%s1 + $0x38] sm:$0xf]
        %v272 = vld [vmem:[%s1 + $0x3c] sm:$0xf]
        %v273 = vld [vmem:[%s1 + $0x40] sm:$0xf]
        %v274 = vld [vmem:[%s1 + $0x44] sm:$0xf]
        %v275 = vld [vmem:[%s1 + $0x48] sm:$0xf]
        %v276 = vld [vmem:[%s1 + $0x4c] sm:$0xf]
        %v277 = vld [vmem:[%s1 + $0x50] sm:$0xf]
        %v278 = vld [vmem:[%s1 + $0x54] sm:$0xf]
        %v279 = vld [vmem:[%s1 + $0x58] sm:$0xf]
        %v280 = vld [vmem:[%s1 + $0x5c] sm:$0xf]
        %v281 = vld [vmem:[%s1 + $0x60] sm:$0xf]
        %v282 = vld [vmem:[%s1 + $0x64] sm:$0xf]
        %v283 = vld [vmem:[%s1 + $0x68] sm:$0xf]
        %v284 = vld [vmem:[%s1 + $0x6c] sm:$0xf]
        %v285 = vld [vmem:[%s1 + $0x70] sm:$0xf]
        %v286 = vld [vmem:[%s1 + $0x74] sm:$0xf]
        %v287 = vld [vmem:[%s1 + $0x78] sm:$0xf]
        %v288 = vld [vmem:[%s1 + $0x7c] sm:$0xf]
        %v289 = vld [vmem:[%s2] sm:$0x1]
        %v291 = vlaneseq
        %v292 = vshrl.u32 %v291, 7
        %v293 = vsub.s32 0, %v292
        %v294 = vrot.slane %v289, %v293
        %v328 = vunpack.c.l.b16 %v225
        %v329 = vunpack.c.h.b16 %v225
        %v330 = vunpack.c.l.b16 %v226
        %v331 = vunpack.c.h.b16 %v226
        %v332 = vunpack.c.l.b16 %v227
        %v333 = vunpack.c.h.b16 %v227
        %v334 = vunpack.c.l.b16 %v228
        %v335 = vunpack.c.h.b16 %v228
        %v336 = vunpack.c.l.b16 %v229
        %v337 = vunpack.c.h.b16 %v229
        %v338 = vunpack.c.l.b16 %v230
        %v339 = vunpack.c.h.b16 %v230
        %v340 = vunpack.c.l.b16 %v231
        %v341 = vunpack.c.h.b16 %v231
        %v342 = vunpack.c.l.b16 %v232
        %v343 = vunpack.c.h.b16 %v232
        %v344 = vunpack.c.l.b16 %v233
        %v345 = vunpack.c.h.b16 %v233
        %v346 = vunpack.c.l.b16 %v234
        %v347 = vunpack.c.h.b16 %v234
        %v348 = vunpack.c.l.b16 %v235
        %v349 = vunpack.c.h.b16 %v235
        %v350 = vunpack.c.l.b16 %v236
        %v351 = vunpack.c.h.b16 %v236
        %v352 = vunpack.c.l.b16 %v237
        %v353 = vunpack.c.h.b16 %v237
        %v354 = vunpack.c.l.b16 %v238
        %v355 = vunpack.c.h.b16 %v238
        %v356 = vunpack.c.l.b16 %v239
        %v357 = vunpack.c.h.b16 %v239
        %v358 = vunpack.c.l.b16 %v240
        %v359 = vunpack.c.h.b16 %v240
        %v360 = vunpack.c.l.b16 %v241
        %v361 = vunpack.c.h.b16 %v241
        %v362 = vunpack.c.l.b16 %v242
        %v363 = vunpack.c.h.b16 %v242
        %v364 = vunpack.c.l.b16 %v243
        %v365 = vunpack.c.h.b16 %v243
        %v366 = vunpack.c.l.b16 %v244
        %v367 = vunpack.c.h.b16 %v244
        %v368 = vunpack.c.l.b16 %v245
        %v369 = vunpack.c.h.b16 %v245
        %v370 = vunpack.c.l.b16 %v246
        %v371 = vunpack.c.h.b16 %v246
        %v372 = vunpack.c.l.b16 %v247
        %v373 = vunpack.c.h.b16 %v247
        %v374 = vunpack.c.l.b16 %v248
        %v375 = vunpack.c.h.b16 %v248
        %v376 = vunpack.c.l.b16 %v249
        %v377 = vunpack.c.h.b16 %v249
        %v378 = vunpack.c.l.b16 %v250
        %v379 = vunpack.c.h.b16 %v250
        %v380 = vunpack.c.l.b16 %v251
        %v381 = vunpack.c.h.b16 %v251
        %v382 = vunpack.c.l.b16 %v252
        %v383 = vunpack.c.h.b16 %v252
        %v384 = vunpack.c.l.b16 %v253
        %v385 = vunpack.c.h.b16 %v253
        %v386 = vunpack.c.l.b16 %v254
        %v387 = vunpack.c.h.b16 %v254
        %v388 = vunpack.c.l.b16 %v255
        %v389 = vunpack.c.h.b16 %v255
        %v390 = vunpack.c.l.b16 %v256
        %v391 = vunpack.c.h.b16 %v256
        %v392 = vpack.c.b16 %v330, %v328
        %v393 = vpack.c.b16 %v331, %v329
        %v394 = vpack.c.b16 %v334, %v332
        %v395 = vpack.c.b16 %v335, %v333
        %v396 = vpack.c.b16 %v338, %v336
        %v397 = vpack.c.b16 %v339, %v337
        %v398 = vpack.c.b16 %v342, %v340
        %v399 = vpack.c.b16 %v343, %v341
        %v400 = vpack.c.b16 %v346, %v344
        %v401 = vpack.c.b16 %v347, %v345
        %v402 = vpack.c.b16 %v350, %v348
        %v403 = vpack.c.b16 %v351, %v349
        %v404 = vpack.c.b16 %v354, %v352
        %v405 = vpack.c.b16 %v355, %v353
        %v406 = vpack.c.b16 %v358, %v356
        %v407 = vpack.c.b16 %v359, %v357
        %v408 = vpack.c.b16 %v362, %v360
        %v409 = vpack.c.b16 %v363, %v361
        %v410 = vpack.c.b16 %v366, %v364
        %v411 = vpack.c.b16 %v367, %v365
        %v412 = vpack.c.b16 %v370, %v368
        %v413 = vpack.c.b16 %v371, %v369
        %v414 = vpack.c.b16 %v374, %v372
        %v415 = vpack.c.b16 %v375, %v373
        %v416 = vpack.c.b16 %v378, %v376
        %v417 = vpack.c.b16 %v379, %v377
        %v418 = vpack.c.b16 %v382, %v380
        %v419 = vpack.c.b16 %v383, %v381
        %v420 = vpack.c.b16 %v386, %v384
        %v421 = vpack.c.b16 %v387, %v385
        %v422 = vpack.c.b16 %v390, %v388
        %v423 = vpack.c.b16 %v391, %v389
        %v488 = vunpack.c.l.b16 %v257
        %v489 = vunpack.c.l.b16 %v258
        %v490 = vunpack.c.l.b16 %v259
        %v491 = vunpack.c.l.b16 %v260
        %v492 = vunpack.c.l.b16 %v261
        %v493 = vunpack.c.l.b16 %v262
        %v494 = vunpack.c.l.b16 %v263
        %v495 = vunpack.c.l.b16 %v264
        %v496 = vunpack.c.l.b16 %v265
        %v497 = vunpack.c.l.b16 %v266
        %v498 = vunpack.c.l.b16 %v267
        %v499 = vunpack.c.l.b16 %v268
        %v500 = vunpack.c.l.b16 %v269
        %v501 = vunpack.c.l.b16 %v270
        %v502 = vunpack.c.l.b16 %v271
        %v503 = vunpack.c.l.b16 %v272
        %v504 = vunpack.c.l.b16 %v273
        %v505 = vunpack.c.l.b16 %v274
        %v506 = vunpack.c.l.b16 %v275
        %v507 = vunpack.c.l.b16 %v276
        %v508 = vunpack.c.l.b16 %v277
        %v509 = vunpack.c.l.b16 %v278
        %v510 = vunpack.c.l.b16 %v279
        %v511 = vunpack.c.l.b16 %v280
        %v512 = vunpack.c.l.b16 %v281
        %v513 = vunpack.c.l.b16 %v282
        %v514 = vunpack.c.l.b16 %v283
        %v515 = vunpack.c.l.b16 %v284
        %v516 = vunpack.c.l.b16 %v285
        %v517 = vunpack.c.l.b16 %v286
        %v518 = vunpack.c.l.b16 %v287
        %v519 = vunpack.c.l.b16 %v288
        %v520 = vpack.c.b16 %v489, %v488
        %v521 = vpack.c.b16 %v491, %v490
        %v522 = vpack.c.b16 %v493, %v492
        %v523 = vpack.c.b16 %v495, %v494
        %v524 = vpack.c.b16 %v497, %v496
        %v525 = vpack.c.b16 %v499, %v498
        %v526 = vpack.c.b16 %v501, %v500
        %v527 = vpack.c.b16 %v503, %v502
        %v528 = vpack.c.b16 %v505, %v504
        %v529 = vpack.c.b16 %v507, %v506
        %v530 = vpack.c.b16 %v509, %v508
        %v531 = vpack.c.b16 %v511, %v510
        %v532 = vpack.c.b16 %v513, %v512
        %v533 = vpack.c.b16 %v515, %v514
        %v534 = vpack.c.b16 %v517, %v516
        %v535 = vpack.c.b16 %v519, %v518
        %552 = vmatprep.subr.bf16.mxu0 0
        %553 = vmatpush1.bf16.msra.mxu0 %v520
        %554 = vmatprep.subr.bf16.mxu0 0
        %555 = vmatpush1.bf16.msra.mxu0 %v521
        %556 = vmatprep.subr.bf16.mxu0 0
        %557 = vmatpush1.bf16.msra.mxu0 %v522
        %558 = vmatprep.subr.bf16.mxu0 0
        %559 = vmatpush1.bf16.msra.mxu0 %v523
        %560 = vmatprep.subr.bf16.mxu0 0
        %561 = vmatpush1.bf16.msra.mxu0 %v524
        %562 = vmatprep.subr.bf16.mxu0 0
        %563 = vmatpush1.bf16.msra.mxu0 %v525
        %564 = vmatprep.subr.bf16.mxu0 0
        %565 = vmatpush1.bf16.msra.mxu0 %v526
        %566 = vmatprep.subr.bf16.mxu0 0
        %567 = vmatpush1.bf16.msra.mxu0 %v527
        %568 = vmatprep.subr.bf16.mxu0 0
        %569 = vmatpush1.bf16.msra.mxu0 %v528
        %570 = vmatprep.subr.bf16.mxu0 0
        %571 = vmatpush1.bf16.msra.mxu0 %v529
        %572 = vmatprep.subr.bf16.mxu0 0
        %573 = vmatpush1.bf16.msra.mxu0 %v530
        %574 = vmatprep.subr.bf16.mxu0 0
        %575 = vmatpush1.bf16.msra.mxu0 %v531
        %576 = vmatprep.subr.bf16.mxu0 0
        %577 = vmatpush1.bf16.msra.mxu0 %v532
        %578 = vmatprep.subr.bf16.mxu0 0
        %579 = vmatpush1.bf16.msra.mxu0 %v533
        %580 = vmatprep.subr.bf16.mxu0 0
        %581 = vmatpush1.bf16.msra.mxu0 %v534
        %582 = vmatprep.subr.bf16.mxu0 0
        %583 = vmatpush1.bf16.msra.mxu0 %v535
        %584 = vmatprep.mubr.bf16.mxu0 %v393
        %585 = vmatmul.mubr.bf16.gmra.mrb[0].mxu0 %v392
        %v586 = vpop.f32.mrb[0].mxu0
        %v587 = vadd.f32 %v294, %v586
        %v588 = vpop.f32.mrb[0].mxu0
        %v589 = vpop.f32.mrb[0].mxu0
        %v590 = vadd.f32 %v294, %v589
        %v591 = vpop.f32.mrb[0].mxu0
        %592 = vmatprep.mubr.bf16.mxu0 %v395
        %593 = vmatmul.mubr.bf16.gmra.mrb[0].mxu0 %v394
        %v594 = vpop.f32.mrb[0].mxu0
        %v595 = vadd.f32 %v294, %v594
        %v596 = vpop.f32.mrb[0].mxu0
        %v597 = vpop.f32.mrb[0].mxu0
        %v598 = vadd.f32 %v294, %v597
        %v599 = vpop.f32.mrb[0].mxu0
        %600 = vmatprep.mubr.bf16.mxu0 %v397
        %601 = vmatmul.mubr.bf16.gmra.mrb[0].mxu0 %v396
        %v602 = vpop.f32.mrb[0].mxu0
        %v603 = vadd.f32 %v294, %v602
        %v604 = vpop.f32.mrb[0].mxu0
        %v605 = vpop.f32.mrb[0].mxu0
        %v606 = vadd.f32 %v294, %v605
        %v607 = vpop.f32.mrb[0].mxu0
        %608 = vmatprep.mubr.bf16.mxu0 %v399
        %609 = vmatmul.mubr.bf16.gmra.mrb[0].mxu0 %v398
        %v610 = vpop.f32.mrb[0].mxu0
        %v611 = vadd.f32 %v294, %v610
        %v612 = vpop.f32.mrb[0].mxu0
        %v613 = vpop.f32.mrb[0].mxu0
        %v614 = vadd.f32 %v294, %v613
        %v615 = vpop.f32.mrb[0].mxu0
        %616 = vmatprep.mubr.bf16.mxu0 %v401
        %617 = vmatmul.mubr.bf16.gmra.mrb[0].mxu0 %v400
        %v618 = vpop.f32.mrb[0].mxu0
        %v619 = vadd.f32 %v294, %v618
        %v620 = vpop.f32.mrb[0].mxu0
        %v621 = vpop.f32.mrb[0].mxu0
        %v622 = vadd.f32 %v294, %v621
        %v623 = vpop.f32.mrb[0].mxu0
        %624 = vmatprep.mubr.bf16.mxu0 %v403
        %625 = vmatmul.mubr.bf16.gmra.mrb[0].mxu0 %v402
        %v626 = vpop.f32.mrb[0].mxu0
        %v627 = vadd.f32 %v294, %v626
        %v628 = vpop.f32.mrb[0].mxu0
        %v629 = vpop.f32.mrb[0].mxu0
        %v630 = vadd.f32 %v294, %v629
        %v631 = vpop.f32.mrb[0].mxu0
        %632 = vmatprep.mubr.bf16.mxu0 %v405
        %633 = vmatmul.mubr.bf16.gmra.mrb[0].mxu0 %v404
        %v634 = vpop.f32.mrb[0].mxu0
        %v635 = vadd.f32 %v294, %v634
        %v636 = vpop.f32.mrb[0].mxu0
        %v637 = vpop.f32.mrb[0].mxu0
        %v638 = vadd.f32 %v294, %v637
        %v639 = vpop.f32.mrb[0].mxu0
        %640 = vmatprep.mubr.bf16.mxu0 %v407
        %641 = vmatmul.mubr.bf16.gmra.mrb[0].mxu0 %v406
        %v642 = vpop.f32.mrb[0].mxu0
        %v643 = vadd.f32 %v294, %v642
        %v644 = vpop.f32.mrb[0].mxu0
        %v645 = vpop.f32.mrb[0].mxu0
        %v646 = vadd.f32 %v294, %v645
        %v647 = vpop.f32.mrb[0].mxu0
        %648 = vmatprep.mubr.bf16.mxu0 %v409
        %649 = vmatmul.mubr.bf16.gmra.mrb[0].mxu0 %v408
        %v650 = vpop.f32.mrb[0].mxu0
        %v651 = vadd.f32 %v294, %v650
        %v652 = vpop.f32.mrb[0].mxu0
        %v653 = vpop.f32.mrb[0].mxu0
        %v654 = vadd.f32 %v294, %v653
        %v655 = vpop.f32.mrb[0].mxu0
        %656 = vmatprep.mubr.bf16.mxu0 %v411
        %657 = vmatmul.mubr.bf16.gmra.mrb[0].mxu0 %v410
        %v658 = vpop.f32.mrb[0].mxu0
        %v659 = vadd.f32 %v294, %v658
        %v660 = vpop.f32.mrb[0].mxu0
        %v661 = vpop.f32.mrb[0].mxu0
        %v662 = vadd.f32 %v294, %v661
        %v663 = vpop.f32.mrb[0].mxu0
        %664 = vmatprep.mubr.bf16.mxu0 %v413
        %665 = vmatmul.mubr.bf16.gmra.mrb[0].mxu0 %v412
        %v666 = vpop.f32.mrb[0].mxu0
        %v667 = vadd.f32 %v294, %v666
        %v668 = vpop.f32.mrb[0].mxu0
        %v669 = vpop.f32.mrb[0].mxu0
        %v670 = vadd.f32 %v294, %v669
        %v671 = vpop.f32.mrb[0].mxu0
        %672 = vmatprep.mubr.bf16.mxu0 %v415
        %673 = vmatmul.mubr.bf16.gmra.mrb[0].mxu0 %v414
        %v674 = vpop.f32.mrb[0].mxu0
        %v675 = vadd.f32 %v294, %v674
        %v676 = vpop.f32.mrb[0].mxu0
        %v677 = vpop.f32.mrb[0].mxu0
        %v678 = vadd.f32 %v294, %v677
        %v679 = vpop.f32.mrb[0].mxu0
        %680 = vmatprep.mubr.bf16.mxu0 %v417
        %681 = vmatmul.mubr.bf16.gmra.mrb[0].mxu0 %v416
        %v682 = vpop.f32.mrb[0].mxu0
        %v683 = vadd.f32 %v294, %v682
        %v684 = vpop.f32.mrb[0].mxu0
        %v685 = vpop.f32.mrb[0].mxu0
        %v686 = vadd.f32 %v294, %v685
        %v687 = vpop.f32.mrb[0].mxu0
        %688 = vmatprep.mubr.bf16.mxu0 %v419
        %689 = vmatmul.mubr.bf16.gmra.mrb[0].mxu0 %v418
        %v690 = vpop.f32.mrb[0].mxu0
        %v691 = vadd.f32 %v294, %v690
        %v692 = vpop.f32.mrb[0].mxu0
        %v693 = vpop.f32.mrb[0].mxu0
        %v694 = vadd.f32 %v294, %v693
        %v695 = vpop.f32.mrb[0].mxu0
        %696 = vmatprep.mubr.bf16.mxu0 %v421
        %697 = vmatmul.mubr.bf16.gmra.mrb[0].mxu0 %v420
        %v698 = vpop.f32.mrb[0].mxu0
        %v699 = vadd.f32 %v294, %v698
        %v700 = vpop.f32.mrb[0].mxu0
        %v701 = vpop.f32.mrb[0].mxu0
        %v702 = vadd.f32 %v294, %v701
        %v703 = vpop.f32.mrb[0].mxu0
        %704 = vmatprep.mubr.bf16.mxu0 %v423
        %705 = vmatmul.mubr.bf16.gmra.mrb[0].mxu0 %v422
        %v706 = vpop.f32.mrb[0].mxu0
        %v707 = vadd.f32 %v294, %v706
        %v708 = vpop.f32.mrb[0].mxu0
        %v709 = vpop.f32.mrb[0].mxu0
        %v710 = vadd.f32 %v294, %v709
        %v711 = vpop.f32.mrb[0].mxu0
        %712 = vdwg.mxu0
        %v713 = vxor.u32 %v587, 2147483648
        %v714 = vxor.u32 %v590, 2147483648
        %v715 = vxor.u32 %v595, 2147483648
        %v716 = vxor.u32 %v598, 2147483648
        %v717 = vxor.u32 %v603, 2147483648
        %v718 = vxor.u32 %v606, 2147483648
        %v719 = vxor.u32 %v611, 2147483648
        %v720 = vxor.u32 %v614, 2147483648
        %v721 = vxor.u32 %v619, 2147483648
        %v722 = vxor.u32 %v622, 2147483648
        %v723 = vxor.u32 %v627, 2147483648
        %v724 = vxor.u32 %v630, 2147483648
        %v725 = vxor.u32 %v635, 2147483648
        %v726 = vxor.u32 %v638, 2147483648
        %v727 = vxor.u32 %v643, 2147483648
        %v728 = vxor.u32 %v646, 2147483648
        %v729 = vxor.u32 %v651, 2147483648
        %v730 = vxor.u32 %v654, 2147483648
        %v731 = vxor.u32 %v659, 2147483648
        %v732 = vxor.u32 %v662, 2147483648
        %v733 = vxor.u32 %v667, 2147483648
        %v734 = vxor.u32 %v670, 2147483648
        %v735 = vxor.u32 %v675, 2147483648
        %v736 = vxor.u32 %v678, 2147483648
        %v737 = vxor.u32 %v683, 2147483648
        %v738 = vxor.u32 %v686, 2147483648
        %v739 = vxor.u32 %v691, 2147483648
        %v740 = vxor.u32 %v694, 2147483648
        %v741 = vxor.u32 %v699, 2147483648
        %v742 = vxor.u32 %v702, 2147483648
        %v743 = vxor.u32 %v707, 2147483648
        %v744 = vxor.u32 %v710, 2147483648
        %v745 = vmul.f32 %v713, 1.442695
        %v746 = vpow.pop %v745
        %v747 = vmul.f32 %v714, 1.442695
        %v748 = vpow.pop %v747
        %v749 = vmul.f32 %v715, 1.442695
        %v750 = vpow.pop %v749
        %v751 = vmul.f32 %v716, 1.442695
        %v752 = vpow.pop %v751
        %v753 = vmul.f32 %v717, 1.442695
        %v754 = vpow.pop %v753
        %v755 = vmul.f32 %v718, 1.442695
        %v756 = vpow.pop %v755
        %v757 = vmul.f32 %v719, 1.442695
        %v758 = vpow.pop %v757
        %v759 = vmul.f32 %v720, 1.442695
        %v760 = vpow.pop %v759
        %v761 = vmul.f32 %v721, 1.442695
        %v762 = vpow.pop %v761
        %v763 = vmul.f32 %v722, 1.442695
        %v764 = vpow.pop %v763
        %v765 = vmul.f32 %v723, 1.442695
        %v766 = vpow.pop %v765
        %v767 = vmul.f32 %v724, 1.442695
        %v768 = vpow.pop %v767
        %v769 = vmul.f32 %v725, 1.442695
        %v770 = vpow.pop %v769
        %v771 = vmul.f32 %v726, 1.442695
        %v772 = vpow.pop %v771
        %v773 = vmul.f32 %v727, 1.442695
        %v774 = vpow.pop %v773
        %v775 = vmul.f32 %v728, 1.442695
        %v776 = vpow.pop %v775
        %v777 = vmul.f32 %v729, 1.442695
        %v778 = vpow.pop %v777
        %v779 = vmul.f32 %v730, 1.442695
        %v780 = vpow.pop %v779
        %v781 = vmul.f32 %v731, 1.442695
        %v782 = vpow.pop %v781
        %v783 = vmul.f32 %v732, 1.442695
        %v784 = vpow.pop %v783
        %v785 = vmul.f32 %v733, 1.442695
        %v786 = vpow.pop %v785
        %v787 = vmul.f32 %v734, 1.442695
        %v788 = vpow.pop %v787
        %v789 = vmul.f32 %v735, 1.442695
        %v790 = vpow.pop %v789
        %v791 = vmul.f32 %v736, 1.442695
        %v792 = vpow.pop %v791
        %v793 = vmul.f32 %v737, 1.442695
        %v794 = vpow.pop %v793
        %v795 = vmul.f32 %v738, 1.442695
        %v796 = vpow.pop %v795
        %v797 = vmul.f32 %v739, 1.442695
        %v798 = vpow.pop %v797
        %v799 = vmul.f32 %v740, 1.442695
        %v800 = vpow.pop %v799
        %v801 = vmul.f32 %v741, 1.442695
        %v802 = vpow.pop %v801
        %v803 = vmul.f32 %v742, 1.442695
        %v804 = vpow.pop %v803
        %v805 = vmul.f32 %v743, 1.442695
        %v806 = vpow.pop %v805
        %v807 = vmul.f32 %v744, 1.442695
        %v808 = vpow.pop %v807
        %v809 = vadd.f32 %v746, 1.0
        %v810 = vadd.f32 %v748, 1.0
        %v811 = vadd.f32 %v750, 1.0
        %v812 = vadd.f32 %v752, 1.0
        %v813 = vadd.f32 %v754, 1.0
        %v814 = vadd.f32 %v756, 1.0
        %v815 = vadd.f32 %v758, 1.0
        %v816 = vadd.f32 %v760, 1.0
        %v817 = vadd.f32 %v762, 1.0
        %v818 = vadd.f32 %v764, 1.0
        %v819 = vadd.f32 %v766, 1.0
        %v820 = vadd.f32 %v768, 1.0
        %v821 = vadd.f32 %v770, 1.0
        %v822 = vadd.f32 %v772, 1.0
        %v823 = vadd.f32 %v774, 1.0
        %v824 = vadd.f32 %v776, 1.0
        %v825 = vadd.f32 %v778, 1.0
        %v826 = vadd.f32 %v780, 1.0
        %v827 = vadd.f32 %v782, 1.0
        %v828 = vadd.f32 %v784, 1.0
        %v829 = vadd.f32 %v786, 1.0
        %v830 = vadd.f32 %v788, 1.0
        %v831 = vadd.f32 %v790, 1.0
        %v832 = vadd.f32 %v792, 1.0
        %v833 = vadd.f32 %v794, 1.0
        %v834 = vadd.f32 %v796, 1.0
        %v835 = vadd.f32 %v798, 1.0
        %v836 = vadd.f32 %v800, 1.0
        %v837 = vadd.f32 %v802, 1.0
        %v838 = vadd.f32 %v804, 1.0
        %v839 = vadd.f32 %v806, 1.0
        %v840 = vadd.f32 %v808, 1.0
        %v841 = vrcp.pop %v809
        %v842 = vmul.f32 1.0, %v841
        %v843 = vrcp.pop %v810
        %v844 = vmul.f32 1.0, %v843
        %v845 = vrcp.pop %v811
        %v846 = vmul.f32 1.0, %v845
        %v847 = vrcp.pop %v812
        %v848 = vmul.f32 1.0, %v847
        %v849 = vrcp.pop %v813
        %v850 = vmul.f32 1.0, %v849
        %v851 = vrcp.pop %v814
        %v852 = vmul.f32 1.0, %v851
        %v853 = vrcp.pop %v815
        %v854 = vmul.f32 1.0, %v853
        %v855 = vrcp.pop %v816
        %v856 = vmul.f32 1.0, %v855
        %v857 = vrcp.pop %v817
        %v858 = vmul.f32 1.0, %v857
        %v859 = vrcp.pop %v818
        %v860 = vmul.f32 1.0, %v859
        %v861 = vrcp.pop %v819
        %v862 = vmul.f32 1.0, %v861
        %v863 = vrcp.pop %v820
        %v864 = vmul.f32 1.0, %v863
        %v865 = vrcp.pop %v821
        %v866 = vmul.f32 1.0, %v865
        %v867 = vrcp.pop %v822
        %v868 = vmul.f32 1.0, %v867
        %v869 = vrcp.pop %v823
        %v870 = vmul.f32 1.0, %v869
        %v871 = vrcp.pop %v824
        %v872 = vmul.f32 1.0, %v871
        %v873 = vrcp.pop %v825
        %v874 = vmul.f32 1.0, %v873
        %v875 = vrcp.pop %v826
        %v876 = vmul.f32 1.0, %v875
        %v877 = vrcp.pop %v827
        %v878 = vmul.f32 1.0, %v877
        %v879 = vrcp.pop %v828
        %v880 = vmul.f32 1.0, %v879
        %v881 = vrcp.pop %v829
        %v882 = vmul.f32 1.0, %v881
        %v883 = vrcp.pop %v830
        %v884 = vmul.f32 1.0, %v883
        %v885 = vrcp.pop %v831
        %v886 = vmul.f32 1.0, %v885
        %v887 = vrcp.pop %v832
        %v888 = vmul.f32 1.0, %v887
        %v889 = vrcp.pop %v833
        %v890 = vmul.f32 1.0, %v889
        %v891 = vrcp.pop %v834
        %v892 = vmul.f32 1.0, %v891
        %v893 = vrcp.pop %v835
        %v894 = vmul.f32 1.0, %v893
        %v895 = vrcp.pop %v836
        %v896 = vmul.f32 1.0, %v895
        %v897 = vrcp.pop %v837
        %v898 = vmul.f32 1.0, %v897
        %v899 = vrcp.pop %v838
        %v900 = vmul.f32 1.0, %v899
        %v901 = vrcp.pop %v839
        %v902 = vmul.f32 1.0, %v901
        %v903 = vrcp.pop %v840
        %v904 = vmul.f32 1.0, %v903
        %v905 = vmul.f32 %v587, %v842
        %v906 = vmul.f32 %v590, %v844
        %v907 = vmul.f32 %v595, %v846
        %v908 = vmul.f32 %v598, %v848
        %v909 = vmul.f32 %v603, %v850
        %v910 = vmul.f32 %v606, %v852
        %v911 = vmul.f32 %v611, %v854
        %v912 = vmul.f32 %v614, %v856
        %v913 = vmul.f32 %v619, %v858
        %v914 = vmul.f32 %v622, %v860
        %v915 = vmul.f32 %v627, %v862
        %v916 = vmul.f32 %v630, %v864
        %v917 = vmul.f32 %v635, %v866
        %v918 = vmul.f32 %v638, %v868
        %v919 = vmul.f32 %v643, %v870
        %v920 = vmul.f32 %v646, %v872
        %v921 = vmul.f32 %v651, %v874
        %v922 = vmul.f32 %v654, %v876
        %v923 = vmul.f32 %v659, %v878
        %v924 = vmul.f32 %v662, %v880
        %v925 = vmul.f32 %v667, %v882
        %v926 = vmul.f32 %v670, %v884
        %v927 = vmul.f32 %v675, %v886
        %v928 = vmul.f32 %v678, %v888
        %v929 = vmul.f32 %v683, %v890
        %v930 = vmul.f32 %v686, %v892
        %v931 = vmul.f32 %v691, %v894
        %v932 = vmul.f32 %v694, %v896
        %v933 = vmul.f32 %v699, %v898
        %v934 = vmul.f32 %v702, %v900
        %v935 = vmul.f32 %v707, %v902
        %v936 = vmul.f32 %v710, %v904
        %v937 = vpack.c.bf16 %v906, %v905
        %v938 = vpack.c.bf16 %v908, %v907
        %v939 = vpack.c.bf16 %v910, %v909
        %v940 = vpack.c.bf16 %v912, %v911
        %v941 = vpack.c.bf16 %v914, %v913
        %v942 = vpack.c.bf16 %v916, %v915
        %v943 = vpack.c.bf16 %v918, %v917
        %v944 = vpack.c.bf16 %v920, %v919
        %v945 = vpack.c.bf16 %v922, %v921
        %v946 = vpack.c.bf16 %v924, %v923
        %v947 = vpack.c.bf16 %v926, %v925
        %v948 = vpack.c.bf16 %v928, %v927
        %v949 = vpack.c.bf16 %v930, %v929
        %v950 = vpack.c.bf16 %v932, %v931
        %v951 = vpack.c.bf16 %v934, %v933
        %v952 = vpack.c.bf16 %v936, %v935
        %953 = vst [vmem:[#allocation2] sm:$0xf] 4286578559
        %954 = vst [vmem:[#allocation2 + $0x4] sm:$0xf] 4286578559
        %955 = vst [vmem:[#allocation2 + $0x8] sm:$0xf] 4286578559
        %956 = vst [vmem:[#allocation2 + $0xc] sm:$0x3] 4286578559
        %957 = vst [vmem:[#allocation2 + $0x10] sm:$0xf] 4286578559
        %958 = vst [vmem:[#allocation2 + $0x14] sm:$0xf] 4286578559
        %959 = vst [vmem:[#allocation2 + $0x18] sm:$0xf] 4286578559
        %960 = vst [vmem:[#allocation2 + $0x1c] sm:$0x3] 4286578559
        %961 = vst [vmem:[#allocation2 + $0x20] sm:$0xf] 4286578559
        %962 = vst [vmem:[#allocation2 + $0x24] sm:$0xf] 4286578559
        %963 = vst [vmem:[#allocation2 + $0x28] sm:$0xf] 4286578559
        %964 = vst [vmem:[#allocation2 + $0x2c] sm:$0x3] 4286578559
        %965 = vst [vmem:[#allocation2 + $0x30] sm:$0xf] 4286578559
        %966 = vst [vmem:[#allocation2 + $0x34] sm:$0xf] 4286578559
        %967 = vst [vmem:[#allocation2 + $0x38] sm:$0xf] 4286578559
        %968 = vst [vmem:[#allocation2 + $0x3c] sm:$0x3] 4286578559
        %969 = vst [vmem:[#allocation2 + $0x40] sm:$0xf] 4286578559
        %970 = vst [vmem:[#allocation2 + $0x44] sm:$0xf] 4286578559
        %971 = vst [vmem:[#allocation2 + $0x48] sm:$0xf] 4286578559
        %972 = vst [vmem:[#allocation2 + $0x4c] sm:$0x3] 4286578559
        %973 = vst [vmem:[#allocation2 + $0x50] sm:$0xf] 4286578559
        %974 = vst [vmem:[#allocation2 + $0x54] sm:$0xf] 4286578559
        %975 = vst [vmem:[#allocation2 + $0x58] sm:$0xf] 4286578559
        %976 = vst [vmem:[#allocation2 + $0x5c] sm:$0x3] 4286578559
        %977 = vst [vmem:[#allocation2 + $0x60] sm:$0xf] 4286578559
        %978 = vst [vmem:[#allocation2 + $0x64] sm:$0xf] 4286578559
        %979 = vst [vmem:[#allocation2 + $0x68] sm:$0xf] 4286578559
        %980 = vst [vmem:[#allocation2 + $0x6c] sm:$0x3] 4286578559
        %981 = vst [vmem:[#allocation2 + $0x70] sm:$0xf] 4286578559
        %982 = vst [vmem:[#allocation2 + $0x74] sm:$0xf] 4286578559
        %983 = vst [vmem:[#allocation2 + $0x78] sm:$0xf] 4286578559
        %984 = vst [vmem:[#allocation2 + $0x7c] sm:$0x3] 4286578559
        %985 = vst [vmem:[#allocation2 + $0x80] sm:$0xf] 4286578559
        %986 = vst [vmem:[#allocation2 + $0x84] sm:$0xf] 4286578559
        %987 = vst [vmem:[#allocation2 + $0x88] sm:$0xf] 4286578559
        %988 = vst [vmem:[#allocation2 + $0x8c] sm:$0x3] 4286578559
        %989 = vst [vmem:[#allocation2 + $0x90] sm:$0xf] 4286578559
        %990 = vst [vmem:[#allocation2 + $0x94] sm:$0xf] 4286578559
        %991 = vst [vmem:[#allocation2 + $0x98] sm:$0xf] 4286578559
        %992 = vst [vmem:[#allocation2 + $0x9c] sm:$0x3] 4286578559
        %993 = vst [vmem:[#allocation2 + $0xa0] sm:$0xf] 4286578559
        %994 = vst [vmem:[#allocation2 + $0xa4] sm:$0xf] 4286578559
        %995 = vst [vmem:[#allocation2 + $0xa8] sm:$0xf] 4286578559
        %996 = vst [vmem:[#allocation2 + $0xac] sm:$0x3] 4286578559
        %997 = vst [vmem:[#allocation2 + $0xb0] sm:$0xf] 4286578559
        %998 = vst [vmem:[#allocation2 + $0xb4] sm:$0xf] 4286578559
        %999 = vst [vmem:[#allocation2 + $0xb8] sm:$0xf] 4286578559
        %1000 = vst [vmem:[#allocation2 + $0xbc] sm:$0x3] 4286578559
        %1001 = vst [vmem:[#allocation2 + $0xc0] sm:$0xf] 4286578559
        %1002 = vst [vmem:[#allocation2 + $0xc4] sm:$0xf] 4286578559
        %1003 = vst [vmem:[#allocation2 + $0xc8] sm:$0xf] 4286578559
        %1004 = vst [vmem:[#allocation2 + $0xcc] sm:$0x3] 4286578559
        %1005 = vst [vmem:[#allocation2 + $0xd0] sm:$0xf] 4286578559
        %1006 = vst [vmem:[#allocation2 + $0xd4] sm:$0xf] 4286578559
        %1007 = vst [vmem:[#allocation2 + $0xd8] sm:$0xf] 4286578559
        %1008 = vst [vmem:[#allocation2 + $0xdc] sm:$0x3] 4286578559
        %1009 = vst [vmem:[#allocation2 + $0xe0] sm:$0xf] 4286578559
        %1010 = vst [vmem:[#allocation2 + $0xe4] sm:$0xf] 4286578559
        %1011 = vst [vmem:[#allocation2 + $0xe8] sm:$0xf] 4286578559
        %1012 = vst [vmem:[#allocation2 + $0xec] sm:$0x3] 4286578559
        %1013 = vst [vmem:[#allocation2 + $0xf0] sm:$0xf] 4286578559
        %1014 = vst [vmem:[#allocation2 + $0xf4] sm:$0xf] 4286578559
        %1015 = vst [vmem:[#allocation2 + $0xf8] sm:$0xf] 4286578559
        %1016 = vst [vmem:[#allocation2 + $0xfc] sm:$0x3] 4286578559
        %1017 = vst [vmem:[#allocation2 + $0x100] sm:$0xf] 4286578559
        %1018 = vst [vmem:[#allocation2 + $0x104] sm:$0xf] 4286578559
        %1019 = vst [vmem:[#allocation2 + $0x108] sm:$0xf] 4286578559
        %1020 = vst [vmem:[#allocation2 + $0x10c] sm:$0x3] 4286578559
        %1021 = vst [vmem:[#allocation2 + $0x110] sm:$0xf] 4286578559
        %1022 = vst [vmem:[#allocation2 + $0x114] sm:$0xf] 4286578559
        %1023 = vst [vmem:[#allocation2 + $0x118] sm:$0xf] 4286578559
        %1024 = vst [vmem:[#allocation2 + $0x11c] sm:$0x3] 4286578559
        %1025 = vst [vmem:[#allocation2 + $0x120] sm:$0xf] 4286578559
        %1026 = vst [vmem:[#allocation2 + $0x124] sm:$0xf] 4286578559
        %1027 = vst [vmem:[#allocation2 + $0x128] sm:$0xf] 4286578559
        %1028 = vst [vmem:[#allocation2 + $0x12c] sm:$0x3] 4286578559
        %1029 = vst [vmem:[#allocation2 + $0x130] sm:$0xf] 4286578559
        %1030 = vst [vmem:[#allocation2 + $0x134] sm:$0xf] 4286578559
        %1031 = vst [vmem:[#allocation2 + $0x138] sm:$0xf] 4286578559
        %1032 = vst [vmem:[#allocation2 + $0x13c] sm:$0x3] 4286578559
        %1033 = vst [vmem:[#allocation2 + $0x140] sm:$0xf] 4286578559
        %1034 = vst [vmem:[#allocation2 + $0x144] sm:$0xf] 4286578559
        %1035 = vst [vmem:[#allocation2 + $0x148] sm:$0xf] 4286578559
        %1036 = vst [vmem:[#allocation2 + $0x14c] sm:$0x3] 4286578559
        %1037 = vst [vmem:[#allocation2 + $0x150] sm:$0xf] 4286578559
        %1038 = vst [vmem:[#allocation2 + $0x154] sm:$0xf] 4286578559
        %1039 = vst [vmem:[#allocation2 + $0x158] sm:$0xf] 4286578559
        %1040 = vst [vmem:[#allocation2 + $0x15c] sm:$0x3] 4286578559
        %1041 = vst [vmem:[#allocation2 + $0x160] sm:$0xf] 4286578559
        %1042 = vst [vmem:[#allocation2 + $0x164] sm:$0xf] 4286578559
        %1043 = vst [vmem:[#allocation2 + $0x168] sm:$0xf] 4286578559
        %1044 = vst [vmem:[#allocation2 + $0x16c] sm:$0x3] 4286578559
        %1045 = vst [vmem:[#allocation2 + $0x170] sm:$0xf] 4286578559
        %1046 = vst [vmem:[#allocation2 + $0x174] sm:$0xf] 4286578559
        %1047 = vst [vmem:[#allocation2 + $0x178] sm:$0xf] 4286578559
        %1048 = vst [vmem:[#allocation2 + $0x17c] sm:$0x3] 4286578559
        %1049 = vst [vmem:[#allocation2 + $0x180] sm:$0xf] 4286578559
        %1050 = vst [vmem:[#allocation2 + $0x184] sm:$0xf] 4286578559
        %1051 = vst [vmem:[#allocation2 + $0x188] sm:$0xf] 4286578559
        %1052 = vst [vmem:[#allocation2 + $0x18c] sm:$0x3] 4286578559
        %1053 = vst [vmem:[#allocation2 + $0x190] sm:$0xf] 4286578559
        %1054 = vst [vmem:[#allocation2 + $0x194] sm:$0xf] 4286578559
        %1055 = vst [vmem:[#allocation2 + $0x198] sm:$0xf] 4286578559
        %1056 = vst [vmem:[#allocation2 + $0x19c] sm:$0x3] 4286578559
        %1057 = vst [vmem:[#allocation2 + $0x1a0] sm:$0xf] 4286578559
        %1058 = vst [vmem:[#allocation2 + $0x1a4] sm:$0xf] 4286578559
        %1059 = vst [vmem:[#allocation2 + $0x1a8] sm:$0xf] 4286578559
        %1060 = vst [vmem:[#allocation2 + $0x1ac] sm:$0x3] 4286578559
        %1061 = vst [vmem:[#allocation2 + $0x1b0] sm:$0xf] 4286578559
        %1062 = vst [vmem:[#allocation2 + $0x1b4] sm:$0xf] 4286578559
        %1063 = vst [vmem:[#allocation2 + $0x1b8] sm:$0xf] 4286578559
        %1064 = vst [vmem:[#allocation2 + $0x1bc] sm:$0x3] 4286578559
        %v1066 = vunpack.c.l.b16 %v937
        %v1067 = vunpack.c.h.b16 %v937
        %v1068 = vpack.c.b16 %v1066, %v1066
        %v1069 = vpack.c.b16 %v1067, %v1067
        %vm1070 = vcmask 1042432
        %vm1071 = vcmask 1046532
        %vm1072 = vmor %vm1070, %vm1071
        %v1073 = vrot.slane %v1068, 5
        %v1074 = vrot.slane %v1073, 4
        %v1075 = vrot.slane %v1069, 5
        %v1076 = vsel %vm1072, %v1074, %v1075
        %v1077 = vrot.slane %v1075, 4
        %s1081 = scalar_lea.vmem [#allocation2], 96
        %1082 = vst [vmem:[%s1081] sm:$0x8] %v1073
        %1083 = vst [vmem:[%s1081 + $0x4] sm:$0xf] %v1076
        %1084 = vst [vmem:[%s1081 + $0x8] sm:$0x7] %v1077
        %v1086 = vunpack.c.l.b16 %v938
        %v1087 = vunpack.c.h.b16 %v938
        %v1088 = vpack.c.b16 %v1086, %v1086
        %v1089 = vpack.c.b16 %v1087, %v1087
        %v1090 = vrot.slane %v1088, 5
        %v1091 = vrot.slane %v1090, 4
        %v1092 = vrot.slane %v1089, 5
        %v1093 = vsel %vm1072, %v1091, %v1092
        %v1094 = vrot.slane %v1092, 4
        %s1098 = scalar_lea.vmem [#allocation2], 112
        %1099 = vst [vmem:[%s1098] sm:$0x8] %v1090
        %1100 = vst [vmem:[%s1098 + $0x4] sm:$0xf] %v1093
        %1101 = vst [vmem:[%s1098 + $0x8] sm:$0x7] %v1094
        %v1103 = vunpack.c.l.b16 %v939
        %v1104 = vunpack.c.h.b16 %v939
        %v1105 = vpack.c.b16 %v1103, %v1103
        %v1106 = vpack.c.b16 %v1104, %v1104
        %v1107 = vrot.slane %v1105, 5
        %v1108 = vrot.slane %v1107, 4
        %v1109 = vrot.slane %v1106, 5
        %v1110 = vsel %vm1072, %v1108, %v1109
        %v1111 = vrot.slane %v1109, 4
        %s1115 = scalar_lea.vmem [#allocation2], 128
        %1116 = vst [vmem:[%s1115] sm:$0x8] %v1107
        %1117 = vst [vmem:[%s1115 + $0x4] sm:$0xf] %v1110
        %1118 = vst [vmem:[%s1115 + $0x8] sm:$0x7] %v1111
        %v1120 = vunpack.c.l.b16 %v940
        %v1121 = vunpack.c.h.b16 %v940
        %v1122 = vpack.c.b16 %v1120, %v1120
        %v1123 = vpack.c.b16 %v1121, %v1121
        %v1124 = vrot.slane %v1122, 5
        %v1125 = vrot.slane %v1124, 4
        %v1126 = vrot.slane %v1123, 5
        %v1127 = vsel %vm1072, %v1125, %v1126
        %v1128 = vrot.slane %v1126, 4
        %s1132 = scalar_lea.vmem [#allocation2], 144
        %1133 = vst [vmem:[%s1132] sm:$0x8] %v1124
        %1134 = vst [vmem:[%s1132 + $0x4] sm:$0xf] %v1127
        %1135 = vst [vmem:[%s1132 + $0x8] sm:$0x7] %v1128
        %v1137 = vunpack.c.l.b16 %v941
        %v1138 = vunpack.c.h.b16 %v941
        %v1139 = vpack.c.b16 %v1137, %v1137
        %v1140 = vpack.c.b16 %v1138, %v1138
        %v1141 = vrot.slane %v1139, 5
        %v1142 = vrot.slane %v1141, 4
        %v1143 = vrot.slane %v1140, 5
        %v1144 = vsel %vm1072, %v1142, %v1143
        %v1145 = vrot.slane %v1143, 4
        %s1149 = scalar_lea.vmem [#allocation2], 160
        %1150 = vst [vmem:[%s1149] sm:$0x8] %v1141
        %1151 = vst [vmem:[%s1149 + $0x4] sm:$0xf] %v1144
        %1152 = vst [vmem:[%s1149 + $0x8] sm:$0x7] %v1145
        %v1154 = vunpack.c.l.b16 %v942
        %v1155 = vunpack.c.h.b16 %v942
        %v1156 = vpack.c.b16 %v1154, %v1154
        %v1157 = vpack.c.b16 %v1155, %v1155
        %v1158 = vrot.slane %v1156, 5
        %v1159 = vrot.slane %v1158, 4
        %v1160 = vrot.slane %v1157, 5
        %v1161 = vsel %vm1072, %v1159, %v1160
        %v1162 = vrot.slane %v1160, 4
        %s1166 = scalar_lea.vmem [#allocation2], 176
        %1167 = vst [vmem:[%s1166] sm:$0x8] %v1158
        %1168 = vst [vmem:[%s1166 + $0x4] sm:$0xf] %v1161
        %1169 = vst [vmem:[%s1166 + $0x8] sm:$0x7] %v1162
        %v1171 = vunpack.c.l.b16 %v943
        %v1172 = vunpack.c.h.b16 %v943
        %v1173 = vpack.c.b16 %v1171, %v1171
        %v1174 = vpack.c.b16 %v1172, %v1172
        %v1175 = vrot.slane %v1173, 5
        %v1176 = vrot.slane %v1175, 4
        %v1177 = vrot.slane %v1174, 5
        %v1178 = vsel %vm1072, %v1176, %v1177
        %v1179 = vrot.slane %v1177, 4
        %s1183 = scalar_lea.vmem [#allocation2], 192
        %1184 = vst [vmem:[%s1183] sm:$0x8] %v1175
        %1185 = vst [vmem:[%s1183 + $0x4] sm:$0xf] %v1178
        %1186 = vst [vmem:[%s1183 + $0x8] sm:$0x7] %v1179
        %v1188 = vunpack.c.l.b16 %v944
        %v1189 = vunpack.c.h.b16 %v944
        %v1190 = vpack.c.b16 %v1188, %v1188
        %v1191 = vpack.c.b16 %v1189, %v1189
        %v1192 = vrot.slane %v1190, 5
        %v1193 = vrot.slane %v1192, 4
        %v1194 = vrot.slane %v1191, 5
        %v1195 = vsel %vm1072, %v1193, %v1194
        %v1196 = vrot.slane %v1194, 4
        %s1200 = scalar_lea.vmem [#allocation2], 208
        %1201 = vst [vmem:[%s1200] sm:$0x8] %v1192
        %1202 = vst [vmem:[%s1200 + $0x4] sm:$0xf] %v1195
        %1203 = vst [vmem:[%s1200 + $0x8] sm:$0x7] %v1196
        %v1205 = vunpack.c.l.b16 %v945
        %v1206 = vunpack.c.h.b16 %v945
        %v1207 = vpack.c.b16 %v1205, %v1205
        %v1208 = vpack.c.b16 %v1206, %v1206
        %v1209 = vrot.slane %v1207, 5
        %v1210 = vrot.slane %v1209, 4
        %v1211 = vrot.slane %v1208, 5
        %v1212 = vsel %vm1072, %v1210, %v1211
        %v1213 = vrot.slane %v1211, 4
        %s1217 = scalar_lea.vmem [#allocation2], 224
        %1218 = vst [vmem:[%s1217] sm:$0x8] %v1209
        %1219 = vst [vmem:[%s1217 + $0x4] sm:$0xf] %v1212
        %1220 = vst [vmem:[%s1217 + $0x8] sm:$0x7] %v1213
        %v1222 = vunpack.c.l.b16 %v946
        %v1223 = vunpack.c.h.b16 %v946
        %v1224 = vpack.c.b16 %v1222, %v1222
        %v1225 = vpack.c.b16 %v1223, %v1223
        %v1226 = vrot.slane %v1224, 5
        %v1227 = vrot.slane %v1226, 4
        %v1228 = vrot.slane %v1225, 5
        %v1229 = vsel %vm1072, %v1227, %v1228
        %v1230 = vrot.slane %v1228, 4
        %s1234 = scalar_lea.vmem [#allocation2], 240
        %1235 = vst [vmem:[%s1234] sm:$0x8] %v1226
        %1236 = vst [vmem:[%s1234 + $0x4] sm:$0xf] %v1229
        %1237 = vst [vmem:[%s1234 + $0x8] sm:$0x7] %v1230
        %v1239 = vunpack.c.l.b16 %v947
        %v1240 = vunpack.c.h.b16 %v947
        %v1241 = vpack.c.b16 %v1239, %v1239
        %v1242 = vpack.c.b16 %v1240, %v1240
        %v1243 = vrot.slane %v1241, 5
        %v1244 = vrot.slane %v1243, 4
        %v1245 = vrot.slane %v1242, 5
        %v1246 = vsel %vm1072, %v1244, %v1245
        %v1247 = vrot.slane %v1245, 4
        %s1251 = scalar_lea.vmem [#allocation2], 256
        %1252 = vst [vmem:[%s1251] sm:$0x8] %v1243
        %1253 = vst [vmem:[%s1251 + $0x4] sm:$0xf] %v1246
        %1254 = vst [vmem:[%s1251 + $0x8] sm:$0x7] %v1247
        %v1256 = vunpack.c.l.b16 %v948
        %v1257 = vunpack.c.h.b16 %v948
        %v1258 = vpack.c.b16 %v1256, %v1256
        %v1259 = vpack.c.b16 %v1257, %v1257
        %v1260 = vrot.slane %v1258, 5
        %v1261 = vrot.slane %v1260, 4
        %v1262 = vrot.slane %v1259, 5
        %v1263 = vsel %vm1072, %v1261, %v1262
        %v1264 = vrot.slane %v1262, 4
        %s1268 = scalar_lea.vmem [#allocation2], 272
        %1269 = vst [vmem:[%s1268] sm:$0x8] %v1260
        %1270 = vst [vmem:[%s1268 + $0x4] sm:$0xf] %v1263
        %1271 = vst [vmem:[%s1268 + $0x8] sm:$0x7] %v1264
        %v1273 = vunpack.c.l.b16 %v949
        %v1274 = vunpack.c.h.b16 %v949
        %v1275 = vpack.c.b16 %v1273, %v1273
        %v1276 = vpack.c.b16 %v1274, %v1274
        %v1277 = vrot.slane %v1275, 5
        %v1278 = vrot.slane %v1277, 4
        %v1279 = vrot.slane %v1276, 5
        %v1280 = vsel %vm1072, %v1278, %v1279
        %v1281 = vrot.slane %v1279, 4
        %s1285 = scalar_lea.vmem [#allocation2], 288
        %1286 = vst [vmem:[%s1285] sm:$0x8] %v1277
        %1287 = vst [vmem:[%s1285 + $0x4] sm:$0xf] %v1280
        %1288 = vst [vmem:[%s1285 + $0x8] sm:$0x7] %v1281
        %v1290 = vunpack.c.l.b16 %v950
        %v1291 = vunpack.c.h.b16 %v950
        %v1292 = vpack.c.b16 %v1290, %v1290
        %v1293 = vpack.c.b16 %v1291, %v1291
        %v1294 = vrot.slane %v1292, 5
        %v1295 = vrot.slane %v1294, 4
        %v1296 = vrot.slane %v1293, 5
        %v1297 = vsel %vm1072, %v1295, %v1296
        %v1298 = vrot.slane %v1296, 4
        %s1302 = scalar_lea.vmem [#allocation2], 304
        %1303 = vst [vmem:[%s1302] sm:$0x8] %v1294
        %1304 = vst [vmem:[%s1302 + $0x4] sm:$0xf] %v1297
        %1305 = vst [vmem:[%s1302 + $0x8] sm:$0x7] %v1298
        %v1307 = vunpack.c.l.b16 %v951
        %v1308 = vunpack.c.h.b16 %v951
        %v1309 = vpack.c.b16 %v1307, %v1307
        %v1310 = vpack.c.b16 %v1308, %v1308
        %v1311 = vrot.slane %v1309, 5
        %v1312 = vrot.slane %v1311, 4
        %v1313 = vrot.slane %v1310, 5
        %v1314 = vsel %vm1072, %v1312, %v1313
        %v1315 = vrot.slane %v1313, 4
        %s1319 = scalar_lea.vmem [#allocation2], 320
        %1320 = vst [vmem:[%s1319] sm:$0x8] %v1311
        %1321 = vst [vmem:[%s1319 + $0x4] sm:$0xf] %v1314
        %1322 = vst [vmem:[%s1319 + $0x8] sm:$0x7] %v1315
        %v1324 = vunpack.c.l.b16 %v952
        %v1325 = vunpack.c.h.b16 %v952
        %v1326 = vpack.c.b16 %v1324, %v1324
        %v1327 = vpack.c.b16 %v1325, %v1325
        %v1328 = vrot.slane %v1326, 5
        %v1329 = vrot.slane %v1328, 4
        %v1330 = vrot.slane %v1327, 5
        %v1331 = vsel %vm1072, %v1329, %v1330
        %v1332 = vrot.slane %v1330, 4
        %s1336 = scalar_lea.vmem [#allocation2], 336
        %1337 = vst [vmem:[%s1336] sm:$0x8] %v1328
        %1338 = vst [vmem:[%s1336 + $0x4] sm:$0xf] %v1331
        %1339 = vst [vmem:[%s1336 + $0x8] sm:$0x7] %v1332
        %v1340 = vld [vmem:[#allocation2] sm:$0xf]
        %v1341 = vld [vmem:[#allocation2 + $0x4] sm:$0xf]
        %v1342 = vld [vmem:[#allocation2 + $0x8] sm:$0xf]
        %v1343 = vld [vmem:[#allocation2 + $0x10] sm:$0xf]
        %v1344 = vld [vmem:[#allocation2 + $0x14] sm:$0xf]
        %v1345 = vld [vmem:[#allocation2 + $0x18] sm:$0xf]
        %v1346 = vld [vmem:[#allocation2 + $0x20] sm:$0xf]
        %v1347 = vld [vmem:[#allocation2 + $0x24] sm:$0xf]
        %v1348 = vld [vmem:[#allocation2 + $0x28] sm:$0xf]
        %v1349 = vld [vmem:[#allocation2 + $0x30] sm:$0xf]
        %v1350 = vld [vmem:[#allocation2 + $0x34] sm:$0xf]
        %v1351 = vld [vmem:[#allocation2 + $0x38] sm:$0xf]
        %v1352 = vld [vmem:[#allocation2 + $0x40] sm:$0xf]
        %v1353 = vld [vmem:[#allocation2 + $0x44] sm:$0xf]
        %v1354 = vld [vmem:[#allocation2 + $0x48] sm:$0xf]
        %v1355 = vld [vmem:[#allocation2 + $0x50] sm:$0xf]
        %v1356 = vld [vmem:[#allocation2 + $0x54] sm:$0xf]
        %v1357 = vld [vmem:[#allocation2 + $0x58] sm:$0xf]
        %v1358 = vld [vmem:[#allocation2 + $0x60] sm:$0xf]
        %v1359 = vld [vmem:[#allocation2 + $0x64] sm:$0xf]
        %v1360 = vld [vmem:[#allocation2 + $0x68] sm:$0xf]
        %v1361 = vld [vmem:[#allocation2 + $0x70] sm:$0xf]
        %v1362 = vld [vmem:[#allocation2 + $0x74] sm:$0xf]
        %v1363 = vld [vmem:[#allocation2 + $0x78] sm:$0xf]
        %v1364 = vld [vmem:[#allocation2 + $0x80] sm:$0xf]
        %v1365 = vld [vmem:[#allocation2 + $0x84] sm:$0xf]
        %v1366 = vld [vmem:[#allocation2 + $0x88] sm:$0xf]
        %v1367 = vld [vmem:[#allocation2 + $0x90] sm:$0xf]
        %v1368 = vld [vmem:[#allocation2 + $0x94] sm:$0xf]
        %v1369 = vld [vmem:[#allocation2 + $0x98] sm:$0xf]
        %v1370 = vld [vmem:[#allocation2 + $0xa0] sm:$0xf]
        %v1371 = vld [vmem:[#allocation2 + $0xa4] sm:$0xf]
        %v1372 = vld [vmem:[#allocation2 + $0xa8] sm:$0xf]
        %v1373 = vld [vmem:[#allocation2 + $0xb0] sm:$0xf]
        %v1374 = vld [vmem:[#allocation2 + $0xb4] sm:$0xf]
        %v1375 = vld [vmem:[#allocation2 + $0xb8] sm:$0xf]
        %v1376 = vld [vmem:[#allocation2 + $0xc0] sm:$0xf]
        %v1377 = vld [vmem:[#allocation2 + $0xc4] sm:$0xf]
        %v1378 = vld [vmem:[#allocation2 + $0xc8] sm:$0xf]
        %v1379 = vld [vmem:[#allocation2 + $0xd0] sm:$0xf]
        %v1380 = vld [vmem:[#allocation2 + $0xd4] sm:$0xf]
        %v1381 = vld [vmem:[#allocation2 + $0xd8] sm:$0xf]
        %v1382 = vld [vmem:[#allocation2 + $0xe0] sm:$0xf]
        %v1383 = vld [vmem:[#allocation2 + $0xe4] sm:$0xf]
        %v1384 = vld [vmem:[#allocation2 + $0xe8] sm:$0xf]
        %v1385 = vld [vmem:[#allocation2 + $0xf0] sm:$0xf]
        %v1386 = vld [vmem:[#allocation2 + $0xf4] sm:$0xf]
        %v1387 = vld [vmem:[#allocation2 + $0xf8] sm:$0xf]
        %v1388 = vld [vmem:[#allocation2 + $0x100] sm:$0xf]
        %v1389 = vld [vmem:[#allocation2 + $0x104] sm:$0xf]
        %v1390 = vld [vmem:[#allocation2 + $0x108] sm:$0xf]
        %v1391 = vld [vmem:[#allocation2 + $0x110] sm:$0xf]
        %v1392 = vld [vmem:[#allocation2 + $0x114] sm:$0xf]
        %v1393 = vld [vmem:[#allocation2 + $0x118] sm:$0xf]
        %v1394 = vld [vmem:[#allocation2 + $0x120] sm:$0xf]
        %v1395 = vld [vmem:[#allocation2 + $0x124] sm:$0xf]
        %v1396 = vld [vmem:[#allocation2 + $0x128] sm:$0xf]
        %v1397 = vld [vmem:[#allocation2 + $0x130] sm:$0xf]
        %v1398 = vld [vmem:[#allocation2 + $0x134] sm:$0xf]
        %v1399 = vld [vmem:[#allocation2 + $0x138] sm:$0xf]
        %v1400 = vld [vmem:[#allocation2 + $0x140] sm:$0xf]
        %v1401 = vld [vmem:[#allocation2 + $0x144] sm:$0xf]
        %v1402 = vld [vmem:[#allocation2 + $0x148] sm:$0xf]
        %v1403 = vld [vmem:[#allocation2 + $0x150] sm:$0xf]
        %v1404 = vld [vmem:[#allocation2 + $0x154] sm:$0xf]
        %v1405 = vld [vmem:[#allocation2 + $0x158] sm:$0xf]
        %v1406 = vld [vmem:[#allocation2 + $0x160] sm:$0xf]
        %v1407 = vld [vmem:[#allocation2 + $0x164] sm:$0xf]
        %v1408 = vld [vmem:[#allocation2 + $0x168] sm:$0xf]
        %v1409 = vld [vmem:[#allocation2 + $0x170] sm:$0xf]
        %v1410 = vld [vmem:[#allocation2 + $0x174] sm:$0xf]
        %v1411 = vld [vmem:[#allocation2 + $0x178] sm:$0xf]
        %v1412 = vld [vmem:[#allocation2 + $0x180] sm:$0xf]
        %v1413 = vld [vmem:[#allocation2 + $0x184] sm:$0xf]
        %v1414 = vld [vmem:[#allocation2 + $0x188] sm:$0xf]
        %v1415 = vld [vmem:[#allocation2 + $0x190] sm:$0xf]
        %v1416 = vld [vmem:[#allocation2 + $0x194] sm:$0xf]
        %v1417 = vld [vmem:[#allocation2 + $0x198] sm:$0xf]
        %v1418 = vld [vmem:[#allocation2 + $0x1a0] sm:$0xf]
        %v1419 = vld [vmem:[#allocation2 + $0x1a4] sm:$0xf]
        %v1420 = vld [vmem:[#allocation2 + $0x1a8] sm:$0xf]
        %v1421 = vld [vmem:[#allocation2 + $0x1b0] sm:$0xf]
        %v1422 = vld [vmem:[#allocation2 + $0x1b4] sm:$0xf]
        %v1423 = vld [vmem:[#allocation2 + $0x1b8] sm:$0xf]
        %v1424 = vld [vmem:[#allocation2 + $0xc] sm:$0x1]
        %v1425 = vld [vmem:[#allocation2 + $0x1c] sm:$0x1]
        %v1426 = vld [vmem:[#allocation2 + $0x2c] sm:$0x1]
        %v1427 = vld [vmem:[#allocation2 + $0x3c] sm:$0x1]
        %v1428 = vld [vmem:[#allocation2 + $0x4c] sm:$0x1]
        %v1429 = vld [vmem:[#allocation2 + $0x5c] sm:$0x1]
        %v1430 = vld [vmem:[#allocation2 + $0x6c] sm:$0x1]
        %v1431 = vld [vmem:[#allocation2 + $0x7c] sm:$0x1]
        %v1432 = vld [vmem:[#allocation2 + $0x8c] sm:$0x1]
        %v1433 = vld [vmem:[#allocation2 + $0x9c] sm:$0x1]
        %v1434 = vld [vmem:[#allocation2 + $0xac] sm:$0x1]
        %v1435 = vld [vmem:[#allocation2 + $0xbc] sm:$0x1]
        %v1436 = vld [vmem:[#allocation2 + $0xcc] sm:$0x1]
        %v1437 = vld [vmem:[#allocation2 + $0xdc] sm:$0x1]
        %v1438 = vld [vmem:[#allocation2 + $0xec] sm:$0x1]
        %v1439 = vld [vmem:[#allocation2 + $0xfc] sm:$0x1]
        %v1440 = vld [vmem:[#allocation2 + $0x10c] sm:$0x1]
        %v1441 = vld [vmem:[#allocation2 + $0x11c] sm:$0x1]
        %v1442 = vld [vmem:[#allocation2 + $0x12c] sm:$0x1]
        %v1443 = vld [vmem:[#allocation2 + $0x13c] sm:$0x1]
        %v1444 = vld [vmem:[#allocation2 + $0x14c] sm:$0x1]
        %v1445 = vld [vmem:[#allocation2 + $0x15c] sm:$0x1]
        %v1446 = vld [vmem:[#allocation2 + $0x16c] sm:$0x1]
        %v1447 = vld [vmem:[#allocation2 + $0x17c] sm:$0x1]
        %v1448 = vld [vmem:[#allocation2 + $0x18c] sm:$0x1]
        %v1449 = vld [vmem:[#allocation2 + $0x19c] sm:$0x1]
        %v1450 = vld [vmem:[#allocation2 + $0x1ac] sm:$0x1]
        %v1451 = vld [vmem:[#allocation2 + $0x1bc] sm:$0x1]
        %vm1452 = vsmask.f32 3328
        %vm1453 = vsmask.f32 7440
        %vm1454 = vmor %vm1452, %vm1453
        %v1456 = vshrl.u32 %v1340, 16
        %v1458 = vrot.slane %v1456, 4
        %v1459 = vshll.u32 %v1340, 16
        %v1461 = vrot.slane %v1459, 5
        %v1462 = vor.u32 %v1458, %v1461
        %v1463 = vrot.slane %v1462, 4
        %v1465 = vshll.u32 %v1341, 16
        %v1467 = vrot.slane %v1465, 5
        %v1468 = vsel %vm1454, %v1463, %v1467
        %v1469 = vshrl.u32 %v1341, 16
        %v1471 = vrot.slane %v1469, 4
        %v1472 = vor.u32 %v1471, %v1467
        %v1473 = vrot.slane %v1472, 4
        %v1475 = vshll.u32 %v1342, 16
        %v1477 = vrot.slane %v1475, 5
        %v1478 = vsel %vm1454, %v1473, %v1477
        %v1479 = vshrl.u32 %v1342, 16
        %v1481 = vrot.slane %v1479, 4
        %v1482 = vor.u32 %v1481, %v1477
        %v1483 = vrot.slane %v1482, 4
        %v1485 = vshll.u32 %v1424, 16
        %v1487 = vrot.slane %v1485, 5
        %v1488 = vsel %vm1454, %v1483, %v1487
        %v1490 = vshrl.u32 %v1343, 16
        %v1492 = vrot.slane %v1490, 4
        %v1493 = vshll.u32 %v1343, 16
        %v1495 = vrot.slane %v1493, 5
        %v1496 = vor.u32 %v1492, %v1495
        %v1497 = vrot.slane %v1496, 4
        %v1499 = vshll.u32 %v1344, 16
        %v1501 = vrot.slane %v1499, 5
        %v1502 = vsel %vm1454, %v1497, %v1501
        %v1503 = vshrl.u32 %v1344, 16
        %v1505 = vrot.slane %v1503, 4
        %v1506 = vor.u32 %v1505, %v1501
        %v1507 = vrot.slane %v1506, 4
        %v1509 = vshll.u32 %v1345, 16
        %v1511 = vrot.slane %v1509, 5
        %v1512 = vsel %vm1454, %v1507, %v1511
        %v1513 = vshrl.u32 %v1345, 16
        %v1515 = vrot.slane %v1513, 4
        %v1516 = vor.u32 %v1515, %v1511
        %v1517 = vrot.slane %v1516, 4
        %v1519 = vshll.u32 %v1425, 16
        %v1521 = vrot.slane %v1519, 5
        %v1522 = vsel %vm1454, %v1517, %v1521
        %v1524 = vshrl.u32 %v1346, 16
        %v1526 = vrot.slane %v1524, 4
        %v1527 = vshll.u32 %v1346, 16
        %v1529 = vrot.slane %v1527, 5
        %v1530 = vor.u32 %v1526, %v1529
        %v1531 = vrot.slane %v1530, 4
        %v1533 = vshll.u32 %v1347, 16
        %v1535 = vrot.slane %v1533, 5
        %v1536 = vsel %vm1454, %v1531, %v1535
        %v1537 = vshrl.u32 %v1347, 16
        %v1539 = vrot.slane %v1537, 4
        %v1540 = vor.u32 %v1539, %v1535
        %v1541 = vrot.slane %v1540, 4
        %v1543 = vshll.u32 %v1348, 16
        %v1545 = vrot.slane %v1543, 5
        %v1546 = vsel %vm1454, %v1541, %v1545
        %v1547 = vshrl.u32 %v1348, 16
        %v1549 = vrot.slane %v1547, 4
        %v1550 = vor.u32 %v1549, %v1545
        %v1551 = vrot.slane %v1550, 4
        %v1553 = vshll.u32 %v1426, 16
        %v1555 = vrot.slane %v1553, 5
        %v1556 = vsel %vm1454, %v1551, %v1555
        %v1558 = vshrl.u32 %v1349, 16
        %v1560 = vrot.slane %v1558, 4
        %v1561 = vshll.u32 %v1349, 16
        %v1563 = vrot.slane %v1561, 5
        %v1564 = vor.u32 %v1560, %v1563
        %v1565 = vrot.slane %v1564, 4
        %v1567 = vshll.u32 %v1350, 16
        %v1569 = vrot.slane %v1567, 5
        %v1570 = vsel %vm1454, %v1565, %v1569
        %v1571 = vshrl.u32 %v1350, 16
        %v1573 = vrot.slane %v1571, 4
        %v1574 = vor.u32 %v1573, %v1569
        %v1575 = vrot.slane %v1574, 4
        %v1577 = vshll.u32 %v1351, 16
        %v1579 = vrot.slane %v1577, 5
        %v1580 = vsel %vm1454, %v1575, %v1579
        %v1581 = vshrl.u32 %v1351, 16
        %v1583 = vrot.slane %v1581, 4
        %v1584 = vor.u32 %v1583, %v1579
        %v1585 = vrot.slane %v1584, 4
        %v1587 = vshll.u32 %v1427, 16
        %v1589 = vrot.slane %v1587, 5
        %v1590 = vsel %vm1454, %v1585, %v1589
        %v1592 = vshrl.u32 %v1352, 16
        %v1594 = vrot.slane %v1592, 4
        %v1595 = vshll.u32 %v1352, 16
        %v1597 = vrot.slane %v1595, 5
        %v1598 = vor.u32 %v1594, %v1597
        %v1599 = vrot.slane %v1598, 4
        %v1601 = vshll.u32 %v1353, 16
        %v1603 = vrot.slane %v1601, 5
        %v1604 = vsel %vm1454, %v1599, %v1603
        %v1605 = vshrl.u32 %v1353, 16
        %v1607 = vrot.slane %v1605, 4
        %v1608 = vor.u32 %v1607, %v1603
        %v1609 = vrot.slane %v1608, 4
        %v1611 = vshll.u32 %v1354, 16
        %v1613 = vrot.slane %v1611, 5
        %v1614 = vsel %vm1454, %v1609, %v1613
        %v1615 = vshrl.u32 %v1354, 16
        %v1617 = vrot.slane %v1615, 4
        %v1618 = vor.u32 %v1617, %v1613
        %v1619 = vrot.slane %v1618, 4
        %v1621 = vshll.u32 %v1428, 16
        %v1623 = vrot.slane %v1621, 5
        %v1624 = vsel %vm1454, %v1619, %v1623
        %v1626 = vshrl.u32 %v1355, 16
        %v1628 = vrot.slane %v1626, 4
        %v1629 = vshll.u32 %v1355, 16
        %v1631 = vrot.slane %v1629, 5
        %v1632 = vor.u32 %v1628, %v1631
        %v1633 = vrot.slane %v1632, 4
        %v1635 = vshll.u32 %v1356, 16
        %v1637 = vrot.slane %v1635, 5
        %v1638 = vsel %vm1454, %v1633, %v1637
        %v1639 = vshrl.u32 %v1356, 16
        %v1641 = vrot.slane %v1639, 4
        %v1642 = vor.u32 %v1641, %v1637
        %v1643 = vrot.slane %v1642, 4
        %v1645 = vshll.u32 %v1357, 16
        %v1647 = vrot.slane %v1645, 5
        %v1648 = vsel %vm1454, %v1643, %v1647
        %v1649 = vshrl.u32 %v1357, 16
        %v1651 = vrot.slane %v1649, 4
        %v1652 = vor.u32 %v1651, %v1647
        %v1653 = vrot.slane %v1652, 4
        %v1655 = vshll.u32 %v1429, 16
        %v1657 = vrot.slane %v1655, 5
        %v1658 = vsel %vm1454, %v1653, %v1657
        %v1660 = vshrl.u32 %v1358, 16
        %v1662 = vrot.slane %v1660, 4
        %v1663 = vshll.u32 %v1358, 16
        %v1665 = vrot.slane %v1663, 5
        %v1666 = vor.u32 %v1662, %v1665
        %v1667 = vrot.slane %v1666, 4
        %v1669 = vshll.u32 %v1359, 16
        %v1671 = vrot.slane %v1669, 5
        %v1672 = vsel %vm1454, %v1667, %v1671
        %v1673 = vshrl.u32 %v1359, 16
        %v1675 = vrot.slane %v1673, 4
        %v1676 = vor.u32 %v1675, %v1671
        %v1677 = vrot.slane %v1676, 4
        %v1679 = vshll.u32 %v1360, 16
        %v1681 = vrot.slane %v1679, 5
        %v1682 = vsel %vm1454, %v1677, %v1681
        %v1683 = vshrl.u32 %v1360, 16
        %v1685 = vrot.slane %v1683, 4
        %v1686 = vor.u32 %v1685, %v1681
        %v1687 = vrot.slane %v1686, 4
        %v1689 = vshll.u32 %v1430, 16
        %v1691 = vrot.slane %v1689, 5
        %v1692 = vsel %vm1454, %v1687, %v1691
        %v1694 = vshrl.u32 %v1361, 16
        %v1696 = vrot.slane %v1694, 4
        %v1697 = vshll.u32 %v1361, 16
        %v1699 = vrot.slane %v1697, 5
        %v1700 = vor.u32 %v1696, %v1699
        %v1701 = vrot.slane %v1700, 4
        %v1703 = vshll.u32 %v1362, 16
        %v1705 = vrot.slane %v1703, 5
        %v1706 = vsel %vm1454, %v1701, %v1705
        %v1707 = vshrl.u32 %v1362, 16
        %v1709 = vrot.slane %v1707, 4
        %v1710 = vor.u32 %v1709, %v1705
        %v1711 = vrot.slane %v1710, 4
        %v1713 = vshll.u32 %v1363, 16
        %v1715 = vrot.slane %v1713, 5
        %v1716 = vsel %vm1454, %v1711, %v1715
        %v1717 = vshrl.u32 %v1363, 16
        %v1719 = vrot.slane %v1717, 4
        %v1720 = vor.u32 %v1719, %v1715
        %v1721 = vrot.slane %v1720, 4
        %v1723 = vshll.u32 %v1431, 16
        %v1725 = vrot.slane %v1723, 5
        %v1726 = vsel %vm1454, %v1721, %v1725
        %v1728 = vshrl.u32 %v1364, 16
        %v1730 = vrot.slane %v1728, 4
        %v1731 = vshll.u32 %v1364, 16
        %v1733 = vrot.slane %v1731, 5
        %v1734 = vor.u32 %v1730, %v1733
        %v1735 = vrot.slane %v1734, 4
        %v1737 = vshll.u32 %v1365, 16
        %v1739 = vrot.slane %v1737, 5
        %v1740 = vsel %vm1454, %v1735, %v1739
        %v1741 = vshrl.u32 %v1365, 16
        %v1743 = vrot.slane %v1741, 4
        %v1744 = vor.u32 %v1743, %v1739
        %v1745 = vrot.slane %v1744, 4
        %v1747 = vshll.u32 %v1366, 16
        %v1749 = vrot.slane %v1747, 5
        %v1750 = vsel %vm1454, %v1745, %v1749
        %v1751 = vshrl.u32 %v1366, 16
        %v1753 = vrot.slane %v1751, 4
        %v1754 = vor.u32 %v1753, %v1749
        %v1755 = vrot.slane %v1754, 4
        %v1757 = vshll.u32 %v1432, 16
        %v1759 = vrot.slane %v1757, 5
        %v1760 = vsel %vm1454, %v1755, %v1759
        %v1762 = vshrl.u32 %v1367, 16
        %v1764 = vrot.slane %v1762, 4
        %v1765 = vshll.u32 %v1367, 16
        %v1767 = vrot.slane %v1765, 5
        %v1768 = vor.u32 %v1764, %v1767
        %v1769 = vrot.slane %v1768, 4
        %v1771 = vshll.u32 %v1368, 16
        %v1773 = vrot.slane %v1771, 5
        %v1774 = vsel %vm1454, %v1769, %v1773
        %v1775 = vshrl.u32 %v1368, 16
        %v1777 = vrot.slane %v1775, 4
        %v1778 = vor.u32 %v1777, %v1773
        %v1779 = vrot.slane %v1778, 4
        %v1781 = vshll.u32 %v1369, 16
        %v1783 = vrot.slane %v1781, 5
        %v1784 = vsel %vm1454, %v1779, %v1783
        %v1785 = vshrl.u32 %v1369, 16
        %v1787 = vrot.slane %v1785, 4
        %v1788 = vor.u32 %v1787, %v1783
        %v1789 = vrot.slane %v1788, 4
        %v1791 = vshll.u32 %v1433, 16
        %v1793 = vrot.slane %v1791, 5
        %v1794 = vsel %vm1454, %v1789, %v1793
        %v1796 = vshrl.u32 %v1370, 16
        %v1798 = vrot.slane %v1796, 4
        %v1799 = vshll.u32 %v1370, 16
        %v1801 = vrot.slane %v1799, 5
        %v1802 = vor.u32 %v1798, %v1801
        %v1803 = vrot.slane %v1802, 4
        %v1805 = vshll.u32 %v1371, 16
        %v1807 = vrot.slane %v1805, 5
        %v1808 = vsel %vm1454, %v1803, %v1807
        %v1809 = vshrl.u32 %v1371, 16
        %v1811 = vrot.slane %v1809, 4
        %v1812 = vor.u32 %v1811, %v1807
        %v1813 = vrot.slane %v1812, 4
        %v1815 = vshll.u32 %v1372, 16
        %v1817 = vrot.slane %v1815, 5
        %v1818 = vsel %vm1454, %v1813, %v1817
        %v1819 = vshrl.u32 %v1372, 16
        %v1821 = vrot.slane %v1819, 4
        %v1822 = vor.u32 %v1821, %v1817
        %v1823 = vrot.slane %v1822, 4
        %v1825 = vshll.u32 %v1434, 16
        %v1827 = vrot.slane %v1825, 5
        %v1828 = vsel %vm1454, %v1823, %v1827
        %v1830 = vshrl.u32 %v1373, 16
        %v1832 = vrot.slane %v1830, 4
        %v1833 = vshll.u32 %v1373, 16
        %v1835 = vrot.slane %v1833, 5
        %v1836 = vor.u32 %v1832, %v1835
        %v1837 = vrot.slane %v1836, 4
        %v1839 = vshll.u32 %v1374, 16
        %v1841 = vrot.slane %v1839, 5
        %v1842 = vsel %vm1454, %v1837, %v1841
        %v1843 = vshrl.u32 %v1374, 16
        %v1845 = vrot.slane %v1843, 4
        %v1846 = vor.u32 %v1845, %v1841
        %v1847 = vrot.slane %v1846, 4
        %v1849 = vshll.u32 %v1375, 16
        %v1851 = vrot.slane %v1849, 5
        %v1852 = vsel %vm1454, %v1847, %v1851
        %v1853 = vshrl.u32 %v1375, 16
        %v1855 = vrot.slane %v1853, 4
        %v1856 = vor.u32 %v1855, %v1851
        %v1857 = vrot.slane %v1856, 4
        %v1859 = vshll.u32 %v1435, 16
        %v1861 = vrot.slane %v1859, 5
        %v1862 = vsel %vm1454, %v1857, %v1861
        %v1864 = vshrl.u32 %v1376, 16
        %v1866 = vrot.slane %v1864, 4
        %v1867 = vshll.u32 %v1376, 16
        %v1869 = vrot.slane %v1867, 5
        %v1870 = vor.u32 %v1866, %v1869
        %v1871 = vrot.slane %v1870, 4
        %v1873 = vshll.u32 %v1377, 16
        %v1875 = vrot.slane %v1873, 5
        %v1876 = vsel %vm1454, %v1871, %v1875
        %v1877 = vshrl.u32 %v1377, 16
        %v1879 = vrot.slane %v1877, 4
        %v1880 = vor.u32 %v1879, %v1875
        %v1881 = vrot.slane %v1880, 4
        %v1883 = vshll.u32 %v1378, 16
        %v1885 = vrot.slane %v1883, 5
        %v1886 = vsel %vm1454, %v1881, %v1885
        %v1887 = vshrl.u32 %v1378, 16
        %v1889 = vrot.slane %v1887, 4
        %v1890 = vor.u32 %v1889, %v1885
        %v1891 = vrot.slane %v1890, 4
        %v1893 = vshll.u32 %v1436, 16
        %v1895 = vrot.slane %v1893, 5
        %v1896 = vsel %vm1454, %v1891, %v1895
        %v1898 = vshrl.u32 %v1379, 16
        %v1900 = vrot.slane %v1898, 4
        %v1901 = vshll.u32 %v1379, 16
        %v1903 = vrot.slane %v1901, 5
        %v1904 = vor.u32 %v1900, %v1903
        %v1905 = vrot.slane %v1904, 4
        %v1907 = vshll.u32 %v1380, 16
        %v1909 = vrot.slane %v1907, 5
        %v1910 = vsel %vm1454, %v1905, %v1909
        %v1911 = vshrl.u32 %v1380, 16
        %v1913 = vrot.slane %v1911, 4
        %v1914 = vor.u32 %v1913, %v1909
        %v1915 = vrot.slane %v1914, 4
        %v1917 = vshll.u32 %v1381, 16
        %v1919 = vrot.slane %v1917, 5
        %v1920 = vsel %vm1454, %v1915, %v1919
        %v1921 = vshrl.u32 %v1381, 16
        %v1923 = vrot.slane %v1921, 4
        %v1924 = vor.u32 %v1923, %v1919
        %v1925 = vrot.slane %v1924, 4
        %v1927 = vshll.u32 %v1437, 16
        %v1929 = vrot.slane %v1927, 5
        %v1930 = vsel %vm1454, %v1925, %v1929
        %v1932 = vshrl.u32 %v1382, 16
        %v1934 = vrot.slane %v1932, 4
        %v1935 = vshll.u32 %v1382, 16
        %v1937 = vrot.slane %v1935, 5
        %v1938 = vor.u32 %v1934, %v1937
        %v1939 = vrot.slane %v1938, 4
        %v1941 = vshll.u32 %v1383, 16
        %v1943 = vrot.slane %v1941, 5
        %v1944 = vsel %vm1454, %v1939, %v1943
        %v1945 = vshrl.u32 %v1383, 16
        %v1947 = vrot.slane %v1945, 4
        %v1948 = vor.u32 %v1947, %v1943
        %v1949 = vrot.slane %v1948, 4
        %v1951 = vshll.u32 %v1384, 16
        %v1953 = vrot.slane %v1951, 5
        %v1954 = vsel %vm1454, %v1949, %v1953
        %v1955 = vshrl.u32 %v1384, 16
        %v1957 = vrot.slane %v1955, 4
        %v1958 = vor.u32 %v1957, %v1953
        %v1959 = vrot.slane %v1958, 4
        %v1961 = vshll.u32 %v1438, 16
        %v1963 = vrot.slane %v1961, 5
        %v1964 = vsel %vm1454, %v1959, %v1963
        %v1966 = vshrl.u32 %v1385, 16
        %v1968 = vrot.slane %v1966, 4
        %v1969 = vshll.u32 %v1385, 16
        %v1971 = vrot.slane %v1969, 5
        %v1972 = vor.u32 %v1968, %v1971
        %v1973 = vrot.slane %v1972, 4
        %v1975 = vshll.u32 %v1386, 16
        %v1977 = vrot.slane %v1975, 5
        %v1978 = vsel %vm1454, %v1973, %v1977
        %v1979 = vshrl.u32 %v1386, 16
        %v1981 = vrot.slane %v1979, 4
        %v1982 = vor.u32 %v1981, %v1977
        %v1983 = vrot.slane %v1982, 4
        %v1985 = vshll.u32 %v1387, 16
        %v1987 = vrot.slane %v1985, 5
        %v1988 = vsel %vm1454, %v1983, %v1987
        %v1989 = vshrl.u32 %v1387, 16
        %v1991 = vrot.slane %v1989, 4
        %v1992 = vor.u32 %v1991, %v1987
        %v1993 = vrot.slane %v1992, 4
        %v1995 = vshll.u32 %v1439, 16
        %v1997 = vrot.slane %v1995, 5
        %v1998 = vsel %vm1454, %v1993, %v1997
        %v2000 = vshrl.u32 %v1388, 16
        %v2002 = vrot.slane %v2000, 4
        %v2003 = vshll.u32 %v1388, 16
        %v2005 = vrot.slane %v2003, 5
        %v2006 = vor.u32 %v2002, %v2005
        %v2007 = vrot.slane %v2006, 4
        %v2009 = vshll.u32 %v1389, 16
        %v2011 = vrot.slane %v2009, 5
        %v2012 = vsel %vm1454, %v2007, %v2011
        %v2013 = vshrl.u32 %v1389, 16
        %v2015 = vrot.slane %v2013, 4
        %v2016 = vor.u32 %v2015, %v2011
        %v2017 = vrot.slane %v2016, 4
        %v2019 = vshll.u32 %v1390, 16
        %v2021 = vrot.slane %v2019, 5
        %v2022 = vsel %vm1454, %v2017, %v2021
        %v2023 = vshrl.u32 %v1390, 16
        %v2025 = vrot.slane %v2023, 4
        %v2026 = vor.u32 %v2025, %v2021
        %v2027 = vrot.slane %v2026, 4
        %v2029 = vshll.u32 %v1440, 16
        %v2031 = vrot.slane %v2029, 5
        %v2032 = vsel %vm1454, %v2027, %v2031
        %v2034 = vshrl.u32 %v1391, 16
        %v2036 = vrot.slane %v2034, 4
        %v2037 = vshll.u32 %v1391, 16
        %v2039 = vrot.slane %v2037, 5
        %v2040 = vor.u32 %v2036, %v2039
        %v2041 = vrot.slane %v2040, 4
        %v2043 = vshll.u32 %v1392, 16
        %v2045 = vrot.slane %v2043, 5
        %v2046 = vsel %vm1454, %v2041, %v2045
        %v2047 = vshrl.u32 %v1392, 16
        %v2049 = vrot.slane %v2047, 4
        %v2050 = vor.u32 %v2049, %v2045
        %v2051 = vrot.slane %v2050, 4
        %v2053 = vshll.u32 %v1393, 16
        %v2055 = vrot.slane %v2053, 5
        %v2056 = vsel %vm1454, %v2051, %v2055
        %v2057 = vshrl.u32 %v1393, 16
        %v2059 = vrot.slane %v2057, 4
        %v2060 = vor.u32 %v2059, %v2055
        %v2061 = vrot.slane %v2060, 4
        %v2063 = vshll.u32 %v1441, 16
        %v2065 = vrot.slane %v2063, 5
        %v2066 = vsel %vm1454, %v2061, %v2065
        %v2068 = vshrl.u32 %v1394, 16
        %v2070 = vrot.slane %v2068, 4
        %v2071 = vshll.u32 %v1394, 16
        %v2073 = vrot.slane %v2071, 5
        %v2074 = vor.u32 %v2070, %v2073
        %v2075 = vrot.slane %v2074, 4
        %v2077 = vshll.u32 %v1395, 16
        %v2079 = vrot.slane %v2077, 5
        %v2080 = vsel %vm1454, %v2075, %v2079
        %v2081 = vshrl.u32 %v1395, 16
        %v2083 = vrot.slane %v2081, 4
        %v2084 = vor.u32 %v2083, %v2079
        %v2085 = vrot.slane %v2084, 4
        %v2087 = vshll.u32 %v1396, 16
        %v2089 = vrot.slane %v2087, 5
        %v2090 = vsel %vm1454, %v2085, %v2089
        %v2091 = vshrl.u32 %v1396, 16
        %v2093 = vrot.slane %v2091, 4
        %v2094 = vor.u32 %v2093, %v2089
        %v2095 = vrot.slane %v2094, 4
        %v2097 = vshll.u32 %v1442, 16
        %v2099 = vrot.slane %v2097, 5
        %v2100 = vsel %vm1454, %v2095, %v2099
        %v2102 = vshrl.u32 %v1397, 16
        %v2104 = vrot.slane %v2102, 4
        %v2105 = vshll.u32 %v1397, 16
        %v2107 = vrot.slane %v2105, 5
        %v2108 = vor.u32 %v2104, %v2107
        %v2109 = vrot.slane %v2108, 4
        %v2111 = vshll.u32 %v1398, 16
        %v2113 = vrot.slane %v2111, 5
        %v2114 = vsel %vm1454, %v2109, %v2113
        %v2115 = vshrl.u32 %v1398, 16
        %v2117 = vrot.slane %v2115, 4
        %v2118 = vor.u32 %v2117, %v2113
        %v2119 = vrot.slane %v2118, 4
        %v2121 = vshll.u32 %v1399, 16
        %v2123 = vrot.slane %v2121, 5
        %v2124 = vsel %vm1454, %v2119, %v2123
        %v2125 = vshrl.u32 %v1399, 16
        %v2127 = vrot.slane %v2125, 4
        %v2128 = vor.u32 %v2127, %v2123
        %v2129 = vrot.slane %v2128, 4
        %v2131 = vshll.u32 %v1443, 16
        %v2133 = vrot.slane %v2131, 5
        %v2134 = vsel %vm1454, %v2129, %v2133
        %v2136 = vshrl.u32 %v1400, 16
        %v2138 = vrot.slane %v2136, 4
        %v2139 = vshll.u32 %v1400, 16
        %v2141 = vrot.slane %v2139, 5
        %v2142 = vor.u32 %v2138, %v2141
        %v2143 = vrot.slane %v2142, 4
        %v2145 = vshll.u32 %v1401, 16
        %v2147 = vrot.slane %v2145, 5
        %v2148 = vsel %vm1454, %v2143, %v2147
        %v2149 = vshrl.u32 %v1401, 16
        %v2151 = vrot.slane %v2149, 4
        %v2152 = vor.u32 %v2151, %v2147
        %v2153 = vrot.slane %v2152, 4
        %v2155 = vshll.u32 %v1402, 16
        %v2157 = vrot.slane %v2155, 5
        %v2158 = vsel %vm1454, %v2153, %v2157
        %v2159 = vshrl.u32 %v1402, 16
        %v2161 = vrot.slane %v2159, 4
        %v2162 = vor.u32 %v2161, %v2157
        %v2163 = vrot.slane %v2162, 4
        %v2165 = vshll.u32 %v1444, 16
        %v2167 = vrot.slane %v2165, 5
        %v2168 = vsel %vm1454, %v2163, %v2167
        %v2170 = vshrl.u32 %v1403, 16
        %v2172 = vrot.slane %v2170, 4
        %v2173 = vshll.u32 %v1403, 16
        %v2175 = vrot.slane %v2173, 5
        %v2176 = vor.u32 %v2172, %v2175
        %v2177 = vrot.slane %v2176, 4
        %v2179 = vshll.u32 %v1404, 16
        %v2181 = vrot.slane %v2179, 5
        %v2182 = vsel %vm1454, %v2177, %v2181
        %v2183 = vshrl.u32 %v1404, 16
        %v2185 = vrot.slane %v2183, 4
        %v2186 = vor.u32 %v2185, %v2181
        %v2187 = vrot.slane %v2186, 4
        %v2189 = vshll.u32 %v1405, 16
        %v2191 = vrot.slane %v2189, 5
        %v2192 = vsel %vm1454, %v2187, %v2191
        %v2193 = vshrl.u32 %v1405, 16
        %v2195 = vrot.slane %v2193, 4
        %v2196 = vor.u32 %v2195, %v2191
        %v2197 = vrot.slane %v2196, 4
        %v2199 = vshll.u32 %v1445, 16
        %v2201 = vrot.slane %v2199, 5
        %v2202 = vsel %vm1454, %v2197, %v2201
        %v2204 = vshrl.u32 %v1406, 16
        %v2206 = vrot.slane %v2204, 4
        %v2207 = vshll.u32 %v1406, 16
        %v2209 = vrot.slane %v2207, 5
        %v2210 = vor.u32 %v2206, %v2209
        %v2211 = vrot.slane %v2210, 4
        %v2213 = vshll.u32 %v1407, 16
        %v2215 = vrot.slane %v2213, 5
        %v2216 = vsel %vm1454, %v2211, %v2215
        %v2217 = vshrl.u32 %v1407, 16
        %v2219 = vrot.slane %v2217, 4
        %v2220 = vor.u32 %v2219, %v2215
        %v2221 = vrot.slane %v2220, 4
        %v2223 = vshll.u32 %v1408, 16
        %v2225 = vrot.slane %v2223, 5
        %v2226 = vsel %vm1454, %v2221, %v2225
        %v2227 = vshrl.u32 %v1408, 16
        %v2229 = vrot.slane %v2227, 4
        %v2230 = vor.u32 %v2229, %v2225
        %v2231 = vrot.slane %v2230, 4
        %v2233 = vshll.u32 %v1446, 16
        %v2235 = vrot.slane %v2233, 5
        %v2236 = vsel %vm1454, %v2231, %v2235
        %v2238 = vshrl.u32 %v1409, 16
        %v2240 = vrot.slane %v2238, 4
        %v2241 = vshll.u32 %v1409, 16
        %v2243 = vrot.slane %v2241, 5
        %v2244 = vor.u32 %v2240, %v2243
        %v2245 = vrot.slane %v2244, 4
        %v2247 = vshll.u32 %v1410, 16
        %v2249 = vrot.slane %v2247, 5
        %v2250 = vsel %vm1454, %v2245, %v2249
        %v2251 = vshrl.u32 %v1410, 16
        %v2253 = vrot.slane %v2251, 4
        %v2254 = vor.u32 %v2253, %v2249
        %v2255 = vrot.slane %v2254, 4
        %v2257 = vshll.u32 %v1411, 16
        %v2259 = vrot.slane %v2257, 5
        %v2260 = vsel %vm1454, %v2255, %v2259
        %v2261 = vshrl.u32 %v1411, 16
        %v2263 = vrot.slane %v2261, 4
        %v2264 = vor.u32 %v2263, %v2259
        %v2265 = vrot.slane %v2264, 4
        %v2267 = vshll.u32 %v1447, 16
        %v2269 = vrot.slane %v2267, 5
        %v2270 = vsel %vm1454, %v2265, %v2269
        %v2272 = vshrl.u32 %v1412, 16
        %v2274 = vrot.slane %v2272, 4
        %v2275 = vshll.u32 %v1412, 16
        %v2277 = vrot.slane %v2275, 5
        %v2278 = vor.u32 %v2274, %v2277
        %v2279 = vrot.slane %v2278, 4
        %v2281 = vshll.u32 %v1413, 16
        %v2283 = vrot.slane %v2281, 5
        %v2284 = vsel %vm1454, %v2279, %v2283
        %v2285 = vshrl.u32 %v1413, 16
        %v2287 = vrot.slane %v2285, 4
        %v2288 = vor.u32 %v2287, %v2283
        %v2289 = vrot.slane %v2288, 4
        %v2291 = vshll.u32 %v1414, 16
        %v2293 = vrot.slane %v2291, 5
        %v2294 = vsel %vm1454, %v2289, %v2293
        %v2295 = vshrl.u32 %v1414, 16
        %v2297 = vrot.slane %v2295, 4
        %v2298 = vor.u32 %v2297, %v2293
        %v2299 = vrot.slane %v2298, 4
        %v2301 = vshll.u32 %v1448, 16
        %v2303 = vrot.slane %v2301, 5
        %v2304 = vsel %vm1454, %v2299, %v2303
        %v2306 = vshrl.u32 %v1415, 16
        %v2308 = vrot.slane %v2306, 4
        %v2309 = vshll.u32 %v1415, 16
        %v2311 = vrot.slane %v2309, 5
        %v2312 = vor.u32 %v2308, %v2311
        %v2313 = vrot.slane %v2312, 4
        %v2315 = vshll.u32 %v1416, 16
        %v2317 = vrot.slane %v2315, 5
        %v2318 = vsel %vm1454, %v2313, %v2317
        %v2319 = vshrl.u32 %v1416, 16
        %v2321 = vrot.slane %v2319, 4
        %v2322 = vor.u32 %v2321, %v2317
        %v2323 = vrot.slane %v2322, 4
        %v2325 = vshll.u32 %v1417, 16
        %v2327 = vrot.slane %v2325, 5
        %v2328 = vsel %vm1454, %v2323, %v2327
        %v2329 = vshrl.u32 %v1417, 16
        %v2331 = vrot.slane %v2329, 4
        %v2332 = vor.u32 %v2331, %v2327
        %v2333 = vrot.slane %v2332, 4
        %v2335 = vshll.u32 %v1449, 16
        %v2337 = vrot.slane %v2335, 5
        %v2338 = vsel %vm1454, %v2333, %v2337
        %v2340 = vshrl.u32 %v1418, 16
        %v2342 = vrot.slane %v2340, 4
        %v2343 = vshll.u32 %v1418, 16
        %v2345 = vrot.slane %v2343, 5
        %v2346 = vor.u32 %v2342, %v2345
        %v2347 = vrot.slane %v2346, 4
        %v2349 = vshll.u32 %v1419, 16
        %v2351 = vrot.slane %v2349, 5
        %v2352 = vsel %vm1454, %v2347, %v2351
        %v2353 = vshrl.u32 %v1419, 16
        %v2355 = vrot.slane %v2353, 4
        %v2356 = vor.u32 %v2355, %v2351
        %v2357 = vrot.slane %v2356, 4
        %v2359 = vshll.u32 %v1420, 16
        %v2361 = vrot.slane %v2359, 5
        %v2362 = vsel %vm1454, %v2357, %v2361
        %v2363 = vshrl.u32 %v1420, 16
        %v2365 = vrot.slane %v2363, 4
        %v2366 = vor.u32 %v2365, %v2361
        %v2367 = vrot.slane %v2366, 4
        %v2369 = vshll.u32 %v1450, 16
        %v2371 = vrot.slane %v2369, 5
        %v2372 = vsel %vm1454, %v2367, %v2371
        %v2374 = vshrl.u32 %v1421, 16
        %v2376 = vrot.slane %v2374, 4
        %v2377 = vshll.u32 %v1421, 16
        %v2379 = vrot.slane %v2377, 5
        %v2380 = vor.u32 %v2376, %v2379
        %v2381 = vrot.slane %v2380, 4
        %v2383 = vshll.u32 %v1422, 16
        %v2385 = vrot.slane %v2383, 5
        %v2386 = vsel %vm1454, %v2381, %v2385
        %v2387 = vshrl.u32 %v1422, 16
        %v2389 = vrot.slane %v2387, 4
        %v2390 = vor.u32 %v2389, %v2385
        %v2391 = vrot.slane %v2390, 4
        %v2393 = vshll.u32 %v1423, 16
        %v2395 = vrot.slane %v2393, 5
        %v2396 = vsel %vm1454, %v2391, %v2395
        %v2397 = vshrl.u32 %v1423, 16
        %v2399 = vrot.slane %v2397, 4
        %v2400 = vor.u32 %v2399, %v2395
        %v2401 = vrot.slane %v2400, 4
        %v2403 = vshll.u32 %v1451, 16
        %v2405 = vrot.slane %v2403, 5
        %v2406 = vsel %vm1454, %v2401, %v2405
        %v2491 = vmax.bf16 %v1340, %v1468
        %v2492 = vmax.bf16 %v1341, %v1478
        %v2493 = vmax.bf16 %v1342, %v1488
        %v2494 = vmax.bf16 %v1343, %v1502
        %v2495 = vmax.bf16 %v1344, %v1512
        %v2496 = vmax.bf16 %v1345, %v1522
        %v2497 = vmax.bf16 %v1346, %v1536
        %v2498 = vmax.bf16 %v1347, %v1546
        %v2499 = vmax.bf16 %v1348, %v1556
        %v2500 = vmax.bf16 %v1349, %v1570
        %v2501 = vmax.bf16 %v1350, %v1580
        %v2502 = vmax.bf16 %v1351, %v1590
        %v2503 = vmax.bf16 %v1352, %v1604
        %v2504 = vmax.bf16 %v1353, %v1614
        %v2505 = vmax.bf16 %v1354, %v1624
        %v2506 = vmax.bf16 %v1355, %v1638
        %v2507 = vmax.bf16 %v1356, %v1648
        %v2508 = vmax.bf16 %v1357, %v1658
        %v2509 = vmax.bf16 %v1358, %v1672
        %v2510 = vmax.bf16 %v1359, %v1682
        %v2511 = vmax.bf16 %v1360, %v1692
        %v2512 = vmax.bf16 %v1361, %v1706
        %v2513 = vmax.bf16 %v1362, %v1716
        %v2514 = vmax.bf16 %v1363, %v1726
        %v2515 = vmax.bf16 %v1364, %v1740
        %v2516 = vmax.bf16 %v1365, %v1750
        %v2517 = vmax.bf16 %v1366, %v1760
        %v2518 = vmax.bf16 %v1367, %v1774
        %v2519 = vmax.bf16 %v1368, %v1784
        %v2520 = vmax.bf16 %v1369, %v1794
        %v2521 = vmax.bf16 %v1370, %v1808
        %v2522 = vmax.bf16 %v1371, %v1818
        %v2523 = vmax.bf16 %v1372, %v1828
        %v2524 = vmax.bf16 %v1373, %v1842
        %v2525 = vmax.bf16 %v1374, %v1852
        %v2526 = vmax.bf16 %v1375, %v1862
        %v2527 = vmax.bf16 %v1376, %v1876
        %v2528 = vmax.bf16 %v1377, %v1886
        %v2529 = vmax.bf16 %v1378, %v1896
        %v2530 = vmax.bf16 %v1379, %v1910
        %v2531 = vmax.bf16 %v1380, %v1920
        %v2532 = vmax.bf16 %v1381, %v1930
        %v2533 = vmax.bf16 %v1382, %v1944
        %v2534 = vmax.bf16 %v1383, %v1954
        %v2535 = vmax.bf16 %v1384, %v1964
        %v2536 = vmax.bf16 %v1385, %v1978
        %v2537 = vmax.bf16 %v1386, %v1988
        %v2538 = vmax.bf16 %v1387, %v1998
        %v2539 = vmax.bf16 %v1388, %v2012
        %v2540 = vmax.bf16 %v1389, %v2022
        %v2541 = vmax.bf16 %v1390, %v2032
        %v2542 = vmax.bf16 %v1391, %v2046
        %v2543 = vmax.bf16 %v1392, %v2056
        %v2544 = vmax.bf16 %v1393, %v2066
        %v2545 = vmax.bf16 %v1394, %v2080
        %v2546 = vmax.bf16 %v1395, %v2090
        %v2547 = vmax.bf16 %v1396, %v2100
        %v2548 = vmax.bf16 %v1397, %v2114
        %v2549 = vmax.bf16 %v1398, %v2124
        %v2550 = vmax.bf16 %v1399, %v2134
        %v2551 = vmax.bf16 %v1400, %v2148
        %v2552 = vmax.bf16 %v1401, %v2158
        %v2553 = vmax.bf16 %v1402, %v2168
        %v2554 = vmax.bf16 %v1403, %v2182
        %v2555 = vmax.bf16 %v1404, %v2192
        %v2556 = vmax.bf16 %v1405, %v2202
        %v2557 = vmax.bf16 %v1406, %v2216
        %v2558 = vmax.bf16 %v1407, %v2226
        %v2559 = vmax.bf16 %v1408, %v2236
        %v2560 = vmax.bf16 %v1409, %v2250
        %v2561 = vmax.bf16 %v1410, %v2260
        %v2562 = vmax.bf16 %v1411, %v2270
        %v2563 = vmax.bf16 %v1412, %v2284
        %v2564 = vmax.bf16 %v1413, %v2294
        %v2565 = vmax.bf16 %v1414, %v2304
        %v2566 = vmax.bf16 %v1415, %v2318
        %v2567 = vmax.bf16 %v1416, %v2328
        %v2568 = vmax.bf16 %v1417, %v2338
        %v2569 = vmax.bf16 %v1418, %v2352
        %v2570 = vmax.bf16 %v1419, %v2362
        %v2571 = vmax.bf16 %v1420, %v2372
        %v2572 = vmax.bf16 %v1421, %v2386
        %v2573 = vmax.bf16 %v1422, %v2396
        %v2574 = vmax.bf16 %v1423, %v2406
        %v2575 = vld [vmem:[#allocation2] sm:$0xe]
        %v2576 = vld [vmem:[#allocation2 + $0x10] sm:$0xe]
        %v2577 = vld [vmem:[#allocation2 + $0x20] sm:$0xe]
        %v2578 = vld [vmem:[#allocation2 + $0x30] sm:$0xe]
        %v2579 = vld [vmem:[#allocation2 + $0x40] sm:$0xe]
        %v2580 = vld [vmem:[#allocation2 + $0x50] sm:$0xe]
        %v2581 = vld [vmem:[#allocation2 + $0x60] sm:$0xe]
        %v2582 = vld [vmem:[#allocation2 + $0x70] sm:$0xe]
        %v2583 = vld [vmem:[#allocation2 + $0x80] sm:$0xe]
        %v2584 = vld [vmem:[#allocation2 + $0x90] sm:$0xe]
        %v2585 = vld [vmem:[#allocation2 + $0xa0] sm:$0xe]
        %v2586 = vld [vmem:[#allocation2 + $0xb0] sm:$0xe]
        %v2587 = vld [vmem:[#allocation2 + $0xc0] sm:$0xe]
        %v2588 = vld [vmem:[#allocation2 + $0xd0] sm:$0xe]
        %v2589 = vld [vmem:[#allocation2 + $0xe0] sm:$0xe]
        %v2590 = vld [vmem:[#allocation2 + $0xf0] sm:$0xe]
        %v2591 = vld [vmem:[#allocation2 + $0x100] sm:$0xe]
        %v2592 = vld [vmem:[#allocation2 + $0x110] sm:$0xe]
        %v2593 = vld [vmem:[#allocation2 + $0x120] sm:$0xe]
        %v2594 = vld [vmem:[#allocation2 + $0x130] sm:$0xe]
        %v2595 = vld [vmem:[#allocation2 + $0x140] sm:$0xe]
        %v2596 = vld [vmem:[#allocation2 + $0x150] sm:$0xe]
        %v2597 = vld [vmem:[#allocation2 + $0x160] sm:$0xe]
        %v2598 = vld [vmem:[#allocation2 + $0x170] sm:$0xe]
        %v2599 = vld [vmem:[#allocation2 + $0x180] sm:$0xe]
        %v2600 = vld [vmem:[#allocation2 + $0x190] sm:$0xe]
        %v2601 = vld [vmem:[#allocation2 + $0x1a0] sm:$0xe]
        %v2602 = vld [vmem:[#allocation2 + $0x1b0] sm:$0xe]
        %v2715 = vrot.slane %v2575, 5
        %v2716 = vrot.slane %v2715, 4
        %v2717 = vrot.slane %v1341, 5
        %v2718 = vsel %vm1072, %v2716, %v2717
        %v2719 = vrot.slane %v2717, 4
        %v2720 = vrot.slane %v1342, 5
        %v2721 = vsel %vm1072, %v2719, %v2720
        %v2722 = vrot.slane %v2720, 4
        %v2723 = vrot.slane %v1424, 5
        %v2724 = vsel %vm1072, %v2722, %v2723
        %v2725 = vrot.slane %v2576, 5
        %v2726 = vrot.slane %v2725, 4
        %v2727 = vrot.slane %v1344, 5
        %v2728 = vsel %vm1072, %v2726, %v2727
        %v2729 = vrot.slane %v2727, 4
        %v2730 = vrot.slane %v1345, 5
        %v2731 = vsel %vm1072, %v2729, %v2730
        %v2732 = vrot.slane %v2730, 4
        %v2733 = vrot.slane %v1425, 5
        %v2734 = vsel %vm1072, %v2732, %v2733
        %v2735 = vrot.slane %v2577, 5
        %v2736 = vrot.slane %v2735, 4
        %v2737 = vrot.slane %v1347, 5
        %v2738 = vsel %vm1072, %v2736, %v2737
        %v2739 = vrot.slane %v2737, 4
        %v2740 = vrot.slane %v1348, 5
        %v2741 = vsel %vm1072, %v2739, %v2740
        %v2742 = vrot.slane %v2740, 4
        %v2743 = vrot.slane %v1426, 5
        %v2744 = vsel %vm1072, %v2742, %v2743
        %v2745 = vrot.slane %v2578, 5
        %v2746 = vrot.slane %v2745, 4
        %v2747 = vrot.slane %v1350, 5
        %v2748 = vsel %vm1072, %v2746, %v2747
        %v2749 = vrot.slane %v2747, 4
        %v2750 = vrot.slane %v1351, 5
        %v2751 = vsel %vm1072, %v2749, %v2750
        %v2752 = vrot.slane %v2750, 4
        %v2753 = vrot.slane %v1427, 5
        %v2754 = vsel %vm1072, %v2752, %v2753
        %v2755 = vrot.slane %v2579, 5
        %v2756 = vrot.slane %v2755, 4
        %v2757 = vrot.slane %v1353, 5
        %v2758 = vsel %vm1072, %v2756, %v2757
        %v2759 = vrot.slane %v2757, 4
        %v2760 = vrot.slane %v1354, 5
        %v2761 = vsel %vm1072, %v2759, %v2760
        %v2762 = vrot.slane %v2760, 4
        %v2763 = vrot.slane %v1428, 5
        %v2764 = vsel %vm1072, %v2762, %v2763
        %v2765 = vrot.slane %v2580, 5
        %v2766 = vrot.slane %v2765, 4
        %v2767 = vrot.slane %v1356, 5
        %v2768 = vsel %vm1072, %v2766, %v2767
        %v2769 = vrot.slane %v2767, 4
        %v2770 = vrot.slane %v1357, 5
        %v2771 = vsel %vm1072, %v2769, %v2770
        %v2772 = vrot.slane %v2770, 4
        %v2773 = vrot.slane %v1429, 5
        %v2774 = vsel %vm1072, %v2772, %v2773
        %v2775 = vrot.slane %v2581, 5
        %v2776 = vrot.slane %v2775, 4
        %v2777 = vrot.slane %v1359, 5
        %v2778 = vsel %vm1072, %v2776, %v2777
        %v2779 = vrot.slane %v2777, 4
        %v2780 = vrot.slane %v1360, 5
        %v2781 = vsel %vm1072, %v2779, %v2780
        %v2782 = vrot.slane %v2780, 4
        %v2783 = vrot.slane %v1430, 5
        %v2784 = vsel %vm1072, %v2782, %v2783
        %v2785 = vrot.slane %v2582, 5
        %v2786 = vrot.slane %v2785, 4
        %v2787 = vrot.slane %v1362, 5
        %v2788 = vsel %vm1072, %v2786, %v2787
        %v2789 = vrot.slane %v2787, 4
        %v2790 = vrot.slane %v1363, 5
        %v2791 = vsel %vm1072, %v2789, %v2790
        %v2792 = vrot.slane %v2790, 4
        %v2793 = vrot.slane %v1431, 5
        %v2794 = vsel %vm1072, %v2792, %v2793
        %v2795 = vrot.slane %v2583, 5
        %v2796 = vrot.slane %v2795, 4
        %v2797 = vrot.slane %v1365, 5
        %v2798 = vsel %vm1072, %v2796, %v2797
        %v2799 = vrot.slane %v2797, 4
        %v2800 = vrot.slane %v1366, 5
        %v2801 = vsel %vm1072, %v2799, %v2800
        %v2802 = vrot.slane %v2800, 4
        %v2803 = vrot.slane %v1432, 5
        %v2804 = vsel %vm1072, %v2802, %v2803
        %v2805 = vrot.slane %v2584, 5
        %v2806 = vrot.slane %v2805, 4
        %v2807 = vrot.slane %v1368, 5
        %v2808 = vsel %vm1072, %v2806, %v2807
        %v2809 = vrot.slane %v2807, 4
        %v2810 = vrot.slane %v1369, 5
        %v2811 = vsel %vm1072, %v2809, %v2810
        %v2812 = vrot.slane %v2810, 4
        %v2813 = vrot.slane %v1433, 5
        %v2814 = vsel %vm1072, %v2812, %v2813
        %v2815 = vrot.slane %v2585, 5
        %v2816 = vrot.slane %v2815, 4
        %v2817 = vrot.slane %v1371, 5
        %v2818 = vsel %vm1072, %v2816, %v2817
        %v2819 = vrot.slane %v2817, 4
        %v2820 = vrot.slane %v1372, 5
        %v2821 = vsel %vm1072, %v2819, %v2820
        %v2822 = vrot.slane %v2820, 4
        %v2823 = vrot.slane %v1434, 5
        %v2824 = vsel %vm1072, %v2822, %v2823
        %v2825 = vrot.slane %v2586, 5
        %v2826 = vrot.slane %v2825, 4
        %v2827 = vrot.slane %v1374, 5
        %v2828 = vsel %vm1072, %v2826, %v2827
        %v2829 = vrot.slane %v2827, 4
        %v2830 = vrot.slane %v1375, 5
        %v2831 = vsel %vm1072, %v2829, %v2830
        %v2832 = vrot.slane %v2830, 4
        %v2833 = vrot.slane %v1435, 5
        %v2834 = vsel %vm1072, %v2832, %v2833
        %v2835 = vrot.slane %v2587, 5
        %v2836 = vrot.slane %v2835, 4
        %v2837 = vrot.slane %v1377, 5
        %v2838 = vsel %vm1072, %v2836, %v2837
        %v2839 = vrot.slane %v2837, 4
        %v2840 = vrot.slane %v1378, 5
        %v2841 = vsel %vm1072, %v2839, %v2840
        %v2842 = vrot.slane %v2840, 4
        %v2843 = vrot.slane %v1436, 5
        %v2844 = vsel %vm1072, %v2842, %v2843
        %v2845 = vrot.slane %v2588, 5
        %v2846 = vrot.slane %v2845, 4
        %v2847 = vrot.slane %v1380, 5
        %v2848 = vsel %vm1072, %v2846, %v2847
        %v2849 = vrot.slane %v2847, 4
        %v2850 = vrot.slane %v1381, 5
        %v2851 = vsel %vm1072, %v2849, %v2850
        %v2852 = vrot.slane %v2850, 4
        %v2853 = vrot.slane %v1437, 5
        %v2854 = vsel %vm1072, %v2852, %v2853
        %v2855 = vrot.slane %v2589, 5
        %v2856 = vrot.slane %v2855, 4
        %v2857 = vrot.slane %v1383, 5
        %v2858 = vsel %vm1072, %v2856, %v2857
        %v2859 = vrot.slane %v2857, 4
        %v2860 = vrot.slane %v1384, 5
        %v2861 = vsel %vm1072, %v2859, %v2860
        %v2862 = vrot.slane %v2860, 4
        %v2863 = vrot.slane %v1438, 5
        %v2864 = vsel %vm1072, %v2862, %v2863
        %v2865 = vrot.slane %v2590, 5
        %v2866 = vrot.slane %v2865, 4
        %v2867 = vrot.slane %v1386, 5
        %v2868 = vsel %vm1072, %v2866, %v2867
        %v2869 = vrot.slane %v2867, 4
        %v2870 = vrot.slane %v1387, 5
        %v2871 = vsel %vm1072, %v2869, %v2870
        %v2872 = vrot.slane %v2870, 4
        %v2873 = vrot.slane %v1439, 5
        %v2874 = vsel %vm1072, %v2872, %v2873
        %v2875 = vrot.slane %v2591, 5
        %v2876 = vrot.slane %v2875, 4
        %v2877 = vrot.slane %v1389, 5
        %v2878 = vsel %vm1072, %v2876, %v2877
        %v2879 = vrot.slane %v2877, 4
        %v2880 = vrot.slane %v1390, 5
        %v2881 = vsel %vm1072, %v2879, %v2880
        %v2882 = vrot.slane %v2880, 4
        %v2883 = vrot.slane %v1440, 5
        %v2884 = vsel %vm1072, %v2882, %v2883
        %v2885 = vrot.slane %v2592, 5
        %v2886 = vrot.slane %v2885, 4
        %v2887 = vrot.slane %v1392, 5
        %v2888 = vsel %vm1072, %v2886, %v2887
        %v2889 = vrot.slane %v2887, 4
        %v2890 = vrot.slane %v1393, 5
        %v2891 = vsel %vm1072, %v2889, %v2890
        %v2892 = vrot.slane %v2890, 4
        %v2893 = vrot.slane %v1441, 5
        %v2894 = vsel %vm1072, %v2892, %v2893
        %v2895 = vrot.slane %v2593, 5
        %v2896 = vrot.slane %v2895, 4
        %v2897 = vrot.slane %v1395, 5
        %v2898 = vsel %vm1072, %v2896, %v2897
        %v2899 = vrot.slane %v2897, 4
        %v2900 = vrot.slane %v1396, 5
        %v2901 = vsel %vm1072, %v2899, %v2900
        %v2902 = vrot.slane %v2900, 4
        %v2903 = vrot.slane %v1442, 5
        %v2904 = vsel %vm1072, %v2902, %v2903
        %v2905 = vrot.slane %v2594, 5
        %v2906 = vrot.slane %v2905, 4
        %v2907 = vrot.slane %v1398, 5
        %v2908 = vsel %vm1072, %v2906, %v2907
        %v2909 = vrot.slane %v2907, 4
        %v2910 = vrot.slane %v1399, 5
        %v2911 = vsel %vm1072, %v2909, %v2910
        %v2912 = vrot.slane %v2910, 4
        %v2913 = vrot.slane %v1443, 5
        %v2914 = vsel %vm1072, %v2912, %v2913
        %v2915 = vrot.slane %v2595, 5
        %v2916 = vrot.slane %v2915, 4
        %v2917 = vrot.slane %v1401, 5
        %v2918 = vsel %vm1072, %v2916, %v2917
        %v2919 = vrot.slane %v2917, 4
        %v2920 = vrot.slane %v1402, 5
        %v2921 = vsel %vm1072, %v2919, %v2920
        %v2922 = vrot.slane %v2920, 4
        %v2923 = vrot.slane %v1444, 5
        %v2924 = vsel %vm1072, %v2922, %v2923
        %v2925 = vrot.slane %v2596, 5
        %v2926 = vrot.slane %v2925, 4
        %v2927 = vrot.slane %v1404, 5
        %v2928 = vsel %vm1072, %v2926, %v2927
        %v2929 = vrot.slane %v2927, 4
        %v2930 = vrot.slane %v1405, 5
        %v2931 = vsel %vm1072, %v2929, %v2930
        %v2932 = vrot.slane %v2930, 4
        %v2933 = vrot.slane %v1445, 5
        %v2934 = vsel %vm1072, %v2932, %v2933
        %v2935 = vrot.slane %v2597, 5
        %v2936 = vrot.slane %v2935, 4
        %v2937 = vrot.slane %v1407, 5
        %v2938 = vsel %vm1072, %v2936, %v2937
        %v2939 = vrot.slane %v2937, 4
        %v2940 = vrot.slane %v1408, 5
        %v2941 = vsel %vm1072, %v2939, %v2940
        %v2942 = vrot.slane %v2940, 4
        %v2943 = vrot.slane %v1446, 5
        %v2944 = vsel %vm1072, %v2942, %v2943
        %v2945 = vrot.slane %v2598, 5
        %v2946 = vrot.slane %v2945, 4
        %v2947 = vrot.slane %v1410, 5
        %v2948 = vsel %vm1072, %v2946, %v2947
        %v2949 = vrot.slane %v2947, 4
        %v2950 = vrot.slane %v1411, 5
        %v2951 = vsel %vm1072, %v2949, %v2950
        %v2952 = vrot.slane %v2950, 4
        %v2953 = vrot.slane %v1447, 5
        %v2954 = vsel %vm1072, %v2952, %v2953
        %v2955 = vrot.slane %v2599, 5
        %v2956 = vrot.slane %v2955, 4
        %v2957 = vrot.slane %v1413, 5
        %v2958 = vsel %vm1072, %v2956, %v2957
        %v2959 = vrot.slane %v2957, 4
        %v2960 = vrot.slane %v1414, 5
        %v2961 = vsel %vm1072, %v2959, %v2960
        %v2962 = vrot.slane %v2960, 4
        %v2963 = vrot.slane %v1448, 5
        %v2964 = vsel %vm1072, %v2962, %v2963
        %v2965 = vrot.slane %v2600, 5
        %v2966 = vrot.slane %v2965, 4
        %v2967 = vrot.slane %v1416, 5
        %v2968 = vsel %vm1072, %v2966, %v2967
        %v2969 = vrot.slane %v2967, 4
        %v2970 = vrot.slane %v1417, 5
        %v2971 = vsel %vm1072, %v2969, %v2970
        %v2972 = vrot.slane %v2970, 4
        %v2973 = vrot.slane %v1449, 5
        %v2974 = vsel %vm1072, %v2972, %v2973
        %v2975 = vrot.slane %v2601, 5
        %v2976 = vrot.slane %v2975, 4
        %v2977 = vrot.slane %v1419, 5
        %v2978 = vsel %vm1072, %v2976, %v2977
        %v2979 = vrot.slane %v2977, 4
        %v2980 = vrot.slane %v1420, 5
        %v2981 = vsel %vm1072, %v2979, %v2980
        %v2982 = vrot.slane %v2980, 4
        %v2983 = vrot.slane %v1450, 5
        %v2984 = vsel %vm1072, %v2982, %v2983
        %v2985 = vrot.slane %v2602, 5
        %v2986 = vrot.slane %v2985, 4
        %v2987 = vrot.slane %v1422, 5
        %v2988 = vsel %vm1072, %v2986, %v2987
        %v2989 = vrot.slane %v2987, 4
        %v2990 = vrot.slane %v1423, 5
        %v2991 = vsel %vm1072, %v2989, %v2990
        %v2992 = vrot.slane %v2990, 4
        %v2993 = vrot.slane %v1451, 5
        %v2994 = vsel %vm1072, %v2992, %v2993
        %v3079 = vmax.bf16 %v2491, %v2718
        %v3080 = vmax.bf16 %v2492, %v2721
        %v3081 = vmax.bf16 %v2493, %v2724
        %v3082 = vmax.bf16 %v2494, %v2728
        %v3083 = vmax.bf16 %v2495, %v2731
        %v3084 = vmax.bf16 %v2496, %v2734
        %v3085 = vmax.bf16 %v2497, %v2738
        %v3086 = vmax.bf16 %v2498, %v2741
        %v3087 = vmax.bf16 %v2499, %v2744
        %v3088 = vmax.bf16 %v2500, %v2748
        %v3089 = vmax.bf16 %v2501, %v2751
        %v3090 = vmax.bf16 %v2502, %v2754
        %v3091 = vmax.bf16 %v2503, %v2758
        %v3092 = vmax.bf16 %v2504, %v2761
        %v3093 = vmax.bf16 %v2505, %v2764
        %v3094 = vmax.bf16 %v2506, %v2768
        %v3095 = vmax.bf16 %v2507, %v2771
        %v3096 = vmax.bf16 %v2508, %v2774
        %v3097 = vmax.bf16 %v2509, %v2778
        %v3098 = vmax.bf16 %v2510, %v2781
        %v3099 = vmax.bf16 %v2511, %v2784
        %v3100 = vmax.bf16 %v2512, %v2788
        %v3101 = vmax.bf16 %v2513, %v2791
        %v3102 = vmax.bf16 %v2514, %v2794
        %v3103 = vmax.bf16 %v2515, %v2798
        %v3104 = vmax.bf16 %v2516, %v2801
        %v3105 = vmax.bf16 %v2517, %v2804
        %v3106 = vmax.bf16 %v2518, %v2808
        %v3107 = vmax.bf16 %v2519, %v2811
        %v3108 = vmax.bf16 %v2520, %v2814
        %v3109 = vmax.bf16 %v2521, %v2818
        %v3110 = vmax.bf16 %v2522, %v2821
        %v3111 = vmax.bf16 %v2523, %v2824
        %v3112 = vmax.bf16 %v2524, %v2828
        %v3113 = vmax.bf16 %v2525, %v2831
        %v3114 = vmax.bf16 %v2526, %v2834
        %v3115 = vmax.bf16 %v2527, %v2838
        %v3116 = vmax.bf16 %v2528, %v2841
        %v3117 = vmax.bf16 %v2529, %v2844
        %v3118 = vmax.bf16 %v2530, %v2848
        %v3119 = vmax.bf16 %v2531, %v2851
        %v3120 = vmax.bf16 %v2532, %v2854
        %v3121 = vmax.bf16 %v2533, %v2858
        %v3122 = vmax.bf16 %v2534, %v2861
        %v3123 = vmax.bf16 %v2535, %v2864
        %v3124 = vmax.bf16 %v2536, %v2868
        %v3125 = vmax.bf16 %v2537, %v2871
        %v3126 = vmax.bf16 %v2538, %v2874
        %v3127 = vmax.bf16 %v2539, %v2878
        %v3128 = vmax.bf16 %v2540, %v2881
        %v3129 = vmax.bf16 %v2541, %v2884
        %v3130 = vmax.bf16 %v2542, %v2888
        %v3131 = vmax.bf16 %v2543, %v2891
        %v3132 = vmax.bf16 %v2544, %v2894
        %v3133 = vmax.bf16 %v2545, %v2898
        %v3134 = vmax.bf16 %v2546, %v2901
        %v3135 = vmax.bf16 %v2547, %v2904
        %v3136 = vmax.bf16 %v2548, %v2908
        %v3137 = vmax.bf16 %v2549, %v2911
        %v3138 = vmax.bf16 %v2550, %v2914
        %v3139 = vmax.bf16 %v2551, %v2918
        %v3140 = vmax.bf16 %v2552, %v2921
        %v3141 = vmax.bf16 %v2553, %v2924
        %v3142 = vmax.bf16 %v2554, %v2928
        %v3143 = vmax.bf16 %v2555, %v2931
        %v3144 = vmax.bf16 %v2556, %v2934
        %v3145 = vmax.bf16 %v2557, %v2938
        %v3146 = vmax.bf16 %v2558, %v2941
        %v3147 = vmax.bf16 %v2559, %v2944
        %v3148 = vmax.bf16 %v2560, %v2948
        %v3149 = vmax.bf16 %v2561, %v2951
        %v3150 = vmax.bf16 %v2562, %v2954
        %v3151 = vmax.bf16 %v2563, %v2958
        %v3152 = vmax.bf16 %v2564, %v2961
        %v3153 = vmax.bf16 %v2565, %v2964
        %v3154 = vmax.bf16 %v2566, %v2968
        %v3155 = vmax.bf16 %v2567, %v2971
        %v3156 = vmax.bf16 %v2568, %v2974
        %v3157 = vmax.bf16 %v2569, %v2978
        %v3158 = vmax.bf16 %v2570, %v2981
        %v3159 = vmax.bf16 %v2571, %v2984
        %v3160 = vmax.bf16 %v2572, %v2988
        %v3161 = vmax.bf16 %v2573, %v2991
        %v3162 = vmax.bf16 %v2574, %v2994
        %v3163 = vld [vmem:[#allocation2 + $0xc] sm:$0x3]
        %v3164 = vld [vmem:[#allocation2 + $0x1c] sm:$0x3]
        %v3165 = vld [vmem:[#allocation2 + $0x2c] sm:$0x3]
        %v3166 = vld [vmem:[#allocation2 + $0x3c] sm:$0x3]
        %v3167 = vld [vmem:[#allocation2 + $0x4c] sm:$0x3]
        %v3168 = vld [vmem:[#allocation2 + $0x5c] sm:$0x3]
        %v3169 = vld [vmem:[#allocation2 + $0x6c] sm:$0x3]
        %v3170 = vld [vmem:[#allocation2 + $0x7c] sm:$0x3]
        %v3171 = vld [vmem:[#allocation2 + $0x8c] sm:$0x3]
        %v3172 = vld [vmem:[#allocation2 + $0x9c] sm:$0x3]
        %v3173 = vld [vmem:[#allocation2 + $0xac] sm:$0x3]
        %v3174 = vld [vmem:[#allocation2 + $0xbc] sm:$0x3]
        %v3175 = vld [vmem:[#allocation2 + $0xcc] sm:$0x3]
        %v3176 = vld [vmem:[#allocation2 + $0xdc] sm:$0x3]
        %v3177 = vld [vmem:[#allocation2 + $0xec] sm:$0x3]
        %v3178 = vld [vmem:[#allocation2 + $0xfc] sm:$0x3]
        %v3179 = vld [vmem:[#allocation2 + $0x10c] sm:$0x3]
        %v3180 = vld [vmem:[#allocation2 + $0x11c] sm:$0x3]
        %v3181 = vld [vmem:[#allocation2 + $0x12c] sm:$0x3]
        %v3182 = vld [vmem:[#allocation2 + $0x13c] sm:$0x3]
        %v3183 = vld [vmem:[#allocation2 + $0x14c] sm:$0x3]
        %v3184 = vld [vmem:[#allocation2 + $0x15c] sm:$0x3]
        %v3185 = vld [vmem:[#allocation2 + $0x16c] sm:$0x3]
        %v3186 = vld [vmem:[#allocation2 + $0x17c] sm:$0x3]
        %v3187 = vld [vmem:[#allocation2 + $0x18c] sm:$0x3]
        %v3188 = vld [vmem:[#allocation2 + $0x19c] sm:$0x3]
        %v3189 = vld [vmem:[#allocation2 + $0x1ac] sm:$0x3]
        %v3190 = vld [vmem:[#allocation2 + $0x1bc] sm:$0x3]
        %vm3191 = vsmask.f32 2304
        %vm3192 = vsmask.f32 6416
        %vm3193 = vmor %vm3191, %vm3192
        %v3195 = vshrl.u32 %v2575, 16
        %v3197 = vrot.slane %v3195, 5
        %v3198 = vshll.u32 %v2575, 16
        %v3200 = vrot.slane %v3198, 6
        %v3201 = vor.u32 %v3197, %v3200
        %v3202 = vrot.slane %v3201, 4
        %v3203 = vrot.slane %v1469, 5
        %v3204 = vrot.slane %v1465, 6
        %v3205 = vor.u32 %v3203, %v3204
        %v3206 = vsel %vm3193, %v3202, %v3205
        %v3207 = vrot.slane %v3205, 4
        %v3208 = vrot.slane %v1479, 5
        %v3209 = vrot.slane %v1475, 6
        %v3210 = vor.u32 %v3208, %v3209
        %v3211 = vsel %vm3193, %v3207, %v3210
        %v3212 = vrot.slane %v3210, 4
        %v3214 = vshrl.u32 %v3163, 16
        %v3216 = vrot.slane %v3214, 5
        %v3217 = vshll.u32 %v3163, 16
        %v3219 = vrot.slane %v3217, 6
        %v3220 = vor.u32 %v3216, %v3219
        %v3221 = vsel %vm3193, %v3212, %v3220
        %v3223 = vshrl.u32 %v2576, 16
        %v3225 = vrot.slane %v3223, 5
        %v3226 = vshll.u32 %v2576, 16
        %v3228 = vrot.slane %v3226, 6
        %v3229 = vor.u32 %v3225, %v3228
        %v3230 = vrot.slane %v3229, 4
        %v3231 = vrot.slane %v1503, 5
        %v3232 = vrot.slane %v1499, 6
        %v3233 = vor.u32 %v3231, %v3232
        %v3234 = vsel %vm3193, %v3230, %v3233
        %v3235 = vrot.slane %v3233, 4
        %v3236 = vrot.slane %v1513, 5
        %v3237 = vrot.slane %v1509, 6
        %v3238 = vor.u32 %v3236, %v3237
        %v3239 = vsel %vm3193, %v3235, %v3238
        %v3240 = vrot.slane %v3238, 4
        %v3242 = vshrl.u32 %v3164, 16
        %v3244 = vrot.slane %v3242, 5
        %v3245 = vshll.u32 %v3164, 16
        %v3247 = vrot.slane %v3245, 6
        %v3248 = vor.u32 %v3244, %v3247
        %v3249 = vsel %vm3193, %v3240, %v3248
        %v3251 = vshrl.u32 %v2577, 16
        %v3253 = vrot.slane %v3251, 5
        %v3254 = vshll.u32 %v2577, 16
        %v3256 = vrot.slane %v3254, 6
        %v3257 = vor.u32 %v3253, %v3256
        %v3258 = vrot.slane %v3257, 4
        %v3259 = vrot.slane %v1537, 5
        %v3260 = vrot.slane %v1533, 6
        %v3261 = vor.u32 %v3259, %v3260
        %v3262 = vsel %vm3193, %v3258, %v3261
        %v3263 = vrot.slane %v3261, 4
        %v3264 = vrot.slane %v1547, 5
        %v3265 = vrot.slane %v1543, 6
        %v3266 = vor.u32 %v3264, %v3265
        %v3267 = vsel %vm3193, %v3263, %v3266
        %v3268 = vrot.slane %v3266, 4
        %v3270 = vshrl.u32 %v3165, 16
        %v3272 = vrot.slane %v3270, 5
        %v3273 = vshll.u32 %v3165, 16
        %v3275 = vrot.slane %v3273, 6
        %v3276 = vor.u32 %v3272, %v3275
        %v3277 = vsel %vm3193, %v3268, %v3276
        %v3279 = vshrl.u32 %v2578, 16
        %v3281 = vrot.slane %v3279, 5
        %v3282 = vshll.u32 %v2578, 16
        %v3284 = vrot.slane %v3282, 6
        %v3285 = vor.u32 %v3281, %v3284
        %v3286 = vrot.slane %v3285, 4
        %v3287 = vrot.slane %v1571, 5
        %v3288 = vrot.slane %v1567, 6
        %v3289 = vor.u32 %v3287, %v3288
        %v3290 = vsel %vm3193, %v3286, %v3289
        %v3291 = vrot.slane %v3289, 4
        %v3292 = vrot.slane %v1581, 5
        %v3293 = vrot.slane %v1577, 6
        %v3294 = vor.u32 %v3292, %v3293
        %v3295 = vsel %vm3193, %v3291, %v3294
        %v3296 = vrot.slane %v3294, 4
        %v3298 = vshrl.u32 %v3166, 16
        %v3300 = vrot.slane %v3298, 5
        %v3301 = vshll.u32 %v3166, 16
        %v3303 = vrot.slane %v3301, 6
        %v3304 = vor.u32 %v3300, %v3303
        %v3305 = vsel %vm3193, %v3296, %v3304
        %v3307 = vshrl.u32 %v2579, 16
        %v3309 = vrot.slane %v3307, 5
        %v3310 = vshll.u32 %v2579, 16
        %v3312 = vrot.slane %v3310, 6
        %v3313 = vor.u32 %v3309, %v3312
        %v3314 = vrot.slane %v3313, 4
        %v3315 = vrot.slane %v1605, 5
        %v3316 = vrot.slane %v1601, 6
        %v3317 = vor.u32 %v3315, %v3316
        %v3318 = vsel %vm3193, %v3314, %v3317
        %v3319 = vrot.slane %v3317, 4
        %v3320 = vrot.slane %v1615, 5
        %v3321 = vrot.slane %v1611, 6
        %v3322 = vor.u32 %v3320, %v3321
        %v3323 = vsel %vm3193, %v3319, %v3322
        %v3324 = vrot.slane %v3322, 4
        %v3326 = vshrl.u32 %v3167, 16
        %v3328 = vrot.slane %v3326, 5
        %v3329 = vshll.u32 %v3167, 16
        %v3331 = vrot.slane %v3329, 6
        %v3332 = vor.u32 %v3328, %v3331
        %v3333 = vsel %vm3193, %v3324, %v3332
        %v3335 = vshrl.u32 %v2580, 16
        %v3337 = vrot.slane %v3335, 5
        %v3338 = vshll.u32 %v2580, 16
        %v3340 = vrot.slane %v3338, 6
        %v3341 = vor.u32 %v3337, %v3340
        %v3342 = vrot.slane %v3341, 4
        %v3343 = vrot.slane %v1639, 5
        %v3344 = vrot.slane %v1635, 6
        %v3345 = vor.u32 %v3343, %v3344
        %v3346 = vsel %vm3193, %v3342, %v3345
        %v3347 = vrot.slane %v3345, 4
        %v3348 = vrot.slane %v1649, 5
        %v3349 = vrot.slane %v1645, 6
        %v3350 = vor.u32 %v3348, %v3349
        %v3351 = vsel %vm3193, %v3347, %v3350
        %v3352 = vrot.slane %v3350, 4
        %v3354 = vshrl.u32 %v3168, 16
        %v3356 = vrot.slane %v3354, 5
        %v3357 = vshll.u32 %v3168, 16
        %v3359 = vrot.slane %v3357, 6
        %v3360 = vor.u32 %v3356, %v3359
        %v3361 = vsel %vm3193, %v3352, %v3360
        %v3363 = vshrl.u32 %v2581, 16
        %v3365 = vrot.slane %v3363, 5
        %v3366 = vshll.u32 %v2581, 16
        %v3368 = vrot.slane %v3366, 6
        %v3369 = vor.u32 %v3365, %v3368
        %v3370 = vrot.slane %v3369, 4
        %v3371 = vrot.slane %v1673, 5
        %v3372 = vrot.slane %v1669, 6
        %v3373 = vor.u32 %v3371, %v3372
        %v3374 = vsel %vm3193, %v3370, %v3373
        %v3375 = vrot.slane %v3373, 4
        %v3376 = vrot.slane %v1683, 5
        %v3377 = vrot.slane %v1679, 6
        %v3378 = vor.u32 %v3376, %v3377
        %v3379 = vsel %vm3193, %v3375, %v3378
        %v3380 = vrot.slane %v3378, 4
        %v3382 = vshrl.u32 %v3169, 16
        %v3384 = vrot.slane %v3382, 5
        %v3385 = vshll.u32 %v3169, 16
        %v3387 = vrot.slane %v3385, 6
        %v3388 = vor.u32 %v3384, %v3387
        %v3389 = vsel %vm3193, %v3380, %v3388
        %v3391 = vshrl.u32 %v2582, 16
        %v3393 = vrot.slane %v3391, 5
        %v3394 = vshll.u32 %v2582, 16
        %v3396 = vrot.slane %v3394, 6
        %v3397 = vor.u32 %v3393, %v3396
        %v3398 = vrot.slane %v3397, 4
        %v3399 = vrot.slane %v1707, 5
        %v3400 = vrot.slane %v1703, 6
        %v3401 = vor.u32 %v3399, %v3400
        %v3402 = vsel %vm3193, %v3398, %v3401
        %v3403 = vrot.slane %v3401, 4
        %v3404 = vrot.slane %v1717, 5
        %v3405 = vrot.slane %v1713, 6
        %v3406 = vor.u32 %v3404, %v3405
        %v3407 = vsel %vm3193, %v3403, %v3406
        %v3408 = vrot.slane %v3406, 4
        %v3410 = vshrl.u32 %v3170, 16
        %v3412 = vrot.slane %v3410, 5
        %v3413 = vshll.u32 %v3170, 16
        %v3415 = vrot.slane %v3413, 6
        %v3416 = vor.u32 %v3412, %v3415
        %v3417 = vsel %vm3193, %v3408, %v3416
        %v3419 = vshrl.u32 %v2583, 16
        %v3421 = vrot.slane %v3419, 5
        %v3422 = vshll.u32 %v2583, 16
        %v3424 = vrot.slane %v3422, 6
        %v3425 = vor.u32 %v3421, %v3424
        %v3426 = vrot.slane %v3425, 4
        %v3427 = vrot.slane %v1741, 5
        %v3428 = vrot.slane %v1737, 6
        %v3429 = vor.u32 %v3427, %v3428
        %v3430 = vsel %vm3193, %v3426, %v3429
        %v3431 = vrot.slane %v3429, 4
        %v3432 = vrot.slane %v1751, 5
        %v3433 = vrot.slane %v1747, 6
        %v3434 = vor.u32 %v3432, %v3433
        %v3435 = vsel %vm3193, %v3431, %v3434
        %v3436 = vrot.slane %v3434, 4
        %v3438 = vshrl.u32 %v3171, 16
        %v3440 = vrot.slane %v3438, 5
        %v3441 = vshll.u32 %v3171, 16
        %v3443 = vrot.slane %v3441, 6
        %v3444 = vor.u32 %v3440, %v3443
        %v3445 = vsel %vm3193, %v3436, %v3444
        %v3447 = vshrl.u32 %v2584, 16
        %v3449 = vrot.slane %v3447, 5
        %v3450 = vshll.u32 %v2584, 16
        %v3452 = vrot.slane %v3450, 6
        %v3453 = vor.u32 %v3449, %v3452
        %v3454 = vrot.slane %v3453, 4
        %v3455 = vrot.slane %v1775, 5
        %v3456 = vrot.slane %v1771, 6
        %v3457 = vor.u32 %v3455, %v3456
        %v3458 = vsel %vm3193, %v3454, %v3457
        %v3459 = vrot.slane %v3457, 4
        %v3460 = vrot.slane %v1785, 5
        %v3461 = vrot.slane %v1781, 6
        %v3462 = vor.u32 %v3460, %v3461
        %v3463 = vsel %vm3193, %v3459, %v3462
        %v3464 = vrot.slane %v3462, 4
        %v3466 = vshrl.u32 %v3172, 16
        %v3468 = vrot.slane %v3466, 5
        %v3469 = vshll.u32 %v3172, 16
        %v3471 = vrot.slane %v3469, 6
        %v3472 = vor.u32 %v3468, %v3471
        %v3473 = vsel %vm3193, %v3464, %v3472
        %v3475 = vshrl.u32 %v2585, 16
        %v3477 = vrot.slane %v3475, 5
        %v3478 = vshll.u32 %v2585, 16
        %v3480 = vrot.slane %v3478, 6
        %v3481 = vor.u32 %v3477, %v3480
        %v3482 = vrot.slane %v3481, 4
        %v3483 = vrot.slane %v1809, 5
        %v3484 = vrot.slane %v1805, 6
        %v3485 = vor.u32 %v3483, %v3484
        %v3486 = vsel %vm3193, %v3482, %v3485
        %v3487 = vrot.slane %v3485, 4
        %v3488 = vrot.slane %v1819, 5
        %v3489 = vrot.slane %v1815, 6
        %v3490 = vor.u32 %v3488, %v3489
        %v3491 = vsel %vm3193, %v3487, %v3490
        %v3492 = vrot.slane %v3490, 4
        %v3494 = vshrl.u32 %v3173, 16
        %v3496 = vrot.slane %v3494, 5
        %v3497 = vshll.u32 %v3173, 16
        %v3499 = vrot.slane %v3497, 6
        %v3500 = vor.u32 %v3496, %v3499
        %v3501 = vsel %vm3193, %v3492, %v3500
        %v3503 = vshrl.u32 %v2586, 16
        %v3505 = vrot.slane %v3503, 5
        %v3506 = vshll.u32 %v2586, 16
        %v3508 = vrot.slane %v3506, 6
        %v3509 = vor.u32 %v3505, %v3508
        %v3510 = vrot.slane %v3509, 4
        %v3511 = vrot.slane %v1843, 5
        %v3512 = vrot.slane %v1839, 6
        %v3513 = vor.u32 %v3511, %v3512
        %v3514 = vsel %vm3193, %v3510, %v3513
        %v3515 = vrot.slane %v3513, 4
        %v3516 = vrot.slane %v1853, 5
        %v3517 = vrot.slane %v1849, 6
        %v3518 = vor.u32 %v3516, %v3517
        %v3519 = vsel %vm3193, %v3515, %v3518
        %v3520 = vrot.slane %v3518, 4
        %v3522 = vshrl.u32 %v3174, 16
        %v3524 = vrot.slane %v3522, 5
        %v3525 = vshll.u32 %v3174, 16
        %v3527 = vrot.slane %v3525, 6
        %v3528 = vor.u32 %v3524, %v3527
        %v3529 = vsel %vm3193, %v3520, %v3528
        %v3531 = vshrl.u32 %v2587, 16
        %v3533 = vrot.slane %v3531, 5
        %v3534 = vshll.u32 %v2587, 16
        %v3536 = vrot.slane %v3534, 6
        %v3537 = vor.u32 %v3533, %v3536
        %v3538 = vrot.slane %v3537, 4
        %v3539 = vrot.slane %v1877, 5
        %v3540 = vrot.slane %v1873, 6
        %v3541 = vor.u32 %v3539, %v3540
        %v3542 = vsel %vm3193, %v3538, %v3541
        %v3543 = vrot.slane %v3541, 4
        %v3544 = vrot.slane %v1887, 5
        %v3545 = vrot.slane %v1883, 6
        %v3546 = vor.u32 %v3544, %v3545
        %v3547 = vsel %vm3193, %v3543, %v3546
        %v3548 = vrot.slane %v3546, 4
        %v3550 = vshrl.u32 %v3175, 16
        %v3552 = vrot.slane %v3550, 5
        %v3553 = vshll.u32 %v3175, 16
        %v3555 = vrot.slane %v3553, 6
        %v3556 = vor.u32 %v3552, %v3555
        %v3557 = vsel %vm3193, %v3548, %v3556
        %v3559 = vshrl.u32 %v2588, 16
        %v3561 = vrot.slane %v3559, 5
        %v3562 = vshll.u32 %v2588, 16
        %v3564 = vrot.slane %v3562, 6
        %v3565 = vor.u32 %v3561, %v3564
        %v3566 = vrot.slane %v3565, 4
        %v3567 = vrot.slane %v1911, 5
        %v3568 = vrot.slane %v1907, 6
        %v3569 = vor.u32 %v3567, %v3568
        %v3570 = vsel %vm3193, %v3566, %v3569
        %v3571 = vrot.slane %v3569, 4
        %v3572 = vrot.slane %v1921, 5
        %v3573 = vrot.slane %v1917, 6
        %v3574 = vor.u32 %v3572, %v3573
        %v3575 = vsel %vm3193, %v3571, %v3574
        %v3576 = vrot.slane %v3574, 4
        %v3578 = vshrl.u32 %v3176, 16
        %v3580 = vrot.slane %v3578, 5
        %v3581 = vshll.u32 %v3176, 16
        %v3583 = vrot.slane %v3581, 6
        %v3584 = vor.u32 %v3580, %v3583
        %v3585 = vsel %vm3193, %v3576, %v3584
        %v3587 = vshrl.u32 %v2589, 16
        %v3589 = vrot.slane %v3587, 5
        %v3590 = vshll.u32 %v2589, 16
        %v3592 = vrot.slane %v3590, 6
        %v3593 = vor.u32 %v3589, %v3592
        %v3594 = vrot.slane %v3593, 4
        %v3595 = vrot.slane %v1945, 5
        %v3596 = vrot.slane %v1941, 6
        %v3597 = vor.u32 %v3595, %v3596
        %v3598 = vsel %vm3193, %v3594, %v3597
        %v3599 = vrot.slane %v3597, 4
        %v3600 = vrot.slane %v1955, 5
        %v3601 = vrot.slane %v1951, 6
        %v3602 = vor.u32 %v3600, %v3601
        %v3603 = vsel %vm3193, %v3599, %v3602
        %v3604 = vrot.slane %v3602, 4
        %v3606 = vshrl.u32 %v3177, 16
        %v3608 = vrot.slane %v3606, 5
        %v3609 = vshll.u32 %v3177, 16
        %v3611 = vrot.slane %v3609, 6
        %v3612 = vor.u32 %v3608, %v3611
        %v3613 = vsel %vm3193, %v3604, %v3612
        %v3615 = vshrl.u32 %v2590, 16
        %v3617 = vrot.slane %v3615, 5
        %v3618 = vshll.u32 %v2590, 16
        %v3620 = vrot.slane %v3618, 6
        %v3621 = vor.u32 %v3617, %v3620
        %v3622 = vrot.slane %v3621, 4
        %v3623 = vrot.slane %v1979, 5
        %v3624 = vrot.slane %v1975, 6
        %v3625 = vor.u32 %v3623, %v3624
        %v3626 = vsel %vm3193, %v3622, %v3625
        %v3627 = vrot.slane %v3625, 4
        %v3628 = vrot.slane %v1989, 5
        %v3629 = vrot.slane %v1985, 6
        %v3630 = vor.u32 %v3628, %v3629
        %v3631 = vsel %vm3193, %v3627, %v3630
        %v3632 = vrot.slane %v3630, 4
        %v3634 = vshrl.u32 %v3178, 16
        %v3636 = vrot.slane %v3634, 5
        %v3637 = vshll.u32 %v3178, 16
        %v3639 = vrot.slane %v3637, 6
        %v3640 = vor.u32 %v3636, %v3639
        %v3641 = vsel %vm3193, %v3632, %v3640
        %v3643 = vshrl.u32 %v2591, 16
        %v3645 = vrot.slane %v3643, 5
        %v3646 = vshll.u32 %v2591, 16
        %v3648 = vrot.slane %v3646, 6
        %v3649 = vor.u32 %v3645, %v3648
        %v3650 = vrot.slane %v3649, 4
        %v3651 = vrot.slane %v2013, 5
        %v3652 = vrot.slane %v2009, 6
        %v3653 = vor.u32 %v3651, %v3652
        %v3654 = vsel %vm3193, %v3650, %v3653
        %v3655 = vrot.slane %v3653, 4
        %v3656 = vrot.slane %v2023, 5
        %v3657 = vrot.slane %v2019, 6
        %v3658 = vor.u32 %v3656, %v3657
        %v3659 = vsel %vm3193, %v3655, %v3658
        %v3660 = vrot.slane %v3658, 4
        %v3662 = vshrl.u32 %v3179, 16
        %v3664 = vrot.slane %v3662, 5
        %v3665 = vshll.u32 %v3179, 16
        %v3667 = vrot.slane %v3665, 6
        %v3668 = vor.u32 %v3664, %v3667
        %v3669 = vsel %vm3193, %v3660, %v3668
        %v3671 = vshrl.u32 %v2592, 16
        %v3673 = vrot.slane %v3671, 5
        %v3674 = vshll.u32 %v2592, 16
        %v3676 = vrot.slane %v3674, 6
        %v3677 = vor.u32 %v3673, %v3676
        %v3678 = vrot.slane %v3677, 4
        %v3679 = vrot.slane %v2047, 5
        %v3680 = vrot.slane %v2043, 6
        %v3681 = vor.u32 %v3679, %v3680
        %v3682 = vsel %vm3193, %v3678, %v3681
        %v3683 = vrot.slane %v3681, 4
        %v3684 = vrot.slane %v2057, 5
        %v3685 = vrot.slane %v2053, 6
        %v3686 = vor.u32 %v3684, %v3685
        %v3687 = vsel %vm3193, %v3683, %v3686
        %v3688 = vrot.slane %v3686, 4
        %v3690 = vshrl.u32 %v3180, 16
        %v3692 = vrot.slane %v3690, 5
        %v3693 = vshll.u32 %v3180, 16
        %v3695 = vrot.slane %v3693, 6
        %v3696 = vor.u32 %v3692, %v3695
        %v3697 = vsel %vm3193, %v3688, %v3696
        %v3699 = vshrl.u32 %v2593, 16
        %v3701 = vrot.slane %v3699, 5
        %v3702 = vshll.u32 %v2593, 16
        %v3704 = vrot.slane %v3702, 6
        %v3705 = vor.u32 %v3701, %v3704
        %v3706 = vrot.slane %v3705, 4
        %v3707 = vrot.slane %v2081, 5
        %v3708 = vrot.slane %v2077, 6
        %v3709 = vor.u32 %v3707, %v3708
        %v3710 = vsel %vm3193, %v3706, %v3709
        %v3711 = vrot.slane %v3709, 4
        %v3712 = vrot.slane %v2091, 5
        %v3713 = vrot.slane %v2087, 6
        %v3714 = vor.u32 %v3712, %v3713
        %v3715 = vsel %vm3193, %v3711, %v3714
        %v3716 = vrot.slane %v3714, 4
        %v3718 = vshrl.u32 %v3181, 16
        %v3720 = vrot.slane %v3718, 5
        %v3721 = vshll.u32 %v3181, 16
        %v3723 = vrot.slane %v3721, 6
        %v3724 = vor.u32 %v3720, %v3723
        %v3725 = vsel %vm3193, %v3716, %v3724
        %v3727 = vshrl.u32 %v2594, 16
        %v3729 = vrot.slane %v3727, 5
        %v3730 = vshll.u32 %v2594, 16
        %v3732 = vrot.slane %v3730, 6
        %v3733 = vor.u32 %v3729, %v3732
        %v3734 = vrot.slane %v3733, 4
        %v3735 = vrot.slane %v2115, 5
        %v3736 = vrot.slane %v2111, 6
        %v3737 = vor.u32 %v3735, %v3736
        %v3738 = vsel %vm3193, %v3734, %v3737
        %v3739 = vrot.slane %v3737, 4
        %v3740 = vrot.slane %v2125, 5
        %v3741 = vrot.slane %v2121, 6
        %v3742 = vor.u32 %v3740, %v3741
        %v3743 = vsel %vm3193, %v3739, %v3742
        %v3744 = vrot.slane %v3742, 4
        %v3746 = vshrl.u32 %v3182, 16
        %v3748 = vrot.slane %v3746, 5
        %v3749 = vshll.u32 %v3182, 16
        %v3751 = vrot.slane %v3749, 6
        %v3752 = vor.u32 %v3748, %v3751
        %v3753 = vsel %vm3193, %v3744, %v3752
        %v3755 = vshrl.u32 %v2595, 16
        %v3757 = vrot.slane %v3755, 5
        %v3758 = vshll.u32 %v2595, 16
        %v3760 = vrot.slane %v3758, 6
        %v3761 = vor.u32 %v3757, %v3760
        %v3762 = vrot.slane %v3761, 4
        %v3763 = vrot.slane %v2149, 5
        %v3764 = vrot.slane %v2145, 6
        %v3765 = vor.u32 %v3763, %v3764
        %v3766 = vsel %vm3193, %v3762, %v3765
        %v3767 = vrot.slane %v3765, 4
        %v3768 = vrot.slane %v2159, 5
        %v3769 = vrot.slane %v2155, 6
        %v3770 = vor.u32 %v3768, %v3769
        %v3771 = vsel %vm3193, %v3767, %v3770
        %v3772 = vrot.slane %v3770, 4
        %v3774 = vshrl.u32 %v3183, 16
        %v3776 = vrot.slane %v3774, 5
        %v3777 = vshll.u32 %v3183, 16
        %v3779 = vrot.slane %v3777, 6
        %v3780 = vor.u32 %v3776, %v3779
        %v3781 = vsel %vm3193, %v3772, %v3780
        %v3783 = vshrl.u32 %v2596, 16
        %v3785 = vrot.slane %v3783, 5
        %v3786 = vshll.u32 %v2596, 16
        %v3788 = vrot.slane %v3786, 6
        %v3789 = vor.u32 %v3785, %v3788
        %v3790 = vrot.slane %v3789, 4
        %v3791 = vrot.slane %v2183, 5
        %v3792 = vrot.slane %v2179, 6
        %v3793 = vor.u32 %v3791, %v3792
        %v3794 = vsel %vm3193, %v3790, %v3793
        %v3795 = vrot.slane %v3793, 4
        %v3796 = vrot.slane %v2193, 5
        %v3797 = vrot.slane %v2189, 6
        %v3798 = vor.u32 %v3796, %v3797
        %v3799 = vsel %vm3193, %v3795, %v3798
        %v3800 = vrot.slane %v3798, 4
        %v3802 = vshrl.u32 %v3184, 16
        %v3804 = vrot.slane %v3802, 5
        %v3805 = vshll.u32 %v3184, 16
        %v3807 = vrot.slane %v3805, 6
        %v3808 = vor.u32 %v3804, %v3807
        %v3809 = vsel %vm3193, %v3800, %v3808
        %v3811 = vshrl.u32 %v2597, 16
        %v3813 = vrot.slane %v3811, 5
        %v3814 = vshll.u32 %v2597, 16
        %v3816 = vrot.slane %v3814, 6
        %v3817 = vor.u32 %v3813, %v3816
        %v3818 = vrot.slane %v3817, 4
        %v3819 = vrot.slane %v2217, 5
        %v3820 = vrot.slane %v2213, 6
        %v3821 = vor.u32 %v3819, %v3820
        %v3822 = vsel %vm3193, %v3818, %v3821
        %v3823 = vrot.slane %v3821, 4
        %v3824 = vrot.slane %v2227, 5
        %v3825 = vrot.slane %v2223, 6
        %v3826 = vor.u32 %v3824, %v3825
        %v3827 = vsel %vm3193, %v3823, %v3826
        %v3828 = vrot.slane %v3826, 4
        %v3830 = vshrl.u32 %v3185, 16
        %v3832 = vrot.slane %v3830, 5
        %v3833 = vshll.u32 %v3185, 16
        %v3835 = vrot.slane %v3833, 6
        %v3836 = vor.u32 %v3832, %v3835
        %v3837 = vsel %vm3193, %v3828, %v3836
        %v3839 = vshrl.u32 %v2598, 16
        %v3841 = vrot.slane %v3839, 5
        %v3842 = vshll.u32 %v2598, 16
        %v3844 = vrot.slane %v3842, 6
        %v3845 = vor.u32 %v3841, %v3844
        %v3846 = vrot.slane %v3845, 4
        %v3847 = vrot.slane %v2251, 5
        %v3848 = vrot.slane %v2247, 6
        %v3849 = vor.u32 %v3847, %v3848
        %v3850 = vsel %vm3193, %v3846, %v3849
        %v3851 = vrot.slane %v3849, 4
        %v3852 = vrot.slane %v2261, 5
        %v3853 = vrot.slane %v2257, 6
        %v3854 = vor.u32 %v3852, %v3853
        %v3855 = vsel %vm3193, %v3851, %v3854
        %v3856 = vrot.slane %v3854, 4
        %v3858 = vshrl.u32 %v3186, 16
        %v3860 = vrot.slane %v3858, 5
        %v3861 = vshll.u32 %v3186, 16
        %v3863 = vrot.slane %v3861, 6
        %v3864 = vor.u32 %v3860, %v3863
        %v3865 = vsel %vm3193, %v3856, %v3864
        %v3867 = vshrl.u32 %v2599, 16
        %v3869 = vrot.slane %v3867, 5
        %v3870 = vshll.u32 %v2599, 16
        %v3872 = vrot.slane %v3870, 6
        %v3873 = vor.u32 %v3869, %v3872
        %v3874 = vrot.slane %v3873, 4
        %v3875 = vrot.slane %v2285, 5
        %v3876 = vrot.slane %v2281, 6
        %v3877 = vor.u32 %v3875, %v3876
        %v3878 = vsel %vm3193, %v3874, %v3877
        %v3879 = vrot.slane %v3877, 4
        %v3880 = vrot.slane %v2295, 5
        %v3881 = vrot.slane %v2291, 6
        %v3882 = vor.u32 %v3880, %v3881
        %v3883 = vsel %vm3193, %v3879, %v3882
        %v3884 = vrot.slane %v3882, 4
        %v3886 = vshrl.u32 %v3187, 16
        %v3888 = vrot.slane %v3886, 5
        %v3889 = vshll.u32 %v3187, 16
        %v3891 = vrot.slane %v3889, 6
        %v3892 = vor.u32 %v3888, %v3891
        %v3893 = vsel %vm3193, %v3884, %v3892
        %v3895 = vshrl.u32 %v2600, 16
        %v3897 = vrot.slane %v3895, 5
        %v3898 = vshll.u32 %v2600, 16
        %v3900 = vrot.slane %v3898, 6
        %v3901 = vor.u32 %v3897, %v3900
        %v3902 = vrot.slane %v3901, 4
        %v3903 = vrot.slane %v2319, 5
        %v3904 = vrot.slane %v2315, 6
        %v3905 = vor.u32 %v3903, %v3904
        %v3906 = vsel %vm3193, %v3902, %v3905
        %v3907 = vrot.slane %v3905, 4
        %v3908 = vrot.slane %v2329, 5
        %v3909 = vrot.slane %v2325, 6
        %v3910 = vor.u32 %v3908, %v3909
        %v3911 = vsel %vm3193, %v3907, %v3910
        %v3912 = vrot.slane %v3910, 4
        %v3914 = vshrl.u32 %v3188, 16
        %v3916 = vrot.slane %v3914, 5
        %v3917 = vshll.u32 %v3188, 16
        %v3919 = vrot.slane %v3917, 6
        %v3920 = vor.u32 %v3916, %v3919
        %v3921 = vsel %vm3193, %v3912, %v3920
        %v3923 = vshrl.u32 %v2601, 16
        %v3925 = vrot.slane %v3923, 5
        %v3926 = vshll.u32 %v2601, 16
        %v3928 = vrot.slane %v3926, 6
        %v3929 = vor.u32 %v3925, %v3928
        %v3930 = vrot.slane %v3929, 4
        %v3931 = vrot.slane %v2353, 5
        %v3932 = vrot.slane %v2349, 6
        %v3933 = vor.u32 %v3931, %v3932
        %v3934 = vsel %vm3193, %v3930, %v3933
        %v3935 = vrot.slane %v3933, 4
        %v3936 = vrot.slane %v2363, 5
        %v3937 = vrot.slane %v2359, 6
        %v3938 = vor.u32 %v3936, %v3937
        %v3939 = vsel %vm3193, %v3935, %v3938
        %v3940 = vrot.slane %v3938, 4
        %v3942 = vshrl.u32 %v3189, 16
        %v3944 = vrot.slane %v3942, 5
        %v3945 = vshll.u32 %v3189, 16
        %v3947 = vrot.slane %v3945, 6
        %v3948 = vor.u32 %v3944, %v3947
        %v3949 = vsel %vm3193, %v3940, %v3948
        %v3951 = vshrl.u32 %v2602, 16
        %v3953 = vrot.slane %v3951, 5
        %v3954 = vshll.u32 %v2602, 16
        %v3956 = vrot.slane %v3954, 6
        %v3957 = vor.u32 %v3953, %v3956
        %v3958 = vrot.slane %v3957, 4
        %v3959 = vrot.slane %v2387, 5
        %v3960 = vrot.slane %v2383, 6
        %v3961 = vor.u32 %v3959, %v3960
        %v3962 = vsel %vm3193, %v3958, %v3961
        %v3963 = vrot.slane %v3961, 4
        %v3964 = vrot.slane %v2397, 5
        %v3965 = vrot.slane %v2393, 6
        %v3966 = vor.u32 %v3964, %v3965
        %v3967 = vsel %vm3193, %v3963, %v3966
        %v3968 = vrot.slane %v3966, 4
        %v3970 = vshrl.u32 %v3190, 16
        %v3972 = vrot.slane %v3970, 5
        %v3973 = vshll.u32 %v3190, 16
        %v3975 = vrot.slane %v3973, 6
        %v3976 = vor.u32 %v3972, %v3975
        %v3977 = vsel %vm3193, %v3968, %v3976
        %v4062 = vmax.bf16 %v3079, %v3206
        %v4063 = vmax.bf16 %v3080, %v3211
        %v4064 = vmax.bf16 %v3081, %v3221
        %v4065 = vmax.bf16 %v3082, %v3234
        %v4066 = vmax.bf16 %v3083, %v3239
        %v4067 = vmax.bf16 %v3084, %v3249
        %v4068 = vmax.bf16 %v3085, %v3262
        %v4069 = vmax.bf16 %v3086, %v3267
        %v4070 = vmax.bf16 %v3087, %v3277
        %v4071 = vmax.bf16 %v3088, %v3290
        %v4072 = vmax.bf16 %v3089, %v3295
        %v4073 = vmax.bf16 %v3090, %v3305
        %v4074 = vmax.bf16 %v3091, %v3318
        %v4075 = vmax.bf16 %v3092, %v3323
        %v4076 = vmax.bf16 %v3093, %v3333
        %v4077 = vmax.bf16 %v3094, %v3346
        %v4078 = vmax.bf16 %v3095, %v3351
        %v4079 = vmax.bf16 %v3096, %v3361
        %v4080 = vmax.bf16 %v3097, %v3374
        %v4081 = vmax.bf16 %v3098, %v3379
        %v4082 = vmax.bf16 %v3099, %v3389
        %v4083 = vmax.bf16 %v3100, %v3402
        %v4084 = vmax.bf16 %v3101, %v3407
        %v4085 = vmax.bf16 %v3102, %v3417
        %v4086 = vmax.bf16 %v3103, %v3430
        %v4087 = vmax.bf16 %v3104, %v3435
        %v4088 = vmax.bf16 %v3105, %v3445
        %v4089 = vmax.bf16 %v3106, %v3458
        %v4090 = vmax.bf16 %v3107, %v3463
        %v4091 = vmax.bf16 %v3108, %v3473
        %v4092 = vmax.bf16 %v3109, %v3486
        %v4093 = vmax.bf16 %v3110, %v3491
        %v4094 = vmax.bf16 %v3111, %v3501
        %v4095 = vmax.bf16 %v3112, %v3514
        %v4096 = vmax.bf16 %v3113, %v3519
        %v4097 = vmax.bf16 %v3114, %v3529
        %v4098 = vmax.bf16 %v3115, %v3542
        %v4099 = vmax.bf16 %v3116, %v3547
        %v4100 = vmax.bf16 %v3117, %v3557
        %v4101 = vmax.bf16 %v3118, %v3570
        %v4102 = vmax.bf16 %v3119, %v3575
        %v4103 = vmax.bf16 %v3120, %v3585
        %v4104 = vmax.bf16 %v3121, %v3598
        %v4105 = vmax.bf16 %v3122, %v3603
        %v4106 = vmax.bf16 %v3123, %v3613
        %v4107 = vmax.bf16 %v3124, %v3626
        %v4108 = vmax.bf16 %v3125, %v3631
        %v4109 = vmax.bf16 %v3126, %v3641
        %v4110 = vmax.bf16 %v3127, %v3654
        %v4111 = vmax.bf16 %v3128, %v3659
        %v4112 = vmax.bf16 %v3129, %v3669
        %v4113 = vmax.bf16 %v3130, %v3682
        %v4114 = vmax.bf16 %v3131, %v3687
        %v4115 = vmax.bf16 %v3132, %v3697
        %v4116 = vmax.bf16 %v3133, %v3710
        %v4117 = vmax.bf16 %v3134, %v3715
        %v4118 = vmax.bf16 %v3135, %v3725
        %v4119 = vmax.bf16 %v3136, %v3738
        %v4120 = vmax.bf16 %v3137, %v3743
        %v4121 = vmax.bf16 %v3138, %v3753
        %v4122 = vmax.bf16 %v3139, %v3766
        %v4123 = vmax.bf16 %v3140, %v3771
        %v4124 = vmax.bf16 %v3141, %v3781
        %v4125 = vmax.bf16 %v3142, %v3794
        %v4126 = vmax.bf16 %v3143, %v3799
        %v4127 = vmax.bf16 %v3144, %v3809
        %v4128 = vmax.bf16 %v3145, %v3822
        %v4129 = vmax.bf16 %v3146, %v3827
        %v4130 = vmax.bf16 %v3147, %v3837
        %v4131 = vmax.bf16 %v3148, %v3850
        %v4132 = vmax.bf16 %v3149, %v3855
        %v4133 = vmax.bf16 %v3150, %v3865
        %v4134 = vmax.bf16 %v3151, %v3878
        %v4135 = vmax.bf16 %v3152, %v3883
        %v4136 = vmax.bf16 %v3153, %v3893
        %v4137 = vmax.bf16 %v3154, %v3906
        %v4138 = vmax.bf16 %v3155, %v3911
        %v4139 = vmax.bf16 %v3156, %v3921
        %v4140 = vmax.bf16 %v3157, %v3934
        %v4141 = vmax.bf16 %v3158, %v3939
        %v4142 = vmax.bf16 %v3159, %v3949
        %v4143 = vmax.bf16 %v3160, %v3962
        %v4144 = vmax.bf16 %v3161, %v3967
        %v4145 = vmax.bf16 %v3162, %v3977
        %v4146 = vld [vmem:[#allocation2] sm:$0xc]
        %v4147 = vld [vmem:[#allocation2 + $0x10] sm:$0xc]
        %v4148 = vld [vmem:[#allocation2 + $0x20] sm:$0xc]
        %v4149 = vld [vmem:[#allocation2 + $0x30] sm:$0xc]
        %v4150 = vld [vmem:[#allocation2 + $0x40] sm:$0xc]
        %v4151 = vld [vmem:[#allocation2 + $0x50] sm:$0xc]
        %v4152 = vld [vmem:[#allocation2 + $0x60] sm:$0xc]
        %v4153 = vld [vmem:[#allocation2 + $0x70] sm:$0xc]
        %v4154 = vld [vmem:[#allocation2 + $0x80] sm:$0xc]
        %v4155 = vld [vmem:[#allocation2 + $0x90] sm:$0xc]
        %v4156 = vld [vmem:[#allocation2 + $0xa0] sm:$0xc]
        %v4157 = vld [vmem:[#allocation2 + $0xb0] sm:$0xc]
        %v4158 = vld [vmem:[#allocation2 + $0xc0] sm:$0xc]
        %v4159 = vld [vmem:[#allocation2 + $0xd0] sm:$0xc]
        %v4160 = vld [vmem:[#allocation2 + $0xe0] sm:$0xc]
        %v4161 = vld [vmem:[#allocation2 + $0xf0] sm:$0xc]
        %v4162 = vld [vmem:[#allocation2 + $0x100] sm:$0xc]
        %v4163 = vld [vmem:[#allocation2 + $0x110] sm:$0xc]
        %v4164 = vld [vmem:[#allocation2 + $0x120] sm:$0xc]
        %v4165 = vld [vmem:[#allocation2 + $0x130] sm:$0xc]
        %v4166 = vld [vmem:[#allocation2 + $0x140] sm:$0xc]
        %v4167 = vld [vmem:[#allocation2 + $0x150] sm:$0xc]
        %v4168 = vld [vmem:[#allocation2 + $0x160] sm:$0xc]
        %v4169 = vld [vmem:[#allocation2 + $0x170] sm:$0xc]
        %v4170 = vld [vmem:[#allocation2 + $0x180] sm:$0xc]
        %v4171 = vld [vmem:[#allocation2 + $0x190] sm:$0xc]
        %v4172 = vld [vmem:[#allocation2 + $0x1a0] sm:$0xc]
        %v4173 = vld [vmem:[#allocation2 + $0x1b0] sm:$0xc]
        %vm4230 = vcmask 1041408
        %vm4231 = vcmask 1045508
        %vm4232 = vmor %vm4230, %vm4231
        %v4233 = vrot.slane %v4146, 6
        %v4234 = vrot.slane %v4233, 4
        %v4235 = vrot.slane %v1341, 6
        %v4236 = vsel %vm4232, %v4234, %v4235
        %v4237 = vrot.slane %v4235, 4
        %v4238 = vrot.slane %v1342, 6
        %v4239 = vsel %vm4232, %v4237, %v4238
        %v4240 = vrot.slane %v4238, 4
        %v4241 = vrot.slane %v3163, 6
        %v4242 = vsel %vm4232, %v4240, %v4241
        %v4243 = vrot.slane %v4147, 6
        %v4244 = vrot.slane %v4243, 4
        %v4245 = vrot.slane %v1344, 6
        %v4246 = vsel %vm4232, %v4244, %v4245
        %v4247 = vrot.slane %v4245, 4
        %v4248 = vrot.slane %v1345, 6
        %v4249 = vsel %vm4232, %v4247, %v4248
        %v4250 = vrot.slane %v4248, 4
        %v4251 = vrot.slane %v3164, 6
        %v4252 = vsel %vm4232, %v4250, %v4251
        %v4253 = vrot.slane %v4148, 6
        %v4254 = vrot.slane %v4253, 4
        %v4255 = vrot.slane %v1347, 6
        %v4256 = vsel %vm4232, %v4254, %v4255
        %v4257 = vrot.slane %v4255, 4
        %v4258 = vrot.slane %v1348, 6
        %v4259 = vsel %vm4232, %v4257, %v4258
        %v4260 = vrot.slane %v4258, 4
        %v4261 = vrot.slane %v3165, 6
        %v4262 = vsel %vm4232, %v4260, %v4261
        %v4263 = vrot.slane %v4149, 6
        %v4264 = vrot.slane %v4263, 4
        %v4265 = vrot.slane %v1350, 6
        %v4266 = vsel %vm4232, %v4264, %v4265
        %v4267 = vrot.slane %v4265, 4
        %v4268 = vrot.slane %v1351, 6
        %v4269 = vsel %vm4232, %v4267, %v4268
        %v4270 = vrot.slane %v4268, 4
        %v4271 = vrot.slane %v3166, 6
        %v4272 = vsel %vm4232, %v4270, %v4271
        %v4273 = vrot.slane %v4150, 6
        %v4274 = vrot.slane %v4273, 4
        %v4275 = vrot.slane %v1353, 6
        %v4276 = vsel %vm4232, %v4274, %v4275
        %v4277 = vrot.slane %v4275, 4
        %v4278 = vrot.slane %v1354, 6
        %v4279 = vsel %vm4232, %v4277, %v4278
        %v4280 = vrot.slane %v4278, 4
        %v4281 = vrot.slane %v3167, 6
        %v4282 = vsel %vm4232, %v4280, %v4281
        %v4283 = vrot.slane %v4151, 6
        %v4284 = vrot.slane %v4283, 4
        %v4285 = vrot.slane %v1356, 6
        %v4286 = vsel %vm4232, %v4284, %v4285
        %v4287 = vrot.slane %v4285, 4
        %v4288 = vrot.slane %v1357, 6
        %v4289 = vsel %vm4232, %v4287, %v4288
        %v4290 = vrot.slane %v4288, 4
        %v4291 = vrot.slane %v3168, 6
        %v4292 = vsel %vm4232, %v4290, %v4291
        %v4293 = vrot.slane %v4152, 6
        %v4294 = vrot.slane %v4293, 4
        %v4295 = vrot.slane %v1359, 6
        %v4296 = vsel %vm4232, %v4294, %v4295
        %v4297 = vrot.slane %v4295, 4
        %v4298 = vrot.slane %v1360, 6
        %v4299 = vsel %vm4232, %v4297, %v4298
        %v4300 = vrot.slane %v4298, 4
        %v4301 = vrot.slane %v3169, 6
        %v4302 = vsel %vm4232, %v4300, %v4301
        %v4303 = vrot.slane %v4153, 6
        %v4304 = vrot.slane %v4303, 4
        %v4305 = vrot.slane %v1362, 6
        %v4306 = vsel %vm4232, %v4304, %v4305
        %v4307 = vrot.slane %v4305, 4
        %v4308 = vrot.slane %v1363, 6
        %v4309 = vsel %vm4232, %v4307, %v4308
        %v4310 = vrot.slane %v4308, 4
        %v4311 = vrot.slane %v3170, 6
        %v4312 = vsel %vm4232, %v4310, %v4311
        %v4313 = vrot.slane %v4154, 6
        %v4314 = vrot.slane %v4313, 4
        %v4315 = vrot.slane %v1365, 6
        %v4316 = vsel %vm4232, %v4314, %v4315
        %v4317 = vrot.slane %v4315, 4
        %v4318 = vrot.slane %v1366, 6
        %v4319 = vsel %vm4232, %v4317, %v4318
        %v4320 = vrot.slane %v4318, 4
        %v4321 = vrot.slane %v3171, 6
        %v4322 = vsel %vm4232, %v4320, %v4321
        %v4323 = vrot.slane %v4155, 6
        %v4324 = vrot.slane %v4323, 4
        %v4325 = vrot.slane %v1368, 6
        %v4326 = vsel %vm4232, %v4324, %v4325
        %v4327 = vrot.slane %v4325, 4
        %v4328 = vrot.slane %v1369, 6
        %v4329 = vsel %vm4232, %v4327, %v4328
        %v4330 = vrot.slane %v4328, 4
        %v4331 = vrot.slane %v3172, 6
        %v4332 = vsel %vm4232, %v4330, %v4331
        %v4333 = vrot.slane %v4156, 6
        %v4334 = vrot.slane %v4333, 4
        %v4335 = vrot.slane %v1371, 6
        %v4336 = vsel %vm4232, %v4334, %v4335
        %v4337 = vrot.slane %v4335, 4
        %v4338 = vrot.slane %v1372, 6
        %v4339 = vsel %vm4232, %v4337, %v4338
        %v4340 = vrot.slane %v4338, 4
        %v4341 = vrot.slane %v3173, 6
        %v4342 = vsel %vm4232, %v4340, %v4341
        %v4343 = vrot.slane %v4157, 6
        %v4344 = vrot.slane %v4343, 4
        %v4345 = vrot.slane %v1374, 6
        %v4346 = vsel %vm4232, %v4344, %v4345
        %v4347 = vrot.slane %v4345, 4
        %v4348 = vrot.slane %v1375, 6
        %v4349 = vsel %vm4232, %v4347, %v4348
        %v4350 = vrot.slane %v4348, 4
        %v4351 = vrot.slane %v3174, 6
        %v4352 = vsel %vm4232, %v4350, %v4351
        %v4353 = vrot.slane %v4158, 6
        %v4354 = vrot.slane %v4353, 4
        %v4355 = vrot.slane %v1377, 6
        %v4356 = vsel %vm4232, %v4354, %v4355
        %v4357 = vrot.slane %v4355, 4
        %v4358 = vrot.slane %v1378, 6
        %v4359 = vsel %vm4232, %v4357, %v4358
        %v4360 = vrot.slane %v4358, 4
        %v4361 = vrot.slane %v3175, 6
        %v4362 = vsel %vm4232, %v4360, %v4361
        %v4363 = vrot.slane %v4159, 6
        %v4364 = vrot.slane %v4363, 4
        %v4365 = vrot.slane %v1380, 6
        %v4366 = vsel %vm4232, %v4364, %v4365
        %v4367 = vrot.slane %v4365, 4
        %v4368 = vrot.slane %v1381, 6
        %v4369 = vsel %vm4232, %v4367, %v4368
        %v4370 = vrot.slane %v4368, 4
        %v4371 = vrot.slane %v3176, 6
        %v4372 = vsel %vm4232, %v4370, %v4371
        %v4373 = vrot.slane %v4160, 6
        %v4374 = vrot.slane %v4373, 4
        %v4375 = vrot.slane %v1383, 6
        %v4376 = vsel %vm4232, %v4374, %v4375
        %v4377 = vrot.slane %v4375, 4
        %v4378 = vrot.slane %v1384, 6
        %v4379 = vsel %vm4232, %v4377, %v4378
        %v4380 = vrot.slane %v4378, 4
        %v4381 = vrot.slane %v3177, 6
        %v4382 = vsel %vm4232, %v4380, %v4381
        %v4383 = vrot.slane %v4161, 6
        %v4384 = vrot.slane %v4383, 4
        %v4385 = vrot.slane %v1386, 6
        %v4386 = vsel %vm4232, %v4384, %v4385
        %v4387 = vrot.slane %v4385, 4
        %v4388 = vrot.slane %v1387, 6
        %v4389 = vsel %vm4232, %v4387, %v4388
        %v4390 = vrot.slane %v4388, 4
        %v4391 = vrot.slane %v3178, 6
        %v4392 = vsel %vm4232, %v4390, %v4391
        %v4393 = vrot.slane %v4162, 6
        %v4394 = vrot.slane %v4393, 4
        %v4395 = vrot.slane %v1389, 6
        %v4396 = vsel %vm4232, %v4394, %v4395
        %v4397 = vrot.slane %v4395, 4
        %v4398 = vrot.slane %v1390, 6
        %v4399 = vsel %vm4232, %v4397, %v4398
        %v4400 = vrot.slane %v4398, 4
        %v4401 = vrot.slane %v3179, 6
        %v4402 = vsel %vm4232, %v4400, %v4401
        %v4403 = vrot.slane %v4163, 6
        %v4404 = vrot.slane %v4403, 4
        %v4405 = vrot.slane %v1392, 6
        %v4406 = vsel %vm4232, %v4404, %v4405
        %v4407 = vrot.slane %v4405, 4
        %v4408 = vrot.slane %v1393, 6
        %v4409 = vsel %vm4232, %v4407, %v4408
        %v4410 = vrot.slane %v4408, 4
        %v4411 = vrot.slane %v3180, 6
        %v4412 = vsel %vm4232, %v4410, %v4411
        %v4413 = vrot.slane %v4164, 6
        %v4414 = vrot.slane %v4413, 4
        %v4415 = vrot.slane %v1395, 6
        %v4416 = vsel %vm4232, %v4414, %v4415
        %v4417 = vrot.slane %v4415, 4
        %v4418 = vrot.slane %v1396, 6
        %v4419 = vsel %vm4232, %v4417, %v4418
        %v4420 = vrot.slane %v4418, 4
        %v4421 = vrot.slane %v3181, 6
        %v4422 = vsel %vm4232, %v4420, %v4421
        %v4423 = vrot.slane %v4165, 6
        %v4424 = vrot.slane %v4423, 4
        %v4425 = vrot.slane %v1398, 6
        %v4426 = vsel %vm4232, %v4424, %v4425
        %v4427 = vrot.slane %v4425, 4
        %v4428 = vrot.slane %v1399, 6
        %v4429 = vsel %vm4232, %v4427, %v4428
        %v4430 = vrot.slane %v4428, 4
        %v4431 = vrot.slane %v3182, 6
        %v4432 = vsel %vm4232, %v4430, %v4431
        %v4433 = vrot.slane %v4166, 6
        %v4434 = vrot.slane %v4433, 4
        %v4435 = vrot.slane %v1401, 6
        %v4436 = vsel %vm4232, %v4434, %v4435
        %v4437 = vrot.slane %v4435, 4
        %v4438 = vrot.slane %v1402, 6
        %v4439 = vsel %vm4232, %v4437, %v4438
        %v4440 = vrot.slane %v4438, 4
        %v4441 = vrot.slane %v3183, 6
        %v4442 = vsel %vm4232, %v4440, %v4441
        %v4443 = vrot.slane %v4167, 6
        %v4444 = vrot.slane %v4443, 4
        %v4445 = vrot.slane %v1404, 6
        %v4446 = vsel %vm4232, %v4444, %v4445
        %v4447 = vrot.slane %v4445, 4
        %v4448 = vrot.slane %v1405, 6
        %v4449 = vsel %vm4232, %v4447, %v4448
        %v4450 = vrot.slane %v4448, 4
        %v4451 = vrot.slane %v3184, 6
        %v4452 = vsel %vm4232, %v4450, %v4451
        %v4453 = vrot.slane %v4168, 6
        %v4454 = vrot.slane %v4453, 4
        %v4455 = vrot.slane %v1407, 6
        %v4456 = vsel %vm4232, %v4454, %v4455
        %v4457 = vrot.slane %v4455, 4
        %v4458 = vrot.slane %v1408, 6
        %v4459 = vsel %vm4232, %v4457, %v4458
        %v4460 = vrot.slane %v4458, 4
        %v4461 = vrot.slane %v3185, 6
        %v4462 = vsel %vm4232, %v4460, %v4461
        %v4463 = vrot.slane %v4169, 6
        %v4464 = vrot.slane %v4463, 4
        %v4465 = vrot.slane %v1410, 6
        %v4466 = vsel %vm4232, %v4464, %v4465
        %v4467 = vrot.slane %v4465, 4
        %v4468 = vrot.slane %v1411, 6
        %v4469 = vsel %vm4232, %v4467, %v4468
        %v4470 = vrot.slane %v4468, 4
        %v4471 = vrot.slane %v3186, 6
        %v4472 = vsel %vm4232, %v4470, %v4471
        %v4473 = vrot.slane %v4170, 6
        %v4474 = vrot.slane %v4473, 4
        %v4475 = vrot.slane %v1413, 6
        %v4476 = vsel %vm4232, %v4474, %v4475
        %v4477 = vrot.slane %v4475, 4
        %v4478 = vrot.slane %v1414, 6
        %v4479 = vsel %vm4232, %v4477, %v4478
        %v4480 = vrot.slane %v4478, 4
        %v4481 = vrot.slane %v3187, 6
        %v4482 = vsel %vm4232, %v4480, %v4481
        %v4483 = vrot.slane %v4171, 6
        %v4484 = vrot.slane %v4483, 4
        %v4485 = vrot.slane %v1416, 6
        %v4486 = vsel %vm4232, %v4484, %v4485
        %v4487 = vrot.slane %v4485, 4
        %v4488 = vrot.slane %v1417, 6
        %v4489 = vsel %vm4232, %v4487, %v4488
        %v4490 = vrot.slane %v4488, 4
        %v4491 = vrot.slane %v3188, 6
        %v4492 = vsel %vm4232, %v4490, %v4491
        %v4493 = vrot.slane %v4172, 6
        %v4494 = vrot.slane %v4493, 4
        %v4495 = vrot.slane %v1419, 6
        %v4496 = vsel %vm4232, %v4494, %v4495
        %v4497 = vrot.slane %v4495, 4
        %v4498 = vrot.slane %v1420, 6
        %v4499 = vsel %vm4232, %v4497, %v4498
        %v4500 = vrot.slane %v4498, 4
        %v4501 = vrot.slane %v3189, 6
        %v4502 = vsel %vm4232, %v4500, %v4501
        %v4503 = vrot.slane %v4173, 6
        %v4504 = vrot.slane %v4503, 4
        %v4505 = vrot.slane %v1422, 6
        %v4506 = vsel %vm4232, %v4504, %v4505
        %v4507 = vrot.slane %v4505, 4
        %v4508 = vrot.slane %v1423, 6
        %v4509 = vsel %vm4232, %v4507, %v4508
        %v4510 = vrot.slane %v4508, 4
        %v4511 = vrot.slane %v3190, 6
        %v4512 = vsel %vm4232, %v4510, %v4511
        %v4597 = vmax.bf16 %v4062, %v4236
        %v4598 = vmax.bf16 %v4063, %v4239
        %v4599 = vmax.bf16 %v4064, %v4242
        %v4600 = vmax.bf16 %v4065, %v4246
        %v4601 = vmax.bf16 %v4066, %v4249
        %v4602 = vmax.bf16 %v4067, %v4252
        %v4603 = vmax.bf16 %v4068, %v4256
        %v4604 = vmax.bf16 %v4069, %v4259
        %v4605 = vmax.bf16 %v4070, %v4262
        %v4606 = vmax.bf16 %v4071, %v4266
        %v4607 = vmax.bf16 %v4072, %v4269
        %v4608 = vmax.bf16 %v4073, %v4272
        %v4609 = vmax.bf16 %v4074, %v4276
        %v4610 = vmax.bf16 %v4075, %v4279
        %v4611 = vmax.bf16 %v4076, %v4282
        %v4612 = vmax.bf16 %v4077, %v4286
        %v4613 = vmax.bf16 %v4078, %v4289
        %v4614 = vmax.bf16 %v4079, %v4292
        %v4615 = vmax.bf16 %v4080, %v4296
        %v4616 = vmax.bf16 %v4081, %v4299
        %v4617 = vmax.bf16 %v4082, %v4302
        %v4618 = vmax.bf16 %v4083, %v4306
        %v4619 = vmax.bf16 %v4084, %v4309
        %v4620 = vmax.bf16 %v4085, %v4312
        %v4621 = vmax.bf16 %v4086, %v4316
        %v4622 = vmax.bf16 %v4087, %v4319
        %v4623 = vmax.bf16 %v4088, %v4322
        %v4624 = vmax.bf16 %v4089, %v4326
        %v4625 = vmax.bf16 %v4090, %v4329
        %v4626 = vmax.bf16 %v4091, %v4332
        %v4627 = vmax.bf16 %v4092, %v4336
        %v4628 = vmax.bf16 %v4093, %v4339
        %v4629 = vmax.bf16 %v4094, %v4342
        %v4630 = vmax.bf16 %v4095, %v4346
        %v4631 = vmax.bf16 %v4096, %v4349
        %v4632 = vmax.bf16 %v4097, %v4352
        %v4633 = vmax.bf16 %v4098, %v4356
        %v4634 = vmax.bf16 %v4099, %v4359
        %v4635 = vmax.bf16 %v4100, %v4362
        %v4636 = vmax.bf16 %v4101, %v4366
        %v4637 = vmax.bf16 %v4102, %v4369
        %v4638 = vmax.bf16 %v4103, %v4372
        %v4639 = vmax.bf16 %v4104, %v4376
        %v4640 = vmax.bf16 %v4105, %v4379
        %v4641 = vmax.bf16 %v4106, %v4382
        %v4642 = vmax.bf16 %v4107, %v4386
        %v4643 = vmax.bf16 %v4108, %v4389
        %v4644 = vmax.bf16 %v4109, %v4392
        %v4645 = vmax.bf16 %v4110, %v4396
        %v4646 = vmax.bf16 %v4111, %v4399
        %v4647 = vmax.bf16 %v4112, %v4402
        %v4648 = vmax.bf16 %v4113, %v4406
        %v4649 = vmax.bf16 %v4114, %v4409
        %v4650 = vmax.bf16 %v4115, %v4412
        %v4651 = vmax.bf16 %v4116, %v4416
        %v4652 = vmax.bf16 %v4117, %v4419
        %v4653 = vmax.bf16 %v4118, %v4422
        %v4654 = vmax.bf16 %v4119, %v4426
        %v4655 = vmax.bf16 %v4120, %v4429
        %v4656 = vmax.bf16 %v4121, %v4432
        %v4657 = vmax.bf16 %v4122, %v4436
        %v4658 = vmax.bf16 %v4123, %v4439
        %v4659 = vmax.bf16 %v4124, %v4442
        %v4660 = vmax.bf16 %v4125, %v4446
        %v4661 = vmax.bf16 %v4126, %v4449
        %v4662 = vmax.bf16 %v4127, %v4452
        %v4663 = vmax.bf16 %v4128, %v4456
        %v4664 = vmax.bf16 %v4129, %v4459
        %v4665 = vmax.bf16 %v4130, %v4462
        %v4666 = vmax.bf16 %v4131, %v4466
        %v4667 = vmax.bf16 %v4132, %v4469
        %v4668 = vmax.bf16 %v4133, %v4472
        %v4669 = vmax.bf16 %v4134, %v4476
        %v4670 = vmax.bf16 %v4135, %v4479
        %v4671 = vmax.bf16 %v4136, %v4482
        %v4672 = vmax.bf16 %v4137, %v4486
        %v4673 = vmax.bf16 %v4138, %v4489
        %v4674 = vmax.bf16 %v4139, %v4492
        %v4675 = vmax.bf16 %v4140, %v4496
        %v4676 = vmax.bf16 %v4141, %v4499
        %v4677 = vmax.bf16 %v4142, %v4502
        %v4678 = vmax.bf16 %v4143, %v4506
        %v4679 = vmax.bf16 %v4144, %v4509
        %v4680 = vmax.bf16 %v4145, %v4512
        %v4681 = vmax.bf16 %v4597, %v4600
        %v4682 = vmax.bf16 %v4598, %v4601
        %v4683 = vmax.bf16 %v4599, %v4602
        %v4684 = vmax.bf16 %v4600, %v4603
        %v4685 = vmax.bf16 %v4601, %v4604
        %v4686 = vmax.bf16 %v4602, %v4605
        %v4687 = vmax.bf16 %v4603, %v4606
        %v4688 = vmax.bf16 %v4604, %v4607
        %v4689 = vmax.bf16 %v4605, %v4608
        %v4690 = vmax.bf16 %v4606, %v4609
        %v4691 = vmax.bf16 %v4607, %v4610
        %v4692 = vmax.bf16 %v4608, %v4611
        %v4693 = vmax.bf16 %v4609, %v4612
        %v4694 = vmax.bf16 %v4610, %v4613
        %v4695 = vmax.bf16 %v4611, %v4614
        %v4696 = vmax.bf16 %v4612, %v4615
        %v4697 = vmax.bf16 %v4613, %v4616
        %v4698 = vmax.bf16 %v4614, %v4617
        %v4699 = vmax.bf16 %v4615, %v4618
        %v4700 = vmax.bf16 %v4616, %v4619
        %v4701 = vmax.bf16 %v4617, %v4620
        %v4702 = vmax.bf16 %v4618, %v4621
        %v4703 = vmax.bf16 %v4619, %v4622
        %v4704 = vmax.bf16 %v4620, %v4623
        %v4705 = vmax.bf16 %v4621, %v4624
        %v4706 = vmax.bf16 %v4622, %v4625
        %v4707 = vmax.bf16 %v4623, %v4626
        %v4708 = vmax.bf16 %v4624, %v4627
        %v4709 = vmax.bf16 %v4625, %v4628
        %v4710 = vmax.bf16 %v4626, %v4629
        %v4711 = vmax.bf16 %v4627, %v4630
        %v4712 = vmax.bf16 %v4628, %v4631
        %v4713 = vmax.bf16 %v4629, %v4632
        %v4714 = vmax.bf16 %v4630, %v4633
        %v4715 = vmax.bf16 %v4631, %v4634
        %v4716 = vmax.bf16 %v4632, %v4635
        %v4717 = vmax.bf16 %v4633, %v4636
        %v4718 = vmax.bf16 %v4634, %v4637
        %v4719 = vmax.bf16 %v4635, %v4638
        %v4720 = vmax.bf16 %v4636, %v4639
        %v4721 = vmax.bf16 %v4637, %v4640
        %v4722 = vmax.bf16 %v4638, %v4641
        %v4723 = vmax.bf16 %v4639, %v4642
        %v4724 = vmax.bf16 %v4640, %v4643
        %v4725 = vmax.bf16 %v4641, %v4644
        %v4726 = vmax.bf16 %v4642, %v4645
        %v4727 = vmax.bf16 %v4643, %v4646
        %v4728 = vmax.bf16 %v4644, %v4647
        %v4729 = vmax.bf16 %v4645, %v4648
        %v4730 = vmax.bf16 %v4646, %v4649
        %v4731 = vmax.bf16 %v4647, %v4650
        %v4732 = vmax.bf16 %v4648, %v4651
        %v4733 = vmax.bf16 %v4649, %v4652
        %v4734 = vmax.bf16 %v4650, %v4653
        %v4735 = vmax.bf16 %v4651, %v4654
        %v4736 = vmax.bf16 %v4652, %v4655
        %v4737 = vmax.bf16 %v4653, %v4656
        %v4738 = vmax.bf16 %v4654, %v4657
        %v4739 = vmax.bf16 %v4655, %v4658
        %v4740 = vmax.bf16 %v4656, %v4659
        %v4741 = vmax.bf16 %v4657, %v4660
        %v4742 = vmax.bf16 %v4658, %v4661
        %v4743 = vmax.bf16 %v4659, %v4662
        %v4744 = vmax.bf16 %v4660, %v4663
        %v4745 = vmax.bf16 %v4661, %v4664
        %v4746 = vmax.bf16 %v4662, %v4665
        %v4747 = vmax.bf16 %v4663, %v4666
        %v4748 = vmax.bf16 %v4664, %v4667
        %v4749 = vmax.bf16 %v4665, %v4668
        %v4750 = vmax.bf16 %v4666, %v4669
        %v4751 = vmax.bf16 %v4667, %v4670
        %v4752 = vmax.bf16 %v4668, %v4671
        %v4753 = vmax.bf16 %v4681, %v4603
        %v4754 = vmax.bf16 %v4682, %v4604
        %v4755 = vmax.bf16 %v4683, %v4605
        %v4756 = vmax.bf16 %v4684, %v4606
        %v4757 = vmax.bf16 %v4685, %v4607
        %v4758 = vmax.bf16 %v4686, %v4608
        %v4759 = vmax.bf16 %v4687, %v4609
        %v4760 = vmax.bf16 %v4688, %v4610
        %v4761 = vmax.bf16 %v4689, %v4611
        %v4762 = vmax.bf16 %v4690, %v4612
        %v4763 = vmax.bf16 %v4691, %v4613
        %v4764 = vmax.bf16 %v4692, %v4614
        %v4765 = vmax.bf16 %v4693, %v4615
        %v4766 = vmax.bf16 %v4694, %v4616
        %v4767 = vmax.bf16 %v4695, %v4617
        %v4768 = vmax.bf16 %v4696, %v4618
        %v4769 = vmax.bf16 %v4697, %v4619
        %v4770 = vmax.bf16 %v4698, %v4620
        %v4771 = vmax.bf16 %v4699, %v4621
        %v4772 = vmax.bf16 %v4700, %v4622
        %v4773 = vmax.bf16 %v4701, %v4623
        %v4774 = vmax.bf16 %v4702, %v4624
        %v4775 = vmax.bf16 %v4703, %v4625
        %v4776 = vmax.bf16 %v4704, %v4626
        %v4777 = vmax.bf16 %v4705, %v4627
        %v4778 = vmax.bf16 %v4706, %v4628
        %v4779 = vmax.bf16 %v4707, %v4629
        %v4780 = vmax.bf16 %v4708, %v4630
        %v4781 = vmax.bf16 %v4709, %v4631
        %v4782 = vmax.bf16 %v4710, %v4632
        %v4783 = vmax.bf16 %v4711, %v4633
        %v4784 = vmax.bf16 %v4712, %v4634
        %v4785 = vmax.bf16 %v4713, %v4635
        %v4786 = vmax.bf16 %v4714, %v4636
        %v4787 = vmax.bf16 %v4715, %v4637
        %v4788 = vmax.bf16 %v4716, %v4638
        %v4789 = vmax.bf16 %v4717, %v4639
        %v4790 = vmax.bf16 %v4718, %v4640
        %v4791 = vmax.bf16 %v4719, %v4641
        %v4792 = vmax.bf16 %v4720, %v4642
        %v4793 = vmax.bf16 %v4721, %v4643
        %v4794 = vmax.bf16 %v4722, %v4644
        %v4795 = vmax.bf16 %v4723, %v4645
        %v4796 = vmax.bf16 %v4724, %v4646
        %v4797 = vmax.bf16 %v4725, %v4647
        %v4798 = vmax.bf16 %v4726, %v4648
        %v4799 = vmax.bf16 %v4727, %v4649
        %v4800 = vmax.bf16 %v4728, %v4650
        %v4801 = vmax.bf16 %v4729, %v4651
        %v4802 = vmax.bf16 %v4730, %v4652
        %v4803 = vmax.bf16 %v4731, %v4653
        %v4804 = vmax.bf16 %v4732, %v4654
        %v4805 = vmax.bf16 %v4733, %v4655
        %v4806 = vmax.bf16 %v4734, %v4656
        %v4807 = vmax.bf16 %v4735, %v4657
        %v4808 = vmax.bf16 %v4736, %v4658
        %v4809 = vmax.bf16 %v4737, %v4659
        %v4810 = vmax.bf16 %v4738, %v4660
        %v4811 = vmax.bf16 %v4739, %v4661
        %v4812 = vmax.bf16 %v4740, %v4662
        %v4813 = vmax.bf16 %v4741, %v4663
        %v4814 = vmax.bf16 %v4742, %v4664
        %v4815 = vmax.bf16 %v4743, %v4665
        %v4816 = vmax.bf16 %v4744, %v4666
        %v4817 = vmax.bf16 %v4745, %v4667
        %v4818 = vmax.bf16 %v4746, %v4668
        %v4819 = vmax.bf16 %v4747, %v4669
        %v4820 = vmax.bf16 %v4748, %v4670
        %v4821 = vmax.bf16 %v4749, %v4671
        %v4822 = vmax.bf16 %v4750, %v4672
        %v4823 = vmax.bf16 %v4751, %v4673
        %v4824 = vmax.bf16 %v4752, %v4674
        %v4825 = vmax.bf16 %v4753, %v4606
        %v4826 = vmax.bf16 %v4754, %v4607
        %v4827 = vmax.bf16 %v4755, %v4608
        %v4828 = vmax.bf16 %v4756, %v4609
        %v4829 = vmax.bf16 %v4757, %v4610
        %v4830 = vmax.bf16 %v4758, %v4611
        %v4831 = vmax.bf16 %v4759, %v4612
        %v4832 = vmax.bf16 %v4760, %v4613
        %v4833 = vmax.bf16 %v4761, %v4614
        %v4834 = vmax.bf16 %v4762, %v4615
        %v4835 = vmax.bf16 %v4763, %v4616
        %v4836 = vmax.bf16 %v4764, %v4617
        %v4837 = vmax.bf16 %v4765, %v4618
        %v4838 = vmax.bf16 %v4766, %v4619
        %v4839 = vmax.bf16 %v4767, %v4620
        %v4840 = vmax.bf16 %v4768, %v4621
        %v4841 = vmax.bf16 %v4769, %v4622
        %v4842 = vmax.bf16 %v4770, %v4623
        %v4843 = vmax.bf16 %v4771, %v4624
        %v4844 = vmax.bf16 %v4772, %v4625
        %v4845 = vmax.bf16 %v4773, %v4626
        %v4846 = vmax.bf16 %v4774, %v4627
        %v4847 = vmax.bf16 %v4775, %v4628
        %v4848 = vmax.bf16 %v4776, %v4629
        %v4849 = vmax.bf16 %v4777, %v4630
        %v4850 = vmax.bf16 %v4778, %v4631
        %v4851 = vmax.bf16 %v4779, %v4632
        %v4852 = vmax.bf16 %v4780, %v4633
        %v4853 = vmax.bf16 %v4781, %v4634
        %v4854 = vmax.bf16 %v4782, %v4635
        %v4855 = vmax.bf16 %v4783, %v4636
        %v4856 = vmax.bf16 %v4784, %v4637
        %v4857 = vmax.bf16 %v4785, %v4638
        %v4858 = vmax.bf16 %v4786, %v4639
        %v4859 = vmax.bf16 %v4787, %v4640
        %v4860 = vmax.bf16 %v4788, %v4641
        %v4861 = vmax.bf16 %v4789, %v4642
        %v4862 = vmax.bf16 %v4790, %v4643
        %v4863 = vmax.bf16 %v4791, %v4644
        %v4864 = vmax.bf16 %v4792, %v4645
        %v4865 = vmax.bf16 %v4793, %v4646
        %v4866 = vmax.bf16 %v4794, %v4647
        %v4867 = vmax.bf16 %v4795, %v4648
        %v4868 = vmax.bf16 %v4796, %v4649
        %v4869 = vmax.bf16 %v4797, %v4650
        %v4870 = vmax.bf16 %v4798, %v4651
        %v4871 = vmax.bf16 %v4799, %v4652
        %v4872 = vmax.bf16 %v4800, %v4653
        %v4873 = vmax.bf16 %v4801, %v4654
        %v4874 = vmax.bf16 %v4802, %v4655
        %v4875 = vmax.bf16 %v4803, %v4656
        %v4876 = vmax.bf16 %v4804, %v4657
        %v4877 = vmax.bf16 %v4805, %v4658
        %v4878 = vmax.bf16 %v4806, %v4659
        %v4879 = vmax.bf16 %v4807, %v4660
        %v4880 = vmax.bf16 %v4808, %v4661
        %v4881 = vmax.bf16 %v4809, %v4662
        %v4882 = vmax.bf16 %v4810, %v4663
        %v4883 = vmax.bf16 %v4811, %v4664
        %v4884 = vmax.bf16 %v4812, %v4665
        %v4885 = vmax.bf16 %v4813, %v4666
        %v4886 = vmax.bf16 %v4814, %v4667
        %v4887 = vmax.bf16 %v4815, %v4668
        %v4888 = vmax.bf16 %v4816, %v4669
        %v4889 = vmax.bf16 %v4817, %v4670
        %v4890 = vmax.bf16 %v4818, %v4671
        %v4891 = vmax.bf16 %v4819, %v4672
        %v4892 = vmax.bf16 %v4820, %v4673
        %v4893 = vmax.bf16 %v4821, %v4674
        %v4894 = vmax.bf16 %v4822, %v4675
        %v4895 = vmax.bf16 %v4823, %v4676
        %v4896 = vmax.bf16 %v4824, %v4677
        %v4897 = vmax.bf16 %v4825, %v4609
        %v4898 = vmax.bf16 %v4826, %v4610
        %v4899 = vmax.bf16 %v4827, %v4611
        %v4900 = vmax.bf16 %v4828, %v4612
        %v4901 = vmax.bf16 %v4829, %v4613
        %v4902 = vmax.bf16 %v4830, %v4614
        %v4903 = vmax.bf16 %v4831, %v4615
        %v4904 = vmax.bf16 %v4832, %v4616
        %v4905 = vmax.bf16 %v4833, %v4617
        %v4906 = vmax.bf16 %v4834, %v4618
        %v4907 = vmax.bf16 %v4835, %v4619
        %v4908 = vmax.bf16 %v4836, %v4620
        %v4909 = vmax.bf16 %v4837, %v4621
        %v4910 = vmax.bf16 %v4838, %v4622
        %v4911 = vmax.bf16 %v4839, %v4623
        %v4912 = vmax.bf16 %v4840, %v4624
        %v4913 = vmax.bf16 %v4841, %v4625
        %v4914 = vmax.bf16 %v4842, %v4626
        %v4915 = vmax.bf16 %v4843, %v4627
        %v4916 = vmax.bf16 %v4844, %v4628
        %v4917 = vmax.bf16 %v4845, %v4629
        %v4918 = vmax.bf16 %v4846, %v4630
        %v4919 = vmax.bf16 %v4847, %v4631
        %v4920 = vmax.bf16 %v4848, %v4632
        %v4921 = vmax.bf16 %v4849, %v4633
        %v4922 = vmax.bf16 %v4850, %v4634
        %v4923 = vmax.bf16 %v4851, %v4635
        %v4924 = vmax.bf16 %v4852, %v4636
        %v4925 = vmax.bf16 %v4853, %v4637
        %v4926 = vmax.bf16 %v4854, %v4638
        %v4927 = vmax.bf16 %v4855, %v4639
        %v4928 = vmax.bf16 %v4856, %v4640
        %v4929 = vmax.bf16 %v4857, %v4641
        %v4930 = vmax.bf16 %v4858, %v4642
        %v4931 = vmax.bf16 %v4859, %v4643
        %v4932 = vmax.bf16 %v4860, %v4644
        %v4933 = vmax.bf16 %v4861, %v4645
        %v4934 = vmax.bf16 %v4862, %v4646
        %v4935 = vmax.bf16 %v4863, %v4647
        %v4936 = vmax.bf16 %v4864, %v4648
        %v4937 = vmax.bf16 %v4865, %v4649
        %v4938 = vmax.bf16 %v4866, %v4650
        %v4939 = vmax.bf16 %v4867, %v4651
        %v4940 = vmax.bf16 %v4868, %v4652
        %v4941 = vmax.bf16 %v4869, %v4653
        %v4942 = vmax.bf16 %v4870, %v4654
        %v4943 = vmax.bf16 %v4871, %v4655
        %v4944 = vmax.bf16 %v4872, %v4656
        %v4945 = vmax.bf16 %v4873, %v4657
        %v4946 = vmax.bf16 %v4874, %v4658
        %v4947 = vmax.bf16 %v4875, %v4659
        %v4948 = vmax.bf16 %v4876, %v4660
        %v4949 = vmax.bf16 %v4877, %v4661
        %v4950 = vmax.bf16 %v4878, %v4662
        %v4951 = vmax.bf16 %v4879, %v4663
        %v4952 = vmax.bf16 %v4880, %v4664
        %v4953 = vmax.bf16 %v4881, %v4665
        %v4954 = vmax.bf16 %v4882, %v4666
        %v4955 = vmax.bf16 %v4883, %v4667
        %v4956 = vmax.bf16 %v4884, %v4668
        %v4957 = vmax.bf16 %v4885, %v4669
        %v4958 = vmax.bf16 %v4886, %v4670
        %v4959 = vmax.bf16 %v4887, %v4671
        %v4960 = vmax.bf16 %v4888, %v4672
        %v4961 = vmax.bf16 %v4889, %v4673
        %v4962 = vmax.bf16 %v4890, %v4674
        %v4963 = vmax.bf16 %v4891, %v4675
        %v4964 = vmax.bf16 %v4892, %v4676
        %v4965 = vmax.bf16 %v4893, %v4677
        %v4966 = vmax.bf16 %v4894, %v4678
        %v4967 = vmax.bf16 %v4895, %v4679
        %v4968 = vmax.bf16 %v4896, %v4680
        %4969 = vst [vmem:[#allocation3] sm:$0xf] %v4897
        %4970 = vst [vmem:[#allocation3 + $0x4] sm:$0xf] %v4898
        %4971 = vst [vmem:[#allocation3 + $0x8] sm:$0xf] %v4899
        %4972 = vst [vmem:[#allocation3 + $0xc] sm:$0xf] %v4900
        %4973 = vst [vmem:[#allocation3 + $0x10] sm:$0xf] %v4901
        %4974 = vst [vmem:[#allocation3 + $0x14] sm:$0xf] %v4902
        %4975 = vst [vmem:[#allocation3 + $0x18] sm:$0xf] %v4903
        %4976 = vst [vmem:[#allocation3 + $0x1c] sm:$0xf] %v4904
        %4977 = vst [vmem:[#allocation3 + $0x20] sm:$0xf] %v4905
        %4978 = vst [vmem:[#allocation3 + $0x24] sm:$0xf] %v4906
        %4979 = vst [vmem:[#allocation3 + $0x28] sm:$0xf] %v4907
        %4980 = vst [vmem:[#allocation3 + $0x2c] sm:$0xf] %v4908
        %4981 = vst [vmem:[#allocation3 + $0x30] sm:$0xf] %v4909
        %4982 = vst [vmem:[#allocation3 + $0x34] sm:$0xf] %v4910
        %4983 = vst [vmem:[#allocation3 + $0x38] sm:$0xf] %v4911
        %4984 = vst [vmem:[#allocation3 + $0x3c] sm:$0xf] %v4912
        %4985 = vst [vmem:[#allocation3 + $0x40] sm:$0xf] %v4913
        %4986 = vst [vmem:[#allocation3 + $0x44] sm:$0xf] %v4914
        %4987 = vst [vmem:[#allocation3 + $0x48] sm:$0xf] %v4915
        %4988 = vst [vmem:[#allocation3 + $0x4c] sm:$0xf] %v4916
        %4989 = vst [vmem:[#allocation3 + $0x50] sm:$0xf] %v4917
        %4990 = vst [vmem:[#allocation3 + $0x54] sm:$0xf] %v4918
        %4991 = vst [vmem:[#allocation3 + $0x58] sm:$0xf] %v4919
        %4992 = vst [vmem:[#allocation3 + $0x5c] sm:$0xf] %v4920
        %4993 = vst [vmem:[#allocation3 + $0x60] sm:$0xf] %v4921
        %4994 = vst [vmem:[#allocation3 + $0x64] sm:$0xf] %v4922
        %4995 = vst [vmem:[#allocation3 + $0x68] sm:$0xf] %v4923
        %4996 = vst [vmem:[#allocation3 + $0x6c] sm:$0xf] %v4924
        %4997 = vst [vmem:[#allocation3 + $0x70] sm:$0xf] %v4925
        %4998 = vst [vmem:[#allocation3 + $0x74] sm:$0xf] %v4926
        %4999 = vst [vmem:[#allocation3 + $0x78] sm:$0xf] %v4927
        %5000 = vst [vmem:[#allocation3 + $0x7c] sm:$0xf] %v4928
        %5001 = vst [vmem:[#allocation3 + $0x80] sm:$0xf] %v4929
        %5002 = vst [vmem:[#allocation3 + $0x84] sm:$0xf] %v4930
        %5003 = vst [vmem:[#allocation3 + $0x88] sm:$0xf] %v4931
        %5004 = vst [vmem:[#allocation3 + $0x8c] sm:$0xf] %v4932
        %5005 = vst [vmem:[#allocation3 + $0x90] sm:$0xf] %v4933
        %5006 = vst [vmem:[#allocation3 + $0x94] sm:$0xf] %v4934
        %5007 = vst [vmem:[#allocation3 + $0x98] sm:$0xf] %v4935
        %5008 = vst [vmem:[#allocation3 + $0x9c] sm:$0xf] %v4936
        %5009 = vst [vmem:[#allocation3 + $0xa0] sm:$0xf] %v4937
        %5010 = vst [vmem:[#allocation3 + $0xa4] sm:$0xf] %v4938
        %5011 = vst [vmem:[#allocation3 + $0xa8] sm:$0xf] %v4939
        %5012 = vst [vmem:[#allocation3 + $0xac] sm:$0xf] %v4940
        %5013 = vst [vmem:[#allocation3 + $0xb0] sm:$0xf] %v4941
        %5014 = vst [vmem:[#allocation3 + $0xb4] sm:$0xf] %v4942
        %5015 = vst [vmem:[#allocation3 + $0xb8] sm:$0xf] %v4943
        %5016 = vst [vmem:[#allocation3 + $0xbc] sm:$0xf] %v4944
        %5017 = vst [vmem:[#allocation3 + $0xc0] sm:$0xf] %v4945
        %5018 = vst [vmem:[#allocation3 + $0xc4] sm:$0xf] %v4946
        %5019 = vst [vmem:[#allocation3 + $0xc8] sm:$0xf] %v4947
        %5020 = vst [vmem:[#allocation3 + $0xcc] sm:$0xf] %v4948
        %5021 = vst [vmem:[#allocation3 + $0xd0] sm:$0xf] %v4949
        %5022 = vst [vmem:[#allocation3 + $0xd4] sm:$0xf] %v4950
        %5023 = vst [vmem:[#allocation3 + $0xd8] sm:$0xf] %v4951
        %5024 = vst [vmem:[#allocation3 + $0xdc] sm:$0xf] %v4952
        %5025 = vst [vmem:[#allocation3 + $0xe0] sm:$0xf] %v4953
        %5026 = vst [vmem:[#allocation3 + $0xe4] sm:$0xf] %v4954
        %5027 = vst [vmem:[#allocation3 + $0xe8] sm:$0xf] %v4955
        %5028 = vst [vmem:[#allocation3 + $0xec] sm:$0xf] %v4956
        %5029 = vst [vmem:[#allocation3 + $0xf0] sm:$0xf] %v4957
        %5030 = vst [vmem:[#allocation3 + $0xf4] sm:$0xf] %v4958
        %5031 = vst [vmem:[#allocation3 + $0xf8] sm:$0xf] %v4959
        %5032 = vst [vmem:[#allocation3 + $0xfc] sm:$0xf] %v4960
        %5033 = vst [vmem:[#allocation3 + $0x100] sm:$0xf] %v4961
        %5034 = vst [vmem:[#allocation3 + $0x104] sm:$0xf] %v4962
        %5035 = vst [vmem:[#allocation3 + $0x108] sm:$0xf] %v4963
        %5036 = vst [vmem:[#allocation3 + $0x10c] sm:$0xf] %v4964
        %5037 = vst [vmem:[#allocation3 + $0x110] sm:$0xf] %v4965
        %5038 = vst [vmem:[#allocation3 + $0x114] sm:$0xf] %v4966
        %5039 = vst [vmem:[#allocation3 + $0x118] sm:$0xf] %v4967
        %5040 = vst [vmem:[#allocation3 + $0x11c] sm:$0xf] %v4968
        %v5041 = vld [vmem:[#allocation3] sm:$0xf]
        %v5042 = vld [vmem:[#allocation3 + $0x4] sm:$0xf]
        %v5043 = vld [vmem:[#allocation3 + $0x8] sm:$0x3]
        %v5044 = vld [vmem:[#allocation3 + $0xc] sm:$0xf]
        %v5045 = vld [vmem:[#allocation3 + $0x10] sm:$0xf]
        %v5046 = vld [vmem:[#allocation3 + $0x14] sm:$0x3]
        %v5047 = vld [vmem:[#allocation3 + $0x18] sm:$0xf]
        %v5048 = vld [vmem:[#allocation3 + $0x1c] sm:$0xf]
        %v5049 = vld [vmem:[#allocation3 + $0x20] sm:$0x3]
        %v5050 = vld [vmem:[#allocation3 + $0x24] sm:$0xf]
        %v5051 = vld [vmem:[#allocation3 + $0x28] sm:$0xf]
        %v5052 = vld [vmem:[#allocation3 + $0x2c] sm:$0x3]
        %v5053 = vld [vmem:[#allocation3 + $0x30] sm:$0xf]
        %v5054 = vld [vmem:[#allocation3 + $0x34] sm:$0xf]
        %v5055 = vld [vmem:[#allocation3 + $0x38] sm:$0x3]
        %v5056 = vld [vmem:[#allocation3 + $0x3c] sm:$0xf]
        %v5057 = vld [vmem:[#allocation3 + $0x40] sm:$0xf]
        %v5058 = vld [vmem:[#allocation3 + $0x44] sm:$0x3]
        %v5059 = vld [vmem:[#allocation3 + $0x48] sm:$0xf]
        %v5060 = vld [vmem:[#allocation3 + $0x4c] sm:$0xf]
        %v5061 = vld [vmem:[#allocation3 + $0x50] sm:$0x3]
        %v5062 = vld [vmem:[#allocation3 + $0x54] sm:$0xf]
        %v5063 = vld [vmem:[#allocation3 + $0x58] sm:$0xf]
        %v5064 = vld [vmem:[#allocation3 + $0x5c] sm:$0x3]
        %v5065 = vld [vmem:[#allocation3 + $0x60] sm:$0xf]
        %v5066 = vld [vmem:[#allocation3 + $0x64] sm:$0xf]
        %v5067 = vld [vmem:[#allocation3 + $0x68] sm:$0x3]
        %v5068 = vld [vmem:[#allocation3 + $0x6c] sm:$0xf]
        %v5069 = vld [vmem:[#allocation3 + $0x70] sm:$0xf]
        %v5070 = vld [vmem:[#allocation3 + $0x74] sm:$0x3]
        %v5071 = vld [vmem:[#allocation3 + $0x78] sm:$0xf]
        %v5072 = vld [vmem:[#allocation3 + $0x7c] sm:$0xf]
        %v5073 = vld [vmem:[#allocation3 + $0x80] sm:$0x3]
        %v5074 = vld [vmem:[#allocation3 + $0x84] sm:$0xf]
        %v5075 = vld [vmem:[#allocation3 + $0x88] sm:$0xf]
        %v5076 = vld [vmem:[#allocation3 + $0x8c] sm:$0x3]
        %v5077 = vld [vmem:[#allocation3 + $0x90] sm:$0xf]
        %v5078 = vld [vmem:[#allocation3 + $0x94] sm:$0xf]
        %v5079 = vld [vmem:[#allocation3 + $0x98] sm:$0x3]
        %v5080 = vld [vmem:[#allocation3 + $0x9c] sm:$0xf]
        %v5081 = vld [vmem:[#allocation3 + $0xa0] sm:$0xf]
        %v5082 = vld [vmem:[#allocation3 + $0xa4] sm:$0x3]
        %v5083 = vld [vmem:[#allocation3 + $0xa8] sm:$0xf]
        %v5084 = vld [vmem:[#allocation3 + $0xac] sm:$0xf]
        %v5085 = vld [vmem:[#allocation3 + $0xb0] sm:$0x3]
        %v5086 = vld [vmem:[#allocation3 + $0xb4] sm:$0xf]
        %v5087 = vld [vmem:[#allocation3 + $0xb8] sm:$0xf]
        %v5088 = vld [vmem:[#allocation3 + $0xbc] sm:$0x3]
        %v5089 = vld [vmem:[#allocation3 + $0xc0] sm:$0xf]
        %v5090 = vld [vmem:[#allocation3 + $0xc4] sm:$0xf]
        %v5091 = vld [vmem:[#allocation3 + $0xc8] sm:$0x3]
        %v5092 = vld [vmem:[#allocation3 + $0xcc] sm:$0xf]
        %v5093 = vld [vmem:[#allocation3 + $0xd0] sm:$0xf]
        %v5094 = vld [vmem:[#allocation3 + $0xd4] sm:$0x3]
        %v5095 = vld [vmem:[#allocation3 + $0xd8] sm:$0xf]
        %v5096 = vld [vmem:[#allocation3 + $0xdc] sm:$0xf]
        %v5097 = vld [vmem:[#allocation3 + $0xe0] sm:$0x3]
        %v5098 = vld [vmem:[#allocation3 + $0xe4] sm:$0xf]
        %v5099 = vld [vmem:[#allocation3 + $0xe8] sm:$0xf]
        %v5100 = vld [vmem:[#allocation3 + $0xec] sm:$0x3]
        %v5101 = vld [vmem:[#allocation3 + $0xf0] sm:$0xf]
        %v5102 = vld [vmem:[#allocation3 + $0xf4] sm:$0xf]
        %v5103 = vld [vmem:[#allocation3 + $0xf8] sm:$0x3]
        %v5104 = vld [vmem:[#allocation3 + $0xfc] sm:$0xf]
        %v5105 = vld [vmem:[#allocation3 + $0x100] sm:$0xf]
        %v5106 = vld [vmem:[#allocation3 + $0x104] sm:$0x3]
        %v5107 = vld [vmem:[#allocation3 + $0x108] sm:$0xf]
        %v5108 = vld [vmem:[#allocation3 + $0x10c] sm:$0xf]
        %v5109 = vld [vmem:[#allocation3 + $0x110] sm:$0x3]
        %v5110 = vld [vmem:[#allocation3 + $0x114] sm:$0xf]
        %v5111 = vld [vmem:[#allocation3 + $0x118] sm:$0xf]
        %v5112 = vld [vmem:[#allocation3 + $0x11c] sm:$0x3]
        %v5113 = vld [vmem:[#allocation3 + $0x8] sm:$0x7]
        %v5114 = vld [vmem:[#allocation3 + $0x14] sm:$0x7]
        %v5115 = vld [vmem:[#allocation3 + $0x20] sm:$0x7]
        %v5116 = vld [vmem:[#allocation3 + $0x2c] sm:$0x7]
        %v5117 = vld [vmem:[#allocation3 + $0x38] sm:$0x7]
        %v5118 = vld [vmem:[#allocation3 + $0x44] sm:$0x7]
        %v5119 = vld [vmem:[#allocation3 + $0x50] sm:$0x7]
        %v5120 = vld [vmem:[#allocation3 + $0x5c] sm:$0x7]
        %v5121 = vld [vmem:[#allocation3 + $0x68] sm:$0x7]
        %v5122 = vld [vmem:[#allocation3 + $0x74] sm:$0x7]
        %v5123 = vld [vmem:[#allocation3 + $0x80] sm:$0x7]
        %v5124 = vld [vmem:[#allocation3 + $0x8c] sm:$0x7]
        %v5125 = vld [vmem:[#allocation3 + $0x98] sm:$0x7]
        %v5126 = vld [vmem:[#allocation3 + $0xa4] sm:$0x7]
        %v5127 = vld [vmem:[#allocation3 + $0xb0] sm:$0x7]
        %v5128 = vld [vmem:[#allocation3 + $0xbc] sm:$0x7]
        %v5129 = vld [vmem:[#allocation3 + $0xc8] sm:$0x7]
        %v5130 = vld [vmem:[#allocation3 + $0xd4] sm:$0x7]
        %v5131 = vld [vmem:[#allocation3 + $0xe0] sm:$0x7]
        %v5132 = vld [vmem:[#allocation3 + $0xec] sm:$0x7]
        %v5133 = vld [vmem:[#allocation3 + $0xf8] sm:$0x7]
        %v5134 = vld [vmem:[#allocation3 + $0x104] sm:$0x7]
        %v5135 = vld [vmem:[#allocation3 + $0x110] sm:$0x7]
        %v5136 = vld [vmem:[#allocation3 + $0x11c] sm:$0x7]
        %v5138 = vshrl.u32 %v5041, 16
        %v5140 = vrot.slane %v5138, 4
        %v5141 = vshll.u32 %v5041, 16
        %v5143 = vrot.slane %v5141, 5
        %v5144 = vor.u32 %v5140, %v5143
        %v5145 = vrot.slane %v5144, 4
        %v5147 = vshll.u32 %v5042, 16
        %v5149 = vrot.slane %v5147, 5
        %v5150 = vsel %vm1454, %v5145, %v5149
        %v5151 = vshrl.u32 %v5042, 16
        %v5153 = vrot.slane %v5151, 4
        %v5154 = vor.u32 %v5153, %v5149
        %v5155 = vrot.slane %v5154, 4
        %v5157 = vshll.u32 %v5113, 16
        %v5159 = vrot.slane %v5157, 5
        %v5160 = vsel %vm1454, %v5155, %v5159
        %v5161 = vshrl.u32 %v5113, 16
        %v5163 = vrot.slane %v5161, 4
        %v5164 = vor.u32 %v5163, %v5159
        %v5165 = vrot.slane %v5164, 4
        %v5167 = vshrl.u32 %v5044, 16
        %v5169 = vrot.slane %v5167, 4
        %v5170 = vshll.u32 %v5044, 16
        %v5172 = vrot.slane %v5170, 5
        %v5173 = vor.u32 %v5169, %v5172
        %v5174 = vrot.slane %v5173, 4
        %v5176 = vshll.u32 %v5045, 16
        %v5178 = vrot.slane %v5176, 5
        %v5179 = vsel %vm1454, %v5174, %v5178
        %v5180 = vshrl.u32 %v5045, 16
        %v5182 = vrot.slane %v5180, 4
        %v5183 = vor.u32 %v5182, %v5178
        %v5184 = vrot.slane %v5183, 4
        %v5186 = vshll.u32 %v5114, 16
        %v5188 = vrot.slane %v5186, 5
        %v5189 = vsel %vm1454, %v5184, %v5188
        %v5190 = vshrl.u32 %v5114, 16
        %v5192 = vrot.slane %v5190, 4
        %v5193 = vor.u32 %v5192, %v5188
        %v5194 = vrot.slane %v5193, 4
        %v5196 = vshrl.u32 %v5047, 16
        %v5198 = vrot.slane %v5196, 4
        %v5199 = vshll.u32 %v5047, 16
        %v5201 = vrot.slane %v5199, 5
        %v5202 = vor.u32 %v5198, %v5201
        %v5203 = vrot.slane %v5202, 4
        %v5205 = vshll.u32 %v5048, 16
        %v5207 = vrot.slane %v5205, 5
        %v5208 = vsel %vm1454, %v5203, %v5207
        %v5209 = vshrl.u32 %v5048, 16
        %v5211 = vrot.slane %v5209, 4
        %v5212 = vor.u32 %v5211, %v5207
        %v5213 = vrot.slane %v5212, 4
        %v5215 = vshll.u32 %v5115, 16
        %v5217 = vrot.slane %v5215, 5
        %v5218 = vsel %vm1454, %v5213, %v5217
        %v5219 = vshrl.u32 %v5115, 16
        %v5221 = vrot.slane %v5219, 4
        %v5222 = vor.u32 %v5221, %v5217
        %v5223 = vrot.slane %v5222, 4
        %v5225 = vshrl.u32 %v5050, 16
        %v5227 = vrot.slane %v5225, 4
        %v5228 = vshll.u32 %v5050, 16
        %v5230 = vrot.slane %v5228, 5
        %v5231 = vor.u32 %v5227, %v5230
        %v5232 = vrot.slane %v5231, 4
        %v5234 = vshll.u32 %v5051, 16
        %v5236 = vrot.slane %v5234, 5
        %v5237 = vsel %vm1454, %v5232, %v5236
        %v5238 = vshrl.u32 %v5051, 16
        %v5240 = vrot.slane %v5238, 4
        %v5241 = vor.u32 %v5240, %v5236
        %v5242 = vrot.slane %v5241, 4
        %v5244 = vshll.u32 %v5116, 16
        %v5246 = vrot.slane %v5244, 5
        %v5247 = vsel %vm1454, %v5242, %v5246
        %v5248 = vshrl.u32 %v5116, 16
        %v5250 = vrot.slane %v5248, 4
        %v5251 = vor.u32 %v5250, %v5246
        %v5252 = vrot.slane %v5251, 4
        %v5254 = vshrl.u32 %v5053, 16
        %v5256 = vrot.slane %v5254, 4
        %v5257 = vshll.u32 %v5053, 16
        %v5259 = vrot.slane %v5257, 5
        %v5260 = vor.u32 %v5256, %v5259
        %v5261 = vrot.slane %v5260, 4
        %v5263 = vshll.u32 %v5054, 16
        %v5265 = vrot.slane %v5263, 5
        %v5266 = vsel %vm1454, %v5261, %v5265
        %v5267 = vshrl.u32 %v5054, 16
        %v5269 = vrot.slane %v5267, 4
        %v5270 = vor.u32 %v5269, %v5265
        %v5271 = vrot.slane %v5270, 4
        %v5273 = vshll.u32 %v5117, 16
        %v5275 = vrot.slane %v5273, 5
        %v5276 = vsel %vm1454, %v5271, %v5275
        %v5277 = vshrl.u32 %v5117, 16
        %v5279 = vrot.slane %v5277, 4
        %v5280 = vor.u32 %v5279, %v5275
        %v5281 = vrot.slane %v5280, 4
        %v5283 = vshrl.u32 %v5056, 16
        %v5285 = vrot.slane %v5283, 4
        %v5286 = vshll.u32 %v5056, 16
        %v5288 = vrot.slane %v5286, 5
        %v5289 = vor.u32 %v5285, %v5288
        %v5290 = vrot.slane %v5289, 4
        %v5292 = vshll.u32 %v5057, 16
        %v5294 = vrot.slane %v5292, 5
        %v5295 = vsel %vm1454, %v5290, %v5294
        %v5296 = vshrl.u32 %v5057, 16
        %v5298 = vrot.slane %v5296, 4
        %v5299 = vor.u32 %v5298, %v5294
        %v5300 = vrot.slane %v5299, 4
        %v5302 = vshll.u32 %v5118, 16
        %v5304 = vrot.slane %v5302, 5
        %v5305 = vsel %vm1454, %v5300, %v5304
        %v5306 = vshrl.u32 %v5118, 16
        %v5308 = vrot.slane %v5306, 4
        %v5309 = vor.u32 %v5308, %v5304
        %v5310 = vrot.slane %v5309, 4
        %v5312 = vshrl.u32 %v5059, 16
        %v5314 = vrot.slane %v5312, 4
        %v5315 = vshll.u32 %v5059, 16
        %v5317 = vrot.slane %v5315, 5
        %v5318 = vor.u32 %v5314, %v5317
        %v5319 = vrot.slane %v5318, 4
        %v5321 = vshll.u32 %v5060, 16
        %v5323 = vrot.slane %v5321, 5
        %v5324 = vsel %vm1454, %v5319, %v5323
        %v5325 = vshrl.u32 %v5060, 16
        %v5327 = vrot.slane %v5325, 4
        %v5328 = vor.u32 %v5327, %v5323
        %v5329 = vrot.slane %v5328, 4
        %v5331 = vshll.u32 %v5119, 16
        %v5333 = vrot.slane %v5331, 5
        %v5334 = vsel %vm1454, %v5329, %v5333
        %v5335 = vshrl.u32 %v5119, 16
        %v5337 = vrot.slane %v5335, 4
        %v5338 = vor.u32 %v5337, %v5333
        %v5339 = vrot.slane %v5338, 4
        %v5341 = vshrl.u32 %v5062, 16
        %v5343 = vrot.slane %v5341, 4
        %v5344 = vshll.u32 %v5062, 16
        %v5346 = vrot.slane %v5344, 5
        %v5347 = vor.u32 %v5343, %v5346
        %v5348 = vrot.slane %v5347, 4
        %v5350 = vshll.u32 %v5063, 16
        %v5352 = vrot.slane %v5350, 5
        %v5353 = vsel %vm1454, %v5348, %v5352
        %v5354 = vshrl.u32 %v5063, 16
        %v5356 = vrot.slane %v5354, 4
        %v5357 = vor.u32 %v5356, %v5352
        %v5358 = vrot.slane %v5357, 4
        %v5360 = vshll.u32 %v5120, 16
        %v5362 = vrot.slane %v5360, 5
        %v5363 = vsel %vm1454, %v5358, %v5362
        %v5364 = vshrl.u32 %v5120, 16
        %v5366 = vrot.slane %v5364, 4
        %v5367 = vor.u32 %v5366, %v5362
        %v5368 = vrot.slane %v5367, 4
        %v5370 = vshrl.u32 %v5065, 16
        %v5372 = vrot.slane %v5370, 4
        %v5373 = vshll.u32 %v5065, 16
        %v5375 = vrot.slane %v5373, 5
        %v5376 = vor.u32 %v5372, %v5375
        %v5377 = vrot.slane %v5376, 4
        %v5379 = vshll.u32 %v5066, 16
        %v5381 = vrot.slane %v5379, 5
        %v5382 = vsel %vm1454, %v5377, %v5381
        %v5383 = vshrl.u32 %v5066, 16
        %v5385 = vrot.slane %v5383, 4
        %v5386 = vor.u32 %v5385, %v5381
        %v5387 = vrot.slane %v5386, 4
        %v5389 = vshll.u32 %v5121, 16
        %v5391 = vrot.slane %v5389, 5
        %v5392 = vsel %vm1454, %v5387, %v5391
        %v5393 = vshrl.u32 %v5121, 16
        %v5395 = vrot.slane %v5393, 4
        %v5396 = vor.u32 %v5395, %v5391
        %v5397 = vrot.slane %v5396, 4
        %v5399 = vshrl.u32 %v5068, 16
        %v5401 = vrot.slane %v5399, 4
        %v5402 = vshll.u32 %v5068, 16
        %v5404 = vrot.slane %v5402, 5
        %v5405 = vor.u32 %v5401, %v5404
        %v5406 = vrot.slane %v5405, 4
        %v5408 = vshll.u32 %v5069, 16
        %v5410 = vrot.slane %v5408, 5
        %v5411 = vsel %vm1454, %v5406, %v5410
        %v5412 = vshrl.u32 %v5069, 16
        %v5414 = vrot.slane %v5412, 4
        %v5415 = vor.u32 %v5414, %v5410
        %v5416 = vrot.slane %v5415, 4
        %v5418 = vshll.u32 %v5122, 16
        %v5420 = vrot.slane %v5418, 5
        %v5421 = vsel %vm1454, %v5416, %v5420
        %v5422 = vshrl.u32 %v5122, 16
        %v5424 = vrot.slane %v5422, 4
        %v5425 = vor.u32 %v5424, %v5420
        %v5426 = vrot.slane %v5425, 4
        %v5428 = vshrl.u32 %v5071, 16
        %v5430 = vrot.slane %v5428, 4
        %v5431 = vshll.u32 %v5071, 16
        %v5433 = vrot.slane %v5431, 5
        %v5434 = vor.u32 %v5430, %v5433
        %v5435 = vrot.slane %v5434, 4
        %v5437 = vshll.u32 %v5072, 16
        %v5439 = vrot.slane %v5437, 5
        %v5440 = vsel %vm1454, %v5435, %v5439
        %v5441 = vshrl.u32 %v5072, 16
        %v5443 = vrot.slane %v5441, 4
        %v5444 = vor.u32 %v5443, %v5439
        %v5445 = vrot.slane %v5444, 4
        %v5447 = vshll.u32 %v5123, 16
        %v5449 = vrot.slane %v5447, 5
        %v5450 = vsel %vm1454, %v5445, %v5449
        %v5451 = vshrl.u32 %v5123, 16
        %v5453 = vrot.slane %v5451, 4
        %v5454 = vor.u32 %v5453, %v5449
        %v5455 = vrot.slane %v5454, 4
        %v5457 = vshrl.u32 %v5074, 16
        %v5459 = vrot.slane %v5457, 4
        %v5460 = vshll.u32 %v5074, 16
        %v5462 = vrot.slane %v5460, 5
        %v5463 = vor.u32 %v5459, %v5462
        %v5464 = vrot.slane %v5463, 4
        %v5466 = vshll.u32 %v5075, 16
        %v5468 = vrot.slane %v5466, 5
        %v5469 = vsel %vm1454, %v5464, %v5468
        %v5470 = vshrl.u32 %v5075, 16
        %v5472 = vrot.slane %v5470, 4
        %v5473 = vor.u32 %v5472, %v5468
        %v5474 = vrot.slane %v5473, 4
        %v5476 = vshll.u32 %v5124, 16
        %v5478 = vrot.slane %v5476, 5
        %v5479 = vsel %vm1454, %v5474, %v5478
        %v5480 = vshrl.u32 %v5124, 16
        %v5482 = vrot.slane %v5480, 4
        %v5483 = vor.u32 %v5482, %v5478
        %v5484 = vrot.slane %v5483, 4
        %v5486 = vshrl.u32 %v5077, 16
        %v5488 = vrot.slane %v5486, 4
        %v5489 = vshll.u32 %v5077, 16
        %v5491 = vrot.slane %v5489, 5
        %v5492 = vor.u32 %v5488, %v5491
        %v5493 = vrot.slane %v5492, 4
        %v5495 = vshll.u32 %v5078, 16
        %v5497 = vrot.slane %v5495, 5
        %v5498 = vsel %vm1454, %v5493, %v5497
        %v5499 = vshrl.u32 %v5078, 16
        %v5501 = vrot.slane %v5499, 4
        %v5502 = vor.u32 %v5501, %v5497
        %v5503 = vrot.slane %v5502, 4
        %v5505 = vshll.u32 %v5125, 16
        %v5507 = vrot.slane %v5505, 5
        %v5508 = vsel %vm1454, %v5503, %v5507
        %v5509 = vshrl.u32 %v5125, 16
        %v5511 = vrot.slane %v5509, 4
        %v5512 = vor.u32 %v5511, %v5507
        %v5513 = vrot.slane %v5512, 4
        %v5515 = vshrl.u32 %v5080, 16
        %v5517 = vrot.slane %v5515, 4
        %v5518 = vshll.u32 %v5080, 16
        %v5520 = vrot.slane %v5518, 5
        %v5521 = vor.u32 %v5517, %v5520
        %v5522 = vrot.slane %v5521, 4
        %v5524 = vshll.u32 %v5081, 16
        %v5526 = vrot.slane %v5524, 5
        %v5527 = vsel %vm1454, %v5522, %v5526
        %v5528 = vshrl.u32 %v5081, 16
        %v5530 = vrot.slane %v5528, 4
        %v5531 = vor.u32 %v5530, %v5526
        %v5532 = vrot.slane %v5531, 4
        %v5534 = vshll.u32 %v5126, 16
        %v5536 = vrot.slane %v5534, 5
        %v5537 = vsel %vm1454, %v5532, %v5536
        %v5538 = vshrl.u32 %v5126, 16
        %v5540 = vrot.slane %v5538, 4
        %v5541 = vor.u32 %v5540, %v5536
        %v5542 = vrot.slane %v5541, 4
        %v5544 = vshrl.u32 %v5083, 16
        %v5546 = vrot.slane %v5544, 4
        %v5547 = vshll.u32 %v5083, 16
        %v5549 = vrot.slane %v5547, 5
        %v5550 = vor.u32 %v5546, %v5549
        %v5551 = vrot.slane %v5550, 4
        %v5553 = vshll.u32 %v5084, 16
        %v5555 = vrot.slane %v5553, 5
        %v5556 = vsel %vm1454, %v5551, %v5555
        %v5557 = vshrl.u32 %v5084, 16
        %v5559 = vrot.slane %v5557, 4
        %v5560 = vor.u32 %v5559, %v5555
        %v5561 = vrot.slane %v5560, 4
        %v5563 = vshll.u32 %v5127, 16
        %v5565 = vrot.slane %v5563, 5
        %v5566 = vsel %vm1454, %v5561, %v5565
        %v5567 = vshrl.u32 %v5127, 16
        %v5569 = vrot.slane %v5567, 4
        %v5570 = vor.u32 %v5569, %v5565
        %v5571 = vrot.slane %v5570, 4
        %v5573 = vshrl.u32 %v5086, 16
        %v5575 = vrot.slane %v5573, 4
        %v5576 = vshll.u32 %v5086, 16
        %v5578 = vrot.slane %v5576, 5
        %v5579 = vor.u32 %v5575, %v5578
        %v5580 = vrot.slane %v5579, 4
        %v5582 = vshll.u32 %v5087, 16
        %v5584 = vrot.slane %v5582, 5
        %v5585 = vsel %vm1454, %v5580, %v5584
        %v5586 = vshrl.u32 %v5087, 16
        %v5588 = vrot.slane %v5586, 4
        %v5589 = vor.u32 %v5588, %v5584
        %v5590 = vrot.slane %v5589, 4
        %v5592 = vshll.u32 %v5128, 16
        %v5594 = vrot.slane %v5592, 5
        %v5595 = vsel %vm1454, %v5590, %v5594
        %v5596 = vshrl.u32 %v5128, 16
        %v5598 = vrot.slane %v5596, 4
        %v5599 = vor.u32 %v5598, %v5594
        %v5600 = vrot.slane %v5599, 4
        %v5602 = vshrl.u32 %v5089, 16
        %v5604 = vrot.slane %v5602, 4
        %v5605 = vshll.u32 %v5089, 16
        %v5607 = vrot.slane %v5605, 5
        %v5608 = vor.u32 %v5604, %v5607
        %v5609 = vrot.slane %v5608, 4
        %v5611 = vshll.u32 %v5090, 16
        %v5613 = vrot.slane %v5611, 5
        %v5614 = vsel %vm1454, %v5609, %v5613
        %v5615 = vshrl.u32 %v5090, 16
        %v5617 = vrot.slane %v5615, 4
        %v5618 = vor.u32 %v5617, %v5613
        %v5619 = vrot.slane %v5618, 4
        %v5621 = vshll.u32 %v5129, 16
        %v5623 = vrot.slane %v5621, 5
        %v5624 = vsel %vm1454, %v5619, %v5623
        %v5625 = vshrl.u32 %v5129, 16
        %v5627 = vrot.slane %v5625, 4
        %v5628 = vor.u32 %v5627, %v5623
        %v5629 = vrot.slane %v5628, 4
        %v5631 = vshrl.u32 %v5092, 16
        %v5633 = vrot.slane %v5631, 4
        %v5634 = vshll.u32 %v5092, 16
        %v5636 = vrot.slane %v5634, 5
        %v5637 = vor.u32 %v5633, %v5636
        %v5638 = vrot.slane %v5637, 4
        %v5640 = vshll.u32 %v5093, 16
        %v5642 = vrot.slane %v5640, 5
        %v5643 = vsel %vm1454, %v5638, %v5642
        %v5644 = vshrl.u32 %v5093, 16
        %v5646 = vrot.slane %v5644, 4
        %v5647 = vor.u32 %v5646, %v5642
        %v5648 = vrot.slane %v5647, 4
        %v5650 = vshll.u32 %v5130, 16
        %v5652 = vrot.slane %v5650, 5
        %v5653 = vsel %vm1454, %v5648, %v5652
        %v5654 = vshrl.u32 %v5130, 16
        %v5656 = vrot.slane %v5654, 4
        %v5657 = vor.u32 %v5656, %v5652
        %v5658 = vrot.slane %v5657, 4
        %v5660 = vshrl.u32 %v5095, 16
        %v5662 = vrot.slane %v5660, 4
        %v5663 = vshll.u32 %v5095, 16
        %v5665 = vrot.slane %v5663, 5
        %v5666 = vor.u32 %v5662, %v5665
        %v5667 = vrot.slane %v5666, 4
        %v5669 = vshll.u32 %v5096, 16
        %v5671 = vrot.slane %v5669, 5
        %v5672 = vsel %vm1454, %v5667, %v5671
        %v5673 = vshrl.u32 %v5096, 16
        %v5675 = vrot.slane %v5673, 4
        %v5676 = vor.u32 %v5675, %v5671
        %v5677 = vrot.slane %v5676, 4
        %v5679 = vshll.u32 %v5131, 16
        %v5681 = vrot.slane %v5679, 5
        %v5682 = vsel %vm1454, %v5677, %v5681
        %v5683 = vshrl.u32 %v5131, 16
        %v5685 = vrot.slane %v5683, 4
        %v5686 = vor.u32 %v5685, %v5681
        %v5687 = vrot.slane %v5686, 4
        %v5689 = vshrl.u32 %v5098, 16
        %v5691 = vrot.slane %v5689, 4
        %v5692 = vshll.u32 %v5098, 16
        %v5694 = vrot.slane %v5692, 5
        %v5695 = vor.u32 %v5691, %v5694
        %v5696 = vrot.slane %v5695, 4
        %v5698 = vshll.u32 %v5099, 16
        %v5700 = vrot.slane %v5698, 5
        %v5701 = vsel %vm1454, %v5696, %v5700
        %v5702 = vshrl.u32 %v5099, 16
        %v5704 = vrot.slane %v5702, 4
        %v5705 = vor.u32 %v5704, %v5700
        %v5706 = vrot.slane %v5705, 4
        %v5708 = vshll.u32 %v5132, 16
        %v5710 = vrot.slane %v5708, 5
        %v5711 = vsel %vm1454, %v5706, %v5710
        %v5712 = vshrl.u32 %v5132, 16
        %v5714 = vrot.slane %v5712, 4
        %v5715 = vor.u32 %v5714, %v5710
        %v5716 = vrot.slane %v5715, 4
        %v5718 = vshrl.u32 %v5101, 16
        %v5720 = vrot.slane %v5718, 4
        %v5721 = vshll.u32 %v5101, 16
        %v5723 = vrot.slane %v5721, 5
        %v5724 = vor.u32 %v5720, %v5723
        %v5725 = vrot.slane %v5724, 4
        %v5727 = vshll.u32 %v5102, 16
        %v5729 = vrot.slane %v5727, 5
        %v5730 = vsel %vm1454, %v5725, %v5729
        %v5731 = vshrl.u32 %v5102, 16
        %v5733 = vrot.slane %v5731, 4
        %v5734 = vor.u32 %v5733, %v5729
        %v5735 = vrot.slane %v5734, 4
        %v5737 = vshll.u32 %v5133, 16
        %v5739 = vrot.slane %v5737, 5
        %v5740 = vsel %vm1454, %v5735, %v5739
        %v5741 = vshrl.u32 %v5133, 16
        %v5743 = vrot.slane %v5741, 4
        %v5744 = vor.u32 %v5743, %v5739
        %v5745 = vrot.slane %v5744, 4
        %v5747 = vshrl.u32 %v5104, 16
        %v5749 = vrot.slane %v5747, 4
        %v5750 = vshll.u32 %v5104, 16
        %v5752 = vrot.slane %v5750, 5
        %v5753 = vor.u32 %v5749, %v5752
        %v5754 = vrot.slane %v5753, 4
        %v5756 = vshll.u32 %v5105, 16
        %v5758 = vrot.slane %v5756, 5
        %v5759 = vsel %vm1454, %v5754, %v5758
        %v5760 = vshrl.u32 %v5105, 16
        %v5762 = vrot.slane %v5760, 4
        %v5763 = vor.u32 %v5762, %v5758
        %v5764 = vrot.slane %v5763, 4
        %v5766 = vshll.u32 %v5134, 16
        %v5768 = vrot.slane %v5766, 5
        %v5769 = vsel %vm1454, %v5764, %v5768
        %v5770 = vshrl.u32 %v5134, 16
        %v5772 = vrot.slane %v5770, 4
        %v5773 = vor.u32 %v5772, %v5768
        %v5774 = vrot.slane %v5773, 4
        %v5776 = vshrl.u32 %v5107, 16
        %v5778 = vrot.slane %v5776, 4
        %v5779 = vshll.u32 %v5107, 16
        %v5781 = vrot.slane %v5779, 5
        %v5782 = vor.u32 %v5778, %v5781
        %v5783 = vrot.slane %v5782, 4
        %v5785 = vshll.u32 %v5108, 16
        %v5787 = vrot.slane %v5785, 5
        %v5788 = vsel %vm1454, %v5783, %v5787
        %v5789 = vshrl.u32 %v5108, 16
        %v5791 = vrot.slane %v5789, 4
        %v5792 = vor.u32 %v5791, %v5787
        %v5793 = vrot.slane %v5792, 4
        %v5795 = vshll.u32 %v5135, 16
        %v5797 = vrot.slane %v5795, 5
        %v5798 = vsel %vm1454, %v5793, %v5797
        %v5799 = vshrl.u32 %v5135, 16
        %v5801 = vrot.slane %v5799, 4
        %v5802 = vor.u32 %v5801, %v5797
        %v5803 = vrot.slane %v5802, 4
        %v5805 = vshrl.u32 %v5110, 16
        %v5807 = vrot.slane %v5805, 4
        %v5808 = vshll.u32 %v5110, 16
        %v5810 = vrot.slane %v5808, 5
        %v5811 = vor.u32 %v5807, %v5810
        %v5812 = vrot.slane %v5811, 4
        %v5814 = vshll.u32 %v5111, 16
        %v5816 = vrot.slane %v5814, 5
        %v5817 = vsel %vm1454, %v5812, %v5816
        %v5818 = vshrl.u32 %v5111, 16
        %v5820 = vrot.slane %v5818, 4
        %v5821 = vor.u32 %v5820, %v5816
        %v5822 = vrot.slane %v5821, 4
        %v5824 = vshll.u32 %v5136, 16
        %v5826 = vrot.slane %v5824, 5
        %v5827 = vsel %vm1454, %v5822, %v5826
        %v5828 = vshrl.u32 %v5136, 16
        %v5830 = vrot.slane %v5828, 4
        %v5831 = vor.u32 %v5830, %v5826
        %v5832 = vrot.slane %v5831, 4
        %v5905 = vmax.bf16 %v5041, %v5150
        %v5906 = vmax.bf16 %v5042, %v5160
        %v5907 = vmax.bf16 %v5043, %v5165
        %v5908 = vmax.bf16 %v5044, %v5179
        %v5909 = vmax.bf16 %v5045, %v5189
        %v5910 = vmax.bf16 %v5046, %v5194
        %v5911 = vmax.bf16 %v5047, %v5208
        %v5912 = vmax.bf16 %v5048, %v5218
        %v5913 = vmax.bf16 %v5049, %v5223
        %v5914 = vmax.bf16 %v5050, %v5237
        %v5915 = vmax.bf16 %v5051, %v5247
        %v5916 = vmax.bf16 %v5052, %v5252
        %v5917 = vmax.bf16 %v5053, %v5266
        %v5918 = vmax.bf16 %v5054, %v5276
        %v5919 = vmax.bf16 %v5055, %v5281
        %v5920 = vmax.bf16 %v5056, %v5295
        %v5921 = vmax.bf16 %v5057, %v5305
        %v5922 = vmax.bf16 %v5058, %v5310
        %v5923 = vmax.bf16 %v5059, %v5324
        %v5924 = vmax.bf16 %v5060, %v5334
        %v5925 = vmax.bf16 %v5061, %v5339
        %v5926 = vmax.bf16 %v5062, %v5353
        %v5927 = vmax.bf16 %v5063, %v5363
        %v5928 = vmax.bf16 %v5064, %v5368
        %v5929 = vmax.bf16 %v5065, %v5382
        %v5930 = vmax.bf16 %v5066, %v5392
        %v5931 = vmax.bf16 %v5067, %v5397
        %v5932 = vmax.bf16 %v5068, %v5411
        %v5933 = vmax.bf16 %v5069, %v5421
        %v5934 = vmax.bf16 %v5070, %v5426
        %v5935 = vmax.bf16 %v5071, %v5440
        %v5936 = vmax.bf16 %v5072, %v5450
        %v5937 = vmax.bf16 %v5073, %v5455
        %v5938 = vmax.bf16 %v5074, %v5469
        %v5939 = vmax.bf16 %v5075, %v5479
        %v5940 = vmax.bf16 %v5076, %v5484
        %v5941 = vmax.bf16 %v5077, %v5498
        %v5942 = vmax.bf16 %v5078, %v5508
        %v5943 = vmax.bf16 %v5079, %v5513
        %v5944 = vmax.bf16 %v5080, %v5527
        %v5945 = vmax.bf16 %v5081, %v5537
        %v5946 = vmax.bf16 %v5082, %v5542
        %v5947 = vmax.bf16 %v5083, %v5556
        %v5948 = vmax.bf16 %v5084, %v5566
        %v5949 = vmax.bf16 %v5085, %v5571
        %v5950 = vmax.bf16 %v5086, %v5585
        %v5951 = vmax.bf16 %v5087, %v5595
        %v5952 = vmax.bf16 %v5088, %v5600
        %v5953 = vmax.bf16 %v5089, %v5614
        %v5954 = vmax.bf16 %v5090, %v5624
        %v5955 = vmax.bf16 %v5091, %v5629
        %v5956 = vmax.bf16 %v5092, %v5643
        %v5957 = vmax.bf16 %v5093, %v5653
        %v5958 = vmax.bf16 %v5094, %v5658
        %v5959 = vmax.bf16 %v5095, %v5672
        %v5960 = vmax.bf16 %v5096, %v5682
        %v5961 = vmax.bf16 %v5097, %v5687
        %v5962 = vmax.bf16 %v5098, %v5701
        %v5963 = vmax.bf16 %v5099, %v5711
        %v5964 = vmax.bf16 %v5100, %v5716
        %v5965 = vmax.bf16 %v5101, %v5730
        %v5966 = vmax.bf16 %v5102, %v5740
        %v5967 = vmax.bf16 %v5103, %v5745
        %v5968 = vmax.bf16 %v5104, %v5759
        %v5969 = vmax.bf16 %v5105, %v5769
        %v5970 = vmax.bf16 %v5106, %v5774
        %v5971 = vmax.bf16 %v5107, %v5788
        %v5972 = vmax.bf16 %v5108, %v5798
        %v5973 = vmax.bf16 %v5109, %v5803
        %v5974 = vmax.bf16 %v5110, %v5817
        %v5975 = vmax.bf16 %v5111, %v5827
        %v5976 = vmax.bf16 %v5112, %v5832
        %v5977 = vld [vmem:[#allocation3] sm:$0xe]
        %v5978 = vld [vmem:[#allocation3 + $0xc] sm:$0xe]
        %v5979 = vld [vmem:[#allocation3 + $0x18] sm:$0xe]
        %v5980 = vld [vmem:[#allocation3 + $0x24] sm:$0xe]
        %v5981 = vld [vmem:[#allocation3 + $0x30] sm:$0xe]
        %v5982 = vld [vmem:[#allocation3 + $0x3c] sm:$0xe]
        %v5983 = vld [vmem:[#allocation3 + $0x48] sm:$0xe]
        %v5984 = vld [vmem:[#allocation3 + $0x54] sm:$0xe]
        %v5985 = vld [vmem:[#allocation3 + $0x60] sm:$0xe]
        %v5986 = vld [vmem:[#allocation3 + $0x6c] sm:$0xe]
        %v5987 = vld [vmem:[#allocation3 + $0x78] sm:$0xe]
        %v5988 = vld [vmem:[#allocation3 + $0x84] sm:$0xe]
        %v5989 = vld [vmem:[#allocation3 + $0x90] sm:$0xe]
        %v5990 = vld [vmem:[#allocation3 + $0x9c] sm:$0xe]
        %v5991 = vld [vmem:[#allocation3 + $0xa8] sm:$0xe]
        %v5992 = vld [vmem:[#allocation3 + $0xb4] sm:$0xe]
        %v5993 = vld [vmem:[#allocation3 + $0xc0] sm:$0xe]
        %v5994 = vld [vmem:[#allocation3 + $0xcc] sm:$0xe]
        %v5995 = vld [vmem:[#allocation3 + $0xd8] sm:$0xe]
        %v5996 = vld [vmem:[#allocation3 + $0xe4] sm:$0xe]
        %v5997 = vld [vmem:[#allocation3 + $0xf0] sm:$0xe]
        %v5998 = vld [vmem:[#allocation3 + $0xfc] sm:$0xe]
        %v5999 = vld [vmem:[#allocation3 + $0x108] sm:$0xe]
        %v6000 = vld [vmem:[#allocation3 + $0x114] sm:$0xe]
        %v6073 = vrot.slane %v5977, 5
        %v6074 = vrot.slane %v6073, 4
        %v6075 = vrot.slane %v5042, 5
        %v6076 = vsel %vm1072, %v6074, %v6075
        %v6077 = vrot.slane %v6075, 4
        %v6078 = vrot.slane %v5113, 5
        %v6079 = vsel %vm1072, %v6077, %v6078
        %v6080 = vrot.slane %v6078, 4
        %v6081 = vrot.slane %v5978, 5
        %v6082 = vrot.slane %v6081, 4
        %v6083 = vrot.slane %v5045, 5
        %v6084 = vsel %vm1072, %v6082, %v6083
        %v6085 = vrot.slane %v6083, 4
        %v6086 = vrot.slane %v5114, 5
        %v6087 = vsel %vm1072, %v6085, %v6086
        %v6088 = vrot.slane %v6086, 4
        %v6089 = vrot.slane %v5979, 5
        %v6090 = vrot.slane %v6089, 4
        %v6091 = vrot.slane %v5048, 5
        %v6092 = vsel %vm1072, %v6090, %v6091
        %v6093 = vrot.slane %v6091, 4
        %v6094 = vrot.slane %v5115, 5
        %v6095 = vsel %vm1072, %v6093, %v6094
        %v6096 = vrot.slane %v6094, 4
        %v6097 = vrot.slane %v5980, 5
        %v6098 = vrot.slane %v6097, 4
        %v6099 = vrot.slane %v5051, 5
        %v6100 = vsel %vm1072, %v6098, %v6099
        %v6101 = vrot.slane %v6099, 4
        %v6102 = vrot.slane %v5116, 5
        %v6103 = vsel %vm1072, %v6101, %v6102
        %v6104 = vrot.slane %v6102, 4
        %v6105 = vrot.slane %v5981, 5
        %v6106 = vrot.slane %v6105, 4
        %v6107 = vrot.slane %v5054, 5
        %v6108 = vsel %vm1072, %v6106, %v6107
        %v6109 = vrot.slane %v6107, 4
        %v6110 = vrot.slane %v5117, 5
        %v6111 = vsel %vm1072, %v6109, %v6110
        %v6112 = vrot.slane %v6110, 4
        %v6113 = vrot.slane %v5982, 5
        %v6114 = vrot.slane %v6113, 4
        %v6115 = vrot.slane %v5057, 5
        %v6116 = vsel %vm1072, %v6114, %v6115
        %v6117 = vrot.slane %v6115, 4
        %v6118 = vrot.slane %v5118, 5
        %v6119 = vsel %vm1072, %v6117, %v6118
        %v6120 = vrot.slane %v6118, 4
        %v6121 = vrot.slane %v5983, 5
        %v6122 = vrot.slane %v6121, 4
        %v6123 = vrot.slane %v5060, 5
        %v6124 = vsel %vm1072, %v6122, %v6123
        %v6125 = vrot.slane %v6123, 4
        %v6126 = vrot.slane %v5119, 5
        %v6127 = vsel %vm1072, %v6125, %v6126
        %v6128 = vrot.slane %v6126, 4
        %v6129 = vrot.slane %v5984, 5
        %v6130 = vrot.slane %v6129, 4
        %v6131 = vrot.slane %v5063, 5
        %v6132 = vsel %vm1072, %v6130, %v6131
        %v6133 = vrot.slane %v6131, 4
        %v6134 = vrot.slane %v5120, 5
        %v6135 = vsel %vm1072, %v6133, %v6134
        %v6136 = vrot.slane %v6134, 4
        %v6137 = vrot.slane %v5985, 5
        %v6138 = vrot.slane %v6137, 4
        %v6139 = vrot.slane %v5066, 5
        %v6140 = vsel %vm1072, %v6138, %v6139
        %v6141 = vrot.slane %v6139, 4
        %v6142 = vrot.slane %v5121, 5
        %v6143 = vsel %vm1072, %v6141, %v6142
        %v6144 = vrot.slane %v6142, 4
        %v6145 = vrot.slane %v5986, 5
        %v6146 = vrot.slane %v6145, 4
        %v6147 = vrot.slane %v5069, 5
        %v6148 = vsel %vm1072, %v6146, %v6147
        %v6149 = vrot.slane %v6147, 4
        %v6150 = vrot.slane %v5122, 5
        %v6151 = vsel %vm1072, %v6149, %v6150
        %v6152 = vrot.slane %v6150, 4
        %v6153 = vrot.slane %v5987, 5
        %v6154 = vrot.slane %v6153, 4
        %v6155 = vrot.slane %v5072, 5
        %v6156 = vsel %vm1072, %v6154, %v6155
        %v6157 = vrot.slane %v6155, 4
        %v6158 = vrot.slane %v5123, 5
        %v6159 = vsel %vm1072, %v6157, %v6158
        %v6160 = vrot.slane %v6158, 4
        %v6161 = vrot.slane %v5988, 5
        %v6162 = vrot.slane %v6161, 4
        %v6163 = vrot.slane %v5075, 5
        %v6164 = vsel %vm1072, %v6162, %v6163
        %v6165 = vrot.slane %v6163, 4
        %v6166 = vrot.slane %v5124, 5
        %v6167 = vsel %vm1072, %v6165, %v6166
        %v6168 = vrot.slane %v6166, 4
        %v6169 = vrot.slane %v5989, 5
        %v6170 = vrot.slane %v6169, 4
        %v6171 = vrot.slane %v5078, 5
        %v6172 = vsel %vm1072, %v6170, %v6171
        %v6173 = vrot.slane %v6171, 4
        %v6174 = vrot.slane %v5125, 5
        %v6175 = vsel %vm1072, %v6173, %v6174
        %v6176 = vrot.slane %v6174, 4
        %v6177 = vrot.slane %v5990, 5
        %v6178 = vrot.slane %v6177, 4
        %v6179 = vrot.slane %v5081, 5
        %v6180 = vsel %vm1072, %v6178, %v6179
        %v6181 = vrot.slane %v6179, 4
        %v6182 = vrot.slane %v5126, 5
        %v6183 = vsel %vm1072, %v6181, %v6182
        %v6184 = vrot.slane %v6182, 4
        %v6185 = vrot.slane %v5991, 5
        %v6186 = vrot.slane %v6185, 4
        %v6187 = vrot.slane %v5084, 5
        %v6188 = vsel %vm1072, %v6186, %v6187
        %v6189 = vrot.slane %v6187, 4
        %v6190 = vrot.slane %v5127, 5
        %v6191 = vsel %vm1072, %v6189, %v6190
        %v6192 = vrot.slane %v6190, 4
        %v6193 = vrot.slane %v5992, 5
        %v6194 = vrot.slane %v6193, 4
        %v6195 = vrot.slane %v5087, 5
        %v6196 = vsel %vm1072, %v6194, %v6195
        %v6197 = vrot.slane %v6195, 4
        %v6198 = vrot.slane %v5128, 5
        %v6199 = vsel %vm1072, %v6197, %v6198
        %v6200 = vrot.slane %v6198, 4
        %v6201 = vrot.slane %v5993, 5
        %v6202 = vrot.slane %v6201, 4
        %v6203 = vrot.slane %v5090, 5
        %v6204 = vsel %vm1072, %v6202, %v6203
        %v6205 = vrot.slane %v6203, 4
        %v6206 = vrot.slane %v5129, 5
        %v6207 = vsel %vm1072, %v6205, %v6206
        %v6208 = vrot.slane %v6206, 4
        %v6209 = vrot.slane %v5994, 5
        %v6210 = vrot.slane %v6209, 4
        %v6211 = vrot.slane %v5093, 5
        %v6212 = vsel %vm1072, %v6210, %v6211
        %v6213 = vrot.slane %v6211, 4
        %v6214 = vrot.slane %v5130, 5
        %v6215 = vsel %vm1072, %v6213, %v6214
        %v6216 = vrot.slane %v6214, 4
        %v6217 = vrot.slane %v5995, 5
        %v6218 = vrot.slane %v6217, 4
        %v6219 = vrot.slane %v5096, 5
        %v6220 = vsel %vm1072, %v6218, %v6219
        %v6221 = vrot.slane %v6219, 4
        %v6222 = vrot.slane %v5131, 5
        %v6223 = vsel %vm1072, %v6221, %v6222
        %v6224 = vrot.slane %v6222, 4
        %v6225 = vrot.slane %v5996, 5
        %v6226 = vrot.slane %v6225, 4
        %v6227 = vrot.slane %v5099, 5
        %v6228 = vsel %vm1072, %v6226, %v6227
        %v6229 = vrot.slane %v6227, 4
        %v6230 = vrot.slane %v5132, 5
        %v6231 = vsel %vm1072, %v6229, %v6230
        %v6232 = vrot.slane %v6230, 4
        %v6233 = vrot.slane %v5997, 5
        %v6234 = vrot.slane %v6233, 4
        %v6235 = vrot.slane %v5102, 5
        %v6236 = vsel %vm1072, %v6234, %v6235
        %v6237 = vrot.slane %v6235, 4
        %v6238 = vrot.slane %v5133, 5
        %v6239 = vsel %vm1072, %v6237, %v6238
        %v6240 = vrot.slane %v6238, 4
        %v6241 = vrot.slane %v5998, 5
        %v6242 = vrot.slane %v6241, 4
        %v6243 = vrot.slane %v5105, 5
        %v6244 = vsel %vm1072, %v6242, %v6243
        %v6245 = vrot.slane %v6243, 4
        %v6246 = vrot.slane %v5134, 5
        %v6247 = vsel %vm1072, %v6245, %v6246
        %v6248 = vrot.slane %v6246, 4
        %v6249 = vrot.slane %v5999, 5
        %v6250 = vrot.slane %v6249, 4
        %v6251 = vrot.slane %v5108, 5
        %v6252 = vsel %vm1072, %v6250, %v6251
        %v6253 = vrot.slane %v6251, 4
        %v6254 = vrot.slane %v5135, 5
        %v6255 = vsel %vm1072, %v6253, %v6254
        %v6256 = vrot.slane %v6254, 4
        %v6257 = vrot.slane %v6000, 5
        %v6258 = vrot.slane %v6257, 4
        %v6259 = vrot.slane %v5111, 5
        %v6260 = vsel %vm1072, %v6258, %v6259
        %v6261 = vrot.slane %v6259, 4
        %v6262 = vrot.slane %v5136, 5
        %v6263 = vsel %vm1072, %v6261, %v6262
        %v6264 = vrot.slane %v6262, 4
        %v6337 = vmax.bf16 %v5905, %v6076
        %v6338 = vmax.bf16 %v5906, %v6079
        %v6339 = vmax.bf16 %v5907, %v6080
        %v6340 = vmax.bf16 %v5908, %v6084
        %v6341 = vmax.bf16 %v5909, %v6087
        %v6342 = vmax.bf16 %v5910, %v6088
        %v6343 = vmax.bf16 %v5911, %v6092
        %v6344 = vmax.bf16 %v5912, %v6095
        %v6345 = vmax.bf16 %v5913, %v6096
        %v6346 = vmax.bf16 %v5914, %v6100
        %v6347 = vmax.bf16 %v5915, %v6103
        %v6348 = vmax.bf16 %v5916, %v6104
        %v6349 = vmax.bf16 %v5917, %v6108
        %v6350 = vmax.bf16 %v5918, %v6111
        %v6351 = vmax.bf16 %v5919, %v6112
        %v6352 = vmax.bf16 %v5920, %v6116
        %v6353 = vmax.bf16 %v5921, %v6119
        %v6354 = vmax.bf16 %v5922, %v6120
        %v6355 = vmax.bf16 %v5923, %v6124
        %v6356 = vmax.bf16 %v5924, %v6127
        %v6357 = vmax.bf16 %v5925, %v6128
        %v6358 = vmax.bf16 %v5926, %v6132
        %v6359 = vmax.bf16 %v5927, %v6135
        %v6360 = vmax.bf16 %v5928, %v6136
        %v6361 = vmax.bf16 %v5929, %v6140
        %v6362 = vmax.bf16 %v5930, %v6143
        %v6363 = vmax.bf16 %v5931, %v6144
        %v6364 = vmax.bf16 %v5932, %v6148
        %v6365 = vmax.bf16 %v5933, %v6151
        %v6366 = vmax.bf16 %v5934, %v6152
        %v6367 = vmax.bf16 %v5935, %v6156
        %v6368 = vmax.bf16 %v5936, %v6159
        %v6369 = vmax.bf16 %v5937, %v6160
        %v6370 = vmax.bf16 %v5938, %v6164
        %v6371 = vmax.bf16 %v5939, %v6167
        %v6372 = vmax.bf16 %v5940, %v6168
        %v6373 = vmax.bf16 %v5941, %v6172
        %v6374 = vmax.bf16 %v5942, %v6175
        %v6375 = vmax.bf16 %v5943, %v6176
        %v6376 = vmax.bf16 %v5944, %v6180
        %v6377 = vmax.bf16 %v5945, %v6183
        %v6378 = vmax.bf16 %v5946, %v6184
        %v6379 = vmax.bf16 %v5947, %v6188
        %v6380 = vmax.bf16 %v5948, %v6191
        %v6381 = vmax.bf16 %v5949, %v6192
        %v6382 = vmax.bf16 %v5950, %v6196
        %v6383 = vmax.bf16 %v5951, %v6199
        %v6384 = vmax.bf16 %v5952, %v6200
        %v6385 = vmax.bf16 %v5953, %v6204
        %v6386 = vmax.bf16 %v5954, %v6207
        %v6387 = vmax.bf16 %v5955, %v6208
        %v6388 = vmax.bf16 %v5956, %v6212
        %v6389 = vmax.bf16 %v5957, %v6215
        %v6390 = vmax.bf16 %v5958, %v6216
        %v6391 = vmax.bf16 %v5959, %v6220
        %v6392 = vmax.bf16 %v5960, %v6223
        %v6393 = vmax.bf16 %v5961, %v6224
        %v6394 = vmax.bf16 %v5962, %v6228
        %v6395 = vmax.bf16 %v5963, %v6231
        %v6396 = vmax.bf16 %v5964, %v6232
        %v6397 = vmax.bf16 %v5965, %v6236
        %v6398 = vmax.bf16 %v5966, %v6239
        %v6399 = vmax.bf16 %v5967, %v6240
        %v6400 = vmax.bf16 %v5968, %v6244
        %v6401 = vmax.bf16 %v5969, %v6247
        %v6402 = vmax.bf16 %v5970, %v6248
        %v6403 = vmax.bf16 %v5971, %v6252
        %v6404 = vmax.bf16 %v5972, %v6255
        %v6405 = vmax.bf16 %v5973, %v6256
        %v6406 = vmax.bf16 %v5974, %v6260
        %v6407 = vmax.bf16 %v5975, %v6263
        %v6408 = vmax.bf16 %v5976, %v6264
        %v6409 = vld [vmem:[#allocation3 + $0x8] sm:$0xf]
        %v6410 = vld [vmem:[#allocation3 + $0x14] sm:$0xf]
        %v6411 = vld [vmem:[#allocation3 + $0x20] sm:$0xf]
        %v6412 = vld [vmem:[#allocation3 + $0x2c] sm:$0xf]
        %v6413 = vld [vmem:[#allocation3 + $0x38] sm:$0xf]
        %v6414 = vld [vmem:[#allocation3 + $0x44] sm:$0xf]
        %v6415 = vld [vmem:[#allocation3 + $0x50] sm:$0xf]
        %v6416 = vld [vmem:[#allocation3 + $0x5c] sm:$0xf]
        %v6417 = vld [vmem:[#allocation3 + $0x68] sm:$0xf]
        %v6418 = vld [vmem:[#allocation3 + $0x74] sm:$0xf]
        %v6419 = vld [vmem:[#allocation3 + $0x80] sm:$0xf]
        %v6420 = vld [vmem:[#allocation3 + $0x8c] sm:$0xf]
        %v6421 = vld [vmem:[#allocation3 + $0x98] sm:$0xf]
        %v6422 = vld [vmem:[#allocation3 + $0xa4] sm:$0xf]
        %v6423 = vld [vmem:[#allocation3 + $0xb0] sm:$0xf]
        %v6424 = vld [vmem:[#allocation3 + $0xbc] sm:$0xf]
        %v6425 = vld [vmem:[#allocation3 + $0xc8] sm:$0xf]
        %v6426 = vld [vmem:[#allocation3 + $0xd4] sm:$0xf]
        %v6427 = vld [vmem:[#allocation3 + $0xe0] sm:$0xf]
        %v6428 = vld [vmem:[#allocation3 + $0xec] sm:$0xf]
        %v6429 = vld [vmem:[#allocation3 + $0xf8] sm:$0xf]
        %v6430 = vld [vmem:[#allocation3 + $0x104] sm:$0xf]
        %v6431 = vld [vmem:[#allocation3 + $0x110] sm:$0xf]
        %v6432 = vld [vmem:[#allocation3 + $0x11c] sm:$0xf]
        %v6434 = vshrl.u32 %v5977, 16
        %v6436 = vrot.slane %v6434, 5
        %v6437 = vshll.u32 %v5977, 16
        %v6439 = vrot.slane %v6437, 6
        %v6440 = vor.u32 %v6436, %v6439
        %v6441 = vrot.slane %v6440, 4
        %v6442 = vrot.slane %v5151, 5
        %v6443 = vrot.slane %v5147, 6
        %v6444 = vor.u32 %v6442, %v6443
        %v6445 = vsel %vm3193, %v6441, %v6444
        %v6446 = vrot.slane %v6444, 4
        %v6448 = vshrl.u32 %v6409, 16
        %v6450 = vrot.slane %v6448, 5
        %v6451 = vshll.u32 %v6409, 16
        %v6453 = vrot.slane %v6451, 6
        %v6454 = vor.u32 %v6450, %v6453
        %v6455 = vsel %vm3193, %v6446, %v6454
        %v6456 = vrot.slane %v6454, 4
        %v6458 = vshrl.u32 %v5978, 16
        %v6460 = vrot.slane %v6458, 5
        %v6461 = vshll.u32 %v5978, 16
        %v6463 = vrot.slane %v6461, 6
        %v6464 = vor.u32 %v6460, %v6463
        %v6465 = vrot.slane %v6464, 4
        %v6466 = vrot.slane %v5180, 5
        %v6467 = vrot.slane %v5176, 6
        %v6468 = vor.u32 %v6466, %v6467
        %v6469 = vsel %vm3193, %v6465, %v6468
        %v6470 = vrot.slane %v6468, 4
        %v6472 = vshrl.u32 %v6410, 16
        %v6474 = vrot.slane %v6472, 5
        %v6475 = vshll.u32 %v6410, 16
        %v6477 = vrot.slane %v6475, 6
        %v6478 = vor.u32 %v6474, %v6477
        %v6479 = vsel %vm3193, %v6470, %v6478
        %v6480 = vrot.slane %v6478, 4
        %v6482 = vshrl.u32 %v5979, 16
        %v6484 = vrot.slane %v6482, 5
        %v6485 = vshll.u32 %v5979, 16
        %v6487 = vrot.slane %v6485, 6
        %v6488 = vor.u32 %v6484, %v6487
        %v6489 = vrot.slane %v6488, 4
        %v6490 = vrot.slane %v5209, 5
        %v6491 = vrot.slane %v5205, 6
        %v6492 = vor.u32 %v6490, %v6491
        %v6493 = vsel %vm3193, %v6489, %v6492
        %v6494 = vrot.slane %v6492, 4
        %v6496 = vshrl.u32 %v6411, 16
        %v6498 = vrot.slane %v6496, 5
        %v6499 = vshll.u32 %v6411, 16
        %v6501 = vrot.slane %v6499, 6
        %v6502 = vor.u32 %v6498, %v6501
        %v6503 = vsel %vm3193, %v6494, %v6502
        %v6504 = vrot.slane %v6502, 4
        %v6506 = vshrl.u32 %v5980, 16
        %v6508 = vrot.slane %v6506, 5
        %v6509 = vshll.u32 %v5980, 16
        %v6511 = vrot.slane %v6509, 6
        %v6512 = vor.u32 %v6508, %v6511
        %v6513 = vrot.slane %v6512, 4
        %v6514 = vrot.slane %v5238, 5
        %v6515 = vrot.slane %v5234, 6
        %v6516 = vor.u32 %v6514, %v6515
        %v6517 = vsel %vm3193, %v6513, %v6516
        %v6518 = vrot.slane %v6516, 4
        %v6520 = vshrl.u32 %v6412, 16
        %v6522 = vrot.slane %v6520, 5
        %v6523 = vshll.u32 %v6412, 16
        %v6525 = vrot.slane %v6523, 6
        %v6526 = vor.u32 %v6522, %v6525
        %v6527 = vsel %vm3193, %v6518, %v6526
        %v6528 = vrot.slane %v6526, 4
        %v6530 = vshrl.u32 %v5981, 16
        %v6532 = vrot.slane %v6530, 5
        %v6533 = vshll.u32 %v5981, 16
        %v6535 = vrot.slane %v6533, 6
        %v6536 = vor.u32 %v6532, %v6535
        %v6537 = vrot.slane %v6536, 4
        %v6538 = vrot.slane %v5267, 5
        %v6539 = vrot.slane %v5263, 6
        %v6540 = vor.u32 %v6538, %v6539
        %v6541 = vsel %vm3193, %v6537, %v6540
        %v6542 = vrot.slane %v6540, 4
        %v6544 = vshrl.u32 %v6413, 16
        %v6546 = vrot.slane %v6544, 5
        %v6547 = vshll.u32 %v6413, 16
        %v6549 = vrot.slane %v6547, 6
        %v6550 = vor.u32 %v6546, %v6549
        %v6551 = vsel %vm3193, %v6542, %v6550
        %v6552 = vrot.slane %v6550, 4
        %v6554 = vshrl.u32 %v5982, 16
        %v6556 = vrot.slane %v6554, 5
        %v6557 = vshll.u32 %v5982, 16
        %v6559 = vrot.slane %v6557, 6
        %v6560 = vor.u32 %v6556, %v6559
        %v6561 = vrot.slane %v6560, 4
        %v6562 = vrot.slane %v5296, 5
        %v6563 = vrot.slane %v5292, 6
        %v6564 = vor.u32 %v6562, %v6563
        %v6565 = vsel %vm3193, %v6561, %v6564
        %v6566 = vrot.slane %v6564, 4
        %v6568 = vshrl.u32 %v6414, 16
        %v6570 = vrot.slane %v6568, 5
        %v6571 = vshll.u32 %v6414, 16
        %v6573 = vrot.slane %v6571, 6
        %v6574 = vor.u32 %v6570, %v6573
        %v6575 = vsel %vm3193, %v6566, %v6574
        %v6576 = vrot.slane %v6574, 4
        %v6578 = vshrl.u32 %v5983, 16
        %v6580 = vrot.slane %v6578, 5
        %v6581 = vshll.u32 %v5983, 16
        %v6583 = vrot.slane %v6581, 6
        %v6584 = vor.u32 %v6580, %v6583
        %v6585 = vrot.slane %v6584, 4
        %v6586 = vrot.slane %v5325, 5
        %v6587 = vrot.slane %v5321, 6
        %v6588 = vor.u32 %v6586, %v6587
        %v6589 = vsel %vm3193, %v6585, %v6588
        %v6590 = vrot.slane %v6588, 4
        %v6592 = vshrl.u32 %v6415, 16
        %v6594 = vrot.slane %v6592, 5
        %v6595 = vshll.u32 %v6415, 16
        %v6597 = vrot.slane %v6595, 6
        %v6598 = vor.u32 %v6594, %v6597
        %v6599 = vsel %vm3193, %v6590, %v6598
        %v6600 = vrot.slane %v6598, 4
        %v6602 = vshrl.u32 %v5984, 16
        %v6604 = vrot.slane %v6602, 5
        %v6605 = vshll.u32 %v5984, 16
        %v6607 = vrot.slane %v6605, 6
        %v6608 = vor.u32 %v6604, %v6607
        %v6609 = vrot.slane %v6608, 4
        %v6610 = vrot.slane %v5354, 5
        %v6611 = vrot.slane %v5350, 6
        %v6612 = vor.u32 %v6610, %v6611
        %v6613 = vsel %vm3193, %v6609, %v6612
        %v6614 = vrot.slane %v6612, 4
        %v6616 = vshrl.u32 %v6416, 16
        %v6618 = vrot.slane %v6616, 5
        %v6619 = vshll.u32 %v6416, 16
        %v6621 = vrot.slane %v6619, 6
        %v6622 = vor.u32 %v6618, %v6621
        %v6623 = vsel %vm3193, %v6614, %v6622
        %v6624 = vrot.slane %v6622, 4
        %v6626 = vshrl.u32 %v5985, 16
        %v6628 = vrot.slane %v6626, 5
        %v6629 = vshll.u32 %v5985, 16
        %v6631 = vrot.slane %v6629, 6
        %v6632 = vor.u32 %v6628, %v6631
        %v6633 = vrot.slane %v6632, 4
        %v6634 = vrot.slane %v5383, 5
        %v6635 = vrot.slane %v5379, 6
        %v6636 = vor.u32 %v6634, %v6635
        %v6637 = vsel %vm3193, %v6633, %v6636
        %v6638 = vrot.slane %v6636, 4
        %v6640 = vshrl.u32 %v6417, 16
        %v6642 = vrot.slane %v6640, 5
        %v6643 = vshll.u32 %v6417, 16
        %v6645 = vrot.slane %v6643, 6
        %v6646 = vor.u32 %v6642, %v6645
        %v6647 = vsel %vm3193, %v6638, %v6646
        %v6648 = vrot.slane %v6646, 4
        %v6650 = vshrl.u32 %v5986, 16
        %v6652 = vrot.slane %v6650, 5
        %v6653 = vshll.u32 %v5986, 16
        %v6655 = vrot.slane %v6653, 6
        %v6656 = vor.u32 %v6652, %v6655
        %v6657 = vrot.slane %v6656, 4
        %v6658 = vrot.slane %v5412, 5
        %v6659 = vrot.slane %v5408, 6
        %v6660 = vor.u32 %v6658, %v6659
        %v6661 = vsel %vm3193, %v6657, %v6660
        %v6662 = vrot.slane %v6660, 4
        %v6664 = vshrl.u32 %v6418, 16
        %v6666 = vrot.slane %v6664, 5
        %v6667 = vshll.u32 %v6418, 16
        %v6669 = vrot.slane %v6667, 6
        %v6670 = vor.u32 %v6666, %v6669
        %v6671 = vsel %vm3193, %v6662, %v6670
        %v6672 = vrot.slane %v6670, 4
        %v6674 = vshrl.u32 %v5987, 16
        %v6676 = vrot.slane %v6674, 5
        %v6677 = vshll.u32 %v5987, 16
        %v6679 = vrot.slane %v6677, 6
        %v6680 = vor.u32 %v6676, %v6679
        %v6681 = vrot.slane %v6680, 4
        %v6682 = vrot.slane %v5441, 5
        %v6683 = vrot.slane %v5437, 6
        %v6684 = vor.u32 %v6682, %v6683
        %v6685 = vsel %vm3193, %v6681, %v6684
        %v6686 = vrot.slane %v6684, 4
        %v6688 = vshrl.u32 %v6419, 16
        %v6690 = vrot.slane %v6688, 5
        %v6691 = vshll.u32 %v6419, 16
        %v6693 = vrot.slane %v6691, 6
        %v6694 = vor.u32 %v6690, %v6693
        %v6695 = vsel %vm3193, %v6686, %v6694
        %v6696 = vrot.slane %v6694, 4
        %v6698 = vshrl.u32 %v5988, 16
        %v6700 = vrot.slane %v6698, 5
        %v6701 = vshll.u32 %v5988, 16
        %v6703 = vrot.slane %v6701, 6
        %v6704 = vor.u32 %v6700, %v6703
        %v6705 = vrot.slane %v6704, 4
        %v6706 = vrot.slane %v5470, 5
        %v6707 = vrot.slane %v5466, 6
        %v6708 = vor.u32 %v6706, %v6707
        %v6709 = vsel %vm3193, %v6705, %v6708
        %v6710 = vrot.slane %v6708, 4
        %v6712 = vshrl.u32 %v6420, 16
        %v6714 = vrot.slane %v6712, 5
        %v6715 = vshll.u32 %v6420, 16
        %v6717 = vrot.slane %v6715, 6
        %v6718 = vor.u32 %v6714, %v6717
        %v6719 = vsel %vm3193, %v6710, %v6718
        %v6720 = vrot.slane %v6718, 4
        %v6722 = vshrl.u32 %v5989, 16
        %v6724 = vrot.slane %v6722, 5
        %v6725 = vshll.u32 %v5989, 16
        %v6727 = vrot.slane %v6725, 6
        %v6728 = vor.u32 %v6724, %v6727
        %v6729 = vrot.slane %v6728, 4
        %v6730 = vrot.slane %v5499, 5
        %v6731 = vrot.slane %v5495, 6
        %v6732 = vor.u32 %v6730, %v6731
        %v6733 = vsel %vm3193, %v6729, %v6732
        %v6734 = vrot.slane %v6732, 4
        %v6736 = vshrl.u32 %v6421, 16
        %v6738 = vrot.slane %v6736, 5
        %v6739 = vshll.u32 %v6421, 16
        %v6741 = vrot.slane %v6739, 6
        %v6742 = vor.u32 %v6738, %v6741
        %v6743 = vsel %vm3193, %v6734, %v6742
        %v6744 = vrot.slane %v6742, 4
        %v6746 = vshrl.u32 %v5990, 16
        %v6748 = vrot.slane %v6746, 5
        %v6749 = vshll.u32 %v5990, 16
        %v6751 = vrot.slane %v6749, 6
        %v6752 = vor.u32 %v6748, %v6751
        %v6753 = vrot.slane %v6752, 4
        %v6754 = vrot.slane %v5528, 5
        %v6755 = vrot.slane %v5524, 6
        %v6756 = vor.u32 %v6754, %v6755
        %v6757 = vsel %vm3193, %v6753, %v6756
        %v6758 = vrot.slane %v6756, 4
        %v6760 = vshrl.u32 %v6422, 16
        %v6762 = vrot.slane %v6760, 5
        %v6763 = vshll.u32 %v6422, 16
        %v6765 = vrot.slane %v6763, 6
        %v6766 = vor.u32 %v6762, %v6765
        %v6767 = vsel %vm3193, %v6758, %v6766
        %v6768 = vrot.slane %v6766, 4
        %v6770 = vshrl.u32 %v5991, 16
        %v6772 = vrot.slane %v6770, 5
        %v6773 = vshll.u32 %v5991, 16
        %v6775 = vrot.slane %v6773, 6
        %v6776 = vor.u32 %v6772, %v6775
        %v6777 = vrot.slane %v6776, 4
        %v6778 = vrot.slane %v5557, 5
        %v6779 = vrot.slane %v5553, 6
        %v6780 = vor.u32 %v6778, %v6779
        %v6781 = vsel %vm3193, %v6777, %v6780
        %v6782 = vrot.slane %v6780, 4
        %v6784 = vshrl.u32 %v6423, 16
        %v6786 = vrot.slane %v6784, 5
        %v6787 = vshll.u32 %v6423, 16
        %v6789 = vrot.slane %v6787, 6
        %v6790 = vor.u32 %v6786, %v6789
        %v6791 = vsel %vm3193, %v6782, %v6790
        %v6792 = vrot.slane %v6790, 4
        %v6794 = vshrl.u32 %v5992, 16
        %v6796 = vrot.slane %v6794, 5
        %v6797 = vshll.u32 %v5992, 16
        %v6799 = vrot.slane %v6797, 6
        %v6800 = vor.u32 %v6796, %v6799
        %v6801 = vrot.slane %v6800, 4
        %v6802 = vrot.slane %v5586, 5
        %v6803 = vrot.slane %v5582, 6
        %v6804 = vor.u32 %v6802, %v6803
        %v6805 = vsel %vm3193, %v6801, %v6804
        %v6806 = vrot.slane %v6804, 4
        %v6808 = vshrl.u32 %v6424, 16
        %v6810 = vrot.slane %v6808, 5
        %v6811 = vshll.u32 %v6424, 16
        %v6813 = vrot.slane %v6811, 6
        %v6814 = vor.u32 %v6810, %v6813
        %v6815 = vsel %vm3193, %v6806, %v6814
        %v6816 = vrot.slane %v6814, 4
        %v6818 = vshrl.u32 %v5993, 16
        %v6820 = vrot.slane %v6818, 5
        %v6821 = vshll.u32 %v5993, 16
        %v6823 = vrot.slane %v6821, 6
        %v6824 = vor.u32 %v6820, %v6823
        %v6825 = vrot.slane %v6824, 4
        %v6826 = vrot.slane %v5615, 5
        %v6827 = vrot.slane %v5611, 6
        %v6828 = vor.u32 %v6826, %v6827
        %v6829 = vsel %vm3193, %v6825, %v6828
        %v6830 = vrot.slane %v6828, 4
        %v6832 = vshrl.u32 %v6425, 16
        %v6834 = vrot.slane %v6832, 5
        %v6835 = vshll.u32 %v6425, 16
        %v6837 = vrot.slane %v6835, 6
        %v6838 = vor.u32 %v6834, %v6837
        %v6839 = vsel %vm3193, %v6830, %v6838
        %v6840 = vrot.slane %v6838, 4
        %v6842 = vshrl.u32 %v5994, 16
        %v6844 = vrot.slane %v6842, 5
        %v6845 = vshll.u32 %v5994, 16
        %v6847 = vrot.slane %v6845, 6
        %v6848 = vor.u32 %v6844, %v6847
        %v6849 = vrot.slane %v6848, 4
        %v6850 = vrot.slane %v5644, 5
        %v6851 = vrot.slane %v5640, 6
        %v6852 = vor.u32 %v6850, %v6851
        %v6853 = vsel %vm3193, %v6849, %v6852
        %v6854 = vrot.slane %v6852, 4
        %v6856 = vshrl.u32 %v6426, 16
        %v6858 = vrot.slane %v6856, 5
        %v6859 = vshll.u32 %v6426, 16
        %v6861 = vrot.slane %v6859, 6
        %v6862 = vor.u32 %v6858, %v6861
        %v6863 = vsel %vm3193, %v6854, %v6862
        %v6864 = vrot.slane %v6862, 4
        %v6866 = vshrl.u32 %v5995, 16
        %v6868 = vrot.slane %v6866, 5
        %v6869 = vshll.u32 %v5995, 16
        %v6871 = vrot.slane %v6869, 6
        %v6872 = vor.u32 %v6868, %v6871
        %v6873 = vrot.slane %v6872, 4
        %v6874 = vrot.slane %v5673, 5
        %v6875 = vrot.slane %v5669, 6
        %v6876 = vor.u32 %v6874, %v6875
        %v6877 = vsel %vm3193, %v6873, %v6876
        %v6878 = vrot.slane %v6876, 4
        %v6880 = vshrl.u32 %v6427, 16
        %v6882 = vrot.slane %v6880, 5
        %v6883 = vshll.u32 %v6427, 16
        %v6885 = vrot.slane %v6883, 6
        %v6886 = vor.u32 %v6882, %v6885
        %v6887 = vsel %vm3193, %v6878, %v6886
        %v6888 = vrot.slane %v6886, 4
        %v6890 = vshrl.u32 %v5996, 16
        %v6892 = vrot.slane %v6890, 5
        %v6893 = vshll.u32 %v5996, 16
        %v6895 = vrot.slane %v6893, 6
        %v6896 = vor.u32 %v6892, %v6895
        %v6897 = vrot.slane %v6896, 4
        %v6898 = vrot.slane %v5702, 5
        %v6899 = vrot.slane %v5698, 6
        %v6900 = vor.u32 %v6898, %v6899
        %v6901 = vsel %vm3193, %v6897, %v6900
        %v6902 = vrot.slane %v6900, 4
        %v6904 = vshrl.u32 %v6428, 16
        %v6906 = vrot.slane %v6904, 5
        %v6907 = vshll.u32 %v6428, 16
        %v6909 = vrot.slane %v6907, 6
        %v6910 = vor.u32 %v6906, %v6909
        %v6911 = vsel %vm3193, %v6902, %v6910
        %v6912 = vrot.slane %v6910, 4
        %v6914 = vshrl.u32 %v5997, 16
        %v6916 = vrot.slane %v6914, 5
        %v6917 = vshll.u32 %v5997, 16
        %v6919 = vrot.slane %v6917, 6
        %v6920 = vor.u32 %v6916, %v6919
        %v6921 = vrot.slane %v6920, 4
        %v6922 = vrot.slane %v5731, 5
        %v6923 = vrot.slane %v5727, 6
        %v6924 = vor.u32 %v6922, %v6923
        %v6925 = vsel %vm3193, %v6921, %v6924
        %v6926 = vrot.slane %v6924, 4
        %v6928 = vshrl.u32 %v6429, 16
        %v6930 = vrot.slane %v6928, 5
        %v6931 = vshll.u32 %v6429, 16
        %v6933 = vrot.slane %v6931, 6
        %v6934 = vor.u32 %v6930, %v6933
        %v6935 = vsel %vm3193, %v6926, %v6934
        %v6936 = vrot.slane %v6934, 4
        %v6938 = vshrl.u32 %v5998, 16
        %v6940 = vrot.slane %v6938, 5
        %v6941 = vshll.u32 %v5998, 16
        %v6943 = vrot.slane %v6941, 6
        %v6944 = vor.u32 %v6940, %v6943
        %v6945 = vrot.slane %v6944, 4
        %v6946 = vrot.slane %v5760, 5
        %v6947 = vrot.slane %v5756, 6
        %v6948 = vor.u32 %v6946, %v6947
        %v6949 = vsel %vm3193, %v6945, %v6948
        %v6950 = vrot.slane %v6948, 4
        %v6952 = vshrl.u32 %v6430, 16
        %v6954 = vrot.slane %v6952, 5
        %v6955 = vshll.u32 %v6430, 16
        %v6957 = vrot.slane %v6955, 6
        %v6958 = vor.u32 %v6954, %v6957
        %v6959 = vsel %vm3193, %v6950, %v6958
        %v6960 = vrot.slane %v6958, 4
        %v6962 = vshrl.u32 %v5999, 16
        %v6964 = vrot.slane %v6962, 5
        %v6965 = vshll.u32 %v5999, 16
        %v6967 = vrot.slane %v6965, 6
        %v6968 = vor.u32 %v6964, %v6967
        %v6969 = vrot.slane %v6968, 4
        %v6970 = vrot.slane %v5789, 5
        %v6971 = vrot.slane %v5785, 6
        %v6972 = vor.u32 %v6970, %v6971
        %v6973 = vsel %vm3193, %v6969, %v6972
        %v6974 = vrot.slane %v6972, 4
        %v6976 = vshrl.u32 %v6431, 16
        %v6978 = vrot.slane %v6976, 5
        %v6979 = vshll.u32 %v6431, 16
        %v6981 = vrot.slane %v6979, 6
        %v6982 = vor.u32 %v6978, %v6981
        %v6983 = vsel %vm3193, %v6974, %v6982
        %v6984 = vrot.slane %v6982, 4
        %v6986 = vshrl.u32 %v6000, 16
        %v6988 = vrot.slane %v6986, 5
        %v6989 = vshll.u32 %v6000, 16
        %v6991 = vrot.slane %v6989, 6
        %v6992 = vor.u32 %v6988, %v6991
        %v6993 = vrot.slane %v6992, 4
        %v6994 = vrot.slane %v5818, 5
        %v6995 = vrot.slane %v5814, 6
        %v6996 = vor.u32 %v6994, %v6995
        %v6997 = vsel %vm3193, %v6993, %v6996
        %v6998 = vrot.slane %v6996, 4
        %v7000 = vshrl.u32 %v6432, 16
        %v7002 = vrot.slane %v7000, 5
        %v7003 = vshll.u32 %v6432, 16
        %v7005 = vrot.slane %v7003, 6
        %v7006 = vor.u32 %v7002, %v7005
        %v7007 = vsel %vm3193, %v6998, %v7006
        %v7008 = vrot.slane %v7006, 4
        %v7081 = vmax.bf16 %v6337, %v6445
        %v7082 = vmax.bf16 %v6338, %v6455
        %v7083 = vmax.bf16 %v6339, %v6456
        %v7084 = vmax.bf16 %v6340, %v6469
        %v7085 = vmax.bf16 %v6341, %v6479
        %v7086 = vmax.bf16 %v6342, %v6480
        %v7087 = vmax.bf16 %v6343, %v6493
        %v7088 = vmax.bf16 %v6344, %v6503
        %v7089 = vmax.bf16 %v6345, %v6504
        %v7090 = vmax.bf16 %v6346, %v6517
        %v7091 = vmax.bf16 %v6347, %v6527
        %v7092 = vmax.bf16 %v6348, %v6528
        %v7093 = vmax.bf16 %v6349, %v6541
        %v7094 = vmax.bf16 %v6350, %v6551
        %v7095 = vmax.bf16 %v6351, %v6552
        %v7096 = vmax.bf16 %v6352, %v6565
        %v7097 = vmax.bf16 %v6353, %v6575
        %v7098 = vmax.bf16 %v6354, %v6576
        %v7099 = vmax.bf16 %v6355, %v6589
        %v7100 = vmax.bf16 %v6356, %v6599
        %v7101 = vmax.bf16 %v6357, %v6600
        %v7102 = vmax.bf16 %v6358, %v6613
        %v7103 = vmax.bf16 %v6359, %v6623
        %v7104 = vmax.bf16 %v6360, %v6624
        %v7105 = vmax.bf16 %v6361, %v6637
        %v7106 = vmax.bf16 %v6362, %v6647
        %v7107 = vmax.bf16 %v6363, %v6648
        %v7108 = vmax.bf16 %v6364, %v6661
        %v7109 = vmax.bf16 %v6365, %v6671
        %v7110 = vmax.bf16 %v6366, %v6672
        %v7111 = vmax.bf16 %v6367, %v6685
        %v7112 = vmax.bf16 %v6368, %v6695
        %v7113 = vmax.bf16 %v6369, %v6696
        %v7114 = vmax.bf16 %v6370, %v6709
        %v7115 = vmax.bf16 %v6371, %v6719
        %v7116 = vmax.bf16 %v6372, %v6720
        %v7117 = vmax.bf16 %v6373, %v6733
        %v7118 = vmax.bf16 %v6374, %v6743
        %v7119 = vmax.bf16 %v6375, %v6744
        %v7120 = vmax.bf16 %v6376, %v6757
        %v7121 = vmax.bf16 %v6377, %v6767
        %v7122 = vmax.bf16 %v6378, %v6768
        %v7123 = vmax.bf16 %v6379, %v6781
        %v7124 = vmax.bf16 %v6380, %v6791
        %v7125 = vmax.bf16 %v6381, %v6792
        %v7126 = vmax.bf16 %v6382, %v6805
        %v7127 = vmax.bf16 %v6383, %v6815
        %v7128 = vmax.bf16 %v6384, %v6816
        %v7129 = vmax.bf16 %v6385, %v6829
        %v7130 = vmax.bf16 %v6386, %v6839
        %v7131 = vmax.bf16 %v6387, %v6840
        %v7132 = vmax.bf16 %v6388, %v6853
        %v7133 = vmax.bf16 %v6389, %v6863
        %v7134 = vmax.bf16 %v6390, %v6864
        %v7135 = vmax.bf16 %v6391, %v6877
        %v7136 = vmax.bf16 %v6392, %v6887
        %v7137 = vmax.bf16 %v6393, %v6888
        %v7138 = vmax.bf16 %v6394, %v6901
        %v7139 = vmax.bf16 %v6395, %v6911
        %v7140 = vmax.bf16 %v6396, %v6912
        %v7141 = vmax.bf16 %v6397, %v6925
        %v7142 = vmax.bf16 %v6398, %v6935
        %v7143 = vmax.bf16 %v6399, %v6936
        %v7144 = vmax.bf16 %v6400, %v6949
        %v7145 = vmax.bf16 %v6401, %v6959
        %v7146 = vmax.bf16 %v6402, %v6960
        %v7147 = vmax.bf16 %v6403, %v6973
        %v7148 = vmax.bf16 %v6404, %v6983
        %v7149 = vmax.bf16 %v6405, %v6984
        %v7150 = vmax.bf16 %v6406, %v6997
        %v7151 = vmax.bf16 %v6407, %v7007
        %v7152 = vmax.bf16 %v6408, %v7008
        %v7153 = vld [vmem:[#allocation3] sm:$0xc]
        %v7154 = vld [vmem:[#allocation3 + $0xc] sm:$0xc]
        %v7155 = vld [vmem:[#allocation3 + $0x18] sm:$0xc]
        %v7156 = vld [vmem:[#allocation3 + $0x24] sm:$0xc]
        %v7157 = vld [vmem:[#allocation3 + $0x30] sm:$0xc]
        %v7158 = vld [vmem:[#allocation3 + $0x3c] sm:$0xc]
        %v7159 = vld [vmem:[#allocation3 + $0x48] sm:$0xc]
        %v7160 = vld [vmem:[#allocation3 + $0x54] sm:$0xc]
        %v7161 = vld [vmem:[#allocation3 + $0x60] sm:$0xc]
        %v7162 = vld [vmem:[#allocation3 + $0x6c] sm:$0xc]
        %v7163 = vld [vmem:[#allocation3 + $0x78] sm:$0xc]
        %v7164 = vld [vmem:[#allocation3 + $0x84] sm:$0xc]
        %v7165 = vld [vmem:[#allocation3 + $0x90] sm:$0xc]
        %v7166 = vld [vmem:[#allocation3 + $0x9c] sm:$0xc]
        %v7167 = vld [vmem:[#allocation3 + $0xa8] sm:$0xc]
        %v7168 = vld [vmem:[#allocation3 + $0xb4] sm:$0xc]
        %v7169 = vld [vmem:[#allocation3 + $0xc0] sm:$0xc]
        %v7170 = vld [vmem:[#allocation3 + $0xcc] sm:$0xc]
        %v7171 = vld [vmem:[#allocation3 + $0xd8] sm:$0xc]
        %v7172 = vld [vmem:[#allocation3 + $0xe4] sm:$0xc]
        %v7173 = vld [vmem:[#allocation3 + $0xf0] sm:$0xc]
        %v7174 = vld [vmem:[#allocation3 + $0xfc] sm:$0xc]
        %v7175 = vld [vmem:[#allocation3 + $0x108] sm:$0xc]
        %v7176 = vld [vmem:[#allocation3 + $0x114] sm:$0xc]
        %v7225 = vrot.slane %v7153, 6
        %v7226 = vrot.slane %v7225, 4
        %v7227 = vrot.slane %v5042, 6
        %v7228 = vsel %vm4232, %v7226, %v7227
        %v7229 = vrot.slane %v7227, 4
        %v7230 = vrot.slane %v6409, 6
        %v7231 = vsel %vm4232, %v7229, %v7230
        %v7232 = vrot.slane %v7230, 4
        %v7233 = vrot.slane %v7154, 6
        %v7234 = vrot.slane %v7233, 4
        %v7235 = vrot.slane %v5045, 6
        %v7236 = vsel %vm4232, %v7234, %v7235
        %v7237 = vrot.slane %v7235, 4
        %v7238 = vrot.slane %v6410, 6
        %v7239 = vsel %vm4232, %v7237, %v7238
        %v7240 = vrot.slane %v7238, 4
        %v7241 = vrot.slane %v7155, 6
        %v7242 = vrot.slane %v7241, 4
        %v7243 = vrot.slane %v5048, 6
        %v7244 = vsel %vm4232, %v7242, %v7243
        %v7245 = vrot.slane %v7243, 4
        %v7246 = vrot.slane %v6411, 6
        %v7247 = vsel %vm4232, %v7245, %v7246
        %v7248 = vrot.slane %v7246, 4
        %v7249 = vrot.slane %v7156, 6
        %v7250 = vrot.slane %v7249, 4
        %v7251 = vrot.slane %v5051, 6
        %v7252 = vsel %vm4232, %v7250, %v7251
        %v7253 = vrot.slane %v7251, 4
        %v7254 = vrot.slane %v6412, 6
        %v7255 = vsel %vm4232, %v7253, %v7254
        %v7256 = vrot.slane %v7254, 4
        %v7257 = vrot.slane %v7157, 6
        %v7258 = vrot.slane %v7257, 4
        %v7259 = vrot.slane %v5054, 6
        %v7260 = vsel %vm4232, %v7258, %v7259
        %v7261 = vrot.slane %v7259, 4
        %v7262 = vrot.slane %v6413, 6
        %v7263 = vsel %vm4232, %v7261, %v7262
        %v7264 = vrot.slane %v7262, 4
        %v7265 = vrot.slane %v7158, 6
        %v7266 = vrot.slane %v7265, 4
        %v7267 = vrot.slane %v5057, 6
        %v7268 = vsel %vm4232, %v7266, %v7267
        %v7269 = vrot.slane %v7267, 4
        %v7270 = vrot.slane %v6414, 6
        %v7271 = vsel %vm4232, %v7269, %v7270
        %v7272 = vrot.slane %v7270, 4
        %v7273 = vrot.slane %v7159, 6
        %v7274 = vrot.slane %v7273, 4
        %v7275 = vrot.slane %v5060, 6
        %v7276 = vsel %vm4232, %v7274, %v7275
        %v7277 = vrot.slane %v7275, 4
        %v7278 = vrot.slane %v6415, 6
        %v7279 = vsel %vm4232, %v7277, %v7278
        %v7280 = vrot.slane %v7278, 4
        %v7281 = vrot.slane %v7160, 6
        %v7282 = vrot.slane %v7281, 4
        %v7283 = vrot.slane %v5063, 6
        %v7284 = vsel %vm4232, %v7282, %v7283
        %v7285 = vrot.slane %v7283, 4
        %v7286 = vrot.slane %v6416, 6
        %v7287 = vsel %vm4232, %v7285, %v7286
        %v7288 = vrot.slane %v7286, 4
        %v7289 = vrot.slane %v7161, 6
        %v7290 = vrot.slane %v7289, 4
        %v7291 = vrot.slane %v5066, 6
        %v7292 = vsel %vm4232, %v7290, %v7291
        %v7293 = vrot.slane %v7291, 4
        %v7294 = vrot.slane %v6417, 6
        %v7295 = vsel %vm4232, %v7293, %v7294
        %v7296 = vrot.slane %v7294, 4
        %v7297 = vrot.slane %v7162, 6
        %v7298 = vrot.slane %v7297, 4
        %v7299 = vrot.slane %v5069, 6
        %v7300 = vsel %vm4232, %v7298, %v7299
        %v7301 = vrot.slane %v7299, 4
        %v7302 = vrot.slane %v6418, 6
        %v7303 = vsel %vm4232, %v7301, %v7302
        %v7304 = vrot.slane %v7302, 4
        %v7305 = vrot.slane %v7163, 6
        %v7306 = vrot.slane %v7305, 4
        %v7307 = vrot.slane %v5072, 6
        %v7308 = vsel %vm4232, %v7306, %v7307
        %v7309 = vrot.slane %v7307, 4
        %v7310 = vrot.slane %v6419, 6
        %v7311 = vsel %vm4232, %v7309, %v7310
        %v7312 = vrot.slane %v7310, 4
        %v7313 = vrot.slane %v7164, 6
        %v7314 = vrot.slane %v7313, 4
        %v7315 = vrot.slane %v5075, 6
        %v7316 = vsel %vm4232, %v7314, %v7315
        %v7317 = vrot.slane %v7315, 4
        %v7318 = vrot.slane %v6420, 6
        %v7319 = vsel %vm4232, %v7317, %v7318
        %v7320 = vrot.slane %v7318, 4
        %v7321 = vrot.slane %v7165, 6
        %v7322 = vrot.slane %v7321, 4
        %v7323 = vrot.slane %v5078, 6
        %v7324 = vsel %vm4232, %v7322, %v7323
        %v7325 = vrot.slane %v7323, 4
        %v7326 = vrot.slane %v6421, 6
        %v7327 = vsel %vm4232, %v7325, %v7326
        %v7328 = vrot.slane %v7326, 4
        %v7329 = vrot.slane %v7166, 6
        %v7330 = vrot.slane %v7329, 4
        %v7331 = vrot.slane %v5081, 6
        %v7332 = vsel %vm4232, %v7330, %v7331
        %v7333 = vrot.slane %v7331, 4
        %v7334 = vrot.slane %v6422, 6
        %v7335 = vsel %vm4232, %v7333, %v7334
        %v7336 = vrot.slane %v7334, 4
        %v7337 = vrot.slane %v7167, 6
        %v7338 = vrot.slane %v7337, 4
        %v7339 = vrot.slane %v5084, 6
        %v7340 = vsel %vm4232, %v7338, %v7339
        %v7341 = vrot.slane %v7339, 4
        %v7342 = vrot.slane %v6423, 6
        %v7343 = vsel %vm4232, %v7341, %v7342
        %v7344 = vrot.slane %v7342, 4
        %v7345 = vrot.slane %v7168, 6
        %v7346 = vrot.slane %v7345, 4
        %v7347 = vrot.slane %v5087, 6
        %v7348 = vsel %vm4232, %v7346, %v7347
        %v7349 = vrot.slane %v7347, 4
        %v7350 = vrot.slane %v6424, 6
        %v7351 = vsel %vm4232, %v7349, %v7350
        %v7352 = vrot.slane %v7350, 4
        %v7353 = vrot.slane %v7169, 6
        %v7354 = vrot.slane %v7353, 4
        %v7355 = vrot.slane %v5090, 6
        %v7356 = vsel %vm4232, %v7354, %v7355
        %v7357 = vrot.slane %v7355, 4
        %v7358 = vrot.slane %v6425, 6
        %v7359 = vsel %vm4232, %v7357, %v7358
        %v7360 = vrot.slane %v7358, 4
        %v7361 = vrot.slane %v7170, 6
        %v7362 = vrot.slane %v7361, 4
        %v7363 = vrot.slane %v5093, 6
        %v7364 = vsel %vm4232, %v7362, %v7363
        %v7365 = vrot.slane %v7363, 4
        %v7366 = vrot.slane %v6426, 6
        %v7367 = vsel %vm4232, %v7365, %v7366
        %v7368 = vrot.slane %v7366, 4
        %v7369 = vrot.slane %v7171, 6
        %v7370 = vrot.slane %v7369, 4
        %v7371 = vrot.slane %v5096, 6
        %v7372 = vsel %vm4232, %v7370, %v7371
        %v7373 = vrot.slane %v7371, 4
        %v7374 = vrot.slane %v6427, 6
        %v7375 = vsel %vm4232, %v7373, %v7374
        %v7376 = vrot.slane %v7374, 4
        %v7377 = vrot.slane %v7172, 6
        %v7378 = vrot.slane %v7377, 4
        %v7379 = vrot.slane %v5099, 6
        %v7380 = vsel %vm4232, %v7378, %v7379
        %v7381 = vrot.slane %v7379, 4
        %v7382 = vrot.slane %v6428, 6
        %v7383 = vsel %vm4232, %v7381, %v7382
        %v7384 = vrot.slane %v7382, 4
        %v7385 = vrot.slane %v7173, 6
        %v7386 = vrot.slane %v7385, 4
        %v7387 = vrot.slane %v5102, 6
        %v7388 = vsel %vm4232, %v7386, %v7387
        %v7389 = vrot.slane %v7387, 4
        %v7390 = vrot.slane %v6429, 6
        %v7391 = vsel %vm4232, %v7389, %v7390
        %v7392 = vrot.slane %v7390, 4
        %v7393 = vrot.slane %v7174, 6
        %v7394 = vrot.slane %v7393, 4
        %v7395 = vrot.slane %v5105, 6
        %v7396 = vsel %vm4232, %v7394, %v7395
        %v7397 = vrot.slane %v7395, 4
        %v7398 = vrot.slane %v6430, 6
        %v7399 = vsel %vm4232, %v7397, %v7398
        %v7400 = vrot.slane %v7398, 4
        %v7401 = vrot.slane %v7175, 6
        %v7402 = vrot.slane %v7401, 4
        %v7403 = vrot.slane %v5108, 6
        %v7404 = vsel %vm4232, %v7402, %v7403
        %v7405 = vrot.slane %v7403, 4
        %v7406 = vrot.slane %v6431, 6
        %v7407 = vsel %vm4232, %v7405, %v7406
        %v7408 = vrot.slane %v7406, 4
        %v7409 = vrot.slane %v7176, 6
        %v7410 = vrot.slane %v7409, 4
        %v7411 = vrot.slane %v5111, 6
        %v7412 = vsel %vm4232, %v7410, %v7411
        %v7413 = vrot.slane %v7411, 4
        %v7414 = vrot.slane %v6432, 6
        %v7415 = vsel %vm4232, %v7413, %v7414
        %v7416 = vrot.slane %v7414, 4
        %v7489 = vmax.bf16 %v7081, %v7228
        %v7490 = vmax.bf16 %v7082, %v7231
        %v7491 = vmax.bf16 %v7083, %v7232
        %v7492 = vmax.bf16 %v7084, %v7236
        %v7493 = vmax.bf16 %v7085, %v7239
        %v7494 = vmax.bf16 %v7086, %v7240
        %v7495 = vmax.bf16 %v7087, %v7244
        %v7496 = vmax.bf16 %v7088, %v7247
        %v7497 = vmax.bf16 %v7089, %v7248
        %v7498 = vmax.bf16 %v7090, %v7252
        %v7499 = vmax.bf16 %v7091, %v7255
        %v7500 = vmax.bf16 %v7092, %v7256
        %v7501 = vmax.bf16 %v7093, %v7260
        %v7502 = vmax.bf16 %v7094, %v7263
        %v7503 = vmax.bf16 %v7095, %v7264
        %v7504 = vmax.bf16 %v7096, %v7268
        %v7505 = vmax.bf16 %v7097, %v7271
        %v7506 = vmax.bf16 %v7098, %v7272
        %v7507 = vmax.bf16 %v7099, %v7276
        %v7508 = vmax.bf16 %v7100, %v7279
        %v7509 = vmax.bf16 %v7101, %v7280
        %v7510 = vmax.bf16 %v7102, %v7284
        %v7511 = vmax.bf16 %v7103, %v7287
        %v7512 = vmax.bf16 %v7104, %v7288
        %v7513 = vmax.bf16 %v7105, %v7292
        %v7514 = vmax.bf16 %v7106, %v7295
        %v7515 = vmax.bf16 %v7107, %v7296
        %v7516 = vmax.bf16 %v7108, %v7300
        %v7517 = vmax.bf16 %v7109, %v7303
        %v7518 = vmax.bf16 %v7110, %v7304
        %v7519 = vmax.bf16 %v7111, %v7308
        %v7520 = vmax.bf16 %v7112, %v7311
        %v7521 = vmax.bf16 %v7113, %v7312
        %v7522 = vmax.bf16 %v7114, %v7316
        %v7523 = vmax.bf16 %v7115, %v7319
        %v7524 = vmax.bf16 %v7116, %v7320
        %v7525 = vmax.bf16 %v7117, %v7324
        %v7526 = vmax.bf16 %v7118, %v7327
        %v7527 = vmax.bf16 %v7119, %v7328
        %v7528 = vmax.bf16 %v7120, %v7332
        %v7529 = vmax.bf16 %v7121, %v7335
        %v7530 = vmax.bf16 %v7122, %v7336
        %v7531 = vmax.bf16 %v7123, %v7340
        %v7532 = vmax.bf16 %v7124, %v7343
        %v7533 = vmax.bf16 %v7125, %v7344
        %v7534 = vmax.bf16 %v7126, %v7348
        %v7535 = vmax.bf16 %v7127, %v7351
        %v7536 = vmax.bf16 %v7128, %v7352
        %v7537 = vmax.bf16 %v7129, %v7356
        %v7538 = vmax.bf16 %v7130, %v7359
        %v7539 = vmax.bf16 %v7131, %v7360
        %v7540 = vmax.bf16 %v7132, %v7364
        %v7541 = vmax.bf16 %v7133, %v7367
        %v7542 = vmax.bf16 %v7134, %v7368
        %v7543 = vmax.bf16 %v7135, %v7372
        %v7544 = vmax.bf16 %v7136, %v7375
        %v7545 = vmax.bf16 %v7137, %v7376
        %v7546 = vmax.bf16 %v7138, %v7380
        %v7547 = vmax.bf16 %v7139, %v7383
        %v7548 = vmax.bf16 %v7140, %v7384
        %v7549 = vmax.bf16 %v7141, %v7388
        %v7550 = vmax.bf16 %v7142, %v7391
        %v7551 = vmax.bf16 %v7143, %v7392
        %v7552 = vmax.bf16 %v7144, %v7396
        %v7553 = vmax.bf16 %v7145, %v7399
        %v7554 = vmax.bf16 %v7146, %v7400
        %v7555 = vmax.bf16 %v7147, %v7404
        %v7556 = vmax.bf16 %v7148, %v7407
        %v7557 = vmax.bf16 %v7149, %v7408
        %v7558 = vmax.bf16 %v7150, %v7412
        %v7559 = vmax.bf16 %v7151, %v7415
        %v7560 = vmax.bf16 %v7152, %v7416
        %v7561 = vmax.bf16 %v7489, %v7492
        %v7562 = vmax.bf16 %v7490, %v7493
        %v7563 = vmax.bf16 %v7491, %v7494
        %v7564 = vmax.bf16 %v7492, %v7495
        %v7565 = vmax.bf16 %v7493, %v7496
        %v7566 = vmax.bf16 %v7494, %v7497
        %v7567 = vmax.bf16 %v7495, %v7498
        %v7568 = vmax.bf16 %v7496, %v7499
        %v7569 = vmax.bf16 %v7497, %v7500
        %v7570 = vmax.bf16 %v7498, %v7501
        %v7571 = vmax.bf16 %v7499, %v7502
        %v7572 = vmax.bf16 %v7500, %v7503
        %v7573 = vmax.bf16 %v7501, %v7504
        %v7574 = vmax.bf16 %v7502, %v7505
        %v7575 = vmax.bf16 %v7503, %v7506
        %v7576 = vmax.bf16 %v7504, %v7507
        %v7577 = vmax.bf16 %v7505, %v7508
        %v7578 = vmax.bf16 %v7506, %v7509
        %v7579 = vmax.bf16 %v7507, %v7510
        %v7580 = vmax.bf16 %v7508, %v7511
        %v7581 = vmax.bf16 %v7509, %v7512
        %v7582 = vmax.bf16 %v7510, %v7513
        %v7583 = vmax.bf16 %v7511, %v7514
        %v7584 = vmax.bf16 %v7512, %v7515
        %v7585 = vmax.bf16 %v7513, %v7516
        %v7586 = vmax.bf16 %v7514, %v7517
        %v7587 = vmax.bf16 %v7515, %v7518
        %v7588 = vmax.bf16 %v7516, %v7519
        %v7589 = vmax.bf16 %v7517, %v7520
        %v7590 = vmax.bf16 %v7518, %v7521
        %v7591 = vmax.bf16 %v7519, %v7522
        %v7592 = vmax.bf16 %v7520, %v7523
        %v7593 = vmax.bf16 %v7521, %v7524
        %v7594 = vmax.bf16 %v7522, %v7525
        %v7595 = vmax.bf16 %v7523, %v7526
        %v7596 = vmax.bf16 %v7524, %v7527
        %v7597 = vmax.bf16 %v7525, %v7528
        %v7598 = vmax.bf16 %v7526, %v7529
        %v7599 = vmax.bf16 %v7527, %v7530
        %v7600 = vmax.bf16 %v7528, %v7531
        %v7601 = vmax.bf16 %v7529, %v7532
        %v7602 = vmax.bf16 %v7530, %v7533
        %v7603 = vmax.bf16 %v7531, %v7534
        %v7604 = vmax.bf16 %v7532, %v7535
        %v7605 = vmax.bf16 %v7533, %v7536
        %v7606 = vmax.bf16 %v7534, %v7537
        %v7607 = vmax.bf16 %v7535, %v7538
        %v7608 = vmax.bf16 %v7536, %v7539
        %v7609 = vmax.bf16 %v7537, %v7540
        %v7610 = vmax.bf16 %v7538, %v7541
        %v7611 = vmax.bf16 %v7539, %v7542
        %v7612 = vmax.bf16 %v7540, %v7543
        %v7613 = vmax.bf16 %v7541, %v7544
        %v7614 = vmax.bf16 %v7542, %v7545
        %v7615 = vmax.bf16 %v7543, %v7546
        %v7616 = vmax.bf16 %v7544, %v7547
        %v7617 = vmax.bf16 %v7545, %v7548
        %v7618 = vmax.bf16 %v7546, %v7549
        %v7619 = vmax.bf16 %v7547, %v7550
        %v7620 = vmax.bf16 %v7548, %v7551
        %v7621 = vmax.bf16 %v7561, %v7495
        %v7622 = vmax.bf16 %v7562, %v7496
        %v7623 = vmax.bf16 %v7563, %v7497
        %v7624 = vmax.bf16 %v7564, %v7498
        %v7625 = vmax.bf16 %v7565, %v7499
        %v7626 = vmax.bf16 %v7566, %v7500
        %v7627 = vmax.bf16 %v7567, %v7501
        %v7628 = vmax.bf16 %v7568, %v7502
        %v7629 = vmax.bf16 %v7569, %v7503
        %v7630 = vmax.bf16 %v7570, %v7504
        %v7631 = vmax.bf16 %v7571, %v7505
        %v7632 = vmax.bf16 %v7572, %v7506
        %v7633 = vmax.bf16 %v7573, %v7507
        %v7634 = vmax.bf16 %v7574, %v7508
        %v7635 = vmax.bf16 %v7575, %v7509
        %v7636 = vmax.bf16 %v7576, %v7510
        %v7637 = vmax.bf16 %v7577, %v7511
        %v7638 = vmax.bf16 %v7578, %v7512
        %v7639 = vmax.bf16 %v7579, %v7513
        %v7640 = vmax.bf16 %v7580, %v7514
        %v7641 = vmax.bf16 %v7581, %v7515
        %v7642 = vmax.bf16 %v7582, %v7516
        %v7643 = vmax.bf16 %v7583, %v7517
        %v7644 = vmax.bf16 %v7584, %v7518
        %v7645 = vmax.bf16 %v7585, %v7519
        %v7646 = vmax.bf16 %v7586, %v7520
        %v7647 = vmax.bf16 %v7587, %v7521
        %v7648 = vmax.bf16 %v7588, %v7522
        %v7649 = vmax.bf16 %v7589, %v7523
        %v7650 = vmax.bf16 %v7590, %v7524
        %v7651 = vmax.bf16 %v7591, %v7525
        %v7652 = vmax.bf16 %v7592, %v7526
        %v7653 = vmax.bf16 %v7593, %v7527
        %v7654 = vmax.bf16 %v7594, %v7528
        %v7655 = vmax.bf16 %v7595, %v7529
        %v7656 = vmax.bf16 %v7596, %v7530
        %v7657 = vmax.bf16 %v7597, %v7531
        %v7658 = vmax.bf16 %v7598, %v7532
        %v7659 = vmax.bf16 %v7599, %v7533
        %v7660 = vmax.bf16 %v7600, %v7534
        %v7661 = vmax.bf16 %v7601, %v7535
        %v7662 = vmax.bf16 %v7602, %v7536
        %v7663 = vmax.bf16 %v7603, %v7537
        %v7664 = vmax.bf16 %v7604, %v7538
        %v7665 = vmax.bf16 %v7605, %v7539
        %v7666 = vmax.bf16 %v7606, %v7540
        %v7667 = vmax.bf16 %v7607, %v7541
        %v7668 = vmax.bf16 %v7608, %v7542
        %v7669 = vmax.bf16 %v7609, %v7543
        %v7670 = vmax.bf16 %v7610, %v7544
        %v7671 = vmax.bf16 %v7611, %v7545
        %v7672 = vmax.bf16 %v7612, %v7546
        %v7673 = vmax.bf16 %v7613, %v7547
        %v7674 = vmax.bf16 %v7614, %v7548
        %v7675 = vmax.bf16 %v7615, %v7549
        %v7676 = vmax.bf16 %v7616, %v7550
        %v7677 = vmax.bf16 %v7617, %v7551
        %v7678 = vmax.bf16 %v7618, %v7552
        %v7679 = vmax.bf16 %v7619, %v7553
        %v7680 = vmax.bf16 %v7620, %v7554
        %v7681 = vmax.bf16 %v7621, %v7498
        %v7682 = vmax.bf16 %v7622, %v7499
        %v7683 = vmax.bf16 %v7623, %v7500
        %v7684 = vmax.bf16 %v7624, %v7501
        %v7685 = vmax.bf16 %v7625, %v7502
        %v7686 = vmax.bf16 %v7626, %v7503
        %v7687 = vmax.bf16 %v7627, %v7504
        %v7688 = vmax.bf16 %v7628, %v7505
        %v7689 = vmax.bf16 %v7629, %v7506
        %v7690 = vmax.bf16 %v7630, %v7507
        %v7691 = vmax.bf16 %v7631, %v7508
        %v7692 = vmax.bf16 %v7632, %v7509
        %v7693 = vmax.bf16 %v7633, %v7510
        %v7694 = vmax.bf16 %v7634, %v7511
        %v7695 = vmax.bf16 %v7635, %v7512
        %v7696 = vmax.bf16 %v7636, %v7513
        %v7697 = vmax.bf16 %v7637, %v7514
        %v7698 = vmax.bf16 %v7638, %v7515
        %v7699 = vmax.bf16 %v7639, %v7516
        %v7700 = vmax.bf16 %v7640, %v7517
        %v7701 = vmax.bf16 %v7641, %v7518
        %v7702 = vmax.bf16 %v7642, %v7519
        %v7703 = vmax.bf16 %v7643, %v7520
        %v7704 = vmax.bf16 %v7644, %v7521
        %v7705 = vmax.bf16 %v7645, %v7522
        %v7706 = vmax.bf16 %v7646, %v7523
        %v7707 = vmax.bf16 %v7647, %v7524
        %v7708 = vmax.bf16 %v7648, %v7525
        %v7709 = vmax.bf16 %v7649, %v7526
        %v7710 = vmax.bf16 %v7650, %v7527
        %v7711 = vmax.bf16 %v7651, %v7528
        %v7712 = vmax.bf16 %v7652, %v7529
        %v7713 = vmax.bf16 %v7653, %v7530
        %v7714 = vmax.bf16 %v7654, %v7531
        %v7715 = vmax.bf16 %v7655, %v7532
        %v7716 = vmax.bf16 %v7656, %v7533
        %v7717 = vmax.bf16 %v7657, %v7534
        %v7718 = vmax.bf16 %v7658, %v7535
        %v7719 = vmax.bf16 %v7659, %v7536
        %v7720 = vmax.bf16 %v7660, %v7537
        %v7721 = vmax.bf16 %v7661, %v7538
        %v7722 = vmax.bf16 %v7662, %v7539
        %v7723 = vmax.bf16 %v7663, %v7540
        %v7724 = vmax.bf16 %v7664, %v7541
        %v7725 = vmax.bf16 %v7665, %v7542
        %v7726 = vmax.bf16 %v7666, %v7543
        %v7727 = vmax.bf16 %v7667, %v7544
        %v7728 = vmax.bf16 %v7668, %v7545
        %v7729 = vmax.bf16 %v7669, %v7546
        %v7730 = vmax.bf16 %v7670, %v7547
        %v7731 = vmax.bf16 %v7671, %v7548
        %v7732 = vmax.bf16 %v7672, %v7549
        %v7733 = vmax.bf16 %v7673, %v7550
        %v7734 = vmax.bf16 %v7674, %v7551
        %v7735 = vmax.bf16 %v7675, %v7552
        %v7736 = vmax.bf16 %v7676, %v7553
        %v7737 = vmax.bf16 %v7677, %v7554
        %v7738 = vmax.bf16 %v7678, %v7555
        %v7739 = vmax.bf16 %v7679, %v7556
        %v7740 = vmax.bf16 %v7680, %v7557
        %v7741 = vmax.bf16 %v7681, %v7501
        %v7742 = vmax.bf16 %v7682, %v7502
        %v7743 = vmax.bf16 %v7683, %v7503
        %v7744 = vmax.bf16 %v7684, %v7504
        %v7745 = vmax.bf16 %v7685, %v7505
        %v7746 = vmax.bf16 %v7686, %v7506
        %v7747 = vmax.bf16 %v7687, %v7507
        %v7748 = vmax.bf16 %v7688, %v7508
        %v7749 = vmax.bf16 %v7689, %v7509
        %v7750 = vmax.bf16 %v7690, %v7510
        %v7751 = vmax.bf16 %v7691, %v7511
        %v7752 = vmax.bf16 %v7692, %v7512
        %v7753 = vmax.bf16 %v7693, %v7513
        %v7754 = vmax.bf16 %v7694, %v7514
        %v7755 = vmax.bf16 %v7695, %v7515
        %v7756 = vmax.bf16 %v7696, %v7516
        %v7757 = vmax.bf16 %v7697, %v7517
        %v7758 = vmax.bf16 %v7698, %v7518
        %v7759 = vmax.bf16 %v7699, %v7519
        %v7760 = vmax.bf16 %v7700, %v7520
        %v7761 = vmax.bf16 %v7701, %v7521
        %v7762 = vmax.bf16 %v7702, %v7522
        %v7763 = vmax.bf16 %v7703, %v7523
        %v7764 = vmax.bf16 %v7704, %v7524
        %v7765 = vmax.bf16 %v7705, %v7525
        %v7766 = vmax.bf16 %v7706, %v7526
        %v7767 = vmax.bf16 %v7707, %v7527
        %v7768 = vmax.bf16 %v7708, %v7528
        %v7769 = vmax.bf16 %v7709, %v7529
        %v7770 = vmax.bf16 %v7710, %v7530
        %v7771 = vmax.bf16 %v7711, %v7531
        %v7772 = vmax.bf16 %v7712, %v7532
        %v7773 = vmax.bf16 %v7713, %v7533
        %v7774 = vmax.bf16 %v7714, %v7534
        %v7775 = vmax.bf16 %v7715, %v7535
        %v7776 = vmax.bf16 %v7716, %v7536
        %v7777 = vmax.bf16 %v7717, %v7537
        %v7778 = vmax.bf16 %v7718, %v7538
        %v7779 = vmax.bf16 %v7719, %v7539
        %v7780 = vmax.bf16 %v7720, %v7540
        %v7781 = vmax.bf16 %v7721, %v7541
        %v7782 = vmax.bf16 %v7722, %v7542
        %v7783 = vmax.bf16 %v7723, %v7543
        %v7784 = vmax.bf16 %v7724, %v7544
        %v7785 = vmax.bf16 %v7725, %v7545
        %v7786 = vmax.bf16 %v7726, %v7546
        %v7787 = vmax.bf16 %v7727, %v7547
        %v7788 = vmax.bf16 %v7728, %v7548
        %v7789 = vmax.bf16 %v7729, %v7549
        %v7790 = vmax.bf16 %v7730, %v7550
        %v7791 = vmax.bf16 %v7731, %v7551
        %v7792 = vmax.bf16 %v7732, %v7552
        %v7793 = vmax.bf16 %v7733, %v7553
        %v7794 = vmax.bf16 %v7734, %v7554
        %v7795 = vmax.bf16 %v7735, %v7555
        %v7796 = vmax.bf16 %v7736, %v7556
        %v7797 = vmax.bf16 %v7737, %v7557
        %v7798 = vmax.bf16 %v7738, %v7558
        %v7799 = vmax.bf16 %v7739, %v7559
        %v7800 = vmax.bf16 %v7740, %v7560
        %7801 = vst [vmem:[#allocation4] sm:$0xf] %v7741
        %7802 = vst [vmem:[#allocation4 + $0x4] sm:$0xf] %v7742
        %7803 = vst [vmem:[#allocation4 + $0x8] sm:$0x3] %v7743
        %7804 = vst [vmem:[#allocation4 + $0xc] sm:$0xf] %v7744
        %7805 = vst [vmem:[#allocation4 + $0x10] sm:$0xf] %v7745
        %7806 = vst [vmem:[#allocation4 + $0x14] sm:$0x3] %v7746
        %7807 = vst [vmem:[#allocation4 + $0x18] sm:$0xf] %v7747
        %7808 = vst [vmem:[#allocation4 + $0x1c] sm:$0xf] %v7748
        %7809 = vst [vmem:[#allocation4 + $0x20] sm:$0x3] %v7749
        %7810 = vst [vmem:[#allocation4 + $0x24] sm:$0xf] %v7750
        %7811 = vst [vmem:[#allocation4 + $0x28] sm:$0xf] %v7751
        %7812 = vst [vmem:[#allocation4 + $0x2c] sm:$0x3] %v7752
        %7813 = vst [vmem:[#allocation4 + $0x30] sm:$0xf] %v7753
        %7814 = vst [vmem:[#allocation4 + $0x34] sm:$0xf] %v7754
        %7815 = vst [vmem:[#allocation4 + $0x38] sm:$0x3] %v7755
        %7816 = vst [vmem:[#allocation4 + $0x3c] sm:$0xf] %v7756
        %7817 = vst [vmem:[#allocation4 + $0x40] sm:$0xf] %v7757
        %7818 = vst [vmem:[#allocation4 + $0x44] sm:$0x3] %v7758
        %7819 = vst [vmem:[#allocation4 + $0x48] sm:$0xf] %v7759
        %7820 = vst [vmem:[#allocation4 + $0x4c] sm:$0xf] %v7760
        %7821 = vst [vmem:[#allocation4 + $0x50] sm:$0x3] %v7761
        %7822 = vst [vmem:[#allocation4 + $0x54] sm:$0xf] %v7762
        %7823 = vst [vmem:[#allocation4 + $0x58] sm:$0xf] %v7763
        %7824 = vst [vmem:[#allocation4 + $0x5c] sm:$0x3] %v7764
        %7825 = vst [vmem:[#allocation4 + $0x60] sm:$0xf] %v7765
        %7826 = vst [vmem:[#allocation4 + $0x64] sm:$0xf] %v7766
        %7827 = vst [vmem:[#allocation4 + $0x68] sm:$0x3] %v7767
        %7828 = vst [vmem:[#allocation4 + $0x6c] sm:$0xf] %v7768
        %7829 = vst [vmem:[#allocation4 + $0x70] sm:$0xf] %v7769
        %7830 = vst [vmem:[#allocation4 + $0x74] sm:$0x3] %v7770
        %7831 = vst [vmem:[#allocation4 + $0x78] sm:$0xf] %v7771
        %7832 = vst [vmem:[#allocation4 + $0x7c] sm:$0xf] %v7772
        %7833 = vst [vmem:[#allocation4 + $0x80] sm:$0x3] %v7773
        %7834 = vst [vmem:[#allocation4 + $0x84] sm:$0xf] %v7774
        %7835 = vst [vmem:[#allocation4 + $0x88] sm:$0xf] %v7775
        %7836 = vst [vmem:[#allocation4 + $0x8c] sm:$0x3] %v7776
        %7837 = vst [vmem:[#allocation4 + $0x90] sm:$0xf] %v7777
        %7838 = vst [vmem:[#allocation4 + $0x94] sm:$0xf] %v7778
        %7839 = vst [vmem:[#allocation4 + $0x98] sm:$0x3] %v7779
        %7840 = vst [vmem:[#allocation4 + $0x9c] sm:$0xf] %v7780
        %7841 = vst [vmem:[#allocation4 + $0xa0] sm:$0xf] %v7781
        %7842 = vst [vmem:[#allocation4 + $0xa4] sm:$0x3] %v7782
        %7843 = vst [vmem:[#allocation4 + $0xa8] sm:$0xf] %v7783
        %7844 = vst [vmem:[#allocation4 + $0xac] sm:$0xf] %v7784
        %7845 = vst [vmem:[#allocation4 + $0xb0] sm:$0x3] %v7785
        %7846 = vst [vmem:[#allocation4 + $0xb4] sm:$0xf] %v7786
        %7847 = vst [vmem:[#allocation4 + $0xb8] sm:$0xf] %v7787
        %7848 = vst [vmem:[#allocation4 + $0xbc] sm:$0x3] %v7788
        %7849 = vst [vmem:[#allocation4 + $0xc0] sm:$0xf] %v7789
        %7850 = vst [vmem:[#allocation4 + $0xc4] sm:$0xf] %v7790
        %7851 = vst [vmem:[#allocation4 + $0xc8] sm:$0x3] %v7791
        %7852 = vst [vmem:[#allocation4 + $0xcc] sm:$0xf] %v7792
        %7853 = vst [vmem:[#allocation4 + $0xd0] sm:$0xf] %v7793
        %7854 = vst [vmem:[#allocation4 + $0xd4] sm:$0x3] %v7794
        %7855 = vst [vmem:[#allocation4 + $0xd8] sm:$0xf] %v7795
        %7856 = vst [vmem:[#allocation4 + $0xdc] sm:$0xf] %v7796
        %7857 = vst [vmem:[#allocation4 + $0xe0] sm:$0x3] %v7797
        %7858 = vst [vmem:[#allocation4 + $0xe4] sm:$0xf] %v7798
        %7859 = vst [vmem:[#allocation4 + $0xe8] sm:$0xf] %v7799
        %7860 = vst [vmem:[#allocation4 + $0xec] sm:$0x3] %v7800
        %v7861 = vld [vmem:[#allocation4] sm:$0xf]
        %v7862 = vld [vmem:[#allocation4 + $0x4] sm:$0xf]
        %v7863 = vld [vmem:[#allocation4 + $0xc] sm:$0xf]
        %v7864 = vld [vmem:[#allocation4 + $0x10] sm:$0xf]
        %v7865 = vld [vmem:[#allocation4 + $0x18] sm:$0xf]
        %v7866 = vld [vmem:[#allocation4 + $0x1c] sm:$0xf]
        %v7867 = vld [vmem:[#allocation4 + $0x24] sm:$0xf]
        %v7868 = vld [vmem:[#allocation4 + $0x28] sm:$0xf]
        %v7869 = vld [vmem:[#allocation4 + $0x30] sm:$0xf]
        %v7870 = vld [vmem:[#allocation4 + $0x34] sm:$0xf]
        %v7871 = vld [vmem:[#allocation4 + $0x3c] sm:$0xf]
        %v7872 = vld [vmem:[#allocation4 + $0x40] sm:$0xf]
        %v7873 = vld [vmem:[#allocation4 + $0x48] sm:$0xf]
        %v7874 = vld [vmem:[#allocation4 + $0x4c] sm:$0xf]
        %v7875 = vld [vmem:[#allocation4 + $0x54] sm:$0xf]
        %v7876 = vld [vmem:[#allocation4 + $0x58] sm:$0xf]
        %v7877 = vld [vmem:[#allocation4 + $0x60] sm:$0xf]
        %v7878 = vld [vmem:[#allocation4 + $0x64] sm:$0xf]
        %v7879 = vld [vmem:[#allocation4 + $0x6c] sm:$0xf]
        %v7880 = vld [vmem:[#allocation4 + $0x70] sm:$0xf]
        %v7881 = vld [vmem:[#allocation4 + $0x78] sm:$0xf]
        %v7882 = vld [vmem:[#allocation4 + $0x7c] sm:$0xf]
        %v7883 = vld [vmem:[#allocation4 + $0x84] sm:$0xf]
        %v7884 = vld [vmem:[#allocation4 + $0x88] sm:$0xf]
        %v7885 = vld [vmem:[#allocation4 + $0x90] sm:$0xf]
        %v7886 = vld [vmem:[#allocation4 + $0x94] sm:$0xf]
        %v7887 = vld [vmem:[#allocation4 + $0x9c] sm:$0xf]
        %v7888 = vld [vmem:[#allocation4 + $0xa0] sm:$0xf]
        %v7889 = vld [vmem:[#allocation4 + $0xa8] sm:$0xf]
        %v7890 = vld [vmem:[#allocation4 + $0xac] sm:$0xf]
        %v7891 = vld [vmem:[#allocation4 + $0xb4] sm:$0xf]
        %v7892 = vld [vmem:[#allocation4 + $0xb8] sm:$0xf]
        %v7893 = vld [vmem:[#allocation4 + $0xc0] sm:$0xf]
        %v7894 = vld [vmem:[#allocation4 + $0xc4] sm:$0xf]
        %v7895 = vld [vmem:[#allocation4 + $0xcc] sm:$0xf]
        %v7896 = vld [vmem:[#allocation4 + $0xd0] sm:$0xf]
        %v7897 = vld [vmem:[#allocation4 + $0xd8] sm:$0xf]
        %v7898 = vld [vmem:[#allocation4 + $0xdc] sm:$0xf]
        %v7899 = vld [vmem:[#allocation4 + $0xe4] sm:$0xf]
        %v7900 = vld [vmem:[#allocation4 + $0xe8] sm:$0xf]
        %v7901 = vld [vmem:[#allocation4 + $0x8] sm:$0x1]
        %v7902 = vld [vmem:[#allocation4 + $0x14] sm:$0x1]
        %v7903 = vld [vmem:[#allocation4 + $0x20] sm:$0x1]
        %v7904 = vld [vmem:[#allocation4 + $0x2c] sm:$0x1]
        %v7905 = vld [vmem:[#allocation4 + $0x38] sm:$0x1]
        %v7906 = vld [vmem:[#allocation4 + $0x44] sm:$0x1]
        %v7907 = vld [vmem:[#allocation4 + $0x50] sm:$0x1]
        %v7908 = vld [vmem:[#allocation4 + $0x5c] sm:$0x1]
        %v7909 = vld [vmem:[#allocation4 + $0x68] sm:$0x1]
        %v7910 = vld [vmem:[#allocation4 + $0x74] sm:$0x1]
        %v7911 = vld [vmem:[#allocation4 + $0x80] sm:$0x1]
        %v7912 = vld [vmem:[#allocation4 + $0x8c] sm:$0x1]
        %v7913 = vld [vmem:[#allocation4 + $0x98] sm:$0x1]
        %v7914 = vld [vmem:[#allocation4 + $0xa4] sm:$0x1]
        %v7915 = vld [vmem:[#allocation4 + $0xb0] sm:$0x1]
        %v7916 = vld [vmem:[#allocation4 + $0xbc] sm:$0x1]
        %v7917 = vld [vmem:[#allocation4 + $0xc8] sm:$0x1]
        %v7918 = vld [vmem:[#allocation4 + $0xd4] sm:$0x1]
        %v7919 = vld [vmem:[#allocation4 + $0xe0] sm:$0x1]
        %v7920 = vld [vmem:[#allocation4 + $0xec] sm:$0x1]
        %v7922 = vshrl.u32 %v7861, 16
        %v7924 = vrot.slane %v7922, 4
        %v7925 = vshll.u32 %v7861, 16
        %v7927 = vrot.slane %v7925, 5
        %v7928 = vor.u32 %v7924, %v7927
        %v7929 = vrot.slane %v7928, 4
        %v7931 = vshll.u32 %v7862, 16
        %v7933 = vrot.slane %v7931, 5
        %v7934 = vsel %vm1454, %v7929, %v7933
        %v7935 = vshrl.u32 %v7862, 16
        %v7937 = vrot.slane %v7935, 4
        %v7938 = vor.u32 %v7937, %v7933
        %v7939 = vrot.slane %v7938, 4
        %v7941 = vshll.u32 %v7901, 16
        %v7943 = vrot.slane %v7941, 5
        %v7944 = vsel %vm1454, %v7939, %v7943
        %v7946 = vshrl.u32 %v7863, 16
        %v7948 = vrot.slane %v7946, 4
        %v7949 = vshll.u32 %v7863, 16
        %v7951 = vrot.slane %v7949, 5
        %v7952 = vor.u32 %v7948, %v7951
        %v7953 = vrot.slane %v7952, 4
        %v7955 = vshll.u32 %v7864, 16
        %v7957 = vrot.slane %v7955, 5
        %v7958 = vsel %vm1454, %v7953, %v7957
        %v7959 = vshrl.u32 %v7864, 16
        %v7961 = vrot.slane %v7959, 4
        %v7962 = vor.u32 %v7961, %v7957
        %v7963 = vrot.slane %v7962, 4
        %v7965 = vshll.u32 %v7902, 16
        %v7967 = vrot.slane %v7965, 5
        %v7968 = vsel %vm1454, %v7963, %v7967
        %v7970 = vshrl.u32 %v7865, 16
        %v7972 = vrot.slane %v7970, 4
        %v7973 = vshll.u32 %v7865, 16
        %v7975 = vrot.slane %v7973, 5
        %v7976 = vor.u32 %v7972, %v7975
        %v7977 = vrot.slane %v7976, 4
        %v7979 = vshll.u32 %v7866, 16
        %v7981 = vrot.slane %v7979, 5
        %v7982 = vsel %vm1454, %v7977, %v7981
        %v7983 = vshrl.u32 %v7866, 16
        %v7985 = vrot.slane %v7983, 4
        %v7986 = vor.u32 %v7985, %v7981
        %v7987 = vrot.slane %v7986, 4
        %v7989 = vshll.u32 %v7903, 16
        %v7991 = vrot.slane %v7989, 5
        %v7992 = vsel %vm1454, %v7987, %v7991
        %v7994 = vshrl.u32 %v7867, 16
        %v7996 = vrot.slane %v7994, 4
        %v7997 = vshll.u32 %v7867, 16
        %v7999 = vrot.slane %v7997, 5
        %v8000 = vor.u32 %v7996, %v7999
        %v8001 = vrot.slane %v8000, 4
        %v8003 = vshll.u32 %v7868, 16
        %v8005 = vrot.slane %v8003, 5
        %v8006 = vsel %vm1454, %v8001, %v8005
        %v8007 = vshrl.u32 %v7868, 16
        %v8009 = vrot.slane %v8007, 4
        %v8010 = vor.u32 %v8009, %v8005
        %v8011 = vrot.slane %v8010, 4
        %v8013 = vshll.u32 %v7904, 16
        %v8015 = vrot.slane %v8013, 5
        %v8016 = vsel %vm1454, %v8011, %v8015
        %v8018 = vshrl.u32 %v7869, 16
        %v8020 = vrot.slane %v8018, 4
        %v8021 = vshll.u32 %v7869, 16
        %v8023 = vrot.slane %v8021, 5
        %v8024 = vor.u32 %v8020, %v8023
        %v8025 = vrot.slane %v8024, 4
        %v8027 = vshll.u32 %v7870, 16
        %v8029 = vrot.slane %v8027, 5
        %v8030 = vsel %vm1454, %v8025, %v8029
        %v8031 = vshrl.u32 %v7870, 16
        %v8033 = vrot.slane %v8031, 4
        %v8034 = vor.u32 %v8033, %v8029
        %v8035 = vrot.slane %v8034, 4
        %v8037 = vshll.u32 %v7905, 16
        %v8039 = vrot.slane %v8037, 5
        %v8040 = vsel %vm1454, %v8035, %v8039
        %v8042 = vshrl.u32 %v7871, 16
        %v8044 = vrot.slane %v8042, 4
        %v8045 = vshll.u32 %v7871, 16
        %v8047 = vrot.slane %v8045, 5
        %v8048 = vor.u32 %v8044, %v8047
        %v8049 = vrot.slane %v8048, 4
        %v8051 = vshll.u32 %v7872, 16
        %v8053 = vrot.slane %v8051, 5
        %v8054 = vsel %vm1454, %v8049, %v8053
        %v8055 = vshrl.u32 %v7872, 16
        %v8057 = vrot.slane %v8055, 4
        %v8058 = vor.u32 %v8057, %v8053
        %v8059 = vrot.slane %v8058, 4
        %v8061 = vshll.u32 %v7906, 16
        %v8063 = vrot.slane %v8061, 5
        %v8064 = vsel %vm1454, %v8059, %v8063
        %v8066 = vshrl.u32 %v7873, 16
        %v8068 = vrot.slane %v8066, 4
        %v8069 = vshll.u32 %v7873, 16
        %v8071 = vrot.slane %v8069, 5
        %v8072 = vor.u32 %v8068, %v8071
        %v8073 = vrot.slane %v8072, 4
        %v8075 = vshll.u32 %v7874, 16
        %v8077 = vrot.slane %v8075, 5
        %v8078 = vsel %vm1454, %v8073, %v8077
        %v8079 = vshrl.u32 %v7874, 16
        %v8081 = vrot.slane %v8079, 4
        %v8082 = vor.u32 %v8081, %v8077
        %v8083 = vrot.slane %v8082, 4
        %v8085 = vshll.u32 %v7907, 16
        %v8087 = vrot.slane %v8085, 5
        %v8088 = vsel %vm1454, %v8083, %v8087
        %v8090 = vshrl.u32 %v7875, 16
        %v8092 = vrot.slane %v8090, 4
        %v8093 = vshll.u32 %v7875, 16
        %v8095 = vrot.slane %v8093, 5
        %v8096 = vor.u32 %v8092, %v8095
        %v8097 = vrot.slane %v8096, 4
        %v8099 = vshll.u32 %v7876, 16
        %v8101 = vrot.slane %v8099, 5
        %v8102 = vsel %vm1454, %v8097, %v8101
        %v8103 = vshrl.u32 %v7876, 16
        %v8105 = vrot.slane %v8103, 4
        %v8106 = vor.u32 %v8105, %v8101
        %v8107 = vrot.slane %v8106, 4
        %v8109 = vshll.u32 %v7908, 16
        %v8111 = vrot.slane %v8109, 5
        %v8112 = vsel %vm1454, %v8107, %v8111
        %v8114 = vshrl.u32 %v7877, 16
        %v8116 = vrot.slane %v8114, 4
        %v8117 = vshll.u32 %v7877, 16
        %v8119 = vrot.slane %v8117, 5
        %v8120 = vor.u32 %v8116, %v8119
        %v8121 = vrot.slane %v8120, 4
        %v8123 = vshll.u32 %v7878, 16
        %v8125 = vrot.slane %v8123, 5
        %v8126 = vsel %vm1454, %v8121, %v8125
        %v8127 = vshrl.u32 %v7878, 16
        %v8129 = vrot.slane %v8127, 4
        %v8130 = vor.u32 %v8129, %v8125
        %v8131 = vrot.slane %v8130, 4
        %v8133 = vshll.u32 %v7909, 16
        %v8135 = vrot.slane %v8133, 5
        %v8136 = vsel %vm1454, %v8131, %v8135
        %v8138 = vshrl.u32 %v7879, 16
        %v8140 = vrot.slane %v8138, 4
        %v8141 = vshll.u32 %v7879, 16
        %v8143 = vrot.slane %v8141, 5
        %v8144 = vor.u32 %v8140, %v8143
        %v8145 = vrot.slane %v8144, 4
        %v8147 = vshll.u32 %v7880, 16
        %v8149 = vrot.slane %v8147, 5
        %v8150 = vsel %vm1454, %v8145, %v8149
        %v8151 = vshrl.u32 %v7880, 16
        %v8153 = vrot.slane %v8151, 4
        %v8154 = vor.u32 %v8153, %v8149
        %v8155 = vrot.slane %v8154, 4
        %v8157 = vshll.u32 %v7910, 16
        %v8159 = vrot.slane %v8157, 5
        %v8160 = vsel %vm1454, %v8155, %v8159
        %v8162 = vshrl.u32 %v7881, 16
        %v8164 = vrot.slane %v8162, 4
        %v8165 = vshll.u32 %v7881, 16
        %v8167 = vrot.slane %v8165, 5
        %v8168 = vor.u32 %v8164, %v8167
        %v8169 = vrot.slane %v8168, 4
        %v8171 = vshll.u32 %v7882, 16
        %v8173 = vrot.slane %v8171, 5
        %v8174 = vsel %vm1454, %v8169, %v8173
        %v8175 = vshrl.u32 %v7882, 16
        %v8177 = vrot.slane %v8175, 4
        %v8178 = vor.u32 %v8177, %v8173
        %v8179 = vrot.slane %v8178, 4
        %v8181 = vshll.u32 %v7911, 16
        %v8183 = vrot.slane %v8181, 5
        %v8184 = vsel %vm1454, %v8179, %v8183
        %v8186 = vshrl.u32 %v7883, 16
        %v8188 = vrot.slane %v8186, 4
        %v8189 = vshll.u32 %v7883, 16
        %v8191 = vrot.slane %v8189, 5
        %v8192 = vor.u32 %v8188, %v8191
        %v8193 = vrot.slane %v8192, 4
        %v8195 = vshll.u32 %v7884, 16
        %v8197 = vrot.slane %v8195, 5
        %v8198 = vsel %vm1454, %v8193, %v8197
        %v8199 = vshrl.u32 %v7884, 16
        %v8201 = vrot.slane %v8199, 4
        %v8202 = vor.u32 %v8201, %v8197
        %v8203 = vrot.slane %v8202, 4
        %v8205 = vshll.u32 %v7912, 16
        %v8207 = vrot.slane %v8205, 5
        %v8208 = vsel %vm1454, %v8203, %v8207
        %v8210 = vshrl.u32 %v7885, 16
        %v8212 = vrot.slane %v8210, 4
        %v8213 = vshll.u32 %v7885, 16
        %v8215 = vrot.slane %v8213, 5
        %v8216 = vor.u32 %v8212, %v8215
        %v8217 = vrot.slane %v8216, 4
        %v8219 = vshll.u32 %v7886, 16
        %v8221 = vrot.slane %v8219, 5
        %v8222 = vsel %vm1454, %v8217, %v8221
        %v8223 = vshrl.u32 %v7886, 16
        %v8225 = vrot.slane %v8223, 4
        %v8226 = vor.u32 %v8225, %v8221
        %v8227 = vrot.slane %v8226, 4
        %v8229 = vshll.u32 %v7913, 16
        %v8231 = vrot.slane %v8229, 5
        %v8232 = vsel %vm1454, %v8227, %v8231
        %v8234 = vshrl.u32 %v7887, 16
        %v8236 = vrot.slane %v8234, 4
        %v8237 = vshll.u32 %v7887, 16
        %v8239 = vrot.slane %v8237, 5
        %v8240 = vor.u32 %v8236, %v8239
        %v8241 = vrot.slane %v8240, 4
        %v8243 = vshll.u32 %v7888, 16
        %v8245 = vrot.slane %v8243, 5
        %v8246 = vsel %vm1454, %v8241, %v8245
        %v8247 = vshrl.u32 %v7888, 16
        %v8249 = vrot.slane %v8247, 4
        %v8250 = vor.u32 %v8249, %v8245
        %v8251 = vrot.slane %v8250, 4
        %v8253 = vshll.u32 %v7914, 16
        %v8255 = vrot.slane %v8253, 5
        %v8256 = vsel %vm1454, %v8251, %v8255
        %v8258 = vshrl.u32 %v7889, 16
        %v8260 = vrot.slane %v8258, 4
        %v8261 = vshll.u32 %v7889, 16
        %v8263 = vrot.slane %v8261, 5
        %v8264 = vor.u32 %v8260, %v8263
        %v8265 = vrot.slane %v8264, 4
        %v8267 = vshll.u32 %v7890, 16
        %v8269 = vrot.slane %v8267, 5
        %v8270 = vsel %vm1454, %v8265, %v8269
        %v8271 = vshrl.u32 %v7890, 16
        %v8273 = vrot.slane %v8271, 4
        %v8274 = vor.u32 %v8273, %v8269
        %v8275 = vrot.slane %v8274, 4
        %v8277 = vshll.u32 %v7915, 16
        %v8279 = vrot.slane %v8277, 5
        %v8280 = vsel %vm1454, %v8275, %v8279
        %v8282 = vshrl.u32 %v7891, 16
        %v8284 = vrot.slane %v8282, 4
        %v8285 = vshll.u32 %v7891, 16
        %v8287 = vrot.slane %v8285, 5
        %v8288 = vor.u32 %v8284, %v8287
        %v8289 = vrot.slane %v8288, 4
        %v8291 = vshll.u32 %v7892, 16
        %v8293 = vrot.slane %v8291, 5
        %v8294 = vsel %vm1454, %v8289, %v8293
        %v8295 = vshrl.u32 %v7892, 16
        %v8297 = vrot.slane %v8295, 4
        %v8298 = vor.u32 %v8297, %v8293
        %v8299 = vrot.slane %v8298, 4
        %v8301 = vshll.u32 %v7916, 16
        %v8303 = vrot.slane %v8301, 5
        %v8304 = vsel %vm1454, %v8299, %v8303
        %v8306 = vshrl.u32 %v7893, 16
        %v8308 = vrot.slane %v8306, 4
        %v8309 = vshll.u32 %v7893, 16
        %v8311 = vrot.slane %v8309, 5
        %v8312 = vor.u32 %v8308, %v8311
        %v8313 = vrot.slane %v8312, 4
        %v8315 = vshll.u32 %v7894, 16
        %v8317 = vrot.slane %v8315, 5
        %v8318 = vsel %vm1454, %v8313, %v8317
        %v8319 = vshrl.u32 %v7894, 16
        %v8321 = vrot.slane %v8319, 4
        %v8322 = vor.u32 %v8321, %v8317
        %v8323 = vrot.slane %v8322, 4
        %v8325 = vshll.u32 %v7917, 16
        %v8327 = vrot.slane %v8325, 5
        %v8328 = vsel %vm1454, %v8323, %v8327
        %v8330 = vshrl.u32 %v7895, 16
        %v8332 = vrot.slane %v8330, 4
        %v8333 = vshll.u32 %v7895, 16
        %v8335 = vrot.slane %v8333, 5
        %v8336 = vor.u32 %v8332, %v8335
        %v8337 = vrot.slane %v8336, 4
        %v8339 = vshll.u32 %v7896, 16
        %v8341 = vrot.slane %v8339, 5
        %v8342 = vsel %vm1454, %v8337, %v8341
        %v8343 = vshrl.u32 %v7896, 16
        %v8345 = vrot.slane %v8343, 4
        %v8346 = vor.u32 %v8345, %v8341
        %v8347 = vrot.slane %v8346, 4
        %v8349 = vshll.u32 %v7918, 16
        %v8351 = vrot.slane %v8349, 5
        %v8352 = vsel %vm1454, %v8347, %v8351
        %v8354 = vshrl.u32 %v7897, 16
        %v8356 = vrot.slane %v8354, 4
        %v8357 = vshll.u32 %v7897, 16
        %v8359 = vrot.slane %v8357, 5
        %v8360 = vor.u32 %v8356, %v8359
        %v8361 = vrot.slane %v8360, 4
        %v8363 = vshll.u32 %v7898, 16
        %v8365 = vrot.slane %v8363, 5
        %v8366 = vsel %vm1454, %v8361, %v8365
        %v8367 = vshrl.u32 %v7898, 16
        %v8369 = vrot.slane %v8367, 4
        %v8370 = vor.u32 %v8369, %v8365
        %v8371 = vrot.slane %v8370, 4
        %v8373 = vshll.u32 %v7919, 16
        %v8375 = vrot.slane %v8373, 5
        %v8376 = vsel %vm1454, %v8371, %v8375
        %v8378 = vshrl.u32 %v7899, 16
        %v8380 = vrot.slane %v8378, 4
        %v8381 = vshll.u32 %v7899, 16
        %v8383 = vrot.slane %v8381, 5
        %v8384 = vor.u32 %v8380, %v8383
        %v8385 = vrot.slane %v8384, 4
        %v8387 = vshll.u32 %v7900, 16
        %v8389 = vrot.slane %v8387, 5
        %v8390 = vsel %vm1454, %v8385, %v8389
        %v8391 = vshrl.u32 %v7900, 16
        %v8393 = vrot.slane %v8391, 4
        %v8394 = vor.u32 %v8393, %v8389
        %v8395 = vrot.slane %v8394, 4
        %v8397 = vshll.u32 %v7920, 16
        %v8399 = vrot.slane %v8397, 5
        %v8400 = vsel %vm1454, %v8395, %v8399
        %v8441 = vmax.bf16 %v7861, %v7934
        %v8442 = vmax.bf16 %v7862, %v7944
        %v8443 = vmax.bf16 %v7863, %v7958
        %v8444 = vmax.bf16 %v7864, %v7968
        %v8445 = vmax.bf16 %v7865, %v7982
        %v8446 = vmax.bf16 %v7866, %v7992
        %v8447 = vmax.bf16 %v7867, %v8006
        %v8448 = vmax.bf16 %v7868, %v8016
        %v8449 = vmax.bf16 %v7869, %v8030
        %v8450 = vmax.bf16 %v7870, %v8040
        %v8451 = vmax.bf16 %v7871, %v8054
        %v8452 = vmax.bf16 %v7872, %v8064
        %v8453 = vmax.bf16 %v7873, %v8078
        %v8454 = vmax.bf16 %v7874, %v8088
        %v8455 = vmax.bf16 %v7875, %v8102
        %v8456 = vmax.bf16 %v7876, %v8112
        %v8457 = vmax.bf16 %v7877, %v8126
        %v8458 = vmax.bf16 %v7878, %v8136
        %v8459 = vmax.bf16 %v7879, %v8150
        %v8460 = vmax.bf16 %v7880, %v8160
        %v8461 = vmax.bf16 %v7881, %v8174
        %v8462 = vmax.bf16 %v7882, %v8184
        %v8463 = vmax.bf16 %v7883, %v8198
        %v8464 = vmax.bf16 %v7884, %v8208
        %v8465 = vmax.bf16 %v7885, %v8222
        %v8466 = vmax.bf16 %v7886, %v8232
        %v8467 = vmax.bf16 %v7887, %v8246
        %v8468 = vmax.bf16 %v7888, %v8256
        %v8469 = vmax.bf16 %v7889, %v8270
        %v8470 = vmax.bf16 %v7890, %v8280
        %v8471 = vmax.bf16 %v7891, %v8294
        %v8472 = vmax.bf16 %v7892, %v8304
        %v8473 = vmax.bf16 %v7893, %v8318
        %v8474 = vmax.bf16 %v7894, %v8328
        %v8475 = vmax.bf16 %v7895, %v8342
        %v8476 = vmax.bf16 %v7896, %v8352
        %v8477 = vmax.bf16 %v7897, %v8366
        %v8478 = vmax.bf16 %v7898, %v8376
        %v8479 = vmax.bf16 %v7899, %v8390
        %v8480 = vmax.bf16 %v7900, %v8400
        %v8481 = vld [vmem:[#allocation4] sm:$0xe]
        %v8482 = vld [vmem:[#allocation4 + $0xc] sm:$0xe]
        %v8483 = vld [vmem:[#allocation4 + $0x18] sm:$0xe]
        %v8484 = vld [vmem:[#allocation4 + $0x24] sm:$0xe]
        %v8485 = vld [vmem:[#allocation4 + $0x30] sm:$0xe]
        %v8486 = vld [vmem:[#allocation4 + $0x3c] sm:$0xe]
        %v8487 = vld [vmem:[#allocation4 + $0x48] sm:$0xe]
        %v8488 = vld [vmem:[#allocation4 + $0x54] sm:$0xe]
        %v8489 = vld [vmem:[#allocation4 + $0x60] sm:$0xe]
        %v8490 = vld [vmem:[#allocation4 + $0x6c] sm:$0xe]
        %v8491 = vld [vmem:[#allocation4 + $0x78] sm:$0xe]
        %v8492 = vld [vmem:[#allocation4 + $0x84] sm:$0xe]
        %v8493 = vld [vmem:[#allocation4 + $0x90] sm:$0xe]
        %v8494 = vld [vmem:[#allocation4 + $0x9c] sm:$0xe]
        %v8495 = vld [vmem:[#allocation4 + $0xa8] sm:$0xe]
        %v8496 = vld [vmem:[#allocation4 + $0xb4] sm:$0xe]
        %v8497 = vld [vmem:[#allocation4 + $0xc0] sm:$0xe]
        %v8498 = vld [vmem:[#allocation4 + $0xcc] sm:$0xe]
        %v8499 = vld [vmem:[#allocation4 + $0xd8] sm:$0xe]
        %v8500 = vld [vmem:[#allocation4 + $0xe4] sm:$0xe]
        %v8561 = vrot.slane %v8481, 5
        %v8562 = vrot.slane %v8561, 4
        %v8563 = vrot.slane %v7862, 5
        %v8564 = vsel %vm1072, %v8562, %v8563
        %v8565 = vrot.slane %v8563, 4
        %v8566 = vrot.slane %v7901, 5
        %v8567 = vsel %vm1072, %v8565, %v8566
        %v8568 = vrot.slane %v8482, 5
        %v8569 = vrot.slane %v8568, 4
        %v8570 = vrot.slane %v7864, 5
        %v8571 = vsel %vm1072, %v8569, %v8570
        %v8572 = vrot.slane %v8570, 4
        %v8573 = vrot.slane %v7902, 5
        %v8574 = vsel %vm1072, %v8572, %v8573
        %v8575 = vrot.slane %v8483, 5
        %v8576 = vrot.slane %v8575, 4
        %v8577 = vrot.slane %v7866, 5
        %v8578 = vsel %vm1072, %v8576, %v8577
        %v8579 = vrot.slane %v8577, 4
        %v8580 = vrot.slane %v7903, 5
        %v8581 = vsel %vm1072, %v8579, %v8580
        %v8582 = vrot.slane %v8484, 5
        %v8583 = vrot.slane %v8582, 4
        %v8584 = vrot.slane %v7868, 5
        %v8585 = vsel %vm1072, %v8583, %v8584
        %v8586 = vrot.slane %v8584, 4
        %v8587 = vrot.slane %v7904, 5
        %v8588 = vsel %vm1072, %v8586, %v8587
        %v8589 = vrot.slane %v8485, 5
        %v8590 = vrot.slane %v8589, 4
        %v8591 = vrot.slane %v7870, 5
        %v8592 = vsel %vm1072, %v8590, %v8591
        %v8593 = vrot.slane %v8591, 4
        %v8594 = vrot.slane %v7905, 5
        %v8595 = vsel %vm1072, %v8593, %v8594
        %v8596 = vrot.slane %v8486, 5
        %v8597 = vrot.slane %v8596, 4
        %v8598 = vrot.slane %v7872, 5
        %v8599 = vsel %vm1072, %v8597, %v8598
        %v8600 = vrot.slane %v8598, 4
        %v8601 = vrot.slane %v7906, 5
        %v8602 = vsel %vm1072, %v8600, %v8601
        %v8603 = vrot.slane %v8487, 5
        %v8604 = vrot.slane %v8603, 4
        %v8605 = vrot.slane %v7874, 5
        %v8606 = vsel %vm1072, %v8604, %v8605
        %v8607 = vrot.slane %v8605, 4
        %v8608 = vrot.slane %v7907, 5
        %v8609 = vsel %vm1072, %v8607, %v8608
        %v8610 = vrot.slane %v8488, 5
        %v8611 = vrot.slane %v8610, 4
        %v8612 = vrot.slane %v7876, 5
        %v8613 = vsel %vm1072, %v8611, %v8612
        %v8614 = vrot.slane %v8612, 4
        %v8615 = vrot.slane %v7908, 5
        %v8616 = vsel %vm1072, %v8614, %v8615
        %v8617 = vrot.slane %v8489, 5
        %v8618 = vrot.slane %v8617, 4
        %v8619 = vrot.slane %v7878, 5
        %v8620 = vsel %vm1072, %v8618, %v8619
        %v8621 = vrot.slane %v8619, 4
        %v8622 = vrot.slane %v7909, 5
        %v8623 = vsel %vm1072, %v8621, %v8622
        %v8624 = vrot.slane %v8490, 5
        %v8625 = vrot.slane %v8624, 4
        %v8626 = vrot.slane %v7880, 5
        %v8627 = vsel %vm1072, %v8625, %v8626
        %v8628 = vrot.slane %v8626, 4
        %v8629 = vrot.slane %v7910, 5
        %v8630 = vsel %vm1072, %v8628, %v8629
        %v8631 = vrot.slane %v8491, 5
        %v8632 = vrot.slane %v8631, 4
        %v8633 = vrot.slane %v7882, 5
        %v8634 = vsel %vm1072, %v8632, %v8633
        %v8635 = vrot.slane %v8633, 4
        %v8636 = vrot.slane %v7911, 5
        %v8637 = vsel %vm1072, %v8635, %v8636
        %v8638 = vrot.slane %v8492, 5
        %v8639 = vrot.slane %v8638, 4
        %v8640 = vrot.slane %v7884, 5
        %v8641 = vsel %vm1072, %v8639, %v8640
        %v8642 = vrot.slane %v8640, 4
        %v8643 = vrot.slane %v7912, 5
        %v8644 = vsel %vm1072, %v8642, %v8643
        %v8645 = vrot.slane %v8493, 5
        %v8646 = vrot.slane %v8645, 4
        %v8647 = vrot.slane %v7886, 5
        %v8648 = vsel %vm1072, %v8646, %v8647
        %v8649 = vrot.slane %v8647, 4
        %v8650 = vrot.slane %v7913, 5
        %v8651 = vsel %vm1072, %v8649, %v8650
        %v8652 = vrot.slane %v8494, 5
        %v8653 = vrot.slane %v8652, 4
        %v8654 = vrot.slane %v7888, 5
        %v8655 = vsel %vm1072, %v8653, %v8654
        %v8656 = vrot.slane %v8654, 4
        %v8657 = vrot.slane %v7914, 5
        %v8658 = vsel %vm1072, %v8656, %v8657
        %v8659 = vrot.slane %v8495, 5
        %v8660 = vrot.slane %v8659, 4
        %v8661 = vrot.slane %v7890, 5
        %v8662 = vsel %vm1072, %v8660, %v8661
        %v8663 = vrot.slane %v8661, 4
        %v8664 = vrot.slane %v7915, 5
        %v8665 = vsel %vm1072, %v8663, %v8664
        %v8666 = vrot.slane %v8496, 5
        %v8667 = vrot.slane %v8666, 4
        %v8668 = vrot.slane %v7892, 5
        %v8669 = vsel %vm1072, %v8667, %v8668
        %v8670 = vrot.slane %v8668, 4
        %v8671 = vrot.slane %v7916, 5
        %v8672 = vsel %vm1072, %v8670, %v8671
        %v8673 = vrot.slane %v8497, 5
        %v8674 = vrot.slane %v8673, 4
        %v8675 = vrot.slane %v7894, 5
        %v8676 = vsel %vm1072, %v8674, %v8675
        %v8677 = vrot.slane %v8675, 4
        %v8678 = vrot.slane %v7917, 5
        %v8679 = vsel %vm1072, %v8677, %v8678
        %v8680 = vrot.slane %v8498, 5
        %v8681 = vrot.slane %v8680, 4
        %v8682 = vrot.slane %v7896, 5
        %v8683 = vsel %vm1072, %v8681, %v8682
        %v8684 = vrot.slane %v8682, 4
        %v8685 = vrot.slane %v7918, 5
        %v8686 = vsel %vm1072, %v8684, %v8685
        %v8687 = vrot.slane %v8499, 5
        %v8688 = vrot.slane %v8687, 4
        %v8689 = vrot.slane %v7898, 5
        %v8690 = vsel %vm1072, %v8688, %v8689
        %v8691 = vrot.slane %v8689, 4
        %v8692 = vrot.slane %v7919, 5
        %v8693 = vsel %vm1072, %v8691, %v8692
        %v8694 = vrot.slane %v8500, 5
        %v8695 = vrot.slane %v8694, 4
        %v8696 = vrot.slane %v7900, 5
        %v8697 = vsel %vm1072, %v8695, %v8696
        %v8698 = vrot.slane %v8696, 4
        %v8699 = vrot.slane %v7920, 5
        %v8700 = vsel %vm1072, %v8698, %v8699
        %v8741 = vmax.bf16 %v8441, %v8564
        %v8742 = vmax.bf16 %v8442, %v8567
        %v8743 = vmax.bf16 %v8443, %v8571
        %v8744 = vmax.bf16 %v8444, %v8574
        %v8745 = vmax.bf16 %v8445, %v8578
        %v8746 = vmax.bf16 %v8446, %v8581
        %v8747 = vmax.bf16 %v8447, %v8585
        %v8748 = vmax.bf16 %v8448, %v8588
        %v8749 = vmax.bf16 %v8449, %v8592
        %v8750 = vmax.bf16 %v8450, %v8595
        %v8751 = vmax.bf16 %v8451, %v8599
        %v8752 = vmax.bf16 %v8452, %v8602
        %v8753 = vmax.bf16 %v8453, %v8606
        %v8754 = vmax.bf16 %v8454, %v8609
        %v8755 = vmax.bf16 %v8455, %v8613
        %v8756 = vmax.bf16 %v8456, %v8616
        %v8757 = vmax.bf16 %v8457, %v8620
        %v8758 = vmax.bf16 %v8458, %v8623
        %v8759 = vmax.bf16 %v8459, %v8627
        %v8760 = vmax.bf16 %v8460, %v8630
        %v8761 = vmax.bf16 %v8461, %v8634
        %v8762 = vmax.bf16 %v8462, %v8637
        %v8763 = vmax.bf16 %v8463, %v8641
        %v8764 = vmax.bf16 %v8464, %v8644
        %v8765 = vmax.bf16 %v8465, %v8648
        %v8766 = vmax.bf16 %v8466, %v8651
        %v8767 = vmax.bf16 %v8467, %v8655
        %v8768 = vmax.bf16 %v8468, %v8658
        %v8769 = vmax.bf16 %v8469, %v8662
        %v8770 = vmax.bf16 %v8470, %v8665
        %v8771 = vmax.bf16 %v8471, %v8669
        %v8772 = vmax.bf16 %v8472, %v8672
        %v8773 = vmax.bf16 %v8473, %v8676
        %v8774 = vmax.bf16 %v8474, %v8679
        %v8775 = vmax.bf16 %v8475, %v8683
        %v8776 = vmax.bf16 %v8476, %v8686
        %v8777 = vmax.bf16 %v8477, %v8690
        %v8778 = vmax.bf16 %v8478, %v8693
        %v8779 = vmax.bf16 %v8479, %v8697
        %v8780 = vmax.bf16 %v8480, %v8700
        %v8781 = vld [vmem:[#allocation4 + $0x8] sm:$0x3]
        %v8782 = vld [vmem:[#allocation4 + $0x14] sm:$0x3]
        %v8783 = vld [vmem:[#allocation4 + $0x20] sm:$0x3]
        %v8784 = vld [vmem:[#allocation4 + $0x2c] sm:$0x3]
        %v8785 = vld [vmem:[#allocation4 + $0x38] sm:$0x3]
        %v8786 = vld [vmem:[#allocation4 + $0x44] sm:$0x3]
        %v8787 = vld [vmem:[#allocation4 + $0x50] sm:$0x3]
        %v8788 = vld [vmem:[#allocation4 + $0x5c] sm:$0x3]
        %v8789 = vld [vmem:[#allocation4 + $0x68] sm:$0x3]
        %v8790 = vld [vmem:[#allocation4 + $0x74] sm:$0x3]
        %v8791 = vld [vmem:[#allocation4 + $0x80] sm:$0x3]
        %v8792 = vld [vmem:[#allocation4 + $0x8c] sm:$0x3]
        %v8793 = vld [vmem:[#allocation4 + $0x98] sm:$0x3]
        %v8794 = vld [vmem:[#allocation4 + $0xa4] sm:$0x3]
        %v8795 = vld [vmem:[#allocation4 + $0xb0] sm:$0x3]
        %v8796 = vld [vmem:[#allocation4 + $0xbc] sm:$0x3]
        %v8797 = vld [vmem:[#allocation4 + $0xc8] sm:$0x3]
        %v8798 = vld [vmem:[#allocation4 + $0xd4] sm:$0x3]
        %v8799 = vld [vmem:[#allocation4 + $0xe0] sm:$0x3]
        %v8800 = vld [vmem:[#allocation4 + $0xec] sm:$0x3]
        %v8802 = vshrl.u32 %v8481, 16
        %v8804 = vrot.slane %v8802, 5
        %v8805 = vshll.u32 %v8481, 16
        %v8807 = vrot.slane %v8805, 6
        %v8808 = vor.u32 %v8804, %v8807
        %v8809 = vrot.slane %v8808, 4
        %v8810 = vrot.slane %v7935, 5
        %v8811 = vrot.slane %v7931, 6
        %v8812 = vor.u32 %v8810, %v8811
        %v8813 = vsel %vm3193, %v8809, %v8812
        %v8814 = vrot.slane %v8812, 4
        %v8816 = vshrl.u32 %v8781, 16
        %v8818 = vrot.slane %v8816, 5
        %v8819 = vshll.u32 %v8781, 16
        %v8821 = vrot.slane %v8819, 6
        %v8822 = vor.u32 %v8818, %v8821
        %v8823 = vsel %vm3193, %v8814, %v8822
        %v8825 = vshrl.u32 %v8482, 16
        %v8827 = vrot.slane %v8825, 5
        %v8828 = vshll.u32 %v8482, 16
        %v8830 = vrot.slane %v8828, 6
        %v8831 = vor.u32 %v8827, %v8830
        %v8832 = vrot.slane %v8831, 4
        %v8833 = vrot.slane %v7959, 5
        %v8834 = vrot.slane %v7955, 6
        %v8835 = vor.u32 %v8833, %v8834
        %v8836 = vsel %vm3193, %v8832, %v8835
        %v8837 = vrot.slane %v8835, 4
        %v8839 = vshrl.u32 %v8782, 16
        %v8841 = vrot.slane %v8839, 5
        %v8842 = vshll.u32 %v8782, 16
        %v8844 = vrot.slane %v8842, 6
        %v8845 = vor.u32 %v8841, %v8844
        %v8846 = vsel %vm3193, %v8837, %v8845
        %v8848 = vshrl.u32 %v8483, 16
        %v8850 = vrot.slane %v8848, 5
        %v8851 = vshll.u32 %v8483, 16
        %v8853 = vrot.slane %v8851, 6
        %v8854 = vor.u32 %v8850, %v8853
        %v8855 = vrot.slane %v8854, 4
        %v8856 = vrot.slane %v7983, 5
        %v8857 = vrot.slane %v7979, 6
        %v8858 = vor.u32 %v8856, %v8857
        %v8859 = vsel %vm3193, %v8855, %v8858
        %v8860 = vrot.slane %v8858, 4
        %v8862 = vshrl.u32 %v8783, 16
        %v8864 = vrot.slane %v8862, 5
        %v8865 = vshll.u32 %v8783, 16
        %v8867 = vrot.slane %v8865, 6
        %v8868 = vor.u32 %v8864, %v8867
        %v8869 = vsel %vm3193, %v8860, %v8868
        %v8871 = vshrl.u32 %v8484, 16
        %v8873 = vrot.slane %v8871, 5
        %v8874 = vshll.u32 %v8484, 16
        %v8876 = vrot.slane %v8874, 6
        %v8877 = vor.u32 %v8873, %v8876
        %v8878 = vrot.slane %v8877, 4
        %v8879 = vrot.slane %v8007, 5
        %v8880 = vrot.slane %v8003, 6
        %v8881 = vor.u32 %v8879, %v8880
        %v8882 = vsel %vm3193, %v8878, %v8881
        %v8883 = vrot.slane %v8881, 4
        %v8885 = vshrl.u32 %v8784, 16
        %v8887 = vrot.slane %v8885, 5
        %v8888 = vshll.u32 %v8784, 16
        %v8890 = vrot.slane %v8888, 6
        %v8891 = vor.u32 %v8887, %v8890
        %v8892 = vsel %vm3193, %v8883, %v8891
        %v8894 = vshrl.u32 %v8485, 16
        %v8896 = vrot.slane %v8894, 5
        %v8897 = vshll.u32 %v8485, 16
        %v8899 = vrot.slane %v8897, 6
        %v8900 = vor.u32 %v8896, %v8899
        %v8901 = vrot.slane %v8900, 4
        %v8902 = vrot.slane %v8031, 5
        %v8903 = vrot.slane %v8027, 6
        %v8904 = vor.u32 %v8902, %v8903
        %v8905 = vsel %vm3193, %v8901, %v8904
        %v8906 = vrot.slane %v8904, 4
        %v8908 = vshrl.u32 %v8785, 16
        %v8910 = vrot.slane %v8908, 5
        %v8911 = vshll.u32 %v8785, 16
        %v8913 = vrot.slane %v8911, 6
        %v8914 = vor.u32 %v8910, %v8913
        %v8915 = vsel %vm3193, %v8906, %v8914
        %v8917 = vshrl.u32 %v8486, 16
        %v8919 = vrot.slane %v8917, 5
        %v8920 = vshll.u32 %v8486, 16
        %v8922 = vrot.slane %v8920, 6
        %v8923 = vor.u32 %v8919, %v8922
        %v8924 = vrot.slane %v8923, 4
        %v8925 = vrot.slane %v8055, 5
        %v8926 = vrot.slane %v8051, 6
        %v8927 = vor.u32 %v8925, %v8926
        %v8928 = vsel %vm3193, %v8924, %v8927
        %v8929 = vrot.slane %v8927, 4
        %v8931 = vshrl.u32 %v8786, 16
        %v8933 = vrot.slane %v8931, 5
        %v8934 = vshll.u32 %v8786, 16
        %v8936 = vrot.slane %v8934, 6
        %v8937 = vor.u32 %v8933, %v8936
        %v8938 = vsel %vm3193, %v8929, %v8937
        %v8940 = vshrl.u32 %v8487, 16
        %v8942 = vrot.slane %v8940, 5
        %v8943 = vshll.u32 %v8487, 16
        %v8945 = vrot.slane %v8943, 6
        %v8946 = vor.u32 %v8942, %v8945
        %v8947 = vrot.slane %v8946, 4
        %v8948 = vrot.slane %v8079, 5
        %v8949 = vrot.slane %v8075, 6
        %v8950 = vor.u32 %v8948, %v8949
        %v8951 = vsel %vm3193, %v8947, %v8950
        %v8952 = vrot.slane %v8950, 4
        %v8954 = vshrl.u32 %v8787, 16
        %v8956 = vrot.slane %v8954, 5
        %v8957 = vshll.u32 %v8787, 16
        %v8959 = vrot.slane %v8957, 6
        %v8960 = vor.u32 %v8956, %v8959
        %v8961 = vsel %vm3193, %v8952, %v8960
        %v8963 = vshrl.u32 %v8488, 16
        %v8965 = vrot.slane %v8963, 5
        %v8966 = vshll.u32 %v8488, 16
        %v8968 = vrot.slane %v8966, 6
        %v8969 = vor.u32 %v8965, %v8968
        %v8970 = vrot.slane %v8969, 4
        %v8971 = vrot.slane %v8103, 5
        %v8972 = vrot.slane %v8099, 6
        %v8973 = vor.u32 %v8971, %v8972
        %v8974 = vsel %vm3193, %v8970, %v8973
        %v8975 = vrot.slane %v8973, 4
        %v8977 = vshrl.u32 %v8788, 16
        %v8979 = vrot.slane %v8977, 5
        %v8980 = vshll.u32 %v8788, 16
        %v8982 = vrot.slane %v8980, 6
        %v8983 = vor.u32 %v8979, %v8982
        %v8984 = vsel %vm3193, %v8975, %v8983
        %v8986 = vshrl.u32 %v8489, 16
        %v8988 = vrot.slane %v8986, 5
        %v8989 = vshll.u32 %v8489, 16
        %v8991 = vrot.slane %v8989, 6
        %v8992 = vor.u32 %v8988, %v8991
        %v8993 = vrot.slane %v8992, 4
        %v8994 = vrot.slane %v8127, 5
        %v8995 = vrot.slane %v8123, 6
        %v8996 = vor.u32 %v8994, %v8995
        %v8997 = vsel %vm3193, %v8993, %v8996
        %v8998 = vrot.slane %v8996, 4
        %v9000 = vshrl.u32 %v8789, 16
        %v9002 = vrot.slane %v9000, 5
        %v9003 = vshll.u32 %v8789, 16
        %v9005 = vrot.slane %v9003, 6
        %v9006 = vor.u32 %v9002, %v9005
        %v9007 = vsel %vm3193, %v8998, %v9006
        %v9009 = vshrl.u32 %v8490, 16
        %v9011 = vrot.slane %v9009, 5
        %v9012 = vshll.u32 %v8490, 16
        %v9014 = vrot.slane %v9012, 6
        %v9015 = vor.u32 %v9011, %v9014
        %v9016 = vrot.slane %v9015, 4
        %v9017 = vrot.slane %v8151, 5
        %v9018 = vrot.slane %v8147, 6
        %v9019 = vor.u32 %v9017, %v9018
        %v9020 = vsel %vm3193, %v9016, %v9019
        %v9021 = vrot.slane %v9019, 4
        %v9023 = vshrl.u32 %v8790, 16
        %v9025 = vrot.slane %v9023, 5
        %v9026 = vshll.u32 %v8790, 16
        %v9028 = vrot.slane %v9026, 6
        %v9029 = vor.u32 %v9025, %v9028
        %v9030 = vsel %vm3193, %v9021, %v9029
        %v9032 = vshrl.u32 %v8491, 16
        %v9034 = vrot.slane %v9032, 5
        %v9035 = vshll.u32 %v8491, 16
        %v9037 = vrot.slane %v9035, 6
        %v9038 = vor.u32 %v9034, %v9037
        %v9039 = vrot.slane %v9038, 4
        %v9040 = vrot.slane %v8175, 5
        %v9041 = vrot.slane %v8171, 6
        %v9042 = vor.u32 %v9040, %v9041
        %v9043 = vsel %vm3193, %v9039, %v9042
        %v9044 = vrot.slane %v9042, 4
        %v9046 = vshrl.u32 %v8791, 16
        %v9048 = vrot.slane %v9046, 5
        %v9049 = vshll.u32 %v8791, 16
        %v9051 = vrot.slane %v9049, 6
        %v9052 = vor.u32 %v9048, %v9051
        %v9053 = vsel %vm3193, %v9044, %v9052
        %v9055 = vshrl.u32 %v8492, 16
        %v9057 = vrot.slane %v9055, 5
        %v9058 = vshll.u32 %v8492, 16
        %v9060 = vrot.slane %v9058, 6
        %v9061 = vor.u32 %v9057, %v9060
        %v9062 = vrot.slane %v9061, 4
        %v9063 = vrot.slane %v8199, 5
        %v9064 = vrot.slane %v8195, 6
        %v9065 = vor.u32 %v9063, %v9064
        %v9066 = vsel %vm3193, %v9062, %v9065
        %v9067 = vrot.slane %v9065, 4
        %v9069 = vshrl.u32 %v8792, 16
        %v9071 = vrot.slane %v9069, 5
        %v9072 = vshll.u32 %v8792, 16
        %v9074 = vrot.slane %v9072, 6
        %v9075 = vor.u32 %v9071, %v9074
        %v9076 = vsel %vm3193, %v9067, %v9075
        %v9078 = vshrl.u32 %v8493, 16
        %v9080 = vrot.slane %v9078, 5
        %v9081 = vshll.u32 %v8493, 16
        %v9083 = vrot.slane %v9081, 6
        %v9084 = vor.u32 %v9080, %v9083
        %v9085 = vrot.slane %v9084, 4
        %v9086 = vrot.slane %v8223, 5
        %v9087 = vrot.slane %v8219, 6
        %v9088 = vor.u32 %v9086, %v9087
        %v9089 = vsel %vm3193, %v9085, %v9088
        %v9090 = vrot.slane %v9088, 4
        %v9092 = vshrl.u32 %v8793, 16
        %v9094 = vrot.slane %v9092, 5
        %v9095 = vshll.u32 %v8793, 16
        %v9097 = vrot.slane %v9095, 6
        %v9098 = vor.u32 %v9094, %v9097
        %v9099 = vsel %vm3193, %v9090, %v9098
        %v9101 = vshrl.u32 %v8494, 16
        %v9103 = vrot.slane %v9101, 5
        %v9104 = vshll.u32 %v8494, 16
        %v9106 = vrot.slane %v9104, 6
        %v9107 = vor.u32 %v9103, %v9106
        %v9108 = vrot.slane %v9107, 4
        %v9109 = vrot.slane %v8247, 5
        %v9110 = vrot.slane %v8243, 6
        %v9111 = vor.u32 %v9109, %v9110
        %v9112 = vsel %vm3193, %v9108, %v9111
        %v9113 = vrot.slane %v9111, 4
        %v9115 = vshrl.u32 %v8794, 16
        %v9117 = vrot.slane %v9115, 5
        %v9118 = vshll.u32 %v8794, 16
        %v9120 = vrot.slane %v9118, 6
        %v9121 = vor.u32 %v9117, %v9120
        %v9122 = vsel %vm3193, %v9113, %v9121
        %v9124 = vshrl.u32 %v8495, 16
        %v9126 = vrot.slane %v9124, 5
        %v9127 = vshll.u32 %v8495, 16
        %v9129 = vrot.slane %v9127, 6
        %v9130 = vor.u32 %v9126, %v9129
        %v9131 = vrot.slane %v9130, 4
        %v9132 = vrot.slane %v8271, 5
        %v9133 = vrot.slane %v8267, 6
        %v9134 = vor.u32 %v9132, %v9133
        %v9135 = vsel %vm3193, %v9131, %v9134
        %v9136 = vrot.slane %v9134, 4
        %v9138 = vshrl.u32 %v8795, 16
        %v9140 = vrot.slane %v9138, 5
        %v9141 = vshll.u32 %v8795, 16
        %v9143 = vrot.slane %v9141, 6
        %v9144 = vor.u32 %v9140, %v9143
        %v9145 = vsel %vm3193, %v9136, %v9144
        %v9147 = vshrl.u32 %v8496, 16
        %v9149 = vrot.slane %v9147, 5
        %v9150 = vshll.u32 %v8496, 16
        %v9152 = vrot.slane %v9150, 6
        %v9153 = vor.u32 %v9149, %v9152
        %v9154 = vrot.slane %v9153, 4
        %v9155 = vrot.slane %v8295, 5
        %v9156 = vrot.slane %v8291, 6
        %v9157 = vor.u32 %v9155, %v9156
        %v9158 = vsel %vm3193, %v9154, %v9157
        %v9159 = vrot.slane %v9157, 4
        %v9161 = vshrl.u32 %v8796, 16
        %v9163 = vrot.slane %v9161, 5
        %v9164 = vshll.u32 %v8796, 16
        %v9166 = vrot.slane %v9164, 6
        %v9167 = vor.u32 %v9163, %v9166
        %v9168 = vsel %vm3193, %v9159, %v9167
        %v9170 = vshrl.u32 %v8497, 16
        %v9172 = vrot.slane %v9170, 5
        %v9173 = vshll.u32 %v8497, 16
        %v9175 = vrot.slane %v9173, 6
        %v9176 = vor.u32 %v9172, %v9175
        %v9177 = vrot.slane %v9176, 4
        %v9178 = vrot.slane %v8319, 5
        %v9179 = vrot.slane %v8315, 6
        %v9180 = vor.u32 %v9178, %v9179
        %v9181 = vsel %vm3193, %v9177, %v9180
        %v9182 = vrot.slane %v9180, 4
        %v9184 = vshrl.u32 %v8797, 16
        %v9186 = vrot.slane %v9184, 5
        %v9187 = vshll.u32 %v8797, 16
        %v9189 = vrot.slane %v9187, 6
        %v9190 = vor.u32 %v9186, %v9189
        %v9191 = vsel %vm3193, %v9182, %v9190
        %v9193 = vshrl.u32 %v8498, 16
        %v9195 = vrot.slane %v9193, 5
        %v9196 = vshll.u32 %v8498, 16
        %v9198 = vrot.slane %v9196, 6
        %v9199 = vor.u32 %v9195, %v9198
        %v9200 = vrot.slane %v9199, 4
        %v9201 = vrot.slane %v8343, 5
        %v9202 = vrot.slane %v8339, 6
        %v9203 = vor.u32 %v9201, %v9202
        %v9204 = vsel %vm3193, %v9200, %v9203
        %v9205 = vrot.slane %v9203, 4
        %v9207 = vshrl.u32 %v8798, 16
        %v9209 = vrot.slane %v9207, 5
        %v9210 = vshll.u32 %v8798, 16
        %v9212 = vrot.slane %v9210, 6
        %v9213 = vor.u32 %v9209, %v9212
        %v9214 = vsel %vm3193, %v9205, %v9213
        %v9216 = vshrl.u32 %v8499, 16
        %v9218 = vrot.slane %v9216, 5
        %v9219 = vshll.u32 %v8499, 16
        %v9221 = vrot.slane %v9219, 6
        %v9222 = vor.u32 %v9218, %v9221
        %v9223 = vrot.slane %v9222, 4
        %v9224 = vrot.slane %v8367, 5
        %v9225 = vrot.slane %v8363, 6
        %v9226 = vor.u32 %v9224, %v9225
        %v9227 = vsel %vm3193, %v9223, %v9226
        %v9228 = vrot.slane %v9226, 4
        %v9230 = vshrl.u32 %v8799, 16
        %v9232 = vrot.slane %v9230, 5
        %v9233 = vshll.u32 %v8799, 16
        %v9235 = vrot.slane %v9233, 6
        %v9236 = vor.u32 %v9232, %v9235
        %v9237 = vsel %vm3193, %v9228, %v9236
        %v9239 = vshrl.u32 %v8500, 16
        %v9241 = vrot.slane %v9239, 5
        %v9242 = vshll.u32 %v8500, 16
        %v9244 = vrot.slane %v9242, 6
        %v9245 = vor.u32 %v9241, %v9244
        %v9246 = vrot.slane %v9245, 4
        %v9247 = vrot.slane %v8391, 5
        %v9248 = vrot.slane %v8387, 6
        %v9249 = vor.u32 %v9247, %v9248
        %v9250 = vsel %vm3193, %v9246, %v9249
        %v9251 = vrot.slane %v9249, 4
        %v9253 = vshrl.u32 %v8800, 16
        %v9255 = vrot.slane %v9253, 5
        %v9256 = vshll.u32 %v8800, 16
        %v9258 = vrot.slane %v9256, 6
        %v9259 = vor.u32 %v9255, %v9258
        %v9260 = vsel %vm3193, %v9251, %v9259
        %v9301 = vmax.bf16 %v8741, %v8813
        %v9302 = vmax.bf16 %v8742, %v8823
        %v9303 = vmax.bf16 %v8743, %v8836
        %v9304 = vmax.bf16 %v8744, %v8846
        %v9305 = vmax.bf16 %v8745, %v8859
        %v9306 = vmax.bf16 %v8746, %v8869
        %v9307 = vmax.bf16 %v8747, %v8882
        %v9308 = vmax.bf16 %v8748, %v8892
        %v9309 = vmax.bf16 %v8749, %v8905
        %v9310 = vmax.bf16 %v8750, %v8915
        %v9311 = vmax.bf16 %v8751, %v8928
        %v9312 = vmax.bf16 %v8752, %v8938
        %v9313 = vmax.bf16 %v8753, %v8951
        %v9314 = vmax.bf16 %v8754, %v8961
        %v9315 = vmax.bf16 %v8755, %v8974
        %v9316 = vmax.bf16 %v8756, %v8984
        %v9317 = vmax.bf16 %v8757, %v8997
        %v9318 = vmax.bf16 %v8758, %v9007
        %v9319 = vmax.bf16 %v8759, %v9020
        %v9320 = vmax.bf16 %v8760, %v9030
        %v9321 = vmax.bf16 %v8761, %v9043
        %v9322 = vmax.bf16 %v8762, %v9053
        %v9323 = vmax.bf16 %v8763, %v9066
        %v9324 = vmax.bf16 %v8764, %v9076
        %v9325 = vmax.bf16 %v8765, %v9089
        %v9326 = vmax.bf16 %v8766, %v9099
        %v9327 = vmax.bf16 %v8767, %v9112
        %v9328 = vmax.bf16 %v8768, %v9122
        %v9329 = vmax.bf16 %v8769, %v9135
        %v9330 = vmax.bf16 %v8770, %v9145
        %v9331 = vmax.bf16 %v8771, %v9158
        %v9332 = vmax.bf16 %v8772, %v9168
        %v9333 = vmax.bf16 %v8773, %v9181
        %v9334 = vmax.bf16 %v8774, %v9191
        %v9335 = vmax.bf16 %v8775, %v9204
        %v9336 = vmax.bf16 %v8776, %v9214
        %v9337 = vmax.bf16 %v8777, %v9227
        %v9338 = vmax.bf16 %v8778, %v9237
        %v9339 = vmax.bf16 %v8779, %v9250
        %v9340 = vmax.bf16 %v8780, %v9260
        %v9341 = vld [vmem:[#allocation4] sm:$0xc]
        %v9342 = vld [vmem:[#allocation4 + $0xc] sm:$0xc]
        %v9343 = vld [vmem:[#allocation4 + $0x18] sm:$0xc]
        %v9344 = vld [vmem:[#allocation4 + $0x24] sm:$0xc]
        %v9345 = vld [vmem:[#allocation4 + $0x30] sm:$0xc]
        %v9346 = vld [vmem:[#allocation4 + $0x3c] sm:$0xc]
        %v9347 = vld [vmem:[#allocation4 + $0x48] sm:$0xc]
        %v9348 = vld [vmem:[#allocation4 + $0x54] sm:$0xc]
        %v9349 = vld [vmem:[#allocation4 + $0x60] sm:$0xc]
        %v9350 = vld [vmem:[#allocation4 + $0x6c] sm:$0xc]
        %v9351 = vld [vmem:[#allocation4 + $0x78] sm:$0xc]
        %v9352 = vld [vmem:[#allocation4 + $0x84] sm:$0xc]
        %v9353 = vld [vmem:[#allocation4 + $0x90] sm:$0xc]
        %v9354 = vld [vmem:[#allocation4 + $0x9c] sm:$0xc]
        %v9355 = vld [vmem:[#allocation4 + $0xa8] sm:$0xc]
        %v9356 = vld [vmem:[#allocation4 + $0xb4] sm:$0xc]
        %v9357 = vld [vmem:[#allocation4 + $0xc0] sm:$0xc]
        %v9358 = vld [vmem:[#allocation4 + $0xcc] sm:$0xc]
        %v9359 = vld [vmem:[#allocation4 + $0xd8] sm:$0xc]
        %v9360 = vld [vmem:[#allocation4 + $0xe4] sm:$0xc]
        %v9401 = vrot.slane %v9341, 6
        %v9402 = vrot.slane %v9401, 4
        %v9403 = vrot.slane %v7862, 6
        %v9404 = vsel %vm4232, %v9402, %v9403
        %v9405 = vrot.slane %v9403, 4
        %v9406 = vrot.slane %v8781, 6
        %v9407 = vsel %vm4232, %v9405, %v9406
        %v9408 = vrot.slane %v9342, 6
        %v9409 = vrot.slane %v9408, 4
        %v9410 = vrot.slane %v7864, 6
        %v9411 = vsel %vm4232, %v9409, %v9410
        %v9412 = vrot.slane %v9410, 4
        %v9413 = vrot.slane %v8782, 6
        %v9414 = vsel %vm4232, %v9412, %v9413
        %v9415 = vrot.slane %v9343, 6
        %v9416 = vrot.slane %v9415, 4
        %v9417 = vrot.slane %v7866, 6
        %v9418 = vsel %vm4232, %v9416, %v9417
        %v9419 = vrot.slane %v9417, 4
        %v9420 = vrot.slane %v8783, 6
        %v9421 = vsel %vm4232, %v9419, %v9420
        %v9422 = vrot.slane %v9344, 6
        %v9423 = vrot.slane %v9422, 4
        %v9424 = vrot.slane %v7868, 6
        %v9425 = vsel %vm4232, %v9423, %v9424
        %v9426 = vrot.slane %v9424, 4
        %v9427 = vrot.slane %v8784, 6
        %v9428 = vsel %vm4232, %v9426, %v9427
        %v9429 = vrot.slane %v9345, 6
        %v9430 = vrot.slane %v9429, 4
        %v9431 = vrot.slane %v7870, 6
        %v9432 = vsel %vm4232, %v9430, %v9431
        %v9433 = vrot.slane %v9431, 4
        %v9434 = vrot.slane %v8785, 6
        %v9435 = vsel %vm4232, %v9433, %v9434
        %v9436 = vrot.slane %v9346, 6
        %v9437 = vrot.slane %v9436, 4
        %v9438 = vrot.slane %v7872, 6
        %v9439 = vsel %vm4232, %v9437, %v9438
        %v9440 = vrot.slane %v9438, 4
        %v9441 = vrot.slane %v8786, 6
        %v9442 = vsel %vm4232, %v9440, %v9441
        %v9443 = vrot.slane %v9347, 6
        %v9444 = vrot.slane %v9443, 4
        %v9445 = vrot.slane %v7874, 6
        %v9446 = vsel %vm4232, %v9444, %v9445
        %v9447 = vrot.slane %v9445, 4
        %v9448 = vrot.slane %v8787, 6
        %v9449 = vsel %vm4232, %v9447, %v9448
        %v9450 = vrot.slane %v9348, 6
        %v9451 = vrot.slane %v9450, 4
        %v9452 = vrot.slane %v7876, 6
        %v9453 = vsel %vm4232, %v9451, %v9452
        %v9454 = vrot.slane %v9452, 4
        %v9455 = vrot.slane %v8788, 6
        %v9456 = vsel %vm4232, %v9454, %v9455
        %v9457 = vrot.slane %v9349, 6
        %v9458 = vrot.slane %v9457, 4
        %v9459 = vrot.slane %v7878, 6
        %v9460 = vsel %vm4232, %v9458, %v9459
        %v9461 = vrot.slane %v9459, 4
        %v9462 = vrot.slane %v8789, 6
        %v9463 = vsel %vm4232, %v9461, %v9462
        %v9464 = vrot.slane %v9350, 6
        %v9465 = vrot.slane %v9464, 4
        %v9466 = vrot.slane %v7880, 6
        %v9467 = vsel %vm4232, %v9465, %v9466
        %v9468 = vrot.slane %v9466, 4
        %v9469 = vrot.slane %v8790, 6
        %v9470 = vsel %vm4232, %v9468, %v9469
        %v9471 = vrot.slane %v9351, 6
        %v9472 = vrot.slane %v9471, 4
        %v9473 = vrot.slane %v7882, 6
        %v9474 = vsel %vm4232, %v9472, %v9473
        %v9475 = vrot.slane %v9473, 4
        %v9476 = vrot.slane %v8791, 6
        %v9477 = vsel %vm4232, %v9475, %v9476
        %v9478 = vrot.slane %v9352, 6
        %v9479 = vrot.slane %v9478, 4
        %v9480 = vrot.slane %v7884, 6
        %v9481 = vsel %vm4232, %v9479, %v9480
        %v9482 = vrot.slane %v9480, 4
        %v9483 = vrot.slane %v8792, 6
        %v9484 = vsel %vm4232, %v9482, %v9483
        %v9485 = vrot.slane %v9353, 6
        %v9486 = vrot.slane %v9485, 4
        %v9487 = vrot.slane %v7886, 6
        %v9488 = vsel %vm4232, %v9486, %v9487
        %v9489 = vrot.slane %v9487, 4
        %v9490 = vrot.slane %v8793, 6
        %v9491 = vsel %vm4232, %v9489, %v9490
        %v9492 = vrot.slane %v9354, 6
        %v9493 = vrot.slane %v9492, 4
        %v9494 = vrot.slane %v7888, 6
        %v9495 = vsel %vm4232, %v9493, %v9494
        %v9496 = vrot.slane %v9494, 4
        %v9497 = vrot.slane %v8794, 6
        %v9498 = vsel %vm4232, %v9496, %v9497
        %v9499 = vrot.slane %v9355, 6
        %v9500 = vrot.slane %v9499, 4
        %v9501 = vrot.slane %v7890, 6
        %v9502 = vsel %vm4232, %v9500, %v9501
        %v9503 = vrot.slane %v9501, 4
        %v9504 = vrot.slane %v8795, 6
        %v9505 = vsel %vm4232, %v9503, %v9504
        %v9506 = vrot.slane %v9356, 6
        %v9507 = vrot.slane %v9506, 4
        %v9508 = vrot.slane %v7892, 6
        %v9509 = vsel %vm4232, %v9507, %v9508
        %v9510 = vrot.slane %v9508, 4
        %v9511 = vrot.slane %v8796, 6
        %v9512 = vsel %vm4232, %v9510, %v9511
        %v9513 = vrot.slane %v9357, 6
        %v9514 = vrot.slane %v9513, 4
        %v9515 = vrot.slane %v7894, 6
        %v9516 = vsel %vm4232, %v9514, %v9515
        %v9517 = vrot.slane %v9515, 4
        %v9518 = vrot.slane %v8797, 6
        %v9519 = vsel %vm4232, %v9517, %v9518
        %v9520 = vrot.slane %v9358, 6
        %v9521 = vrot.slane %v9520, 4
        %v9522 = vrot.slane %v7896, 6
        %v9523 = vsel %vm4232, %v9521, %v9522
        %v9524 = vrot.slane %v9522, 4
        %v9525 = vrot.slane %v8798, 6
        %v9526 = vsel %vm4232, %v9524, %v9525
        %v9527 = vrot.slane %v9359, 6
        %v9528 = vrot.slane %v9527, 4
        %v9529 = vrot.slane %v7898, 6
        %v9530 = vsel %vm4232, %v9528, %v9529
        %v9531 = vrot.slane %v9529, 4
        %v9532 = vrot.slane %v8799, 6
        %v9533 = vsel %vm4232, %v9531, %v9532
        %v9534 = vrot.slane %v9360, 6
        %v9535 = vrot.slane %v9534, 4
        %v9536 = vrot.slane %v7900, 6
        %v9537 = vsel %vm4232, %v9535, %v9536
        %v9538 = vrot.slane %v9536, 4
        %v9539 = vrot.slane %v8800, 6
        %v9540 = vsel %vm4232, %v9538, %v9539
        %v9581 = vmax.bf16 %v9301, %v9404
        %v9582 = vmax.bf16 %v9302, %v9407
        %v9583 = vmax.bf16 %v9303, %v9411
        %v9584 = vmax.bf16 %v9304, %v9414
        %v9585 = vmax.bf16 %v9305, %v9418
        %v9586 = vmax.bf16 %v9306, %v9421
        %v9587 = vmax.bf16 %v9307, %v9425
        %v9588 = vmax.bf16 %v9308, %v9428
        %v9589 = vmax.bf16 %v9309, %v9432
        %v9590 = vmax.bf16 %v9310, %v9435
        %v9591 = vmax.bf16 %v9311, %v9439
        %v9592 = vmax.bf16 %v9312, %v9442
        %v9593 = vmax.bf16 %v9313, %v9446
        %v9594 = vmax.bf16 %v9314, %v9449
        %v9595 = vmax.bf16 %v9315, %v9453
        %v9596 = vmax.bf16 %v9316, %v9456
        %v9597 = vmax.bf16 %v9317, %v9460
        %v9598 = vmax.bf16 %v9318, %v9463
        %v9599 = vmax.bf16 %v9319, %v9467
        %v9600 = vmax.bf16 %v9320, %v9470
        %v9601 = vmax.bf16 %v9321, %v9474
        %v9602 = vmax.bf16 %v9322, %v9477
        %v9603 = vmax.bf16 %v9323, %v9481
        %v9604 = vmax.bf16 %v9324, %v9484
        %v9605 = vmax.bf16 %v9325, %v9488
        %v9606 = vmax.bf16 %v9326, %v9491
        %v9607 = vmax.bf16 %v9327, %v9495
        %v9608 = vmax.bf16 %v9328, %v9498
        %v9609 = vmax.bf16 %v9329, %v9502
        %v9610 = vmax.bf16 %v9330, %v9505
        %v9611 = vmax.bf16 %v9331, %v9509
        %v9612 = vmax.bf16 %v9332, %v9512
        %v9613 = vmax.bf16 %v9333, %v9516
        %v9614 = vmax.bf16 %v9334, %v9519
        %v9615 = vmax.bf16 %v9335, %v9523
        %v9616 = vmax.bf16 %v9336, %v9526
        %v9617 = vmax.bf16 %v9337, %v9530
        %v9618 = vmax.bf16 %v9338, %v9533
        %v9619 = vmax.bf16 %v9339, %v9537
        %v9620 = vmax.bf16 %v9340, %v9540
        %v9621 = vmax.bf16 %v9581, %v9583
        %v9622 = vmax.bf16 %v9582, %v9584
        %v9623 = vmax.bf16 %v9583, %v9585
        %v9624 = vmax.bf16 %v9584, %v9586
        %v9625 = vmax.bf16 %v9585, %v9587
        %v9626 = vmax.bf16 %v9586, %v9588
        %v9627 = vmax.bf16 %v9587, %v9589
        %v9628 = vmax.bf16 %v9588, %v9590
        %v9629 = vmax.bf16 %v9589, %v9591
        %v9630 = vmax.bf16 %v9590, %v9592
        %v9631 = vmax.bf16 %v9591, %v9593
        %v9632 = vmax.bf16 %v9592, %v9594
        %v9633 = vmax.bf16 %v9593, %v9595
        %v9634 = vmax.bf16 %v9594, %v9596
        %v9635 = vmax.bf16 %v9595, %v9597
        %v9636 = vmax.bf16 %v9596, %v9598
        %v9637 = vmax.bf16 %v9597, %v9599
        %v9638 = vmax.bf16 %v9598, %v9600
        %v9639 = vmax.bf16 %v9599, %v9601
        %v9640 = vmax.bf16 %v9600, %v9602
        %v9641 = vmax.bf16 %v9601, %v9603
        %v9642 = vmax.bf16 %v9602, %v9604
        %v9643 = vmax.bf16 %v9603, %v9605
        %v9644 = vmax.bf16 %v9604, %v9606
        %v9645 = vmax.bf16 %v9605, %v9607
        %v9646 = vmax.bf16 %v9606, %v9608
        %v9647 = vmax.bf16 %v9607, %v9609
        %v9648 = vmax.bf16 %v9608, %v9610
        %v9649 = vmax.bf16 %v9609, %v9611
        %v9650 = vmax.bf16 %v9610, %v9612
        %v9651 = vmax.bf16 %v9611, %v9613
        %v9652 = vmax.bf16 %v9612, %v9614
        %v9653 = vmax.bf16 %v9621, %v9585
        %v9654 = vmax.bf16 %v9622, %v9586
        %v9655 = vmax.bf16 %v9623, %v9587
        %v9656 = vmax.bf16 %v9624, %v9588
        %v9657 = vmax.bf16 %v9625, %v9589
        %v9658 = vmax.bf16 %v9626, %v9590
        %v9659 = vmax.bf16 %v9627, %v9591
        %v9660 = vmax.bf16 %v9628, %v9592
        %v9661 = vmax.bf16 %v9629, %v9593
        %v9662 = vmax.bf16 %v9630, %v9594
        %v9663 = vmax.bf16 %v9631, %v9595
        %v9664 = vmax.bf16 %v9632, %v9596
        %v9665 = vmax.bf16 %v9633, %v9597
        %v9666 = vmax.bf16 %v9634, %v9598
        %v9667 = vmax.bf16 %v9635, %v9599
        %v9668 = vmax.bf16 %v9636, %v9600
        %v9669 = vmax.bf16 %v9637, %v9601
        %v9670 = vmax.bf16 %v9638, %v9602
        %v9671 = vmax.bf16 %v9639, %v9603
        %v9672 = vmax.bf16 %v9640, %v9604
        %v9673 = vmax.bf16 %v9641, %v9605
        %v9674 = vmax.bf16 %v9642, %v9606
        %v9675 = vmax.bf16 %v9643, %v9607
        %v9676 = vmax.bf16 %v9644, %v9608
        %v9677 = vmax.bf16 %v9645, %v9609
        %v9678 = vmax.bf16 %v9646, %v9610
        %v9679 = vmax.bf16 %v9647, %v9611
        %v9680 = vmax.bf16 %v9648, %v9612
        %v9681 = vmax.bf16 %v9649, %v9613
        %v9682 = vmax.bf16 %v9650, %v9614
        %v9683 = vmax.bf16 %v9651, %v9615
        %v9684 = vmax.bf16 %v9652, %v9616
        %v9685 = vmax.bf16 %v9653, %v9587
        %v9686 = vmax.bf16 %v9654, %v9588
        %v9687 = vmax.bf16 %v9655, %v9589
        %v9688 = vmax.bf16 %v9656, %v9590
        %v9689 = vmax.bf16 %v9657, %v9591
        %v9690 = vmax.bf16 %v9658, %v9592
        %v9691 = vmax.bf16 %v9659, %v9593
        %v9692 = vmax.bf16 %v9660, %v9594
        %v9693 = vmax.bf16 %v9661, %v9595
        %v9694 = vmax.bf16 %v9662, %v9596
        %v9695 = vmax.bf16 %v9663, %v9597
        %v9696 = vmax.bf16 %v9664, %v9598
        %v9697 = vmax.bf16 %v9665, %v9599
        %v9698 = vmax.bf16 %v9666, %v9600
        %v9699 = vmax.bf16 %v9667, %v9601
        %v9700 = vmax.bf16 %v9668, %v9602
        %v9701 = vmax.bf16 %v9669, %v9603
        %v9702 = vmax.bf16 %v9670, %v9604
        %v9703 = vmax.bf16 %v9671, %v9605
        %v9704 = vmax.bf16 %v9672, %v9606
        %v9705 = vmax.bf16 %v9673, %v9607
        %v9706 = vmax.bf16 %v9674, %v9608
        %v9707 = vmax.bf16 %v9675, %v9609
        %v9708 = vmax.bf16 %v9676, %v9610
        %v9709 = vmax.bf16 %v9677, %v9611
        %v9710 = vmax.bf16 %v9678, %v9612
        %v9711 = vmax.bf16 %v9679, %v9613
        %v9712 = vmax.bf16 %v9680, %v9614
        %v9713 = vmax.bf16 %v9681, %v9615
        %v9714 = vmax.bf16 %v9682, %v9616
        %v9715 = vmax.bf16 %v9683, %v9617
        %v9716 = vmax.bf16 %v9684, %v9618
        %v9717 = vmax.bf16 %v9685, %v9589
        %v9718 = vmax.bf16 %v9686, %v9590
        %v9719 = vmax.bf16 %v9687, %v9591
        %v9720 = vmax.bf16 %v9688, %v9592
        %v9721 = vmax.bf16 %v9689, %v9593
        %v9722 = vmax.bf16 %v9690, %v9594
        %v9723 = vmax.bf16 %v9691, %v9595
        %v9724 = vmax.bf16 %v9692, %v9596
        %v9725 = vmax.bf16 %v9693, %v9597
        %v9726 = vmax.bf16 %v9694, %v9598
        %v9727 = vmax.bf16 %v9695, %v9599
        %v9728 = vmax.bf16 %v9696, %v9600
        %v9729 = vmax.bf16 %v9697, %v9601
        %v9730 = vmax.bf16 %v9698, %v9602
        %v9731 = vmax.bf16 %v9699, %v9603
        %v9732 = vmax.bf16 %v9700, %v9604
        %v9733 = vmax.bf16 %v9701, %v9605
        %v9734 = vmax.bf16 %v9702, %v9606
        %v9735 = vmax.bf16 %v9703, %v9607
        %v9736 = vmax.bf16 %v9704, %v9608
        %v9737 = vmax.bf16 %v9705, %v9609
        %v9738 = vmax.bf16 %v9706, %v9610
        %v9739 = vmax.bf16 %v9707, %v9611
        %v9740 = vmax.bf16 %v9708, %v9612
        %v9741 = vmax.bf16 %v9709, %v9613
        %v9742 = vmax.bf16 %v9710, %v9614
        %v9743 = vmax.bf16 %v9711, %v9615
        %v9744 = vmax.bf16 %v9712, %v9616
        %v9745 = vmax.bf16 %v9713, %v9617
        %v9746 = vmax.bf16 %v9714, %v9618
        %v9747 = vmax.bf16 %v9715, %v9619
        %v9748 = vmax.bf16 %v9716, %v9620
        %v9749 = vld [vmem:[%s1081] sm:$0x8]
        %v9750 = vld [vmem:[%s1081 + $0x4] sm:$0xf]
        %v9751 = vld [vmem:[%s1081 + $0x8] sm:$0x7]
        %v9752 = vld [vmem:[%s1081 + $0x10] sm:$0x8]
        %v9753 = vld [vmem:[%s1081 + $0x14] sm:$0xf]
        %v9754 = vld [vmem:[%s1081 + $0x18] sm:$0x7]
        %v9755 = vld [vmem:[%s1081 + $0x20] sm:$0x8]
        %v9756 = vld [vmem:[%s1081 + $0x24] sm:$0xf]
        %v9757 = vld [vmem:[%s1081 + $0x28] sm:$0x7]
        %v9758 = vld [vmem:[%s1081 + $0x30] sm:$0x8]
        %v9759 = vld [vmem:[%s1081 + $0x34] sm:$0xf]
        %v9760 = vld [vmem:[%s1081 + $0x38] sm:$0x7]
        %v9761 = vld [vmem:[%s1081 + $0x40] sm:$0x8]
        %v9762 = vld [vmem:[%s1081 + $0x44] sm:$0xf]
        %v9763 = vld [vmem:[%s1081 + $0x48] sm:$0x7]
        %v9764 = vld [vmem:[%s1081 + $0x50] sm:$0x8]
        %v9765 = vld [vmem:[%s1081 + $0x54] sm:$0xf]
        %v9766 = vld [vmem:[%s1081 + $0x58] sm:$0x7]
        %v9767 = vld [vmem:[%s1081 + $0x60] sm:$0x8]
        %v9768 = vld [vmem:[%s1081 + $0x64] sm:$0xf]
        %v9769 = vld [vmem:[%s1081 + $0x68] sm:$0x7]
        %v9770 = vld [vmem:[%s1081 + $0x70] sm:$0x8]
        %v9771 = vld [vmem:[%s1081 + $0x74] sm:$0xf]
        %v9772 = vld [vmem:[%s1081 + $0x78] sm:$0x7]
        %v9773 = vld [vmem:[%s1081 + $0x80] sm:$0x8]
        %v9774 = vld [vmem:[%s1081 + $0x84] sm:$0xf]
        %v9775 = vld [vmem:[%s1081 + $0x88] sm:$0x7]
        %v9776 = vld [vmem:[%s1081 + $0x90] sm:$0x8]
        %v9777 = vld [vmem:[%s1081 + $0x94] sm:$0xf]
        %v9778 = vld [vmem:[%s1081 + $0x98] sm:$0x7]
        %v9779 = vld [vmem:[%s1081 + $0xa0] sm:$0x8]
        %v9780 = vld [vmem:[%s1081 + $0xa4] sm:$0xf]
        %v9781 = vld [vmem:[%s1081 + $0xa8] sm:$0x7]
        %v9782 = vld [vmem:[%s1081 + $0xb0] sm:$0x8]
        %v9783 = vld [vmem:[%s1081 + $0xb4] sm:$0xf]
        %v9784 = vld [vmem:[%s1081 + $0xb8] sm:$0x7]
        %v9785 = vld [vmem:[%s1081 + $0xc0] sm:$0x8]
        %v9786 = vld [vmem:[%s1081 + $0xc4] sm:$0xf]
        %v9787 = vld [vmem:[%s1081 + $0xc8] sm:$0x7]
        %v9788 = vld [vmem:[%s1081 + $0xd0] sm:$0x8]
        %v9789 = vld [vmem:[%s1081 + $0xd4] sm:$0xf]
        %v9790 = vld [vmem:[%s1081 + $0xd8] sm:$0x7]
        %v9791 = vld [vmem:[%s1081 + $0xe0] sm:$0x8]
        %v9792 = vld [vmem:[%s1081 + $0xe4] sm:$0xf]
        %v9793 = vld [vmem:[%s1081 + $0xe8] sm:$0x7]
        %v9794 = vld [vmem:[%s1081 + $0xf0] sm:$0x8]
        %v9795 = vld [vmem:[%s1081 + $0xf4] sm:$0xf]
        %v9796 = vld [vmem:[%s1081 + $0xf8] sm:$0x7]
        %s9797 = scalar_lea.vmem [#allocation3], 48
        %v9798 = vld [vmem:[%s9797] sm:$0xc]
        %v9799 = vld [vmem:[%s9797 + $0x4] sm:$0xf]
        %v9800 = vld [vmem:[%s9797 + $0x8] sm:$0x3]
        %v9801 = vld [vmem:[%s9797 + $0xc] sm:$0xc]
        %v9802 = vld [vmem:[%s9797 + $0x10] sm:$0xf]
        %v9803 = vld [vmem:[%s9797 + $0x14] sm:$0x3]
        %v9804 = vld [vmem:[%s9797 + $0x18] sm:$0xc]
        %v9805 = vld [vmem:[%s9797 + $0x1c] sm:$0xf]
        %v9806 = vld [vmem:[%s9797 + $0x20] sm:$0x3]
        %v9807 = vld [vmem:[%s9797 + $0x24] sm:$0xc]
        %v9808 = vld [vmem:[%s9797 + $0x28] sm:$0xf]
        %v9809 = vld [vmem:[%s9797 + $0x2c] sm:$0x3]
        %v9810 = vld [vmem:[%s9797 + $0x30] sm:$0xc]
        %v9811 = vld [vmem:[%s9797 + $0x34] sm:$0xf]
        %v9812 = vld [vmem:[%s9797 + $0x38] sm:$0x3]
        %v9813 = vld [vmem:[%s9797 + $0x3c] sm:$0xc]
        %v9814 = vld [vmem:[%s9797 + $0x40] sm:$0xf]
        %v9815 = vld [vmem:[%s9797 + $0x44] sm:$0x3]
        %v9816 = vld [vmem:[%s9797 + $0x48] sm:$0xc]
        %v9817 = vld [vmem:[%s9797 + $0x4c] sm:$0xf]
        %v9818 = vld [vmem:[%s9797 + $0x50] sm:$0x3]
        %v9819 = vld [vmem:[%s9797 + $0x54] sm:$0xc]
        %v9820 = vld [vmem:[%s9797 + $0x58] sm:$0xf]
        %v9821 = vld [vmem:[%s9797 + $0x5c] sm:$0x3]
        %v9822 = vld [vmem:[%s9797 + $0x60] sm:$0xc]
        %v9823 = vld [vmem:[%s9797 + $0x64] sm:$0xf]
        %v9824 = vld [vmem:[%s9797 + $0x68] sm:$0x3]
        %v9825 = vld [vmem:[%s9797 + $0x6c] sm:$0xc]
        %v9826 = vld [vmem:[%s9797 + $0x70] sm:$0xf]
        %v9827 = vld [vmem:[%s9797 + $0x74] sm:$0x3]
        %v9828 = vld [vmem:[%s9797 + $0x78] sm:$0xc]
        %v9829 = vld [vmem:[%s9797 + $0x7c] sm:$0xf]
        %v9830 = vld [vmem:[%s9797 + $0x80] sm:$0x3]
        %v9831 = vld [vmem:[%s9797 + $0x84] sm:$0xc]
        %v9832 = vld [vmem:[%s9797 + $0x88] sm:$0xf]
        %v9833 = vld [vmem:[%s9797 + $0x8c] sm:$0x3]
        %v9834 = vld [vmem:[%s9797 + $0x90] sm:$0xc]
        %v9835 = vld [vmem:[%s9797 + $0x94] sm:$0xf]
        %v9836 = vld [vmem:[%s9797 + $0x98] sm:$0x3]
        %v9837 = vld [vmem:[%s9797 + $0x9c] sm:$0xc]
        %v9838 = vld [vmem:[%s9797 + $0xa0] sm:$0xf]
        %v9839 = vld [vmem:[%s9797 + $0xa4] sm:$0x3]
        %v9840 = vld [vmem:[%s9797 + $0xa8] sm:$0xc]
        %v9841 = vld [vmem:[%s9797 + $0xac] sm:$0xf]
        %v9842 = vld [vmem:[%s9797 + $0xb0] sm:$0x3]
        %v9843 = vld [vmem:[%s9797 + $0xb4] sm:$0xc]
        %v9844 = vld [vmem:[%s9797 + $0xb8] sm:$0xf]
        %v9845 = vld [vmem:[%s9797 + $0xbc] sm:$0x3]
        %s9846 = scalar_lea.vmem [#allocation4], 24
        %v9847 = vld [vmem:[%s9846] sm:$0xe]
        %v9848 = vld [vmem:[%s9846 + $0x4] sm:$0xf]
        %v9849 = vld [vmem:[%s9846 + $0x8] sm:$0x1]
        %v9850 = vld [vmem:[%s9846 + $0xc] sm:$0xe]
        %v9851 = vld [vmem:[%s9846 + $0x10] sm:$0xf]
        %v9852 = vld [vmem:[%s9846 + $0x14] sm:$0x1]
        %v9853 = vld [vmem:[%s9846 + $0x18] sm:$0xe]
        %v9854 = vld [vmem:[%s9846 + $0x1c] sm:$0xf]
        %v9855 = vld [vmem:[%s9846 + $0x20] sm:$0x1]
        %v9856 = vld [vmem:[%s9846 + $0x24] sm:$0xe]
        %v9857 = vld [vmem:[%s9846 + $0x28] sm:$0xf]
        %v9858 = vld [vmem:[%s9846 + $0x2c] sm:$0x1]
        %v9859 = vld [vmem:[%s9846 + $0x30] sm:$0xe]
        %v9860 = vld [vmem:[%s9846 + $0x34] sm:$0xf]
        %v9861 = vld [vmem:[%s9846 + $0x38] sm:$0x1]
        %v9862 = vld [vmem:[%s9846 + $0x3c] sm:$0xe]
        %v9863 = vld [vmem:[%s9846 + $0x40] sm:$0xf]
        %v9864 = vld [vmem:[%s9846 + $0x44] sm:$0x1]
        %v9865 = vld [vmem:[%s9846 + $0x48] sm:$0xe]
        %v9866 = vld [vmem:[%s9846 + $0x4c] sm:$0xf]
        %v9867 = vld [vmem:[%s9846 + $0x50] sm:$0x1]
        %v9868 = vld [vmem:[%s9846 + $0x54] sm:$0xe]
        %v9869 = vld [vmem:[%s9846 + $0x58] sm:$0xf]
        %v9870 = vld [vmem:[%s9846 + $0x5c] sm:$0x1]
        %v9871 = vld [vmem:[%s9846 + $0x60] sm:$0xe]
        %v9872 = vld [vmem:[%s9846 + $0x64] sm:$0xf]
        %v9873 = vld [vmem:[%s9846 + $0x68] sm:$0x1]
        %v9874 = vld [vmem:[%s9846 + $0x6c] sm:$0xe]
        %v9875 = vld [vmem:[%s9846 + $0x70] sm:$0xf]
        %v9876 = vld [vmem:[%s9846 + $0x74] sm:$0x1]
        %v9877 = vld [vmem:[%s9846 + $0x78] sm:$0xe]
        %v9878 = vld [vmem:[%s9846 + $0x7c] sm:$0xf]
        %v9879 = vld [vmem:[%s9846 + $0x80] sm:$0x1]
        %v9880 = vld [vmem:[%s9846 + $0x84] sm:$0xe]
        %v9881 = vld [vmem:[%s9846 + $0x88] sm:$0xf]
        %v9882 = vld [vmem:[%s9846 + $0x8c] sm:$0x1]
        %v9883 = vld [vmem:[%s9846 + $0x90] sm:$0xe]
        %v9884 = vld [vmem:[%s9846 + $0x94] sm:$0xf]
        %v9885 = vld [vmem:[%s9846 + $0x98] sm:$0x1]
        %v9886 = vld [vmem:[%s9846 + $0x9c] sm:$0xe]
        %v9887 = vld [vmem:[%s9846 + $0xa0] sm:$0xf]
        %v9888 = vld [vmem:[%s9846 + $0xa4] sm:$0x1]
        %v9889 = vld [vmem:[%s9846 + $0xa8] sm:$0xe]
        %v9890 = vld [vmem:[%s9846 + $0xac] sm:$0xf]
        %v9891 = vld [vmem:[%s9846 + $0xb0] sm:$0x1]
        %v9892 = vld [vmem:[%s9846 + $0xb4] sm:$0xe]
        %v9893 = vld [vmem:[%s9846 + $0xb8] sm:$0xf]
        %v9894 = vld [vmem:[%s9846 + $0xbc] sm:$0x1]
        %v9943 = vunpack.c.l.b16 %v9749
        %v9944 = vunpack.c.l.b16 %v9750
        %v9945 = vunpack.c.l.b16 %v9751
        %v9946 = vunpack.c.l.b16 %v9752
        %v9947 = vunpack.c.l.b16 %v9753
        %v9948 = vunpack.c.l.b16 %v9754
        %v9949 = vunpack.c.l.b16 %v9755
        %v9950 = vunpack.c.l.b16 %v9756
        %v9951 = vunpack.c.l.b16 %v9757
        %v9952 = vunpack.c.l.b16 %v9758
        %v9953 = vunpack.c.l.b16 %v9759
        %v9954 = vunpack.c.l.b16 %v9760
        %v9955 = vunpack.c.l.b16 %v9761
        %v9956 = vunpack.c.l.b16 %v9762
        %v9957 = vunpack.c.l.b16 %v9763
        %v9958 = vunpack.c.l.b16 %v9764
        %v9959 = vunpack.c.l.b16 %v9765
        %v9960 = vunpack.c.l.b16 %v9766
        %v9961 = vunpack.c.l.b16 %v9767
        %v9962 = vunpack.c.l.b16 %v9768
        %v9963 = vunpack.c.l.b16 %v9769
        %v9964 = vunpack.c.l.b16 %v9770
        %v9965 = vunpack.c.l.b16 %v9771
        %v9966 = vunpack.c.l.b16 %v9772
        %v9967 = vunpack.c.l.b16 %v9773
        %v9968 = vunpack.c.l.b16 %v9774
        %v9969 = vunpack.c.l.b16 %v9775
        %v9970 = vunpack.c.l.b16 %v9776
        %v9971 = vunpack.c.l.b16 %v9777
        %v9972 = vunpack.c.l.b16 %v9778
        %v9973 = vunpack.c.l.b16 %v9779
        %v9974 = vunpack.c.l.b16 %v9780
        %v9975 = vunpack.c.l.b16 %v9781
        %v9976 = vunpack.c.l.b16 %v9782
        %v9977 = vunpack.c.l.b16 %v9783
        %v9978 = vunpack.c.l.b16 %v9784
        %v9979 = vunpack.c.l.b16 %v9785
        %v9980 = vunpack.c.l.b16 %v9786
        %v9981 = vunpack.c.l.b16 %v9787
        %v9982 = vunpack.c.l.b16 %v9788
        %v9983 = vunpack.c.l.b16 %v9789
        %v9984 = vunpack.c.l.b16 %v9790
        %v9985 = vunpack.c.l.b16 %v9791
        %v9986 = vunpack.c.l.b16 %v9792
        %v9987 = vunpack.c.l.b16 %v9793
        %v9988 = vunpack.c.l.b16 %v9794
        %v9989 = vunpack.c.l.b16 %v9795
        %v9990 = vunpack.c.l.b16 %v9796
        %v9991 = vpack.c.b16 %v9944, %v9943
        %v9992 = vpack.c.b16 %v9945, %v9945
        %v9993 = vpack.c.b16 %v9947, %v9946
        %v9994 = vpack.c.b16 %v9948, %v9948
        %v9995 = vpack.c.b16 %v9950, %v9949
        %v9996 = vpack.c.b16 %v9951, %v9951
        %v9997 = vpack.c.b16 %v9953, %v9952
        %v9998 = vpack.c.b16 %v9954, %v9954
        %v9999 = vpack.c.b16 %v9956, %v9955
        %v10000 = vpack.c.b16 %v9957, %v9957
        %v10001 = vpack.c.b16 %v9959, %v9958
        %v10002 = vpack.c.b16 %v9960, %v9960
        %v10003 = vpack.c.b16 %v9962, %v9961
        %v10004 = vpack.c.b16 %v9963, %v9963
        %v10005 = vpack.c.b16 %v9965, %v9964
        %v10006 = vpack.c.b16 %v9966, %v9966
        %v10007 = vpack.c.b16 %v9968, %v9967
        %v10008 = vpack.c.b16 %v9969, %v9969
        %v10009 = vpack.c.b16 %v9971, %v9970
        %v10010 = vpack.c.b16 %v9972, %v9972
        %v10011 = vpack.c.b16 %v9974, %v9973
        %v10012 = vpack.c.b16 %v9975, %v9975
        %v10013 = vpack.c.b16 %v9977, %v9976
        %v10014 = vpack.c.b16 %v9978, %v9978
        %v10015 = vpack.c.b16 %v9980, %v9979
        %v10016 = vpack.c.b16 %v9981, %v9981
        %v10017 = vpack.c.b16 %v9983, %v9982
        %v10018 = vpack.c.b16 %v9984, %v9984
        %v10019 = vpack.c.b16 %v9986, %v9985
        %v10020 = vpack.c.b16 %v9987, %v9987
        %v10021 = vpack.c.b16 %v9989, %v9988
        %v10022 = vpack.c.b16 %v9990, %v9990
        %v10071 = vunpack.c.l.b16 %v9798
        %v10072 = vunpack.c.l.b16 %v9799
        %v10073 = vunpack.c.l.b16 %v9800
        %v10074 = vunpack.c.l.b16 %v9801
        %v10075 = vunpack.c.l.b16 %v9802
        %v10076 = vunpack.c.l.b16 %v9803
        %v10077 = vunpack.c.l.b16 %v9804
        %v10078 = vunpack.c.l.b16 %v9805
        %v10079 = vunpack.c.l.b16 %v9806
        %v10080 = vunpack.c.l.b16 %v9807
        %v10081 = vunpack.c.l.b16 %v9808
        %v10082 = vunpack.c.l.b16 %v9809
        %v10083 = vunpack.c.l.b16 %v9810
        %v10084 = vunpack.c.l.b16 %v9811
        %v10085 = vunpack.c.l.b16 %v9812
        %v10086 = vunpack.c.l.b16 %v9813
        %v10087 = vunpack.c.l.b16 %v9814
        %v10088 = vunpack.c.l.b16 %v9815
        %v10089 = vunpack.c.l.b16 %v9816
        %v10090 = vunpack.c.l.b16 %v9817
        %v10091 = vunpack.c.l.b16 %v9818
        %v10092 = vunpack.c.l.b16 %v9819
        %v10093 = vunpack.c.l.b16 %v9820
        %v10094 = vunpack.c.l.b16 %v9821
        %v10095 = vunpack.c.l.b16 %v9822
        %v10096 = vunpack.c.l.b16 %v9823
        %v10097 = vunpack.c.l.b16 %v9824
        %v10098 = vunpack.c.l.b16 %v9825
        %v10099 = vunpack.c.l.b16 %v9826
        %v10100 = vunpack.c.l.b16 %v9827
        %v10101 = vunpack.c.l.b16 %v9828
        %v10102 = vunpack.c.l.b16 %v9829
        %v10103 = vunpack.c.l.b16 %v9830
        %v10104 = vunpack.c.l.b16 %v9831
        %v10105 = vunpack.c.l.b16 %v9832
        %v10106 = vunpack.c.l.b16 %v9833
        %v10107 = vunpack.c.l.b16 %v9834
        %v10108 = vunpack.c.l.b16 %v9835
        %v10109 = vunpack.c.l.b16 %v9836
        %v10110 = vunpack.c.l.b16 %v9837
        %v10111 = vunpack.c.l.b16 %v9838
        %v10112 = vunpack.c.l.b16 %v9839
        %v10113 = vunpack.c.l.b16 %v9840
        %v10114 = vunpack.c.l.b16 %v9841
        %v10115 = vunpack.c.l.b16 %v9842
        %v10116 = vunpack.c.l.b16 %v9843
        %v10117 = vunpack.c.l.b16 %v9844
        %v10118 = vunpack.c.l.b16 %v9845
        %v10119 = vpack.c.b16 %v10072, %v10071
        %v10120 = vpack.c.b16 %v10073, %v10073
        %v10121 = vpack.c.b16 %v10075, %v10074
        %v10122 = vpack.c.b16 %v10076, %v10076
        %v10123 = vpack.c.b16 %v10078, %v10077
        %v10124 = vpack.c.b16 %v10079, %v10079
        %v10125 = vpack.c.b16 %v10081, %v10080
        %v10126 = vpack.c.b16 %v10082, %v10082
        %v10127 = vpack.c.b16 %v10084, %v10083
        %v10128 = vpack.c.b16 %v10085, %v10085
        %v10129 = vpack.c.b16 %v10087, %v10086
        %v10130 = vpack.c.b16 %v10088, %v10088
        %v10131 = vpack.c.b16 %v10090, %v10089
        %v10132 = vpack.c.b16 %v10091, %v10091
        %v10133 = vpack.c.b16 %v10093, %v10092
        %v10134 = vpack.c.b16 %v10094, %v10094
        %v10135 = vpack.c.b16 %v10096, %v10095
        %v10136 = vpack.c.b16 %v10097, %v10097
        %v10137 = vpack.c.b16 %v10099, %v10098
        %v10138 = vpack.c.b16 %v10100, %v10100
        %v10139 = vpack.c.b16 %v10102, %v10101
        %v10140 = vpack.c.b16 %v10103, %v10103
        %v10141 = vpack.c.b16 %v10105, %v10104
        %v10142 = vpack.c.b16 %v10106, %v10106
        %v10143 = vpack.c.b16 %v10108, %v10107
        %v10144 = vpack.c.b16 %v10109, %v10109
        %v10145 = vpack.c.b16 %v10111, %v10110
        %v10146 = vpack.c.b16 %v10112, %v10112
        %v10147 = vpack.c.b16 %v10114, %v10113
        %v10148 = vpack.c.b16 %v10115, %v10115
        %v10149 = vpack.c.b16 %v10117, %v10116
        %v10150 = vpack.c.b16 %v10118, %v10118
        %vm10151 = vcmask 1040384
        %v10152 = vrot.slane %v10119, 7
        %v10153 = vrot.slane %v10120, 7
        %v10154 = vsel %vm10151, %v10152, %v10153
        %v10155 = vrot.slane %v10121, 7
        %v10156 = vrot.slane %v10122, 7
        %v10157 = vsel %vm10151, %v10155, %v10156
        %v10158 = vrot.slane %v10123, 7
        %v10159 = vrot.slane %v10124, 7
        %v10160 = vsel %vm10151, %v10158, %v10159
        %v10161 = vrot.slane %v10125, 7
        %v10162 = vrot.slane %v10126, 7
        %v10163 = vsel %vm10151, %v10161, %v10162
        %v10164 = vrot.slane %v10127, 7
        %v10165 = vrot.slane %v10128, 7
        %v10166 = vsel %vm10151, %v10164, %v10165
        %v10167 = vrot.slane %v10129, 7
        %v10168 = vrot.slane %v10130, 7
        %v10169 = vsel %vm10151, %v10167, %v10168
        %v10170 = vrot.slane %v10131, 7
        %v10171 = vrot.slane %v10132, 7
        %v10172 = vsel %vm10151, %v10170, %v10171
        %v10173 = vrot.slane %v10133, 7
        %v10174 = vrot.slane %v10134, 7
        %v10175 = vsel %vm10151, %v10173, %v10174
        %v10176 = vrot.slane %v10135, 7
        %v10177 = vrot.slane %v10136, 7
        %v10178 = vsel %vm10151, %v10176, %v10177
        %v10179 = vrot.slane %v10137, 7
        %v10180 = vrot.slane %v10138, 7
        %v10181 = vsel %vm10151, %v10179, %v10180
        %v10182 = vrot.slane %v10139, 7
        %v10183 = vrot.slane %v10140, 7
        %v10184 = vsel %vm10151, %v10182, %v10183
        %v10185 = vrot.slane %v10141, 7
        %v10186 = vrot.slane %v10142, 7
        %v10187 = vsel %vm10151, %v10185, %v10186
        %v10188 = vrot.slane %v10143, 7
        %v10189 = vrot.slane %v10144, 7
        %v10190 = vsel %vm10151, %v10188, %v10189
        %v10191 = vrot.slane %v10145, 7
        %v10192 = vrot.slane %v10146, 7
        %v10193 = vsel %vm10151, %v10191, %v10192
        %v10194 = vrot.slane %v10147, 7
        %v10195 = vrot.slane %v10148, 7
        %v10196 = vsel %vm10151, %v10194, %v10195
        %v10197 = vrot.slane %v10149, 7
        %v10198 = vrot.slane %v10150, 7
        %v10199 = vsel %vm10151, %v10197, %v10198
        %v10248 = vunpack.c.l.b16 %v9847
        %v10249 = vunpack.c.l.b16 %v9848
        %v10250 = vunpack.c.l.b16 %v9849
        %v10251 = vunpack.c.l.b16 %v9850
        %v10252 = vunpack.c.l.b16 %v9851
        %v10253 = vunpack.c.l.b16 %v9852
        %v10254 = vunpack.c.l.b16 %v9853
        %v10255 = vunpack.c.l.b16 %v9854
        %v10256 = vunpack.c.l.b16 %v9855
        %v10257 = vunpack.c.l.b16 %v9856
        %v10258 = vunpack.c.l.b16 %v9857
        %v10259 = vunpack.c.l.b16 %v9858
        %v10260 = vunpack.c.l.b16 %v9859
        %v10261 = vunpack.c.l.b16 %v9860
        %v10262 = vunpack.c.l.b16 %v9861
        %v10263 = vunpack.c.l.b16 %v9862
        %v10264 = vunpack.c.l.b16 %v9863
        %v10265 = vunpack.c.l.b16 %v9864
        %v10266 = vunpack.c.l.b16 %v9865
        %v10267 = vunpack.c.l.b16 %v9866
        %v10268 = vunpack.c.l.b16 %v9867
        %v10269 = vunpack.c.l.b16 %v9868
        %v10270 = vunpack.c.l.b16 %v9869
        %v10271 = vunpack.c.l.b16 %v9870
        %v10272 = vunpack.c.l.b16 %v9871
        %v10273 = vunpack.c.l.b16 %v9872
        %v10274 = vunpack.c.l.b16 %v9873
        %v10275 = vunpack.c.l.b16 %v9874
        %v10276 = vunpack.c.l.b16 %v9875
        %v10277 = vunpack.c.l.b16 %v9876
        %v10278 = vunpack.c.l.b16 %v9877
        %v10279 = vunpack.c.l.b16 %v9878
        %v10280 = vunpack.c.l.b16 %v9879
        %v10281 = vunpack.c.l.b16 %v9880
        %v10282 = vunpack.c.l.b16 %v9881
        %v10283 = vunpack.c.l.b16 %v9882
        %v10284 = vunpack.c.l.b16 %v9883
        %v10285 = vunpack.c.l.b16 %v9884
        %v10286 = vunpack.c.l.b16 %v9885
        %v10287 = vunpack.c.l.b16 %v9886
        %v10288 = vunpack.c.l.b16 %v9887
        %v10289 = vunpack.c.l.b16 %v9888
        %v10290 = vunpack.c.l.b16 %v9889
        %v10291 = vunpack.c.l.b16 %v9890
        %v10292 = vunpack.c.l.b16 %v9891
        %v10293 = vunpack.c.l.b16 %v9892
        %v10294 = vunpack.c.l.b16 %v9893
        %v10295 = vunpack.c.l.b16 %v9894
        %v10296 = vpack.c.b16 %v10249, %v10248
        %v10297 = vpack.c.b16 %v10250, %v10250
        %v10298 = vpack.c.b16 %v10252, %v10251
        %v10299 = vpack.c.b16 %v10253, %v10253
        %v10300 = vpack.c.b16 %v10255, %v10254
        %v10301 = vpack.c.b16 %v10256, %v10256
        %v10302 = vpack.c.b16 %v10258, %v10257
        %v10303 = vpack.c.b16 %v10259, %v10259
        %v10304 = vpack.c.b16 %v10261, %v10260
        %v10305 = vpack.c.b16 %v10262, %v10262
        %v10306 = vpack.c.b16 %v10264, %v10263
        %v10307 = vpack.c.b16 %v10265, %v10265
        %v10308 = vpack.c.b16 %v10267, %v10266
        %v10309 = vpack.c.b16 %v10268, %v10268
        %v10310 = vpack.c.b16 %v10270, %v10269
        %v10311 = vpack.c.b16 %v10271, %v10271
        %v10312 = vpack.c.b16 %v10273, %v10272
        %v10313 = vpack.c.b16 %v10274, %v10274
        %v10314 = vpack.c.b16 %v10276, %v10275
        %v10315 = vpack.c.b16 %v10277, %v10277
        %v10316 = vpack.c.b16 %v10279, %v10278
        %v10317 = vpack.c.b16 %v10280, %v10280
        %v10318 = vpack.c.b16 %v10282, %v10281
        %v10319 = vpack.c.b16 %v10283, %v10283
        %v10320 = vpack.c.b16 %v10285, %v10284
        %v10321 = vpack.c.b16 %v10286, %v10286
        %v10322 = vpack.c.b16 %v10288, %v10287
        %v10323 = vpack.c.b16 %v10289, %v10289
        %v10324 = vpack.c.b16 %v10291, %v10290
        %v10325 = vpack.c.b16 %v10292, %v10292
        %v10326 = vpack.c.b16 %v10294, %v10293
        %v10327 = vpack.c.b16 %v10295, %v10295
        %v10328 = vrot.slane %v10296, 6
        %v10329 = vrot.slane %v10297, 6
        %v10330 = vsel %vm4230, %v10328, %v10329
        %v10331 = vrot.slane %v10298, 6
        %v10332 = vrot.slane %v10299, 6
        %v10333 = vsel %vm4230, %v10331, %v10332
        %v10334 = vrot.slane %v10300, 6
        %v10335 = vrot.slane %v10301, 6
        %v10336 = vsel %vm4230, %v10334, %v10335
        %v10337 = vrot.slane %v10302, 6
        %v10338 = vrot.slane %v10303, 6
        %v10339 = vsel %vm4230, %v10337, %v10338
        %v10340 = vrot.slane %v10304, 6
        %v10341 = vrot.slane %v10305, 6
        %v10342 = vsel %vm4230, %v10340, %v10341
        %v10343 = vrot.slane %v10306, 6
        %v10344 = vrot.slane %v10307, 6
        %v10345 = vsel %vm4230, %v10343, %v10344
        %v10346 = vrot.slane %v10308, 6
        %v10347 = vrot.slane %v10309, 6
        %v10348 = vsel %vm4230, %v10346, %v10347
        %v10349 = vrot.slane %v10310, 6
        %v10350 = vrot.slane %v10311, 6
        %v10351 = vsel %vm4230, %v10349, %v10350
        %v10352 = vrot.slane %v10312, 6
        %v10353 = vrot.slane %v10313, 6
        %v10354 = vsel %vm4230, %v10352, %v10353
        %v10355 = vrot.slane %v10314, 6
        %v10356 = vrot.slane %v10315, 6
        %v10357 = vsel %vm4230, %v10355, %v10356
        %v10358 = vrot.slane %v10316, 6
        %v10359 = vrot.slane %v10317, 6
        %v10360 = vsel %vm4230, %v10358, %v10359
        %v10361 = vrot.slane %v10318, 6
        %v10362 = vrot.slane %v10319, 6
        %v10363 = vsel %vm4230, %v10361, %v10362
        %v10364 = vrot.slane %v10320, 6
        %v10365 = vrot.slane %v10321, 6
        %v10366 = vsel %vm4230, %v10364, %v10365
        %v10367 = vrot.slane %v10322, 6
        %v10368 = vrot.slane %v10323, 6
        %v10369 = vsel %vm4230, %v10367, %v10368
        %v10370 = vrot.slane %v10324, 6
        %v10371 = vrot.slane %v10325, 6
        %v10372 = vsel %vm4230, %v10370, %v10371
        %v10373 = vrot.slane %v10326, 6
        %v10374 = vrot.slane %v10327, 6
        %v10375 = vsel %vm4230, %v10373, %v10374
        %v10408 = vunpack.c.l.b16 %v9717
        %v10409 = vunpack.c.l.b16 %v9718
        %v10410 = vunpack.c.l.b16 %v9719
        %v10411 = vunpack.c.l.b16 %v9720
        %v10412 = vunpack.c.l.b16 %v9721
        %v10413 = vunpack.c.l.b16 %v9722
        %v10414 = vunpack.c.l.b16 %v9723
        %v10415 = vunpack.c.l.b16 %v9724
        %v10416 = vunpack.c.l.b16 %v9725
        %v10417 = vunpack.c.l.b16 %v9726
        %v10418 = vunpack.c.l.b16 %v9727
        %v10419 = vunpack.c.l.b16 %v9728
        %v10420 = vunpack.c.l.b16 %v9729
        %v10421 = vunpack.c.l.b16 %v9730
        %v10422 = vunpack.c.l.b16 %v9731
        %v10423 = vunpack.c.l.b16 %v9732
        %v10424 = vunpack.c.l.b16 %v9733
        %v10425 = vunpack.c.l.b16 %v9734
        %v10426 = vunpack.c.l.b16 %v9735
        %v10427 = vunpack.c.l.b16 %v9736
        %v10428 = vunpack.c.l.b16 %v9737
        %v10429 = vunpack.c.l.b16 %v9738
        %v10430 = vunpack.c.l.b16 %v9739
        %v10431 = vunpack.c.l.b16 %v9740
        %v10432 = vunpack.c.l.b16 %v9741
        %v10433 = vunpack.c.l.b16 %v9742
        %v10434 = vunpack.c.l.b16 %v9743
        %v10435 = vunpack.c.l.b16 %v9744
        %v10436 = vunpack.c.l.b16 %v9745
        %v10437 = vunpack.c.l.b16 %v9746
        %v10438 = vunpack.c.l.b16 %v9747
        %v10439 = vunpack.c.l.b16 %v9748
        %v10440 = vpack.c.b16 %v10409, %v10408
        %v10441 = vpack.c.b16 %v10411, %v10410
        %v10442 = vpack.c.b16 %v10413, %v10412
        %v10443 = vpack.c.b16 %v10415, %v10414
        %v10444 = vpack.c.b16 %v10417, %v10416
        %v10445 = vpack.c.b16 %v10419, %v10418
        %v10446 = vpack.c.b16 %v10421, %v10420
        %v10447 = vpack.c.b16 %v10423, %v10422
        %v10448 = vpack.c.b16 %v10425, %v10424
        %v10449 = vpack.c.b16 %v10427, %v10426
        %v10450 = vpack.c.b16 %v10429, %v10428
        %v10451 = vpack.c.b16 %v10431, %v10430
        %v10452 = vpack.c.b16 %v10433, %v10432
        %v10453 = vpack.c.b16 %v10435, %v10434
        %v10454 = vpack.c.b16 %v10437, %v10436
        %v10455 = vpack.c.b16 %v10439, %v10438
        %v10456 = vrot.slane %v10440, 5
        %v10457 = vrot.slane %v10441, 5
        %v10458 = vrot.slane %v10442, 5
        %v10459 = vrot.slane %v10443, 5
        %v10460 = vrot.slane %v10444, 5
        %v10461 = vrot.slane %v10445, 5
        %v10462 = vrot.slane %v10446, 5
        %v10463 = vrot.slane %v10447, 5
        %v10464 = vrot.slane %v10448, 5
        %v10465 = vrot.slane %v10449, 5
        %v10466 = vrot.slane %v10450, 5
        %v10467 = vrot.slane %v10451, 5
        %v10468 = vrot.slane %v10452, 5
        %v10469 = vrot.slane %v10453, 5
        %v10470 = vrot.slane %v10454, 5
        %v10471 = vrot.slane %v10455, 5
        %vm10472 = vcmask 1044480
        %v10473 = vrot.slane %v9991, 3
        %v10474 = vrot.slane %v9992, 3
        %v10475 = vsel %vm10472, %v10473, %v10474
        %v10476 = vrot.slane %v10152, 3
        %v10477 = vrot.slane %v10154, 3
        %v10478 = vsel %vm10472, %v10476, %v10477
        %v10479 = vrot.slane %v10328, 3
        %v10480 = vrot.slane %v10330, 3
        %v10481 = vsel %vm10472, %v10479, %v10480
        %v10482 = vrot.slane %v10456, 3
        %v10483 = vsel %vm10472, %v10482, %v10482
        %v10484 = vrot.slane %v9993, 3
        %v10485 = vrot.slane %v9994, 3
        %v10486 = vsel %vm10472, %v10484, %v10485
        %v10487 = vrot.slane %v10155, 3
        %v10488 = vrot.slane %v10157, 3
        %v10489 = vsel %vm10472, %v10487, %v10488
        %v10490 = vrot.slane %v10331, 3
        %v10491 = vrot.slane %v10333, 3
        %v10492 = vsel %vm10472, %v10490, %v10491
        %v10493 = vrot.slane %v10457, 3
        %v10494 = vsel %vm10472, %v10493, %v10493
        %v10495 = vrot.slane %v9995, 3
        %v10496 = vrot.slane %v9996, 3
        %v10497 = vsel %vm10472, %v10495, %v10496
        %v10498 = vrot.slane %v10158, 3
        %v10499 = vrot.slane %v10160, 3
        %v10500 = vsel %vm10472, %v10498, %v10499
        %v10501 = vrot.slane %v10334, 3
        %v10502 = vrot.slane %v10336, 3
        %v10503 = vsel %vm10472, %v10501, %v10502
        %v10504 = vrot.slane %v10458, 3
        %v10505 = vsel %vm10472, %v10504, %v10504
        %v10506 = vrot.slane %v9997, 3
        %v10507 = vrot.slane %v9998, 3
        %v10508 = vsel %vm10472, %v10506, %v10507
        %v10509 = vrot.slane %v10161, 3
        %v10510 = vrot.slane %v10163, 3
        %v10511 = vsel %vm10472, %v10509, %v10510
        %v10512 = vrot.slane %v10337, 3
        %v10513 = vrot.slane %v10339, 3
        %v10514 = vsel %vm10472, %v10512, %v10513
        %v10515 = vrot.slane %v10459, 3
        %v10516 = vsel %vm10472, %v10515, %v10515
        %v10517 = vrot.slane %v9999, 3
        %v10518 = vrot.slane %v10000, 3
        %v10519 = vsel %vm10472, %v10517, %v10518
        %v10520 = vrot.slane %v10164, 3
        %v10521 = vrot.slane %v10166, 3
        %v10522 = vsel %vm10472, %v10520, %v10521
        %v10523 = vrot.slane %v10340, 3
        %v10524 = vrot.slane %v10342, 3
        %v10525 = vsel %vm10472, %v10523, %v10524
        %v10526 = vrot.slane %v10460, 3
        %v10527 = vsel %vm10472, %v10526, %v10526
        %v10528 = vrot.slane %v10001, 3
        %v10529 = vrot.slane %v10002, 3
        %v10530 = vsel %vm10472, %v10528, %v10529
        %v10531 = vrot.slane %v10167, 3
        %v10532 = vrot.slane %v10169, 3
        %v10533 = vsel %vm10472, %v10531, %v10532
        %v10534 = vrot.slane %v10343, 3
        %v10535 = vrot.slane %v10345, 3
        %v10536 = vsel %vm10472, %v10534, %v10535
        %v10537 = vrot.slane %v10461, 3
        %v10538 = vsel %vm10472, %v10537, %v10537
        %v10539 = vrot.slane %v10003, 3
        %v10540 = vrot.slane %v10004, 3
        %v10541 = vsel %vm10472, %v10539, %v10540
        %v10542 = vrot.slane %v10170, 3
        %v10543 = vrot.slane %v10172, 3
        %v10544 = vsel %vm10472, %v10542, %v10543
        %v10545 = vrot.slane %v10346, 3
        %v10546 = vrot.slane %v10348, 3
        %v10547 = vsel %vm10472, %v10545, %v10546
        %v10548 = vrot.slane %v10462, 3
        %v10549 = vsel %vm10472, %v10548, %v10548
        %v10550 = vrot.slane %v10005, 3
        %v10551 = vrot.slane %v10006, 3
        %v10552 = vsel %vm10472, %v10550, %v10551
        %v10553 = vrot.slane %v10173, 3
        %v10554 = vrot.slane %v10175, 3
        %v10555 = vsel %vm10472, %v10553, %v10554
        %v10556 = vrot.slane %v10349, 3
        %v10557 = vrot.slane %v10351, 3
        %v10558 = vsel %vm10472, %v10556, %v10557
        %v10559 = vrot.slane %v10463, 3
        %v10560 = vsel %vm10472, %v10559, %v10559
        %v10561 = vrot.slane %v10007, 3
        %v10562 = vrot.slane %v10008, 3
        %v10563 = vsel %vm10472, %v10561, %v10562
        %v10564 = vrot.slane %v10176, 3
        %v10565 = vrot.slane %v10178, 3
        %v10566 = vsel %vm10472, %v10564, %v10565
        %v10567 = vrot.slane %v10352, 3
        %v10568 = vrot.slane %v10354, 3
        %v10569 = vsel %vm10472, %v10567, %v10568
        %v10570 = vrot.slane %v10464, 3
        %v10571 = vsel %vm10472, %v10570, %v10570
        %v10572 = vrot.slane %v10009, 3
        %v10573 = vrot.slane %v10010, 3
        %v10574 = vsel %vm10472, %v10572, %v10573
        %v10575 = vrot.slane %v10179, 3
        %v10576 = vrot.slane %v10181, 3
        %v10577 = vsel %vm10472, %v10575, %v10576
        %v10578 = vrot.slane %v10355, 3
        %v10579 = vrot.slane %v10357, 3
        %v10580 = vsel %vm10472, %v10578, %v10579
        %v10581 = vrot.slane %v10465, 3
        %v10582 = vsel %vm10472, %v10581, %v10581
        %v10583 = vrot.slane %v10011, 3
        %v10584 = vrot.slane %v10012, 3
        %v10585 = vsel %vm10472, %v10583, %v10584
        %v10586 = vrot.slane %v10182, 3
        %v10587 = vrot.slane %v10184, 3
        %v10588 = vsel %vm10472, %v10586, %v10587
        %v10589 = vrot.slane %v10358, 3
        %v10590 = vrot.slane %v10360, 3
        %v10591 = vsel %vm10472, %v10589, %v10590
        %v10592 = vrot.slane %v10466, 3
        %v10593 = vsel %vm10472, %v10592, %v10592
        %v10594 = vrot.slane %v10013, 3
        %v10595 = vrot.slane %v10014, 3
        %v10596 = vsel %vm10472, %v10594, %v10595
        %v10597 = vrot.slane %v10185, 3
        %v10598 = vrot.slane %v10187, 3
        %v10599 = vsel %vm10472, %v10597, %v10598
        %v10600 = vrot.slane %v10361, 3
        %v10601 = vrot.slane %v10363, 3
        %v10602 = vsel %vm10472, %v10600, %v10601
        %v10603 = vrot.slane %v10467, 3
        %v10604 = vsel %vm10472, %v10603, %v10603
        %v10605 = vrot.slane %v10015, 3
        %v10606 = vrot.slane %v10016, 3
        %v10607 = vsel %vm10472, %v10605, %v10606
        %v10608 = vrot.slane %v10188, 3
        %v10609 = vrot.slane %v10190, 3
        %v10610 = vsel %vm10472, %v10608, %v10609
        %v10611 = vrot.slane %v10364, 3
        %v10612 = vrot.slane %v10366, 3
        %v10613 = vsel %vm10472, %v10611, %v10612
        %v10614 = vrot.slane %v10468, 3
        %v10615 = vsel %vm10472, %v10614, %v10614
        %v10616 = vrot.slane %v10017, 3
        %v10617 = vrot.slane %v10018, 3
        %v10618 = vsel %vm10472, %v10616, %v10617
        %v10619 = vrot.slane %v10191, 3
        %v10620 = vrot.slane %v10193, 3
        %v10621 = vsel %vm10472, %v10619, %v10620
        %v10622 = vrot.slane %v10367, 3
        %v10623 = vrot.slane %v10369, 3
        %v10624 = vsel %vm10472, %v10622, %v10623
        %v10625 = vrot.slane %v10469, 3
        %v10626 = vsel %vm10472, %v10625, %v10625
        %v10627 = vrot.slane %v10019, 3
        %v10628 = vrot.slane %v10020, 3
        %v10629 = vsel %vm10472, %v10627, %v10628
        %v10630 = vrot.slane %v10194, 3
        %v10631 = vrot.slane %v10196, 3
        %v10632 = vsel %vm10472, %v10630, %v10631
        %v10633 = vrot.slane %v10370, 3
        %v10634 = vrot.slane %v10372, 3
        %v10635 = vsel %vm10472, %v10633, %v10634
        %v10636 = vrot.slane %v10470, 3
        %v10637 = vsel %vm10472, %v10636, %v10636
        %v10638 = vrot.slane %v10021, 3
        %v10639 = vrot.slane %v10022, 3
        %v10640 = vsel %vm10472, %v10638, %v10639
        %v10641 = vrot.slane %v10197, 3
        %v10642 = vrot.slane %v10199, 3
        %v10643 = vsel %vm10472, %v10641, %v10642
        %v10644 = vrot.slane %v10373, 3
        %v10645 = vrot.slane %v10375, 3
        %v10646 = vsel %vm10472, %v10644, %v10645
        %v10647 = vrot.slane %v10471, 3
        %v10648 = vsel %vm10472, %v10647, %v10647
        %v10713 = vld [vmem:[%s3] sm:$0xff]
        %v10714 = vld [vmem:[%s3 + $0x8] sm:$0xff]
        %v10715 = vld [vmem:[%s3 + $0x10] sm:$0xff]
        %v10716 = vld [vmem:[%s3 + $0x18] sm:$0xff]
        %v10717 = vld [vmem:[%s3 + $0x20] sm:$0xff]
        %v10718 = vld [vmem:[%s3 + $0x28] sm:$0xff]
        %v10719 = vld [vmem:[%s3 + $0x30] sm:$0xff]
        %v10720 = vld [vmem:[%s3 + $0x38] sm:$0xff]
        %v10721 = vld [vmem:[%s3 + $0x40] sm:$0xff]
        %v10722 = vld [vmem:[%s3 + $0x48] sm:$0xff]
        %v10723 = vld [vmem:[%s3 + $0x50] sm:$0xff]
        %v10724 = vld [vmem:[%s3 + $0x58] sm:$0xff]
        %v10725 = vld [vmem:[%s3 + $0x60] sm:$0xff]
        %v10726 = vld [vmem:[%s3 + $0x68] sm:$0xff]
        %v10727 = vld [vmem:[%s3 + $0x70] sm:$0xff]
        %v10728 = vld [vmem:[%s3 + $0x78] sm:$0xff]
        %v10729 = vld [vmem:[%s3 + $0x80] sm:$0xff]
        %v10730 = vld [vmem:[%s3 + $0x88] sm:$0xff]
        %v10731 = vld [vmem:[%s3 + $0x90] sm:$0xff]
        %v10732 = vld [vmem:[%s3 + $0x98] sm:$0xff]
        %v10733 = vld [vmem:[%s3 + $0xa0] sm:$0xff]
        %v10734 = vld [vmem:[%s3 + $0xa8] sm:$0xff]
        %v10735 = vld [vmem:[%s3 + $0xb0] sm:$0xff]
        %v10736 = vld [vmem:[%s3 + $0xb8] sm:$0xff]
        %v10737 = vld [vmem:[%s3 + $0xc0] sm:$0xff]
        %v10738 = vld [vmem:[%s3 + $0xc8] sm:$0xff]
        %v10739 = vld [vmem:[%s3 + $0xd0] sm:$0xff]
        %v10740 = vld [vmem:[%s3 + $0xd8] sm:$0xff]
        %v10741 = vld [vmem:[%s3 + $0xe0] sm:$0xff]
        %v10742 = vld [vmem:[%s3 + $0xe8] sm:$0xff]
        %v10743 = vld [vmem:[%s3 + $0xf0] sm:$0xff]
        %v10744 = vld [vmem:[%s3 + $0xf8] sm:$0xff]
        %v10745 = vld [vmem:[%s3 + $0x100] sm:$0xff]
        %v10746 = vld [vmem:[%s3 + $0x108] sm:$0xff]
        %v10747 = vld [vmem:[%s3 + $0x110] sm:$0xff]
        %v10748 = vld [vmem:[%s3 + $0x118] sm:$0xff]
        %v10749 = vld [vmem:[%s3 + $0x120] sm:$0xff]
        %v10750 = vld [vmem:[%s3 + $0x128] sm:$0xff]
        %v10751 = vld [vmem:[%s3 + $0x130] sm:$0xff]
        %v10752 = vld [vmem:[%s3 + $0x138] sm:$0xff]
        %v10753 = vld [vmem:[%s3 + $0x140] sm:$0xff]
        %v10754 = vld [vmem:[%s3 + $0x148] sm:$0xff]
        %v10755 = vld [vmem:[%s3 + $0x150] sm:$0xff]
        %v10756 = vld [vmem:[%s3 + $0x158] sm:$0xff]
        %v10757 = vld [vmem:[%s3 + $0x160] sm:$0xff]
        %v10758 = vld [vmem:[%s3 + $0x168] sm:$0xff]
        %v10759 = vld [vmem:[%s3 + $0x170] sm:$0xff]
        %v10760 = vld [vmem:[%s3 + $0x178] sm:$0xff]
        %v10761 = vld [vmem:[%s3 + $0x180] sm:$0xff]
        %v10762 = vld [vmem:[%s3 + $0x188] sm:$0xff]
        %v10763 = vld [vmem:[%s3 + $0x190] sm:$0xff]
        %v10764 = vld [vmem:[%s3 + $0x198] sm:$0xff]
        %v10765 = vld [vmem:[%s3 + $0x1a0] sm:$0xff]
        %v10766 = vld [vmem:[%s3 + $0x1a8] sm:$0xff]
        %v10767 = vld [vmem:[%s3 + $0x1b0] sm:$0xff]
        %v10768 = vld [vmem:[%s3 + $0x1b8] sm:$0xff]
        %v10769 = vld [vmem:[%s3 + $0x1c0] sm:$0xff]
        %v10770 = vld [vmem:[%s3 + $0x1c8] sm:$0xff]
        %v10771 = vld [vmem:[%s3 + $0x1d0] sm:$0xff]
        %v10772 = vld [vmem:[%s3 + $0x1d8] sm:$0xff]
        %v10773 = vld [vmem:[%s3 + $0x1e0] sm:$0xff]
        %v10774 = vld [vmem:[%s3 + $0x1e8] sm:$0xff]
        %v10775 = vld [vmem:[%s3 + $0x1f0] sm:$0xff]
        %v10776 = vld [vmem:[%s3 + $0x1f8] sm:$0xff]
        %v10777 = vld [vmem:[%s4] sm:$0x3]
        %v10779 = vlaneseq
        %v10780 = vshrl.u32 %v10779, 7
        %v10781 = vsub.s32 0, %v10780
        %v10782 = vrot.slane %v10777, %v10781
        %v10783 = vlaneseq
        %v10784 = vshrl.u32 %v10783, 7
        %v10785 = vsub.s32 1, %v10784
        %v10786 = vrot.slane %v10777, %v10785
        %v10853 = vunpack.c.l.b16 %v10713
        %v10854 = vunpack.c.h.b16 %v10713
        %v10855 = vunpack.c.l.b16 %v10714
        %v10856 = vunpack.c.h.b16 %v10714
        %v10857 = vunpack.c.l.b16 %v10715
        %v10858 = vunpack.c.h.b16 %v10715
        %v10859 = vunpack.c.l.b16 %v10716
        %v10860 = vunpack.c.h.b16 %v10716
        %v10861 = vunpack.c.l.b16 %v10717
        %v10862 = vunpack.c.h.b16 %v10717
        %v10863 = vunpack.c.l.b16 %v10718
        %v10864 = vunpack.c.h.b16 %v10718
        %v10865 = vunpack.c.l.b16 %v10719
        %v10866 = vunpack.c.h.b16 %v10719
        %v10867 = vunpack.c.l.b16 %v10720
        %v10868 = vunpack.c.h.b16 %v10720
        %v10869 = vunpack.c.l.b16 %v10721
        %v10870 = vunpack.c.h.b16 %v10721
        %v10871 = vunpack.c.l.b16 %v10722
        %v10872 = vunpack.c.h.b16 %v10722
        %v10873 = vunpack.c.l.b16 %v10723
        %v10874 = vunpack.c.h.b16 %v10723
        %v10875 = vunpack.c.l.b16 %v10724
        %v10876 = vunpack.c.h.b16 %v10724
        %v10877 = vunpack.c.l.b16 %v10725
        %v10878 = vunpack.c.h.b16 %v10725
        %v10879 = vunpack.c.l.b16 %v10726
        %v10880 = vunpack.c.h.b16 %v10726
        %v10881 = vunpack.c.l.b16 %v10727
        %v10882 = vunpack.c.h.b16 %v10727
        %v10883 = vunpack.c.l.b16 %v10728
        %v10884 = vunpack.c.h.b16 %v10728
        %v10885 = vunpack.c.l.b16 %v10729
        %v10886 = vunpack.c.h.b16 %v10729
        %v10887 = vunpack.c.l.b16 %v10730
        %v10888 = vunpack.c.h.b16 %v10730
        %v10889 = vunpack.c.l.b16 %v10731
        %v10890 = vunpack.c.h.b16 %v10731
        %v10891 = vunpack.c.l.b16 %v10732
        %v10892 = vunpack.c.h.b16 %v10732
        %v10893 = vunpack.c.l.b16 %v10733
        %v10894 = vunpack.c.h.b16 %v10733
        %v10895 = vunpack.c.l.b16 %v10734
        %v10896 = vunpack.c.h.b16 %v10734
        %v10897 = vunpack.c.l.b16 %v10735
        %v10898 = vunpack.c.h.b16 %v10735
        %v10899 = vunpack.c.l.b16 %v10736
        %v10900 = vunpack.c.h.b16 %v10736
        %v10901 = vunpack.c.l.b16 %v10737
        %v10902 = vunpack.c.h.b16 %v10737
        %v10903 = vunpack.c.l.b16 %v10738
        %v10904 = vunpack.c.h.b16 %v10738
        %v10905 = vunpack.c.l.b16 %v10739
        %v10906 = vunpack.c.h.b16 %v10739
        %v10907 = vunpack.c.l.b16 %v10740
        %v10908 = vunpack.c.h.b16 %v10740
        %v10909 = vunpack.c.l.b16 %v10741
        %v10910 = vunpack.c.h.b16 %v10741
        %v10911 = vunpack.c.l.b16 %v10742
        %v10912 = vunpack.c.h.b16 %v10742
        %v10913 = vunpack.c.l.b16 %v10743
        %v10914 = vunpack.c.h.b16 %v10743
        %v10915 = vunpack.c.l.b16 %v10744
        %v10916 = vunpack.c.h.b16 %v10744
        %v10917 = vunpack.c.l.b16 %v10745
        %v10918 = vunpack.c.h.b16 %v10745
        %v10919 = vunpack.c.l.b16 %v10746
        %v10920 = vunpack.c.h.b16 %v10746
        %v10921 = vunpack.c.l.b16 %v10747
        %v10922 = vunpack.c.h.b16 %v10747
        %v10923 = vunpack.c.l.b16 %v10748
        %v10924 = vunpack.c.h.b16 %v10748
        %v10925 = vunpack.c.l.b16 %v10749
        %v10926 = vunpack.c.h.b16 %v10749
        %v10927 = vunpack.c.l.b16 %v10750
        %v10928 = vunpack.c.h.b16 %v10750
        %v10929 = vunpack.c.l.b16 %v10751
        %v10930 = vunpack.c.h.b16 %v10751
        %v10931 = vunpack.c.l.b16 %v10752
        %v10932 = vunpack.c.h.b16 %v10752
        %v10933 = vunpack.c.l.b16 %v10753
        %v10934 = vunpack.c.h.b16 %v10753
        %v10935 = vunpack.c.l.b16 %v10754
        %v10936 = vunpack.c.h.b16 %v10754
        %v10937 = vunpack.c.l.b16 %v10755
        %v10938 = vunpack.c.h.b16 %v10755
        %v10939 = vunpack.c.l.b16 %v10756
        %v10940 = vunpack.c.h.b16 %v10756
        %v10941 = vunpack.c.l.b16 %v10757
        %v10942 = vunpack.c.h.b16 %v10757
        %v10943 = vunpack.c.l.b16 %v10758
        %v10944 = vunpack.c.h.b16 %v10758
        %v10945 = vunpack.c.l.b16 %v10759
        %v10946 = vunpack.c.h.b16 %v10759
        %v10947 = vunpack.c.l.b16 %v10760
        %v10948 = vunpack.c.h.b16 %v10760
        %v10949 = vunpack.c.l.b16 %v10761
        %v10950 = vunpack.c.h.b16 %v10761
        %v10951 = vunpack.c.l.b16 %v10762
        %v10952 = vunpack.c.h.b16 %v10762
        %v10953 = vunpack.c.l.b16 %v10763
        %v10954 = vunpack.c.h.b16 %v10763
        %v10955 = vunpack.c.l.b16 %v10764
        %v10956 = vunpack.c.h.b16 %v10764
        %v10957 = vunpack.c.l.b16 %v10765
        %v10958 = vunpack.c.h.b16 %v10765
        %v10959 = vunpack.c.l.b16 %v10766
        %v10960 = vunpack.c.h.b16 %v10766
        %v10961 = vunpack.c.l.b16 %v10767
        %v10962 = vunpack.c.h.b16 %v10767
        %v10963 = vunpack.c.l.b16 %v10768
        %v10964 = vunpack.c.h.b16 %v10768
        %v10965 = vunpack.c.l.b16 %v10769
        %v10966 = vunpack.c.h.b16 %v10769
        %v10967 = vunpack.c.l.b16 %v10770
        %v10968 = vunpack.c.h.b16 %v10770
        %v10969 = vunpack.c.l.b16 %v10771
        %v10970 = vunpack.c.h.b16 %v10771
        %v10971 = vunpack.c.l.b16 %v10772
        %v10972 = vunpack.c.h.b16 %v10772
        %v10973 = vunpack.c.l.b16 %v10773
        %v10974 = vunpack.c.h.b16 %v10773
        %v10975 = vunpack.c.l.b16 %v10774
        %v10976 = vunpack.c.h.b16 %v10774
        %v10977 = vunpack.c.l.b16 %v10775
        %v10978 = vunpack.c.h.b16 %v10775
        %v10979 = vunpack.c.l.b16 %v10776
        %v10980 = vunpack.c.h.b16 %v10776
        %v10981 = vpack.c.b16 %v10855, %v10853
        %v10982 = vpack.c.b16 %v10856, %v10854
        %v10983 = vpack.c.b16 %v10859, %v10857
        %v10984 = vpack.c.b16 %v10860, %v10858
        %v10985 = vpack.c.b16 %v10863, %v10861
        %v10986 = vpack.c.b16 %v10864, %v10862
        %v10987 = vpack.c.b16 %v10867, %v10865
        %v10988 = vpack.c.b16 %v10868, %v10866
        %v10989 = vpack.c.b16 %v10871, %v10869
        %v10990 = vpack.c.b16 %v10872, %v10870
        %v10991 = vpack.c.b16 %v10875, %v10873
        %v10992 = vpack.c.b16 %v10876, %v10874
        %v10993 = vpack.c.b16 %v10879, %v10877
        %v10994 = vpack.c.b16 %v10880, %v10878
        %v10995 = vpack.c.b16 %v10883, %v10881
        %v10996 = vpack.c.b16 %v10884, %v10882
        %v10997 = vpack.c.b16 %v10887, %v10885
        %v10998 = vpack.c.b16 %v10888, %v10886
        %v10999 = vpack.c.b16 %v10891, %v10889
        %v11000 = vpack.c.b16 %v10892, %v10890
        %v11001 = vpack.c.b16 %v10895, %v10893
        %v11002 = vpack.c.b16 %v10896, %v10894
        %v11003 = vpack.c.b16 %v10899, %v10897
        %v11004 = vpack.c.b16 %v10900, %v10898
        %v11005 = vpack.c.b16 %v10903, %v10901
        %v11006 = vpack.c.b16 %v10904, %v10902
        %v11007 = vpack.c.b16 %v10907, %v10905
        %v11008 = vpack.c.b16 %v10908, %v10906
        %v11009 = vpack.c.b16 %v10911, %v10909
        %v11010 = vpack.c.b16 %v10912, %v10910
        %v11011 = vpack.c.b16 %v10915, %v10913
        %v11012 = vpack.c.b16 %v10916, %v10914
        %v11013 = vpack.c.b16 %v10919, %v10917
        %v11014 = vpack.c.b16 %v10920, %v10918
        %v11015 = vpack.c.b16 %v10923, %v10921
        %v11016 = vpack.c.b16 %v10924, %v10922
        %v11017 = vpack.c.b16 %v10927, %v10925
        %v11018 = vpack.c.b16 %v10928, %v10926
        %v11019 = vpack.c.b16 %v10931, %v10929
        %v11020 = vpack.c.b16 %v10932, %v10930
        %v11021 = vpack.c.b16 %v10935, %v10933
        %v11022 = vpack.c.b16 %v10936, %v10934
        %v11023 = vpack.c.b16 %v10939, %v10937
        %v11024 = vpack.c.b16 %v10940, %v10938
        %v11025 = vpack.c.b16 %v10943, %v10941
        %v11026 = vpack.c.b16 %v10944, %v10942
        %v11027 = vpack.c.b16 %v10947, %v10945
        %v11028 = vpack.c.b16 %v10948, %v10946
        %v11029 = vpack.c.b16 %v10951, %v10949
        %v11030 = vpack.c.b16 %v10952, %v10950
        %v11031 = vpack.c.b16 %v10955, %v10953
        %v11032 = vpack.c.b16 %v10956, %v10954
        %v11033 = vpack.c.b16 %v10959, %v10957
        %v11034 = vpack.c.b16 %v10960, %v10958
        %v11035 = vpack.c.b16 %v10963, %v10961
        %v11036 = vpack.c.b16 %v10964, %v10962
        %v11037 = vpack.c.b16 %v10967, %v10965
        %v11038 = vpack.c.b16 %v10968, %v10966
        %v11039 = vpack.c.b16 %v10971, %v10969
        %v11040 = vpack.c.b16 %v10972, %v10970
        %v11041 = vpack.c.b16 %v10975, %v10973
        %v11042 = vpack.c.b16 %v10976, %v10974
        %v11043 = vpack.c.b16 %v10979, %v10977
        %v11044 = vpack.c.b16 %v10980, %v10978
        %11109 = vmatprep.subr.bf16.mxu0 %v10982
        %11110 = vmatpush1.bf16.msra.mxu0 %v10981
        %11111 = vmatprep.subr.bf16.mxu0 %v10984
        %11112 = vmatpush1.bf16.msra.mxu0 %v10983
        %11113 = vmatprep.subr.bf16.mxu0 %v10986
        %11114 = vmatpush1.bf16.msra.mxu0 %v10985
        %11115 = vmatprep.subr.bf16.mxu0 %v10988
        %11116 = vmatpush1.bf16.msra.mxu0 %v10987
        %11117 = vmatprep.subr.bf16.mxu0 %v10990
        %11118 = vmatpush1.bf16.msra.mxu0 %v10989
        %11119 = vmatprep.subr.bf16.mxu0 %v10992
        %11120 = vmatpush1.bf16.msra.mxu0 %v10991
        %11121 = vmatprep.subr.bf16.mxu0 %v10994
        %11122 = vmatpush1.bf16.msra.mxu0 %v10993
        %11123 = vmatprep.subr.bf16.mxu0 %v10996
        %11124 = vmatpush1.bf16.msra.mxu0 %v10995
        %11125 = vmatprep.subr.bf16.mxu0 %v10998
        %11126 = vmatpush1.bf16.msra.mxu0 %v10997
        %11127 = vmatprep.subr.bf16.mxu0 %v11000
        %11128 = vmatpush1.bf16.msra.mxu0 %v10999
        %11129 = vmatprep.subr.bf16.mxu0 %v11002
        %11130 = vmatpush1.bf16.msra.mxu0 %v11001
        %11131 = vmatprep.subr.bf16.mxu0 %v11004
        %11132 = vmatpush1.bf16.msra.mxu0 %v11003
        %11133 = vmatprep.subr.bf16.mxu0 %v11006
        %11134 = vmatpush1.bf16.msra.mxu0 %v11005
        %11135 = vmatprep.subr.bf16.mxu0 %v11008
        %11136 = vmatpush1.bf16.msra.mxu0 %v11007
        %11137 = vmatprep.subr.bf16.mxu0 %v11010
        %11138 = vmatpush1.bf16.msra.mxu0 %v11009
        %11139 = vmatprep.subr.bf16.mxu0 %v11012
        %11140 = vmatpush1.bf16.msra.mxu0 %v11011
        %11141 = vmatprep.mubr.bf16.mxu0 %v10478
        %11142 = vmatmul.mubr.bf16.gmra.mrb[0].mxu0 %v10475
        %v11143 = vpop.f32.mrb[0].mxu0
        %v11144 = vadd.f32 %v10782, %v11143
        %v11145 = vpop.f32.mrb[0].mxu0
        %v11146 = vadd.f32 %v10786, %v11145
        %v11147 = vpop.f32.mrb[0].mxu0
        %v11148 = vadd.f32 %v10782, %v11147
        %v11149 = vpop.f32.mrb[0].mxu0
        %v11150 = vadd.f32 %v10786, %v11149
        %11151 = vmatprep.mubr.bf16.mxu0 %v10489
        %11152 = vmatmul.mubr.bf16.gmra.mrb[0].mxu0 %v10486
        %v11153 = vpop.f32.mrb[0].mxu0
        %v11154 = vadd.f32 %v10782, %v11153
        %v11155 = vpop.f32.mrb[0].mxu0
        %v11156 = vadd.f32 %v10786, %v11155
        %v11157 = vpop.f32.mrb[0].mxu0
        %v11158 = vadd.f32 %v10782, %v11157
        %v11159 = vpop.f32.mrb[0].mxu0
        %v11160 = vadd.f32 %v10786, %v11159
        %11161 = vmatprep.mubr.bf16.mxu0 %v10500
        %11162 = vmatmul.mubr.bf16.gmra.mrb[0].mxu0 %v10497
        %v11163 = vpop.f32.mrb[0].mxu0
        %v11164 = vadd.f32 %v10782, %v11163
        %v11165 = vpop.f32.mrb[0].mxu0
        %v11166 = vadd.f32 %v10786, %v11165
        %v11167 = vpop.f32.mrb[0].mxu0
        %v11168 = vadd.f32 %v10782, %v11167
        %v11169 = vpop.f32.mrb[0].mxu0
        %v11170 = vadd.f32 %v10786, %v11169
        %11171 = vmatprep.mubr.bf16.mxu0 %v10511
        %11172 = vmatmul.mubr.bf16.gmra.mrb[0].mxu0 %v10508
        %v11173 = vpop.f32.mrb[0].mxu0
        %v11174 = vadd.f32 %v10782, %v11173
        %v11175 = vpop.f32.mrb[0].mxu0
        %v11176 = vadd.f32 %v10786, %v11175
        %v11177 = vpop.f32.mrb[0].mxu0
        %v11178 = vadd.f32 %v10782, %v11177
        %v11179 = vpop.f32.mrb[0].mxu0
        %v11180 = vadd.f32 %v10786, %v11179
        %11181 = vmatprep.mubr.bf16.mxu0 %v10522
        %11182 = vmatmul.mubr.bf16.gmra.mrb[0].mxu0 %v10519
        %v11183 = vpop.f32.mrb[0].mxu0
        %v11184 = vadd.f32 %v10782, %v11183
        %v11185 = vpop.f32.mrb[0].mxu0
        %v11186 = vadd.f32 %v10786, %v11185
        %v11187 = vpop.f32.mrb[0].mxu0
        %v11188 = vadd.f32 %v10782, %v11187
        %v11189 = vpop.f32.mrb[0].mxu0
        %v11190 = vadd.f32 %v10786, %v11189
        %11191 = vmatprep.mubr.bf16.mxu0 %v10533
        %11192 = vmatmul.mubr.bf16.gmra.mrb[0].mxu0 %v10530
        %v11193 = vpop.f32.mrb[0].mxu0
        %v11194 = vadd.f32 %v10782, %v11193
        %v11195 = vpop.f32.mrb[0].mxu0
        %v11196 = vadd.f32 %v10786, %v11195
        %v11197 = vpop.f32.mrb[0].mxu0
        %v11198 = vadd.f32 %v10782, %v11197
        %v11199 = vpop.f32.mrb[0].mxu0
        %v11200 = vadd.f32 %v10786, %v11199
        %11201 = vmatprep.mubr.bf16.mxu0 %v10544
        %11202 = vmatmul.mubr.bf16.gmra.mrb[0].mxu0 %v10541
        %v11203 = vpop.f32.mrb[0].mxu0
        %v11204 = vadd.f32 %v10782, %v11203
        %v11205 = vpop.f32.mrb[0].mxu0
        %v11206 = vadd.f32 %v10786, %v11205
        %v11207 = vpop.f32.mrb[0].mxu0
        %v11208 = vadd.f32 %v10782, %v11207
        %v11209 = vpop.f32.mrb[0].mxu0
        %v11210 = vadd.f32 %v10786, %v11209
        %11211 = vmatprep.mubr.bf16.mxu0 %v10555
        %11212 = vmatmul.mubr.bf16.gmra.mrb[0].mxu0 %v10552
        %v11213 = vpop.f32.mrb[0].mxu0
        %v11214 = vadd.f32 %v10782, %v11213
        %v11215 = vpop.f32.mrb[0].mxu0
        %v11216 = vadd.f32 %v10786, %v11215
        %v11217 = vpop.f32.mrb[0].mxu0
        %v11218 = vadd.f32 %v10782, %v11217
        %v11219 = vpop.f32.mrb[0].mxu0
        %v11220 = vadd.f32 %v10786, %v11219
        %11221 = vmatprep.mubr.bf16.mxu0 %v10566
        %11222 = vmatmul.mubr.bf16.gmra.mrb[0].mxu0 %v10563
        %v11223 = vpop.f32.mrb[0].mxu0
        %v11224 = vadd.f32 %v10782, %v11223
        %v11225 = vpop.f32.mrb[0].mxu0
        %v11226 = vadd.f32 %v10786, %v11225
        %v11227 = vpop.f32.mrb[0].mxu0
        %v11228 = vadd.f32 %v10782, %v11227
        %v11229 = vpop.f32.mrb[0].mxu0
        %v11230 = vadd.f32 %v10786, %v11229
        %11231 = vmatprep.mubr.bf16.mxu0 %v10577
        %11232 = vmatmul.mubr.bf16.gmra.mrb[0].mxu0 %v10574
        %v11233 = vpop.f32.mrb[0].mxu0
        %v11234 = vadd.f32 %v10782, %v11233
        %v11235 = vpop.f32.mrb[0].mxu0
        %v11236 = vadd.f32 %v10786, %v11235
        %v11237 = vpop.f32.mrb[0].mxu0
        %v11238 = vadd.f32 %v10782, %v11237
        %v11239 = vpop.f32.mrb[0].mxu0
        %v11240 = vadd.f32 %v10786, %v11239
        %11241 = vmatprep.mubr.bf16.mxu0 %v10588
        %11242 = vmatmul.mubr.bf16.gmra.mrb[0].mxu0 %v10585
        %v11243 = vpop.f32.mrb[0].mxu0
        %v11244 = vadd.f32 %v10782, %v11243
        %v11245 = vpop.f32.mrb[0].mxu0
        %v11246 = vadd.f32 %v10786, %v11245
        %v11247 = vpop.f32.mrb[0].mxu0
        %v11248 = vadd.f32 %v10782, %v11247
        %v11249 = vpop.f32.mrb[0].mxu0
        %v11250 = vadd.f32 %v10786, %v11249
        %11251 = vmatprep.mubr.bf16.mxu0 %v10599
        %11252 = vmatmul.mubr.bf16.gmra.mrb[0].mxu0 %v10596
        %v11253 = vpop.f32.mrb[0].mxu0
        %v11254 = vadd.f32 %v10782, %v11253
        %v11255 = vpop.f32.mrb[0].mxu0
        %v11256 = vadd.f32 %v10786, %v11255
        %v11257 = vpop.f32.mrb[0].mxu0
        %v11258 = vadd.f32 %v10782, %v11257
        %v11259 = vpop.f32.mrb[0].mxu0
        %v11260 = vadd.f32 %v10786, %v11259
        %11261 = vmatprep.mubr.bf16.mxu0 %v10610
        %11262 = vmatmul.mubr.bf16.gmra.mrb[0].mxu0 %v10607
        %v11263 = vpop.f32.mrb[0].mxu0
        %v11264 = vadd.f32 %v10782, %v11263
        %v11265 = vpop.f32.mrb[0].mxu0
        %v11266 = vadd.f32 %v10786, %v11265
        %v11267 = vpop.f32.mrb[0].mxu0
        %v11268 = vadd.f32 %v10782, %v11267
        %v11269 = vpop.f32.mrb[0].mxu0
        %v11270 = vadd.f32 %v10786, %v11269
        %11271 = vmatprep.mubr.bf16.mxu0 %v10621
        %11272 = vmatmul.mubr.bf16.gmra.mrb[0].mxu0 %v10618
        %v11273 = vpop.f32.mrb[0].mxu0
        %v11274 = vadd.f32 %v10782, %v11273
        %v11275 = vpop.f32.mrb[0].mxu0
        %v11276 = vadd.f32 %v10786, %v11275
        %v11277 = vpop.f32.mrb[0].mxu0
        %v11278 = vadd.f32 %v10782, %v11277
        %v11279 = vpop.f32.mrb[0].mxu0
        %v11280 = vadd.f32 %v10786, %v11279
        %11281 = vmatprep.mubr.bf16.mxu0 %v10632
        %11282 = vmatmul.mubr.bf16.gmra.mrb[0].mxu0 %v10629
        %v11283 = vpop.f32.mrb[0].mxu0
        %v11284 = vadd.f32 %v10782, %v11283
        %v11285 = vpop.f32.mrb[0].mxu0
        %v11286 = vadd.f32 %v10786, %v11285
        %v11287 = vpop.f32.mrb[0].mxu0
        %v11288 = vadd.f32 %v10782, %v11287
        %v11289 = vpop.f32.mrb[0].mxu0
        %v11290 = vadd.f32 %v10786, %v11289
        %11291 = vmatprep.mubr.bf16.mxu0 %v10643
        %11292 = vmatmul.mubr.bf16.gmra.mrb[0].mxu0 %v10640
        %v11293 = vpop.f32.mrb[0].mxu0
        %v11294 = vadd.f32 %v10782, %v11293
        %v11295 = vpop.f32.mrb[0].mxu0
        %v11296 = vadd.f32 %v10786, %v11295
        %v11297 = vpop.f32.mrb[0].mxu0
        %v11298 = vadd.f32 %v10782, %v11297
        %v11299 = vpop.f32.mrb[0].mxu0
        %v11300 = vadd.f32 %v10786, %v11299
        %11301 = vdwg.mxu0
        %11302 = vmatprep.subr.bf16.mxu0 %v11014
        %11303 = vmatpush1.bf16.msra.mxu0 %v11013
        %11304 = vmatprep.subr.bf16.mxu0 %v11016
        %11305 = vmatpush1.bf16.msra.mxu0 %v11015
        %11306 = vmatprep.subr.bf16.mxu0 %v11018
        %11307 = vmatpush1.bf16.msra.mxu0 %v11017
        %11308 = vmatprep.subr.bf16.mxu0 %v11020
        %11309 = vmatpush1.bf16.msra.mxu0 %v11019
        %11310 = vmatprep.subr.bf16.mxu0 %v11022
        %11311 = vmatpush1.bf16.msra.mxu0 %v11021
        %11312 = vmatprep.subr.bf16.mxu0 %v11024
        %11313 = vmatpush1.bf16.msra.mxu0 %v11023
        %11314 = vmatprep.subr.bf16.mxu0 %v11026
        %11315 = vmatpush1.bf16.msra.mxu0 %v11025
        %11316 = vmatprep.subr.bf16.mxu0 %v11028
        %11317 = vmatpush1.bf16.msra.mxu0 %v11027
        %11318 = vmatprep.subr.bf16.mxu0 %v11030
        %11319 = vmatpush1.bf16.msra.mxu0 %v11029
        %11320 = vmatprep.subr.bf16.mxu0 %v11032
        %11321 = vmatpush1.bf16.msra.mxu0 %v11031
        %11322 = vmatprep.subr.bf16.mxu0 %v11034
        %11323 = vmatpush1.bf16.msra.mxu0 %v11033
        %11324 = vmatprep.subr.bf16.mxu0 %v11036
        %11325 = vmatpush1.bf16.msra.mxu0 %v11035
        %11326 = vmatprep.subr.bf16.mxu0 %v11038
        %11327 = vmatpush1.bf16.msra.mxu0 %v11037
        %11328 = vmatprep.subr.bf16.mxu0 %v11040
        %11329 = vmatpush1.bf16.msra.mxu0 %v11039
        %11330 = vmatprep.subr.bf16.mxu0 %v11042
        %11331 = vmatpush1.bf16.msra.mxu0 %v11041
        %11332 = vmatprep.subr.bf16.mxu0 %v11044
        %11333 = vmatpush1.bf16.msra.mxu0 %v11043
        %11334 = vmatprep.mubr.bf16.mxu0 %v10483
        %11335 = vmatmul.mubr.bf16.gmra.mrb[0].mxu0 %v10481
        %v11336 = vpop.f32.mrb[0].mxu0
        %v11337 = vadd.f32 %v11144, %v11336
        %v11338 = vpop.f32.mrb[0].mxu0
        %v11339 = vadd.f32 %v11146, %v11338
        %v11340 = vpop.f32.mrb[0].mxu0
        %v11341 = vadd.f32 %v11148, %v11340
        %v11342 = vpop.f32.mrb[0].mxu0
        %v11343 = vadd.f32 %v11150, %v11342
        %11344 = vmatprep.mubr.bf16.mxu0 %v10494
        %11345 = vmatmul.mubr.bf16.gmra.mrb[0].mxu0 %v10492
        %v11346 = vpop.f32.mrb[0].mxu0
        %v11347 = vadd.f32 %v11154, %v11346
        %v11348 = vpop.f32.mrb[0].mxu0
        %v11349 = vadd.f32 %v11156, %v11348
        %v11350 = vpop.f32.mrb[0].mxu0
        %v11351 = vadd.f32 %v11158, %v11350
        %v11352 = vpop.f32.mrb[0].mxu0
        %v11353 = vadd.f32 %v11160, %v11352
        %11354 = vmatprep.mubr.bf16.mxu0 %v10505
        %11355 = vmatmul.mubr.bf16.gmra.mrb[0].mxu0 %v10503
        %v11356 = vpop.f32.mrb[0].mxu0
        %v11357 = vadd.f32 %v11164, %v11356
        %v11358 = vpop.f32.mrb[0].mxu0
        %v11359 = vadd.f32 %v11166, %v11358
        %v11360 = vpop.f32.mrb[0].mxu0
        %v11361 = vadd.f32 %v11168, %v11360
        %v11362 = vpop.f32.mrb[0].mxu0
        %v11363 = vadd.f32 %v11170, %v11362
        %11364 = vmatprep.mubr.bf16.mxu0 %v10516
        %11365 = vmatmul.mubr.bf16.gmra.mrb[0].mxu0 %v10514
        %v11366 = vpop.f32.mrb[0].mxu0
        %v11367 = vadd.f32 %v11174, %v11366
        %v11368 = vpop.f32.mrb[0].mxu0
        %v11369 = vadd.f32 %v11176, %v11368
        %v11370 = vpop.f32.mrb[0].mxu0
        %v11371 = vadd.f32 %v11178, %v11370
        %v11372 = vpop.f32.mrb[0].mxu0
        %v11373 = vadd.f32 %v11180, %v11372
        %11374 = vmatprep.mubr.bf16.mxu0 %v10527
        %11375 = vmatmul.mubr.bf16.gmra.mrb[0].mxu0 %v10525
        %v11376 = vpop.f32.mrb[0].mxu0
        %v11377 = vadd.f32 %v11184, %v11376
        %v11378 = vpop.f32.mrb[0].mxu0
        %v11379 = vadd.f32 %v11186, %v11378
        %v11380 = vpop.f32.mrb[0].mxu0
        %v11381 = vadd.f32 %v11188, %v11380
        %v11382 = vpop.f32.mrb[0].mxu0
        %v11383 = vadd.f32 %v11190, %v11382
        %11384 = vmatprep.mubr.bf16.mxu0 %v10538
        %11385 = vmatmul.mubr.bf16.gmra.mrb[0].mxu0 %v10536
        %v11386 = vpop.f32.mrb[0].mxu0
        %v11387 = vadd.f32 %v11194, %v11386
        %v11388 = vpop.f32.mrb[0].mxu0
        %v11389 = vadd.f32 %v11196, %v11388
        %v11390 = vpop.f32.mrb[0].mxu0
        %v11391 = vadd.f32 %v11198, %v11390
        %v11392 = vpop.f32.mrb[0].mxu0
        %v11393 = vadd.f32 %v11200, %v11392
        %11394 = vmatprep.mubr.bf16.mxu0 %v10549
        %11395 = vmatmul.mubr.bf16.gmra.mrb[0].mxu0 %v10547
        %v11396 = vpop.f32.mrb[0].mxu0
        %v11397 = vadd.f32 %v11204, %v11396
        %v11398 = vpop.f32.mrb[0].mxu0
        %v11399 = vadd.f32 %v11206, %v11398
        %v11400 = vpop.f32.mrb[0].mxu0
        %v11401 = vadd.f32 %v11208, %v11400
        %v11402 = vpop.f32.mrb[0].mxu0
        %v11403 = vadd.f32 %v11210, %v11402
        %11404 = vmatprep.mubr.bf16.mxu0 %v10560
        %11405 = vmatmul.mubr.bf16.gmra.mrb[0].mxu0 %v10558
        %v11406 = vpop.f32.mrb[0].mxu0
        %v11407 = vadd.f32 %v11214, %v11406
        %v11408 = vpop.f32.mrb[0].mxu0
        %v11409 = vadd.f32 %v11216, %v11408
        %v11410 = vpop.f32.mrb[0].mxu0
        %v11411 = vadd.f32 %v11218, %v11410
        %v11412 = vpop.f32.mrb[0].mxu0
        %v11413 = vadd.f32 %v11220, %v11412
        %11414 = vmatprep.mubr.bf16.mxu0 %v10571
        %11415 = vmatmul.mubr.bf16.gmra.mrb[0].mxu0 %v10569
        %v11416 = vpop.f32.mrb[0].mxu0
        %v11417 = vadd.f32 %v11224, %v11416
        %v11418 = vpop.f32.mrb[0].mxu0
        %v11419 = vadd.f32 %v11226, %v11418
        %v11420 = vpop.f32.mrb[0].mxu0
        %v11421 = vadd.f32 %v11228, %v11420
        %v11422 = vpop.f32.mrb[0].mxu0
        %v11423 = vadd.f32 %v11230, %v11422
        %11424 = vmatprep.mubr.bf16.mxu0 %v10582
        %11425 = vmatmul.mubr.bf16.gmra.mrb[0].mxu0 %v10580
        %v11426 = vpop.f32.mrb[0].mxu0
        %v11427 = vadd.f32 %v11234, %v11426
        %v11428 = vpop.f32.mrb[0].mxu0
        %v11429 = vadd.f32 %v11236, %v11428
        %v11430 = vpop.f32.mrb[0].mxu0
        %v11431 = vadd.f32 %v11238, %v11430
        %v11432 = vpop.f32.mrb[0].mxu0
        %v11433 = vadd.f32 %v11240, %v11432
        %11434 = vmatprep.mubr.bf16.mxu0 %v10593
        %11435 = vmatmul.mubr.bf16.gmra.mrb[0].mxu0 %v10591
        %v11436 = vpop.f32.mrb[0].mxu0
        %v11437 = vadd.f32 %v11244, %v11436
        %v11438 = vpop.f32.mrb[0].mxu0
        %v11439 = vadd.f32 %v11246, %v11438
        %v11440 = vpop.f32.mrb[0].mxu0
        %v11441 = vadd.f32 %v11248, %v11440
        %v11442 = vpop.f32.mrb[0].mxu0
        %v11443 = vadd.f32 %v11250, %v11442
        %11444 = vmatprep.mubr.bf16.mxu0 %v10604
        %11445 = vmatmul.mubr.bf16.gmra.mrb[0].mxu0 %v10602
        %v11446 = vpop.f32.mrb[0].mxu0
        %v11447 = vadd.f32 %v11254, %v11446
        %v11448 = vpop.f32.mrb[0].mxu0
        %v11449 = vadd.f32 %v11256, %v11448
        %v11450 = vpop.f32.mrb[0].mxu0
        %v11451 = vadd.f32 %v11258, %v11450
        %v11452 = vpop.f32.mrb[0].mxu0
        %v11453 = vadd.f32 %v11260, %v11452
        %11454 = vmatprep.mubr.bf16.mxu0 %v10615
        %11455 = vmatmul.mubr.bf16.gmra.mrb[0].mxu0 %v10613
        %v11456 = vpop.f32.mrb[0].mxu0
        %v11457 = vadd.f32 %v11264, %v11456
        %v11458 = vpop.f32.mrb[0].mxu0
        %v11459 = vadd.f32 %v11266, %v11458
        %v11460 = vpop.f32.mrb[0].mxu0
        %v11461 = vadd.f32 %v11268, %v11460
        %v11462 = vpop.f32.mrb[0].mxu0
        %v11463 = vadd.f32 %v11270, %v11462
        %11464 = vmatprep.mubr.bf16.mxu0 %v10626
        %11465 = vmatmul.mubr.bf16.gmra.mrb[0].mxu0 %v10624
        %v11466 = vpop.f32.mrb[0].mxu0
        %v11467 = vadd.f32 %v11274, %v11466
        %v11468 = vpop.f32.mrb[0].mxu0
        %v11469 = vadd.f32 %v11276, %v11468
        %v11470 = vpop.f32.mrb[0].mxu0
        %v11471 = vadd.f32 %v11278, %v11470
        %v11472 = vpop.f32.mrb[0].mxu0
        %v11473 = vadd.f32 %v11280, %v11472
        %11474 = vmatprep.mubr.bf16.mxu0 %v10637
        %11475 = vmatmul.mubr.bf16.gmra.mrb[0].mxu0 %v10635
        %v11476 = vpop.f32.mrb[0].mxu0
        %v11477 = vadd.f32 %v11284, %v11476
        %v11478 = vpop.f32.mrb[0].mxu0
        %v11479 = vadd.f32 %v11286, %v11478
        %v11480 = vpop.f32.mrb[0].mxu0
        %v11481 = vadd.f32 %v11288, %v11480
        %v11482 = vpop.f32.mrb[0].mxu0
        %v11483 = vadd.f32 %v11290, %v11482
        %11484 = vmatprep.mubr.bf16.mxu0 %v10648
        %11485 = vmatmul.mubr.bf16.gmra.mrb[0].mxu0 %v10646
        %v11486 = vpop.f32.mrb[0].mxu0
        %v11487 = vadd.f32 %v11294, %v11486
        %v11488 = vpop.f32.mrb[0].mxu0
        %v11489 = vadd.f32 %v11296, %v11488
        %v11490 = vpop.f32.mrb[0].mxu0
        %v11491 = vadd.f32 %v11298, %v11490
        %v11492 = vpop.f32.mrb[0].mxu0
        %v11493 = vadd.f32 %v11300, %v11492
        %11494 = vdwg.mxu0
        %v11495 = vxor.u32 %v11337, 2147483648
        %v11496 = vxor.u32 %v11339, 2147483648
        %v11497 = vxor.u32 %v11341, 2147483648
        %v11498 = vxor.u32 %v11343, 2147483648
        %v11499 = vxor.u32 %v11347, 2147483648
        %v11500 = vxor.u32 %v11349, 2147483648
        %v11501 = vxor.u32 %v11351, 2147483648
        %v11502 = vxor.u32 %v11353, 2147483648
        %v11503 = vxor.u32 %v11357, 2147483648
        %v11504 = vxor.u32 %v11359, 2147483648
        %v11505 = vxor.u32 %v11361, 2147483648
        %v11506 = vxor.u32 %v11363, 2147483648
        %v11507 = vxor.u32 %v11367, 2147483648
        %v11508 = vxor.u32 %v11369, 2147483648
        %v11509 = vxor.u32 %v11371, 2147483648
        %v11510 = vxor.u32 %v11373, 2147483648
        %v11511 = vxor.u32 %v11377, 2147483648
        %v11512 = vxor.u32 %v11379, 2147483648
        %v11513 = vxor.u32 %v11381, 2147483648
        %v11514 = vxor.u32 %v11383, 2147483648
        %v11515 = vxor.u32 %v11387, 2147483648
        %v11516 = vxor.u32 %v11389, 2147483648
        %v11517 = vxor.u32 %v11391, 2147483648
        %v11518 = vxor.u32 %v11393, 2147483648
        %v11519 = vxor.u32 %v11397, 2147483648
        %v11520 = vxor.u32 %v11399, 2147483648
        %v11521 = vxor.u32 %v11401, 2147483648
        %v11522 = vxor.u32 %v11403, 2147483648
        %v11523 = vxor.u32 %v11407, 2147483648
        %v11524 = vxor.u32 %v11409, 2147483648
        %v11525 = vxor.u32 %v11411, 2147483648
        %v11526 = vxor.u32 %v11413, 2147483648
        %v11527 = vxor.u32 %v11417, 2147483648
        %v11528 = vxor.u32 %v11419, 2147483648
        %v11529 = vxor.u32 %v11421, 2147483648
        %v11530 = vxor.u32 %v11423, 2147483648
        %v11531 = vxor.u32 %v11427, 2147483648
        %v11532 = vxor.u32 %v11429, 2147483648
        %v11533 = vxor.u32 %v11431, 2147483648
        %v11534 = vxor.u32 %v11433, 2147483648
        %v11535 = vxor.u32 %v11437, 2147483648
        %v11536 = vxor.u32 %v11439, 2147483648
        %v11537 = vxor.u32 %v11441, 2147483648
        %v11538 = vxor.u32 %v11443, 2147483648
        %v11539 = vxor.u32 %v11447, 2147483648
        %v11540 = vxor.u32 %v11449, 2147483648
        %v11541 = vxor.u32 %v11451, 2147483648
        %v11542 = vxor.u32 %v11453, 2147483648
        %v11543 = vxor.u32 %v11457, 2147483648
        %v11544 = vxor.u32 %v11459, 2147483648
        %v11545 = vxor.u32 %v11461, 2147483648
        %v11546 = vxor.u32 %v11463, 2147483648
        %v11547 = vxor.u32 %v11467, 2147483648
        %v11548 = vxor.u32 %v11469, 2147483648
        %v11549 = vxor.u32 %v11471, 2147483648
        %v11550 = vxor.u32 %v11473, 2147483648
        %v11551 = vxor.u32 %v11477, 2147483648
        %v11552 = vxor.u32 %v11479, 2147483648
        %v11553 = vxor.u32 %v11481, 2147483648
        %v11554 = vxor.u32 %v11483, 2147483648
        %v11555 = vxor.u32 %v11487, 2147483648
        %v11556 = vxor.u32 %v11489, 2147483648
        %v11557 = vxor.u32 %v11491, 2147483648
        %v11558 = vxor.u32 %v11493, 2147483648
        %v11559 = vmul.f32 %v11495, 1.442695
        %v11560 = vpow.pop %v11559
        %v11561 = vmul.f32 %v11496, 1.442695
        %v11562 = vpow.pop %v11561
        %v11563 = vmul.f32 %v11497, 1.442695
        %v11564 = vpow.pop %v11563
        %v11565 = vmul.f32 %v11498, 1.442695
        %v11566 = vpow.pop %v11565
        %v11567 = vmul.f32 %v11499, 1.442695
        %v11568 = vpow.pop %v11567
        %v11569 = vmul.f32 %v11500, 1.442695
        %v11570 = vpow.pop %v11569
        %v11571 = vmul.f32 %v11501, 1.442695
        %v11572 = vpow.pop %v11571
        %v11573 = vmul.f32 %v11502, 1.442695
        %v11574 = vpow.pop %v11573
        %v11575 = vmul.f32 %v11503, 1.442695
        %v11576 = vpow.pop %v11575
        %v11577 = vmul.f32 %v11504, 1.442695
        %v11578 = vpow.pop %v11577
        %v11579 = vmul.f32 %v11505, 1.442695
        %v11580 = vpow.pop %v11579
        %v11581 = vmul.f32 %v11506, 1.442695
        %v11582 = vpow.pop %v11581
        %v11583 = vmul.f32 %v11507, 1.442695
        %v11584 = vpow.pop %v11583
        %v11585 = vmul.f32 %v11508, 1.442695
        %v11586 = vpow.pop %v11585
        %v11587 = vmul.f32 %v11509, 1.442695
        %v11588 = vpow.pop %v11587
        %v11589 = vmul.f32 %v11510, 1.442695
        %v11590 = vpow.pop %v11589
        %v11591 = vmul.f32 %v11511, 1.442695
        %v11592 = vpow.pop %v11591
        %v11593 = vmul.f32 %v11512, 1.442695
        %v11594 = vpow.pop %v11593
        %v11595 = vmul.f32 %v11513, 1.442695
        %v11596 = vpow.pop %v11595
        %v11597 = vmul.f32 %v11514, 1.442695
        %v11598 = vpow.pop %v11597
        %v11599 = vmul.f32 %v11515, 1.442695
        %v11600 = vpow.pop %v11599
        %v11601 = vmul.f32 %v11516, 1.442695
        %v11602 = vpow.pop %v11601
        %v11603 = vmul.f32 %v11517, 1.442695
        %v11604 = vpow.pop %v11603
        %v11605 = vmul.f32 %v11518, 1.442695
        %v11606 = vpow.pop %v11605
        %v11607 = vmul.f32 %v11519, 1.442695
        %v11608 = vpow.pop %v11607
        %v11609 = vmul.f32 %v11520, 1.442695
        %v11610 = vpow.pop %v11609
        %v11611 = vmul.f32 %v11521, 1.442695
        %v11612 = vpow.pop %v11611
        %v11613 = vmul.f32 %v11522, 1.442695
        %v11614 = vpow.pop %v11613
        %v11615 = vmul.f32 %v11523, 1.442695
        %v11616 = vpow.pop %v11615
        %v11617 = vmul.f32 %v11524, 1.442695
        %v11618 = vpow.pop %v11617
        %v11619 = vmul.f32 %v11525, 1.442695
        %v11620 = vpow.pop %v11619
        %v11621 = vmul.f32 %v11526, 1.442695
        %v11622 = vpow.pop %v11621
        %v11623 = vmul.f32 %v11527, 1.442695
        %v11624 = vpow.pop %v11623
        %v11625 = vmul.f32 %v11528, 1.442695
        %v11626 = vpow.pop %v11625
        %v11627 = vmul.f32 %v11529, 1.442695
        %v11628 = vpow.pop %v11627
        %v11629 = vmul.f32 %v11530, 1.442695
        %v11630 = vpow.pop %v11629
        %v11631 = vmul.f32 %v11531, 1.442695
        %v11632 = vpow.pop %v11631
        %v11633 = vmul.f32 %v11532, 1.442695
        %v11634 = vpow.pop %v11633
        %v11635 = vmul.f32 %v11533, 1.442695
        %v11636 = vpow.pop %v11635
        %v11637 = vmul.f32 %v11534, 1.442695
        %v11638 = vpow.pop %v11637
        %v11639 = vmul.f32 %v11535, 1.442695
        %v11640 = vpow.pop %v11639
        %v11641 = vmul.f32 %v11536, 1.442695
        %v11642 = vpow.pop %v11641
        %v11643 = vmul.f32 %v11537, 1.442695
        %v11644 = vpow.pop %v11643
        %v11645 = vmul.f32 %v11538, 1.442695
        %v11646 = vpow.pop %v11645
        %v11647 = vmul.f32 %v11539, 1.442695
        %v11648 = vpow.pop %v11647
        %v11649 = vmul.f32 %v11540, 1.442695
        %v11650 = vpow.pop %v11649
        %v11651 = vmul.f32 %v11541, 1.442695
        %v11652 = vpow.pop %v11651
        %v11653 = vmul.f32 %v11542, 1.442695
        %v11654 = vpow.pop %v11653
        %v11655 = vmul.f32 %v11543, 1.442695
        %v11656 = vpow.pop %v11655
        %v11657 = vmul.f32 %v11544, 1.442695
        %v11658 = vpow.pop %v11657
        %v11659 = vmul.f32 %v11545, 1.442695
        %v11660 = vpow.pop %v11659
        %v11661 = vmul.f32 %v11546, 1.442695
        %v11662 = vpow.pop %v11661
        %v11663 = vmul.f32 %v11547, 1.442695
        %v11664 = vpow.pop %v11663
        %v11665 = vmul.f32 %v11548, 1.442695
        %v11666 = vpow.pop %v11665
        %v11667 = vmul.f32 %v11549, 1.442695
        %v11668 = vpow.pop %v11667
        %v11669 = vmul.f32 %v11550, 1.442695
        %v11670 = vpow.pop %v11669
        %v11671 = vmul.f32 %v11551, 1.442695
        %v11672 = vpow.pop %v11671
        %v11673 = vmul.f32 %v11552, 1.442695
        %v11674 = vpow.pop %v11673
        %v11675 = vmul.f32 %v11553, 1.442695
        %v11676 = vpow.pop %v11675
        %v11677 = vmul.f32 %v11554, 1.442695
        %v11678 = vpow.pop %v11677
        %v11679 = vmul.f32 %v11555, 1.442695
        %v11680 = vpow.pop %v11679
        %v11681 = vmul.f32 %v11556, 1.442695
        %v11682 = vpow.pop %v11681
        %v11683 = vmul.f32 %v11557, 1.442695
        %v11684 = vpow.pop %v11683
        %v11685 = vmul.f32 %v11558, 1.442695
        %v11686 = vpow.pop %v11685
        %v11687 = vadd.f32 %v11560, 1.0
        %v11688 = vadd.f32 %v11562, 1.0
        %v11689 = vadd.f32 %v11564, 1.0
        %v11690 = vadd.f32 %v11566, 1.0
        %v11691 = vadd.f32 %v11568, 1.0
        %v11692 = vadd.f32 %v11570, 1.0
        %v11693 = vadd.f32 %v11572, 1.0
        %v11694 = vadd.f32 %v11574, 1.0
        %v11695 = vadd.f32 %v11576, 1.0
        %v11696 = vadd.f32 %v11578, 1.0
        %v11697 = vadd.f32 %v11580, 1.0
        %v11698 = vadd.f32 %v11582, 1.0
        %v11699 = vadd.f32 %v11584, 1.0
        %v11700 = vadd.f32 %v11586, 1.0
        %v11701 = vadd.f32 %v11588, 1.0
        %v11702 = vadd.f32 %v11590, 1.0
        %v11703 = vadd.f32 %v11592, 1.0
        %v11704 = vadd.f32 %v11594, 1.0
        %v11705 = vadd.f32 %v11596, 1.0
        %v11706 = vadd.f32 %v11598, 1.0
        %v11707 = vadd.f32 %v11600, 1.0
        %v11708 = vadd.f32 %v11602, 1.0
        %v11709 = vadd.f32 %v11604, 1.0
        %v11710 = vadd.f32 %v11606, 1.0
        %v11711 = vadd.f32 %v11608, 1.0
        %v11712 = vadd.f32 %v11610, 1.0
        %v11713 = vadd.f32 %v11612, 1.0
        %v11714 = vadd.f32 %v11614, 1.0
        %v11715 = vadd.f32 %v11616, 1.0
        %v11716 = vadd.f32 %v11618, 1.0
        %v11717 = vadd.f32 %v11620, 1.0
        %v11718 = vadd.f32 %v11622, 1.0
        %v11719 = vadd.f32 %v11624, 1.0
        %v11720 = vadd.f32 %v11626, 1.0
        %v11721 = vadd.f32 %v11628, 1.0
        %v11722 = vadd.f32 %v11630, 1.0
        %v11723 = vadd.f32 %v11632, 1.0
        %v11724 = vadd.f32 %v11634, 1.0
        %v11725 = vadd.f32 %v11636, 1.0
        %v11726 = vadd.f32 %v11638, 1.0
        %v11727 = vadd.f32 %v11640, 1.0
        %v11728 = vadd.f32 %v11642, 1.0
        %v11729 = vadd.f32 %v11644, 1.0
        %v11730 = vadd.f32 %v11646, 1.0
        %v11731 = vadd.f32 %v11648, 1.0
        %v11732 = vadd.f32 %v11650, 1.0
        %v11733 = vadd.f32 %v11652, 1.0
        %v11734 = vadd.f32 %v11654, 1.0
        %v11735 = vadd.f32 %v11656, 1.0
        %v11736 = vadd.f32 %v11658, 1.0
        %v11737 = vadd.f32 %v11660, 1.0
        %v11738 = vadd.f32 %v11662, 1.0
        %v11739 = vadd.f32 %v11664, 1.0
        %v11740 = vadd.f32 %v11666, 1.0
        %v11741 = vadd.f32 %v11668, 1.0
        %v11742 = vadd.f32 %v11670, 1.0
        %v11743 = vadd.f32 %v11672, 1.0
        %v11744 = vadd.f32 %v11674, 1.0
        %v11745 = vadd.f32 %v11676, 1.0
        %v11746 = vadd.f32 %v11678, 1.0
        %v11747 = vadd.f32 %v11680, 1.0
        %v11748 = vadd.f32 %v11682, 1.0
        %v11749 = vadd.f32 %v11684, 1.0
        %v11750 = vadd.f32 %v11686, 1.0
        %v11751 = vrcp.pop %v11687
        %v11752 = vmul.f32 1.0, %v11751
        %v11753 = vrcp.pop %v11688
        %v11754 = vmul.f32 1.0, %v11753
        %v11755 = vrcp.pop %v11689
        %v11756 = vmul.f32 1.0, %v11755
        %v11757 = vrcp.pop %v11690
        %v11758 = vmul.f32 1.0, %v11757
        %v11759 = vrcp.pop %v11691
        %v11760 = vmul.f32 1.0, %v11759
        %v11761 = vrcp.pop %v11692
        %v11762 = vmul.f32 1.0, %v11761
        %v11763 = vrcp.pop %v11693
        %v11764 = vmul.f32 1.0, %v11763
        %v11765 = vrcp.pop %v11694
        %v11766 = vmul.f32 1.0, %v11765
        %v11767 = vrcp.pop %v11695
        %v11768 = vmul.f32 1.0, %v11767
        %v11769 = vrcp.pop %v11696
        %v11770 = vmul.f32 1.0, %v11769
        %v11771 = vrcp.pop %v11697
        %v11772 = vmul.f32 1.0, %v11771
        %v11773 = vrcp.pop %v11698
        %v11774 = vmul.f32 1.0, %v11773
        %v11775 = vrcp.pop %v11699
        %v11776 = vmul.f32 1.0, %v11775
        %v11777 = vrcp.pop %v11700
        %v11778 = vmul.f32 1.0, %v11777
        %v11779 = vrcp.pop %v11701
        %v11780 = vmul.f32 1.0, %v11779
        %v11781 = vrcp.pop %v11702
        %v11782 = vmul.f32 1.0, %v11781
        %v11783 = vrcp.pop %v11703
        %v11784 = vmul.f32 1.0, %v11783
        %v11785 = vrcp.pop %v11704
        %v11786 = vmul.f32 1.0, %v11785
        %v11787 = vrcp.pop %v11705
        %v11788 = vmul.f32 1.0, %v11787
        %v11789 = vrcp.pop %v11706
        %v11790 = vmul.f32 1.0, %v11789
        %v11791 = vrcp.pop %v11707
        %v11792 = vmul.f32 1.0, %v11791
        %v11793 = vrcp.pop %v11708
        %v11794 = vmul.f32 1.0, %v11793
        %v11795 = vrcp.pop %v11709
        %v11796 = vmul.f32 1.0, %v11795
        %v11797 = vrcp.pop %v11710
        %v11798 = vmul.f32 1.0, %v11797
        %v11799 = vrcp.pop %v11711
        %v11800 = vmul.f32 1.0, %v11799
        %v11801 = vrcp.pop %v11712
        %v11802 = vmul.f32 1.0, %v11801
        %v11803 = vrcp.pop %v11713
        %v11804 = vmul.f32 1.0, %v11803
        %v11805 = vrcp.pop %v11714
        %v11806 = vmul.f32 1.0, %v11805
        %v11807 = vrcp.pop %v11715
        %v11808 = vmul.f32 1.0, %v11807
        %v11809 = vrcp.pop %v11716
        %v11810 = vmul.f32 1.0, %v11809
        %v11811 = vrcp.pop %v11717
        %v11812 = vmul.f32 1.0, %v11811
        %v11813 = vrcp.pop %v11718
        %v11814 = vmul.f32 1.0, %v11813
        %v11815 = vrcp.pop %v11719
        %v11816 = vmul.f32 1.0, %v11815
        %v11817 = vrcp.pop %v11720
        %v11818 = vmul.f32 1.0, %v11817
        %v11819 = vrcp.pop %v11721
        %v11820 = vmul.f32 1.0, %v11819
        %v11821 = vrcp.pop %v11722
        %v11822 = vmul.f32 1.0, %v11821
        %v11823 = vrcp.pop %v11723
        %v11824 = vmul.f32 1.0, %v11823
        %v11825 = vrcp.pop %v11724
        %v11826 = vmul.f32 1.0, %v11825
        %v11827 = vrcp.pop %v11725
        %v11828 = vmul.f32 1.0, %v11827
        %v11829 = vrcp.pop %v11726
        %v11830 = vmul.f32 1.0, %v11829
        %v11831 = vrcp.pop %v11727
        %v11832 = vmul.f32 1.0, %v11831
        %v11833 = vrcp.pop %v11728
        %v11834 = vmul.f32 1.0, %v11833
        %v11835 = vrcp.pop %v11729
        %v11836 = vmul.f32 1.0, %v11835
        %v11837 = vrcp.pop %v11730
        %v11838 = vmul.f32 1.0, %v11837
        %v11839 = vrcp.pop %v11731
        %v11840 = vmul.f32 1.0, %v11839
        %v11841 = vrcp.pop %v11732
        %v11842 = vmul.f32 1.0, %v11841
        %v11843 = vrcp.pop %v11733
        %v11844 = vmul.f32 1.0, %v11843
        %v11845 = vrcp.pop %v11734
        %v11846 = vmul.f32 1.0, %v11845
        %v11847 = vrcp.pop %v11735
        %v11848 = vmul.f32 1.0, %v11847
        %v11849 = vrcp.pop %v11736
        %v11850 = vmul.f32 1.0, %v11849
        %v11851 = vrcp.pop %v11737
        %v11852 = vmul.f32 1.0, %v11851
        %v11853 = vrcp.pop %v11738
        %v11854 = vmul.f32 1.0, %v11853
        %v11855 = vrcp.pop %v11739
        %v11856 = vmul.f32 1.0, %v11855
        %v11857 = vrcp.pop %v11740
        %v11858 = vmul.f32 1.0, %v11857
        %v11859 = vrcp.pop %v11741
        %v11860 = vmul.f32 1.0, %v11859
        %v11861 = vrcp.pop %v11742
        %v11862 = vmul.f32 1.0, %v11861
        %v11863 = vrcp.pop %v11743
        %v11864 = vmul.f32 1.0, %v11863
        %v11865 = vrcp.pop %v11744
        %v11866 = vmul.f32 1.0, %v11865
        %v11867 = vrcp.pop %v11745
        %v11868 = vmul.f32 1.0, %v11867
        %v11869 = vrcp.pop %v11746
        %v11870 = vmul.f32 1.0, %v11869
        %v11871 = vrcp.pop %v11747
        %v11872 = vmul.f32 1.0, %v11871
        %v11873 = vrcp.pop %v11748
        %v11874 = vmul.f32 1.0, %v11873
        %v11875 = vrcp.pop %v11749
        %v11876 = vmul.f32 1.0, %v11875
        %v11877 = vrcp.pop %v11750
        %v11878 = vmul.f32 1.0, %v11877
        %v11879 = vmul.f32 %v11337, %v11752
        %v11880 = vmul.f32 %v11339, %v11754
        %v11881 = vmul.f32 %v11341, %v11756
        %v11882 = vmul.f32 %v11343, %v11758
        %v11883 = vmul.f32 %v11347, %v11760
        %v11884 = vmul.f32 %v11349, %v11762
        %v11885 = vmul.f32 %v11351, %v11764
        %v11886 = vmul.f32 %v11353, %v11766
        %v11887 = vmul.f32 %v11357, %v11768
        %v11888 = vmul.f32 %v11359, %v11770
        %v11889 = vmul.f32 %v11361, %v11772
        %v11890 = vmul.f32 %v11363, %v11774
        %v11891 = vmul.f32 %v11367, %v11776
        %v11892 = vmul.f32 %v11369, %v11778
        %v11893 = vmul.f32 %v11371, %v11780
        %v11894 = vmul.f32 %v11373, %v11782
        %v11895 = vmul.f32 %v11377, %v11784
        %v11896 = vmul.f32 %v11379, %v11786
        %v11897 = vmul.f32 %v11381, %v11788
        %v11898 = vmul.f32 %v11383, %v11790
        %v11899 = vmul.f32 %v11387, %v11792
        %v11900 = vmul.f32 %v11389, %v11794
        %v11901 = vmul.f32 %v11391, %v11796
        %v11902 = vmul.f32 %v11393, %v11798
        %v11903 = vmul.f32 %v11397, %v11800
        %v11904 = vmul.f32 %v11399, %v11802
        %v11905 = vmul.f32 %v11401, %v11804
        %v11906 = vmul.f32 %v11403, %v11806
        %v11907 = vmul.f32 %v11407, %v11808
        %v11908 = vmul.f32 %v11409, %v11810
        %v11909 = vmul.f32 %v11411, %v11812
        %v11910 = vmul.f32 %v11413, %v11814
        %v11911 = vmul.f32 %v11417, %v11816
        %v11912 = vmul.f32 %v11419, %v11818
        %v11913 = vmul.f32 %v11421, %v11820
        %v11914 = vmul.f32 %v11423, %v11822
        %v11915 = vmul.f32 %v11427, %v11824
        %v11916 = vmul.f32 %v11429, %v11826
        %v11917 = vmul.f32 %v11431, %v11828
        %v11918 = vmul.f32 %v11433, %v11830
        %v11919 = vmul.f32 %v11437, %v11832
        %v11920 = vmul.f32 %v11439, %v11834
        %v11921 = vmul.f32 %v11441, %v11836
        %v11922 = vmul.f32 %v11443, %v11838
        %v11923 = vmul.f32 %v11447, %v11840
        %v11924 = vmul.f32 %v11449, %v11842
        %v11925 = vmul.f32 %v11451, %v11844
        %v11926 = vmul.f32 %v11453, %v11846
        %v11927 = vmul.f32 %v11457, %v11848
        %v11928 = vmul.f32 %v11459, %v11850
        %v11929 = vmul.f32 %v11461, %v11852
        %v11930 = vmul.f32 %v11463, %v11854
        %v11931 = vmul.f32 %v11467, %v11856
        %v11932 = vmul.f32 %v11469, %v11858
        %v11933 = vmul.f32 %v11471, %v11860
        %v11934 = vmul.f32 %v11473, %v11862
        %v11935 = vmul.f32 %v11477, %v11864
        %v11936 = vmul.f32 %v11479, %v11866
        %v11937 = vmul.f32 %v11481, %v11868
        %v11938 = vmul.f32 %v11483, %v11870
        %v11939 = vmul.f32 %v11487, %v11872
        %v11940 = vmul.f32 %v11489, %v11874
        %v11941 = vmul.f32 %v11491, %v11876
        %v11942 = vmul.f32 %v11493, %v11878
        %11943 = vst [vmem:[%s217] sm:$0xff] %v11879
        %11944 = vst [vmem:[%s217 + $0x8] sm:$0xff] %v11880
        %11945 = vst [vmem:[%s217 + $0x10] sm:$0xff] %v11881
        %11946 = vst [vmem:[%s217 + $0x18] sm:$0xff] %v11882
        %11947 = vst [vmem:[%s217 + $0x20] sm:$0xff] %v11883
        %11948 = vst [vmem:[%s217 + $0x28] sm:$0xff] %v11884
        %11949 = vst [vmem:[%s217 + $0x30] sm:$0xff] %v11885
        %11950 = vst [vmem:[%s217 + $0x38] sm:$0xff] %v11886
        %11951 = vst [vmem:[%s217 + $0x40] sm:$0xff] %v11887
        %11952 = vst [vmem:[%s217 + $0x48] sm:$0xff] %v11888
        %11953 = vst [vmem:[%s217 + $0x50] sm:$0xff] %v11889
        %11954 = vst [vmem:[%s217 + $0x58] sm:$0xff] %v11890
        %11955 = vst [vmem:[%s217 + $0x60] sm:$0xff] %v11891
        %11956 = vst [vmem:[%s217 + $0x68] sm:$0xff] %v11892
        %11957 = vst [vmem:[%s217 + $0x70] sm:$0xff] %v11893
        %11958 = vst [vmem:[%s217 + $0x78] sm:$0xff] %v11894
        %11959 = vst [vmem:[%s217 + $0x80] sm:$0xff] %v11895
        %11960 = vst [vmem:[%s217 + $0x88] sm:$0xff] %v11896
        %11961 = vst [vmem:[%s217 + $0x90] sm:$0xff] %v11897
        %11962 = vst [vmem:[%s217 + $0x98] sm:$0xff] %v11898
        %11963 = vst [vmem:[%s217 + $0xa0] sm:$0xff] %v11899
        %11964 = vst [vmem:[%s217 + $0xa8] sm:$0xff] %v11900
        %11965 = vst [vmem:[%s217 + $0xb0] sm:$0xff] %v11901
        %11966 = vst [vmem:[%s217 + $0xb8] sm:$0xff] %v11902
        %11967 = vst [vmem:[%s217 + $0xc0] sm:$0xff] %v11903
        %11968 = vst [vmem:[%s217 + $0xc8] sm:$0xff] %v11904
        %11969 = vst [vmem:[%s217 + $0xd0] sm:$0xff] %v11905
        %11970 = vst [vmem:[%s217 + $0xd8] sm:$0xff] %v11906
        %11971 = vst [vmem:[%s217 + $0xe0] sm:$0xff] %v11907
        %11972 = vst [vmem:[%s217 + $0xe8] sm:$0xff] %v11908
        %11973 = vst [vmem:[%s217 + $0xf0] sm:$0xff] %v11909
        %11974 = vst [vmem:[%s217 + $0xf8] sm:$0xff] %v11910
        %11975 = vst [vmem:[%s217 + $0x100] sm:$0xff] %v11911
        %11976 = vst [vmem:[%s217 + $0x108] sm:$0xff] %v11912
        %11977 = vst [vmem:[%s217 + $0x110] sm:$0xff] %v11913
        %11978 = vst [vmem:[%s217 + $0x118] sm:$0xff] %v11914
        %11979 = vst [vmem:[%s217 + $0x120] sm:$0xff] %v11915
        %11980 = vst [vmem:[%s217 + $0x128] sm:$0xff] %v11916
        %11981 = vst [vmem:[%s217 + $0x130] sm:$0xff] %v11917
        %11982 = vst [vmem:[%s217 + $0x138] sm:$0xff] %v11918
        %11983 = vst [vmem:[%s217 + $0x140] sm:$0xff] %v11919
        %11984 = vst [vmem:[%s217 + $0x148] sm:$0xff] %v11920
        %11985 = vst [vmem:[%s217 + $0x150] sm:$0xff] %v11921
        %11986 = vst [vmem:[%s217 + $0x158] sm:$0xff] %v11922
        %11987 = vst [vmem:[%s217 + $0x160] sm:$0xff] %v11923
        %11988 = vst [vmem:[%s217 + $0x168] sm:$0xff] %v11924
        %11989 = vst [vmem:[%s217 + $0x170] sm:$0xff] %v11925
        %11990 = vst [vmem:[%s217 + $0x178] sm:$0xff] %v11926
        %11991 = vst [vmem:[%s217 + $0x180] sm:$0xff] %v11927
        %11992 = vst [vmem:[%s217 + $0x188] sm:$0xff] %v11928
        %11993 = vst [vmem:[%s217 + $0x190] sm:$0xff] %v11929
        %11994 = vst [vmem:[%s217 + $0x198] sm:$0xff] %v11930
        %11995 = vst [vmem:[%s217 + $0x1a0] sm:$0xff] %v11931
        %11996 = vst [vmem:[%s217 + $0x1a8] sm:$0xff] %v11932
        %11997 = vst [vmem:[%s217 + $0x1b0] sm:$0xff] %v11933
        %11998 = vst [vmem:[%s217 + $0x1b8] sm:$0xff] %v11934
        %11999 = vst [vmem:[%s217 + $0x1c0] sm:$0xff] %v11935
        %12000 = vst [vmem:[%s217 + $0x1c8] sm:$0xff] %v11936
        %12001 = vst [vmem:[%s217 + $0x1d0] sm:$0xff] %v11937
        %12002 = vst [vmem:[%s217 + $0x1d8] sm:$0xff] %v11938
        %12003 = vst [vmem:[%s217 + $0x1e0] sm:$0xff] %v11939
        %12004 = vst [vmem:[%s217 + $0x1e8] sm:$0xff] %v11940
        %12005 = vst [vmem:[%s217 + $0x1f0] sm:$0xff] %v11941
        %12006 = vst [vmem:[%s217 + $0x1f8] sm:$0xff] %v11942
        %s12007 = sand.u32 %s137, 1
        %s12008 = scalar_lea.sflag [#allocation6], %s12007
        %s12009 = sand.u32 %s137, 1
        %s12010 = smul.addr %s12009, 512
        %s12011 = scalar_lea.vmem [#allocation5], %s12010
        // Predicated region
        $region41: #{a_call__.1} parent=39 // pred_check
          %p12012 = pneg %p147
        $region42: #{a_call__.1} parent=39 // pred_check_branch
          %12014 = sbr.rel (%p12012) target = $region44
        $region43: #{a_call__.1} parent=39 // pred_region
          %s12016 = ssub.s32 8192, 8192
          %12017 = vsyncadd %s12008, %s12016
          %s12018 = smul.addr %s19, 64
          %s12019 = smul.addr %s12018, 128
          %s12020 = scalar_lea.hbm %s5, %s12019
          %s12021 = sshll.u32 %s12011, 4
          %s12022 = int_to_ptr.vmem [resolvable:$true] %s12021
          %12027 = dma.vmem_to_hbm [thread:$0]  %s12022, 8192, %s12020, %s12008, 256, 256, 16
        $region44: #{a_call__.1} parent=39 // pred_fallthru
          _
      $region40: #{a_call__.1} parent=5 // pred_fallthru
        _
      %p12028 = scmp.le.s32.totalorder 2, %s14
      // Predicated region
      $region45: #{a_call__.1} parent=5 // pred_check
        %p12029 = pneg %p12028
      $region46: #{a_call__.1} parent=5 // pred_check_branch
        %12031 = sbr.rel (%p12029) target = $region48
      $region47: #{a_call__.1} parent=5 // pred_region
        %s12032 = ssub.s32 %s14, 2
        // Predicated region
        $region49: #{a_call__.1} parent=47 // pred_check
          %p12033 = pneg %p153
        $region50: #{a_call__.1} parent=47 // pred_check_branch
          %12035 = sbr.rel (%p12033) target = $region52
        $region51: #{a_call__.1} parent=47 // pred_region
          %s12036 = sand.u32 %s138, 1
          %s12037 = scalar_lea.sflag [#allocation6], %s12036
          %s12038 = sand.u32 %s138, 1
          %s12039 = smul.addr %s12038, 512
          %s12040 = scalar_lea.vmem [#allocation5], %s12039
          %12041 = dma.done %s12037, 8192
        $region52: #{a_call__.1} parent=47 // pred_fallthru
          _
      $region48: #{a_call__.1} parent=5 // pred_fallthru
        _
    $region6: #{a_call__.1} parent=1 // loop_footer
      %s18 = sadd.s32 1, %s14
    $region7: #{a_call__.1} parent=1 // loop_footer_branch
      %13 = sbr.rel target = $region3
    $region8: #{a_call__.1} parent=1 // loop_exit
      _
    %12042 = vsyncpa [#allocation6], 1
    %s12043 = scalar_lea.sflag [#allocation6], 1
    %12044 = vsyncpa %s12043, 1

</llo_original>
